<compile_context>
chip_gen: v7x
topology: tpu7x:2x2x1
jax: 0.10.0
libtpu: 0.0.40
codegen_flags: <defaults>
</compile_context>

<pallas_src>
import math

import jax
import jax.numpy as jnp
from jax import lax
from jax.experimental import pallas as pl
from jax.experimental.pallas import tpu as pltpu

EPS = 1e-5  # nn.InstanceNorm2d default eps


def _make_fused_kernel(H, W, K, P, C, Cred, Cout, Q, NPAD):
    """Fused conv1+IN+ReLU -> replicate-pad -> conv2+IN+Sigmoid (one batch)."""
    Wp = W + 2 * P
    HW = H * W
    inv_n = 1.0 / float(HW)

    def kernel(xp_ref, w1_ref, w2_ref, mask_ref, o_ref, x1_ref, y1p_ref, x2_ref):
        mask = mask_ref[...] > 0.0                     # (1, Q) valid columns

        # ---- conv1 im2col: 49 shifted, full-width copies of the padded input.
        # Columns are q = h*Wp + w ("padded-column" coords), so tap (ky, kx)
        # is the flat slice of the padded input starting at ky*Wp + kx.
        for ky in range(K):
            for kx in range(K):
                off = ky * Wp + kx
                r0 = (ky * K + kx) * C
                x1_ref[r0:r0 + C, :] = xp_ref[0, :, off:off + Q]

        # ---- conv1 as ONE MXU matmul (bf16 x bf16 -> f32 accumulate)
        a1_full = lax.dot_general(
            w1_ref[...], x1_ref[...],
            dimension_numbers=(((1,), (0,)), ((), ())),
            preferred_element_type=jnp.float32)        # (CP, Q)
        a1 = a1_full[0:Cred, :]                        # drop zero pad rows

        # ---- InstanceNorm (fused sum / sum-of-squares over valid cols) + ReLU
        a1m = jnp.where(mask, a1, 0.0)
        s1 = jnp.sum(a1m, axis=1, keepdims=True)
        q1 = jnp.sum(a1m * a1m, axis=1, keepdims=True)
        m1 = s1 * inv_n
        v1 = q1 * inv_n - m1 * m1
        y1 = jnp.maximum((a1 - m1) * lax.rsqrt(v1 + EPS), 0.0)
        y1 = y1.astype(jnp.bfloat16)                   # (Cred, Q)

        # ---- replicate ("edge") pad of y1, flat with stride Wp: (Cred, NPAD)
        y1p_ref[...] = jnp.zeros(y1p_ref.shape, y1p_ref.dtype)
        y1p_ref[:, P * Wp + P:P * Wp + P + Q] = y1     # interior (one store)
        for h in range(H):                             # left/right edge cols
            row = (h + P) * Wp
            y1p_ref[:, row:row + P] = jnp.broadcast_to(
                y1[:, h * Wp:h * Wp + 1], (Cred, P))
            y1p_ref[:, row + P + W:row + Wp] = jnp.broadcast_to(
                y1[:, h * Wp + W - 1:h * Wp + W], (Cred, P))
        qb = (H - 1) * Wp                              # top/bottom rows
        le0 = jnp.broadcast_to(y1[:, 0:1], (Cred, P))
        re0 = jnp.broadcast_to(y1[:, W - 1:W], (Cred, P))
        leb = jnp.broadcast_to(y1[:, qb:qb + 1], (Cred, P))
        reb = jnp.broadcast_to(y1[:, qb + W - 1:qb + W], (Cred, P))
        for r in range(P):
            t0 = r * Wp
            y1p_ref[:, t0:t0 + P] = le0
            y1p_ref[:, t0 + P:t0 + P + W] = y1[:, 0:W]
            y1p_ref[:, t0 + P + W:t0 + Wp] = re0
            b0 = (P + H + r) * Wp
            y1p_ref[:, b0:b0 + P] = leb
            y1p_ref[:, b0 + P:b0 + P + W] = y1[:, qb:qb + W]
            y1p_ref[:, b0 + P + W:b0 + Wp] = reb

        # ---- conv2 im2col: 49 shifted, full-width copies of padded y1
        for ky in range(K):
            for kx in range(K):
                off = ky * Wp + kx
                r0 = (ky * K + kx) * Cred
                x2_ref[r0:r0 + Cred, :] = y1p_ref[:, off:off + Q]

        # ---- conv2 as ONE matmul, lane-dense (Cout, Q) output + IN + sigmoid
        a2 = lax.dot_general(
            w2_ref[...], x2_ref[...],
            dimension_numbers=(((1,), (0,)), ((), ())),
            preferred_element_type=jnp.float32)        # (Cout, Q)
        a2m = jnp.where(mask, a2, 0.0)
        s2 = jnp.sum(a2m, axis=1, keepdims=True)
        q2 = jnp.sum(a2m * a2m, axis=1, keepdims=True)
        m2 = s2 * inv_n
        v2 = q2 * inv_n - m2 * m2
        o_ref[0] = jax.nn.sigmoid((a2 - m2) * lax.rsqrt(v2 + EPS))

    return kernel


def gam_spatial_forward(x_nchw, params):
    """GAM_Spatial forward.  x_nchw: (B, C, H, W) -> (B, C, H, W)."""
    B, C, H, W = x_nchw.shape
    w1, w2 = params["w1"], params["w2"]                # HWIO: (K, K, Cin, Cout)
    K = w1.shape[0]
    P = (K - 1) // 2
    Cred, Cout = w1.shape[3], w2.shape[3]
    Hp, Wp = H + 2 * P, W + 2 * P
    Q = H * Wp                                         # output cols, padded coords
    NPIX = Hp * Wp
    NPAD = pl.cdiv(Q + (K - 1) * (Wp + 1), 128) * 128  # covers max slice end
    KKC = K * K * C
    KKR = K * K * Cred
    CP = pl.cdiv(Cred, 8) * 8                          # pad conv1 M to 8 rows

    # Replicate-pad the native NCHW input and flatten spatially (stride Wp).
    # Only a ~2x pad copy crosses HBM; both im2cols are built in VMEM.
    xp = jnp.pad(x_nchw.astype(jnp.float32),
                 ((0, 0), (0, 0), (P, P), (P, P)), mode="edge")
    xp = xp.reshape(B, C, NPIX)
    xp = jnp.pad(xp, ((0, 0), (0, 0), (0, NPAD - NPIX))).astype(jnp.bfloat16)

    # Lane-dense weights; (ky, kx, cin)-ordered columns match the im2col rows.
    # Conv biases are dropped: a per-channel constant before
    # InstanceNorm2d(affine=False) is exactly cancelled by the mean.
    w1f = jnp.transpose(w1.reshape(KKC, Cred)).astype(jnp.bfloat16)   # (Cred, KKC)
    w1f = jnp.pad(w1f, ((0, CP - Cred), (0, 0)))                      # (CP, KKC)
    w2f = jnp.transpose(w2.reshape(KKR, Cout)).astype(jnp.bfloat16)   # (Cout, KKR)

    # Valid-column mask ((q mod Wp) < W) for the InstanceNorm statistics.
    mask = ((jnp.arange(Q) % Wp) < W).astype(jnp.float32).reshape(1, Q)

    kernel = _make_fused_kernel(H, W, K, P, C, Cred, Cout, Q, NPAD)
    cost = pl.CostEstimate(
        flops=2 * B * Q * (CP * KKC + Cout * KKR),
        transcendentals=B * Cout * Q,
        bytes_accessed=(2 * B * C * NPAD + 2 * (CP * KKC + Cout * KKR)
                        + 4 * B * Cout * Q + 4 * Q),
    )

    out = pl.pallas_call(
        kernel,
        out_shape=jax.ShapeDtypeStruct((B, Cout, Q), jnp.float32),
        grid=(B,),
        in_specs=[
            pl.BlockSpec((1, C, NPAD), lambda b: (b, 0, 0)),
            pl.BlockSpec((CP, KKC), lambda b: (0, 0)),
            pl.BlockSpec((Cout, KKR), lambda b: (0, 0)),
            pl.BlockSpec((1, Q), lambda b: (0, 0)),
        ],
        out_specs=pl.BlockSpec((1, Cout, Q), lambda b: (b, 0, 0)),
        scratch_shapes=[
            pltpu.VMEM((KKC, Q), jnp.bfloat16),      # conv1 im2col
            pltpu.VMEM((Cred, NPAD), jnp.bfloat16),  # replicate-padded y1 (flat)
            pltpu.VMEM((KKR, Q), jnp.bfloat16),      # conv2 im2col
        ],
        compiler_params=pltpu.CompilerParams(dimension_semantics=("parallel",)),
        cost_estimate=cost,
    )(xp, w1f, w2f, mask)

    # Drop the Wp-W "hole" columns of the padded-column layout (cheap slice).
    return out.reshape(B, Cout, H, Wp)[:, :, :, :W]


def init_params(key, in_channels, ratio=16, kernel_size=7):
    """Deterministic PyTorch-default-style init (kaiming-uniform bounds)."""
    reduced = in_channels // ratio
    K = kernel_size
    k1, k2, k3, k4 = jax.random.split(key, 4)

    fan1 = in_channels * K * K
    bound1 = 1.0 / math.sqrt(fan1)
    w1 = jax.random.uniform(k1, (K, K, in_channels, reduced),
                            minval=-bound1, maxval=bound1, dtype=jnp.float32)
    b1 = jax.random.uniform(k2, (reduced,), minval=-bound1, maxval=bound1,
                            dtype=jnp.float32)

    fan2 = reduced * K * K
    bound2 = 1.0 / math.sqrt(fan2)
    w2 = jax.random.uniform(k3, (K, K, reduced, in_channels),
                            minval=-bound2, maxval=bound2, dtype=jnp.float32)
    b2 = jax.random.uniform(k4, (in_channels,), minval=-bound2, maxval=bound2,
                            dtype=jnp.float32)
    return {"w1": w1, "b1": b1, "w2": w2, "b2": b2}


def _reference_forward(x_nchw, params):
    """Pure-JAX f32 reference (lax.conv, with biases) of the PyTorch module."""
    w1, b1, w2, b2 = params["w1"], params["b1"], params["w2"], params["b2"]
    K = w1.shape[0]
    P = (K - 1) // 2
    x = jnp.transpose(x_nchw, (0, 2, 3, 1))

    def block(x, w, b, act):
        xp = jnp.pad(x, ((0, 0), (P, P), (P, P), (0, 0)), mode="edge")
        y = lax.conv_general_dilated(
            xp, w, window_strides=(1, 1), padding="VALID",
            dimension_numbers=("NHWC", "HWIO", "NHWC")) + b
        mean = jnp.mean(y, axis=(1, 2), keepdims=True)
        var = jnp.mean(jnp.square(y - mean), axis=(1, 2), keepdims=True)
        y = (y - mean) / jnp.sqrt(var + EPS)
        return jnp.maximum(y, 0.0) if act == "relu" else jax.nn.sigmoid(y)

    y1 = block(x, w1, b1, "relu")
    y2 = block(y1, w2, b2, "sigmoid")
    return jnp.transpose(y2, (0, 3, 1, 2))


if __name__ == "__main__":
    B, C, H, W = 2, 32, 16, 16   # in_channels=32, ratio=16 -> reduced=2
    ratio, K = 16, 7

    key = jax.random.PRNGKey(0)
    kp, kx = jax.random.split(key)
    params = init_params(kp, C, ratio=ratio, kernel_size=K)
    x = jax.random.normal(kx, (B, C, H, W), dtype=jnp.float32)

    fwd = jax.jit(gam_spatial_forward)
    out = jax.block_until_ready(fwd(x, params))
    assert out.shape == (B, C, H, W)

    ref = jax.block_until_ready(_reference_forward(x, params))
    # bf16 matmul operands (f32 accumulate) -> ~1e-3..1e-2 abs error on the
    # sigmoid-gated output; tolerance loosened accordingly (per perf review).
    err = float(jnp.max(jnp.abs(out - ref)))
    assert jnp.allclose(out, ref, atol=2e-2, rtol=2e-2), (
        "mismatch vs reference, max abs err = %e" % err)

    print("KERNEL_OK")
</pallas_src>

<mosaic_0001>
module attributes {stable_mosaic.version = 11 : i64} {
  func.func @kernel(%arg0: i32, %arg1: memref<1x32x512xbf16, #tpu.memory_space<vmem>>, %arg2: memref<8x1568xbf16, #tpu.memory_space<vmem>>, %arg3: memref<32x98xbf16, #tpu.memory_space<vmem>>, %arg4: memref<1x352xf32, #tpu.memory_space<vmem>>, %arg5: memref<1x32x352xf32, #tpu.memory_space<vmem>>, %arg6: memref<1568x352xbf16, #tpu.memory_space<vmem>>, %arg7: memref<2x512xbf16, #tpu.memory_space<vmem>>, %arg8: memref<98x352xbf16, #tpu.memory_space<vmem>>) attributes {dimension_semantics = [#tpu.dimension_semantics<parallel>], iteration_bounds = array<i64: 2>, scalar_prefetch = 0 : i64, scratch_operands = 3 : i64, tpu.core_type = #tpu.core_type<tc>, window_params = [{transform_indices = @transform_0, window_bounds = array<i64: 1, 32, 512>}, {pipeline_mode = #tpu.pipeline_mode<synchronous>, transform_indices = @transform_1, window_bounds = array<i64: 8, 1568>}, {pipeline_mode = #tpu.pipeline_mode<synchronous>, transform_indices = @transform_2, window_bounds = array<i64: 32, 98>}, {pipeline_mode = #tpu.pipeline_mode<synchronous>, transform_indices = @transform_3, window_bounds = array<i64: 1, 352>}, {transform_indices = @transform_4, window_bounds = array<i64: 1, 32, 352>}]} {
    %c0 = arith.constant 0 : index
    %c0_0 = arith.constant 0 : index
    %0 = vector.load %arg4[%c0, %c0_0] : memref<1x352xf32, #tpu.memory_space<vmem>>, vector<1x352xf32>
    %cst = arith.constant 0.000000e+00 : f32
    %1 = vector.broadcast %cst : f32 to vector<1x352xf32>
    %2 = arith.cmpf ogt, %0, %1 : vector<1x352xf32>
    %c0_1 = arith.constant 0 : index
    %c0_2 = arith.constant 0 : index
    %c0_3 = arith.constant 0 : index
    %3 = vector.load %arg1[%c0_1, %c0_2, %c0_3] : memref<1x32x512xbf16, #tpu.memory_space<vmem>>, vector<1x32x352xbf16>
    %4 = vector.shape_cast %3 : vector<1x32x352xbf16> to vector<32x352xbf16>
    %c0_4 = arith.constant 0 : index
    %c0_5 = arith.constant 0 : index
    %5 = vector.load %arg6[%c0_4, %c0_5] : memref<1568x352xbf16, #tpu.memory_space<vmem>>, vector<32x352xbf16>
    tpu.vector_store %arg6[%c0_4, %c0_5], %4 {strides = array<i32>} : memref<1568x352xbf16, #tpu.memory_space<vmem>>, vector<32x352xbf16>,
    %c0_6 = arith.constant 0 : index
    %c0_7 = arith.constant 0 : index
    %c1 = arith.constant 1 : index
    %6 = vector.load %arg1[%c0_6, %c0_7, %c1] : memref<1x32x512xbf16, #tpu.memory_space<vmem>>, vector<1x32x352xbf16>
    %7 = vector.shape_cast %6 : vector<1x32x352xbf16> to vector<32x352xbf16>
    %c32 = arith.constant 32 : index
    %c0_8 = arith.constant 0 : index
    %8 = vector.load %arg6[%c32, %c0_8] : memref<1568x352xbf16, #tpu.memory_space<vmem>>, vector<32x352xbf16>
    tpu.vector_store %arg6[%c32, %c0_8], %7 {strides = array<i32>} : memref<1568x352xbf16, #tpu.memory_space<vmem>>, vector<32x352xbf16>,
    %c0_9 = arith.constant 0 : index
    %c0_10 = arith.constant 0 : index
    %c2 = arith.constant 2 : index
    %9 = vector.load %arg1[%c0_9, %c0_10, %c2] : memref<1x32x512xbf16, #tpu.memory_space<vmem>>, vector<1x32x352xbf16>
    %10 = vector.shape_cast %9 : vector<1x32x352xbf16> to vector<32x352xbf16>
    %c64 = arith.constant 64 : index
    %c0_11 = arith.constant 0 : index
    %11 = vector.load %arg6[%c64, %c0_11] : memref<1568x352xbf16, #tpu.memory_space<vmem>>, vector<32x352xbf16>
    tpu.vector_store %arg6[%c64, %c0_11], %10 {strides = array<i32>} : memref<1568x352xbf16, #tpu.memory_space<vmem>>, vector<32x352xbf16>,
    %c0_12 = arith.constant 0 : index
    %c0_13 = arith.constant 0 : index
    %c3 = arith.constant 3 : index
    %12 = vector.load %arg1[%c0_12, %c0_13, %c3] : memref<1x32x512xbf16, #tpu.memory_space<vmem>>, vector<1x32x352xbf16>
    %13 = vector.shape_cast %12 : vector<1x32x352xbf16> to vector<32x352xbf16>
    %c96 = arith.constant 96 : index
    %c0_14 = arith.constant 0 : index
    %14 = vector.load %arg6[%c96, %c0_14] : memref<1568x352xbf16, #tpu.memory_space<vmem>>, vector<32x352xbf16>
    tpu.vector_store %arg6[%c96, %c0_14], %13 {strides = array<i32>} : memref<1568x352xbf16, #tpu.memory_space<vmem>>, vector<32x352xbf16>,
    %c0_15 = arith.constant 0 : index
    %c0_16 = arith.constant 0 : index
    %c4 = arith.constant 4 : index
    %15 = vector.load %arg1[%c0_15, %c0_16, %c4] : memref<1x32x512xbf16, #tpu.memory_space<vmem>>, vector<1x32x352xbf16>
    %16 = vector.shape_cast %15 : vector<1x32x352xbf16> to vector<32x352xbf16>
    %c128 = arith.constant 128 : index
    %c0_17 = arith.constant 0 : index
    %17 = vector.load %arg6[%c128, %c0_17] : memref<1568x352xbf16, #tpu.memory_space<vmem>>, vector<32x352xbf16>
    tpu.vector_store %arg6[%c128, %c0_17], %16 {strides = array<i32>} : memref<1568x352xbf16, #tpu.memory_space<vmem>>, vector<32x352xbf16>,
    %c0_18 = arith.constant 0 : index
    %c0_19 = arith.constant 0 : index
    %c5 = arith.constant 5 : index
    %18 = vector.load %arg1[%c0_18, %c0_19, %c5] : memref<1x32x512xbf16, #tpu.memory_space<vmem>>, vector<1x32x352xbf16>
    %19 = vector.shape_cast %18 : vector<1x32x352xbf16> to vector<32x352xbf16>
    %c160 = arith.constant 160 : index
    %c0_20 = arith.constant 0 : index
    %20 = vector.load %arg6[%c160, %c0_20] : memref<1568x352xbf16, #tpu.memory_space<vmem>>, vector<32x352xbf16>
    tpu.vector_store %arg6[%c160, %c0_20], %19 {strides = array<i32>} : memref<1568x352xbf16, #tpu.memory_space<vmem>>, vector<32x352xbf16>,
    %c0_21 = arith.constant 0 : index
    %c0_22 = arith.constant 0 : index
    %c6 = arith.constant 6 : index
    %21 = vector.load %arg1[%c0_21, %c0_22, %c6] : memref<1x32x512xbf16, #tpu.memory_space<vmem>>, vector<1x32x352xbf16>
    %22 = vector.shape_cast %21 : vector<1x32x352xbf16> to vector<32x352xbf16>
    %c192 = arith.constant 192 : index
    %c0_23 = arith.constant 0 : index
    %23 = vector.load %arg6[%c192, %c0_23] : memref<1568x352xbf16, #tpu.memory_space<vmem>>, vector<32x352xbf16>
    tpu.vector_store %arg6[%c192, %c0_23], %22 {strides = array<i32>} : memref<1568x352xbf16, #tpu.memory_space<vmem>>, vector<32x352xbf16>,
    %c0_24 = arith.constant 0 : index
    %c0_25 = arith.constant 0 : index
    %c22 = arith.constant 22 : index
    %24 = vector.load %arg1[%c0_24, %c0_25, %c22] : memref<1x32x512xbf16, #tpu.memory_space<vmem>>, vector<1x32x352xbf16>
    %25 = vector.shape_cast %24 : vector<1x32x352xbf16> to vector<32x352xbf16>
    %c224 = arith.constant 224 : index
    %c0_26 = arith.constant 0 : index
    %26 = vector.load %arg6[%c224, %c0_26] : memref<1568x352xbf16, #tpu.memory_space<vmem>>, vector<32x352xbf16>
    tpu.vector_store %arg6[%c224, %c0_26], %25 {strides = array<i32>} : memref<1568x352xbf16, #tpu.memory_space<vmem>>, vector<32x352xbf16>,
    %c0_27 = arith.constant 0 : index
    %c0_28 = arith.constant 0 : index
    %c23 = arith.constant 23 : index
    %27 = vector.load %arg1[%c0_27, %c0_28, %c23] : memref<1x32x512xbf16, #tpu.memory_space<vmem>>, vector<1x32x352xbf16>
    %28 = vector.shape_cast %27 : vector<1x32x352xbf16> to vector<32x352xbf16>
    %c256 = arith.constant 256 : index
    %c0_29 = arith.constant 0 : index
    %29 = vector.load %arg6[%c256, %c0_29] : memref<1568x352xbf16, #tpu.memory_space<vmem>>, vector<32x352xbf16>
    tpu.vector_store %arg6[%c256, %c0_29], %28 {strides = array<i32>} : memref<1568x352xbf16, #tpu.memory_space<vmem>>, vector<32x352xbf16>,
    %c0_30 = arith.constant 0 : index
    %c0_31 = arith.constant 0 : index
    %c24 = arith.constant 24 : index
    %30 = vector.load %arg1[%c0_30, %c0_31, %c24] : memref<1x32x512xbf16, #tpu.memory_space<vmem>>, vector<1x32x352xbf16>
    %31 = vector.shape_cast %30 : vector<1x32x352xbf16> to vector<32x352xbf16>
    %c288 = arith.constant 288 : index
    %c0_32 = arith.constant 0 : index
    %32 = vector.load %arg6[%c288, %c0_32] : memref<1568x352xbf16, #tpu.memory_space<vmem>>, vector<32x352xbf16>
    tpu.vector_store %arg6[%c288, %c0_32], %31 {strides = array<i32>} : memref<1568x352xbf16, #tpu.memory_space<vmem>>, vector<32x352xbf16>,
    %c0_33 = arith.constant 0 : index
    %c0_34 = arith.constant 0 : index
    %c25 = arith.constant 25 : index
    %33 = vector.load %arg1[%c0_33, %c0_34, %c25] : memref<1x32x512xbf16, #tpu.memory_space<vmem>>, vector<1x32x352xbf16>
    %34 = vector.shape_cast %33 : vector<1x32x352xbf16> to vector<32x352xbf16>
    %c320 = arith.constant 320 : index
    %c0_35 = arith.constant 0 : index
    %35 = vector.load %arg6[%c320, %c0_35] : memref<1568x352xbf16, #tpu.memory_space<vmem>>, vector<32x352xbf16>
    tpu.vector_store %arg6[%c320, %c0_35], %34 {strides = array<i32>} : memref<1568x352xbf16, #tpu.memory_space<vmem>>, vector<32x352xbf16>,
    %c0_36 = arith.constant 0 : index
    %c0_37 = arith.constant 0 : index
    %c26 = arith.constant 26 : index
    %36 = vector.load %arg1[%c0_36, %c0_37, %c26] : memref<1x32x512xbf16, #tpu.memory_space<vmem>>, vector<1x32x352xbf16>
    %37 = vector.shape_cast %36 : vector<1x32x352xbf16> to vector<32x352xbf16>
    %c352 = arith.constant 352 : index
    %c0_38 = arith.constant 0 : index
    %38 = vector.load %arg6[%c352, %c0_38] : memref<1568x352xbf16, #tpu.memory_space<vmem>>, vector<32x352xbf16>
    tpu.vector_store %arg6[%c352, %c0_38], %37 {strides = array<i32>} : memref<1568x352xbf16, #tpu.memory_space<vmem>>, vector<32x352xbf16>,
    %c0_39 = arith.constant 0 : index
    %c0_40 = arith.constant 0 : index
    %c27 = arith.constant 27 : index
    %39 = vector.load %arg1[%c0_39, %c0_40, %c27] : memref<1x32x512xbf16, #tpu.memory_space<vmem>>, vector<1x32x352xbf16>
    %40 = vector.shape_cast %39 : vector<1x32x352xbf16> to vector<32x352xbf16>
    %c384 = arith.constant 384 : index
    %c0_41 = arith.constant 0 : index
    %41 = vector.load %arg6[%c384, %c0_41] : memref<1568x352xbf16, #tpu.memory_space<vmem>>, vector<32x352xbf16>
    tpu.vector_store %arg6[%c384, %c0_41], %40 {strides = array<i32>} : memref<1568x352xbf16, #tpu.memory_space<vmem>>, vector<32x352xbf16>,
    %c0_42 = arith.constant 0 : index
    %c0_43 = arith.constant 0 : index
    %c28 = arith.constant 28 : index
    %42 = vector.load %arg1[%c0_42, %c0_43, %c28] : memref<1x32x512xbf16, #tpu.memory_space<vmem>>, vector<1x32x352xbf16>
    %43 = vector.shape_cast %42 : vector<1x32x352xbf16> to vector<32x352xbf16>
    %c416 = arith.constant 416 : index
    %c0_44 = arith.constant 0 : index
    %44 = vector.load %arg6[%c416, %c0_44] : memref<1568x352xbf16, #tpu.memory_space<vmem>>, vector<32x352xbf16>
    tpu.vector_store %arg6[%c416, %c0_44], %43 {strides = array<i32>} : memref<1568x352xbf16, #tpu.memory_space<vmem>>, vector<32x352xbf16>,
    %c0_45 = arith.constant 0 : index
    %c0_46 = arith.constant 0 : index
    %c44 = arith.constant 44 : index
    %45 = vector.load %arg1[%c0_45, %c0_46, %c44] : memref<1x32x512xbf16, #tpu.memory_space<vmem>>, vector<1x32x352xbf16>
    %46 = vector.shape_cast %45 : vector<1x32x352xbf16> to vector<32x352xbf16>
    %c448 = arith.constant 448 : index
    %c0_47 = arith.constant 0 : index
    %47 = vector.load %arg6[%c448, %c0_47] : memref<1568x352xbf16, #tpu.memory_space<vmem>>, vector<32x352xbf16>
    tpu.vector_store %arg6[%c448, %c0_47], %46 {strides = array<i32>} : memref<1568x352xbf16, #tpu.memory_space<vmem>>, vector<32x352xbf16>,
    %c0_48 = arith.constant 0 : index
    %c0_49 = arith.constant 0 : index
    %c45 = arith.constant 45 : index
    %48 = vector.load %arg1[%c0_48, %c0_49, %c45] : memref<1x32x512xbf16, #tpu.memory_space<vmem>>, vector<1x32x352xbf16>
    %49 = vector.shape_cast %48 : vector<1x32x352xbf16> to vector<32x352xbf16>
    %c480 = arith.constant 480 : index
    %c0_50 = arith.constant 0 : index
    %50 = vector.load %arg6[%c480, %c0_50] : memref<1568x352xbf16, #tpu.memory_space<vmem>>, vector<32x352xbf16>
    tpu.vector_store %arg6[%c480, %c0_50], %49 {strides = array<i32>} : memref<1568x352xbf16, #tpu.memory_space<vmem>>, vector<32x352xbf16>,
    %c0_51 = arith.constant 0 : index
    %c0_52 = arith.constant 0 : index
    %c46 = arith.constant 46 : index
    %51 = vector.load %arg1[%c0_51, %c0_52, %c46] : memref<1x32x512xbf16, #tpu.memory_space<vmem>>, vector<1x32x352xbf16>
    %52 = vector.shape_cast %51 : vector<1x32x352xbf16> to vector<32x352xbf16>
    %c512 = arith.constant 512 : index
    %c0_53 = arith.constant 0 : index
    %53 = vector.load %arg6[%c512, %c0_53] : memref<1568x352xbf16, #tpu.memory_space<vmem>>, vector<32x352xbf16>
    tpu.vector_store %arg6[%c512, %c0_53], %52 {strides = array<i32>} : memref<1568x352xbf16, #tpu.memory_space<vmem>>, vector<32x352xbf16>,
    %c0_54 = arith.constant 0 : index
    %c0_55 = arith.constant 0 : index
    %c47 = arith.constant 47 : index
    %54 = vector.load %arg1[%c0_54, %c0_55, %c47] : memref<1x32x512xbf16, #tpu.memory_space<vmem>>, vector<1x32x352xbf16>
    %55 = vector.shape_cast %54 : vector<1x32x352xbf16> to vector<32x352xbf16>
    %c544 = arith.constant 544 : index
    %c0_56 = arith.constant 0 : index
    %56 = vector.load %arg6[%c544, %c0_56] : memref<1568x352xbf16, #tpu.memory_space<vmem>>, vector<32x352xbf16>
    tpu.vector_store %arg6[%c544, %c0_56], %55 {strides = array<i32>} : memref<1568x352xbf16, #tpu.memory_space<vmem>>, vector<32x352xbf16>,
    %c0_57 = arith.constant 0 : index
    %c0_58 = arith.constant 0 : index
    %c48 = arith.constant 48 : index
    %57 = vector.load %arg1[%c0_57, %c0_58, %c48] : memref<1x32x512xbf16, #tpu.memory_space<vmem>>, vector<1x32x352xbf16>
    %58 = vector.shape_cast %57 : vector<1x32x352xbf16> to vector<32x352xbf16>
    %c576 = arith.constant 576 : index
    %c0_59 = arith.constant 0 : index
    %59 = vector.load %arg6[%c576, %c0_59] : memref<1568x352xbf16, #tpu.memory_space<vmem>>, vector<32x352xbf16>
    tpu.vector_store %arg6[%c576, %c0_59], %58 {strides = array<i32>} : memref<1568x352xbf16, #tpu.memory_space<vmem>>, vector<32x352xbf16>,
    %c0_60 = arith.constant 0 : index
    %c0_61 = arith.constant 0 : index
    %c49 = arith.constant 49 : index
    %60 = vector.load %arg1[%c0_60, %c0_61, %c49] : memref<1x32x512xbf16, #tpu.memory_space<vmem>>, vector<1x32x352xbf16>
    %61 = vector.shape_cast %60 : vector<1x32x352xbf16> to vector<32x352xbf16>
    %c608 = arith.constant 608 : index
    %c0_62 = arith.constant 0 : index
    %62 = vector.load %arg6[%c608, %c0_62] : memref<1568x352xbf16, #tpu.memory_space<vmem>>, vector<32x352xbf16>
    tpu.vector_store %arg6[%c608, %c0_62], %61 {strides = array<i32>} : memref<1568x352xbf16, #tpu.memory_space<vmem>>, vector<32x352xbf16>,
    %c0_63 = arith.constant 0 : index
    %c0_64 = arith.constant 0 : index
    %c50 = arith.constant 50 : index
    %63 = vector.load %arg1[%c0_63, %c0_64, %c50] : memref<1x32x512xbf16, #tpu.memory_space<vmem>>, vector<1x32x352xbf16>
    %64 = vector.shape_cast %63 : vector<1x32x352xbf16> to vector<32x352xbf16>
    %c640 = arith.constant 640 : index
    %c0_65 = arith.constant 0 : index
    %65 = vector.load %arg6[%c640, %c0_65] : memref<1568x352xbf16, #tpu.memory_space<vmem>>, vector<32x352xbf16>
    tpu.vector_store %arg6[%c640, %c0_65], %64 {strides = array<i32>} : memref<1568x352xbf16, #tpu.memory_space<vmem>>, vector<32x352xbf16>,
    %c0_66 = arith.constant 0 : index
    %c0_67 = arith.constant 0 : index
    %c66 = arith.constant 66 : index
    %66 = vector.load %arg1[%c0_66, %c0_67, %c66] : memref<1x32x512xbf16, #tpu.memory_space<vmem>>, vector<1x32x352xbf16>
    %67 = vector.shape_cast %66 : vector<1x32x352xbf16> to vector<32x352xbf16>
    %c672 = arith.constant 672 : index
    %c0_68 = arith.constant 0 : index
    %68 = vector.load %arg6[%c672, %c0_68] : memref<1568x352xbf16, #tpu.memory_space<vmem>>, vector<32x352xbf16>
    tpu.vector_store %arg6[%c672, %c0_68], %67 {strides = array<i32>} : memref<1568x352xbf16, #tpu.memory_space<vmem>>, vector<32x352xbf16>,
    %c0_69 = arith.constant 0 : index
    %c0_70 = arith.constant 0 : index
    %c67 = arith.constant 67 : index
    %69 = vector.load %arg1[%c0_69, %c0_70, %c67] : memref<1x32x512xbf16, #tpu.memory_space<vmem>>, vector<1x32x352xbf16>
    %70 = vector.shape_cast %69 : vector<1x32x352xbf16> to vector<32x352xbf16>
    %c704 = arith.constant 704 : index
    %c0_71 = arith.constant 0 : index
    %71 = vector.load %arg6[%c704, %c0_71] : memref<1568x352xbf16, #tpu.memory_space<vmem>>, vector<32x352xbf16>
    tpu.vector_store %arg6[%c704, %c0_71], %70 {strides = array<i32>} : memref<1568x352xbf16, #tpu.memory_space<vmem>>, vector<32x352xbf16>,
    %c0_72 = arith.constant 0 : index
    %c0_73 = arith.constant 0 : index
    %c68 = arith.constant 68 : index
    %72 = vector.load %arg1[%c0_72, %c0_73, %c68] : memref<1x32x512xbf16, #tpu.memory_space<vmem>>, vector<1x32x352xbf16>
    %73 = vector.shape_cast %72 : vector<1x32x352xbf16> to vector<32x352xbf16>
    %c736 = arith.constant 736 : index
    %c0_74 = arith.constant 0 : index
    %74 = vector.load %arg6[%c736, %c0_74] : memref<1568x352xbf16, #tpu.memory_space<vmem>>, vector<32x352xbf16>
    tpu.vector_store %arg6[%c736, %c0_74], %73 {strides = array<i32>} : memref<1568x352xbf16, #tpu.memory_space<vmem>>, vector<32x352xbf16>,
    %c0_75 = arith.constant 0 : index
    %c0_76 = arith.constant 0 : index
    %c69 = arith.constant 69 : index
    %75 = vector.load %arg1[%c0_75, %c0_76, %c69] : memref<1x32x512xbf16, #tpu.memory_space<vmem>>, vector<1x32x352xbf16>
    %76 = vector.shape_cast %75 : vector<1x32x352xbf16> to vector<32x352xbf16>
    %c768 = arith.constant 768 : index
    %c0_77 = arith.constant 0 : index
    %77 = vector.load %arg6[%c768, %c0_77] : memref<1568x352xbf16, #tpu.memory_space<vmem>>, vector<32x352xbf16>
    tpu.vector_store %arg6[%c768, %c0_77], %76 {strides = array<i32>} : memref<1568x352xbf16, #tpu.memory_space<vmem>>, vector<32x352xbf16>,
    %c0_78 = arith.constant 0 : index
    %c0_79 = arith.constant 0 : index
    %c70 = arith.constant 70 : index
    %78 = vector.load %arg1[%c0_78, %c0_79, %c70] : memref<1x32x512xbf16, #tpu.memory_space<vmem>>, vector<1x32x352xbf16>
    %79 = vector.shape_cast %78 : vector<1x32x352xbf16> to vector<32x352xbf16>
    %c800 = arith.constant 800 : index
    %c0_80 = arith.constant 0 : index
    %80 = vector.load %arg6[%c800, %c0_80] : memref<1568x352xbf16, #tpu.memory_space<vmem>>, vector<32x352xbf16>
    tpu.vector_store %arg6[%c800, %c0_80], %79 {strides = array<i32>} : memref<1568x352xbf16, #tpu.memory_space<vmem>>, vector<32x352xbf16>,
    %c0_81 = arith.constant 0 : index
    %c0_82 = arith.constant 0 : index
    %c71 = arith.constant 71 : index
    %81 = vector.load %arg1[%c0_81, %c0_82, %c71] : memref<1x32x512xbf16, #tpu.memory_space<vmem>>, vector<1x32x352xbf16>
    %82 = vector.shape_cast %81 : vector<1x32x352xbf16> to vector<32x352xbf16>
    %c832 = arith.constant 832 : index
    %c0_83 = arith.constant 0 : index
    %83 = vector.load %arg6[%c832, %c0_83] : memref<1568x352xbf16, #tpu.memory_space<vmem>>, vector<32x352xbf16>
    tpu.vector_store %arg6[%c832, %c0_83], %82 {strides = array<i32>} : memref<1568x352xbf16, #tpu.memory_space<vmem>>, vector<32x352xbf16>,
    %c0_84 = arith.constant 0 : index
    %c0_85 = arith.constant 0 : index
    %c72 = arith.constant 72 : index
    %84 = vector.load %arg1[%c0_84, %c0_85, %c72] : memref<1x32x512xbf16, #tpu.memory_space<vmem>>, vector<1x32x352xbf16>
    %85 = vector.shape_cast %84 : vector<1x32x352xbf16> to vector<32x352xbf16>
    %c864 = arith.constant 864 : index
    %c0_86 = arith.constant 0 : index
    %86 = vector.load %arg6[%c864, %c0_86] : memref<1568x352xbf16, #tpu.memory_space<vmem>>, vector<32x352xbf16>
    tpu.vector_store %arg6[%c864, %c0_86], %85 {strides = array<i32>} : memref<1568x352xbf16, #tpu.memory_space<vmem>>, vector<32x352xbf16>,
    %c0_87 = arith.constant 0 : index
    %c0_88 = arith.constant 0 : index
    %c88 = arith.constant 88 : index
    %87 = vector.load %arg1[%c0_87, %c0_88, %c88] : memref<1x32x512xbf16, #tpu.memory_space<vmem>>, vector<1x32x352xbf16>
    %88 = vector.shape_cast %87 : vector<1x32x352xbf16> to vector<32x352xbf16>
    %c896 = arith.constant 896 : index
    %c0_89 = arith.constant 0 : index
    %89 = vector.load %arg6[%c896, %c0_89] : memref<1568x352xbf16, #tpu.memory_space<vmem>>, vector<32x352xbf16>
    tpu.vector_store %arg6[%c896, %c0_89], %88 {strides = array<i32>} : memref<1568x352xbf16, #tpu.memory_space<vmem>>, vector<32x352xbf16>,
    %c0_90 = arith.constant 0 : index
    %c0_91 = arith.constant 0 : index
    %c89 = arith.constant 89 : index
    %90 = vector.load %arg1[%c0_90, %c0_91, %c89] : memref<1x32x512xbf16, #tpu.memory_space<vmem>>, vector<1x32x352xbf16>
    %91 = vector.shape_cast %90 : vector<1x32x352xbf16> to vector<32x352xbf16>
    %c928 = arith.constant 928 : index
    %c0_92 = arith.constant 0 : index
    %92 = vector.load %arg6[%c928, %c0_92] : memref<1568x352xbf16, #tpu.memory_space<vmem>>, vector<32x352xbf16>
    tpu.vector_store %arg6[%c928, %c0_92], %91 {strides = array<i32>} : memref<1568x352xbf16, #tpu.memory_space<vmem>>, vector<32x352xbf16>,
    %c0_93 = arith.constant 0 : index
    %c0_94 = arith.constant 0 : index
    %c90 = arith.constant 90 : index
    %93 = vector.load %arg1[%c0_93, %c0_94, %c90] : memref<1x32x512xbf16, #tpu.memory_space<vmem>>, vector<1x32x352xbf16>
    %94 = vector.shape_cast %93 : vector<1x32x352xbf16> to vector<32x352xbf16>
    %c960 = arith.constant 960 : index
    %c0_95 = arith.constant 0 : index
    %95 = vector.load %arg6[%c960, %c0_95] : memref<1568x352xbf16, #tpu.memory_space<vmem>>, vector<32x352xbf16>
    tpu.vector_store %arg6[%c960, %c0_95], %94 {strides = array<i32>} : memref<1568x352xbf16, #tpu.memory_space<vmem>>, vector<32x352xbf16>,
    %c0_96 = arith.constant 0 : index
    %c0_97 = arith.constant 0 : index
    %c91 = arith.constant 91 : index
    %96 = vector.load %arg1[%c0_96, %c0_97, %c91] : memref<1x32x512xbf16, #tpu.memory_space<vmem>>, vector<1x32x352xbf16>
    %97 = vector.shape_cast %96 : vector<1x32x352xbf16> to vector<32x352xbf16>
    %c992 = arith.constant 992 : index
    %c0_98 = arith.constant 0 : index
    %98 = vector.load %arg6[%c992, %c0_98] : memref<1568x352xbf16, #tpu.memory_space<vmem>>, vector<32x352xbf16>
    tpu.vector_store %arg6[%c992, %c0_98], %97 {strides = array<i32>} : memref<1568x352xbf16, #tpu.memory_space<vmem>>, vector<32x352xbf16>,
    %c0_99 = arith.constant 0 : index
    %c0_100 = arith.constant 0 : index
    %c92 = arith.constant 92 : index
    %99 = vector.load %arg1[%c0_99, %c0_100, %c92] : memref<1x32x512xbf16, #tpu.memory_space<vmem>>, vector<1x32x352xbf16>
    %100 = vector.shape_cast %99 : vector<1x32x352xbf16> to vector<32x352xbf16>
    %c1024 = arith.constant 1024 : index
    %c0_101 = arith.constant 0 : index
    %101 = vector.load %arg6[%c1024, %c0_101] : memref<1568x352xbf16, #tpu.memory_space<vmem>>, vector<32x352xbf16>
    tpu.vector_store %arg6[%c1024, %c0_101], %100 {strides = array<i32>} : memref<1568x352xbf16, #tpu.memory_space<vmem>>, vector<32x352xbf16>,
    %c0_102 = arith.constant 0 : index
    %c0_103 = arith.constant 0 : index
    %c93 = arith.constant 93 : index
    %102 = vector.load %arg1[%c0_102, %c0_103, %c93] : memref<1x32x512xbf16, #tpu.memory_space<vmem>>, vector<1x32x352xbf16>
    %103 = vector.shape_cast %102 : vector<1x32x352xbf16> to vector<32x352xbf16>
    %c1056 = arith.constant 1056 : index
    %c0_104 = arith.constant 0 : index
    %104 = vector.load %arg6[%c1056, %c0_104] : memref<1568x352xbf16, #tpu.memory_space<vmem>>, vector<32x352xbf16>
    tpu.vector_store %arg6[%c1056, %c0_104], %103 {strides = array<i32>} : memref<1568x352xbf16, #tpu.memory_space<vmem>>, vector<32x352xbf16>,
    %c0_105 = arith.constant 0 : index
    %c0_106 = arith.constant 0 : index
    %c94 = arith.constant 94 : index
    %105 = vector.load %arg1[%c0_105, %c0_106, %c94] : memref<1x32x512xbf16, #tpu.memory_space<vmem>>, vector<1x32x352xbf16>
    %106 = vector.shape_cast %105 : vector<1x32x352xbf16> to vector<32x352xbf16>
    %c1088 = arith.constant 1088 : index
    %c0_107 = arith.constant 0 : index
    %107 = vector.load %arg6[%c1088, %c0_107] : memref<1568x352xbf16, #tpu.memory_space<vmem>>, vector<32x352xbf16>
    tpu.vector_store %arg6[%c1088, %c0_107], %106 {strides = array<i32>} : memref<1568x352xbf16, #tpu.memory_space<vmem>>, vector<32x352xbf16>,
    %c0_108 = arith.constant 0 : index
    %c0_109 = arith.constant 0 : index
    %c110 = arith.constant 110 : index
    %108 = vector.load %arg1[%c0_108, %c0_109, %c110] : memref<1x32x512xbf16, #tpu.memory_space<vmem>>, vector<1x32x352xbf16>
    %109 = vector.shape_cast %108 : vector<1x32x352xbf16> to vector<32x352xbf16>
    %c1120 = arith.constant 1120 : index
    %c0_110 = arith.constant 0 : index
    %110 = vector.load %arg6[%c1120, %c0_110] : memref<1568x352xbf16, #tpu.memory_space<vmem>>, vector<32x352xbf16>
    tpu.vector_store %arg6[%c1120, %c0_110], %109 {strides = array<i32>} : memref<1568x352xbf16, #tpu.memory_space<vmem>>, vector<32x352xbf16>,
    %c0_111 = arith.constant 0 : index
    %c0_112 = arith.constant 0 : index
    %c111 = arith.constant 111 : index
    %111 = vector.load %arg1[%c0_111, %c0_112, %c111] : memref<1x32x512xbf16, #tpu.memory_space<vmem>>, vector<1x32x352xbf16>
    %112 = vector.shape_cast %111 : vector<1x32x352xbf16> to vector<32x352xbf16>
    %c1152 = arith.constant 1152 : index
    %c0_113 = arith.constant 0 : index
    %113 = vector.load %arg6[%c1152, %c0_113] : memref<1568x352xbf16, #tpu.memory_space<vmem>>, vector<32x352xbf16>
    tpu.vector_store %arg6[%c1152, %c0_113], %112 {strides = array<i32>} : memref<1568x352xbf16, #tpu.memory_space<vmem>>, vector<32x352xbf16>,
    %c0_114 = arith.constant 0 : index
    %c0_115 = arith.constant 0 : index
    %c112 = arith.constant 112 : index
    %114 = vector.load %arg1[%c0_114, %c0_115, %c112] : memref<1x32x512xbf16, #tpu.memory_space<vmem>>, vector<1x32x352xbf16>
    %115 = vector.shape_cast %114 : vector<1x32x352xbf16> to vector<32x352xbf16>
    %c1184 = arith.constant 1184 : index
    %c0_116 = arith.constant 0 : index
    %116 = vector.load %arg6[%c1184, %c0_116] : memref<1568x352xbf16, #tpu.memory_space<vmem>>, vector<32x352xbf16>
    tpu.vector_store %arg6[%c1184, %c0_116], %115 {strides = array<i32>} : memref<1568x352xbf16, #tpu.memory_space<vmem>>, vector<32x352xbf16>,
    %c0_117 = arith.constant 0 : index
    %c0_118 = arith.constant 0 : index
    %c113 = arith.constant 113 : index
    %117 = vector.load %arg1[%c0_117, %c0_118, %c113] : memref<1x32x512xbf16, #tpu.memory_space<vmem>>, vector<1x32x352xbf16>
    %118 = vector.shape_cast %117 : vector<1x32x352xbf16> to vector<32x352xbf16>
    %c1216 = arith.constant 1216 : index
    %c0_119 = arith.constant 0 : index
    %119 = vector.load %arg6[%c1216, %c0_119] : memref<1568x352xbf16, #tpu.memory_space<vmem>>, vector<32x352xbf16>
    tpu.vector_store %arg6[%c1216, %c0_119], %118 {strides = array<i32>} : memref<1568x352xbf16, #tpu.memory_space<vmem>>, vector<32x352xbf16>,
    %c0_120 = arith.constant 0 : index
    %c0_121 = arith.constant 0 : index
    %c114 = arith.constant 114 : index
    %120 = vector.load %arg1[%c0_120, %c0_121, %c114] : memref<1x32x512xbf16, #tpu.memory_space<vmem>>, vector<1x32x352xbf16>
    %121 = vector.shape_cast %120 : vector<1x32x352xbf16> to vector<32x352xbf16>
    %c1248 = arith.constant 1248 : index
    %c0_122 = arith.constant 0 : index
    %122 = vector.load %arg6[%c1248, %c0_122] : memref<1568x352xbf16, #tpu.memory_space<vmem>>, vector<32x352xbf16>
    tpu.vector_store %arg6[%c1248, %c0_122], %121 {strides = array<i32>} : memref<1568x352xbf16, #tpu.memory_space<vmem>>, vector<32x352xbf16>,
    %c0_123 = arith.constant 0 : index
    %c0_124 = arith.constant 0 : index
    %c115 = arith.constant 115 : index
    %123 = vector.load %arg1[%c0_123, %c0_124, %c115] : memref<1x32x512xbf16, #tpu.memory_space<vmem>>, vector<1x32x352xbf16>
    %124 = vector.shape_cast %123 : vector<1x32x352xbf16> to vector<32x352xbf16>
    %c1280 = arith.constant 1280 : index
    %c0_125 = arith.constant 0 : index
    %125 = vector.load %arg6[%c1280, %c0_125] : memref<1568x352xbf16, #tpu.memory_space<vmem>>, vector<32x352xbf16>
    tpu.vector_store %arg6[%c1280, %c0_125], %124 {strides = array<i32>} : memref<1568x352xbf16, #tpu.memory_space<vmem>>, vector<32x352xbf16>,
    %c0_126 = arith.constant 0 : index
    %c0_127 = arith.constant 0 : index
    %c116 = arith.constant 116 : index
    %126 = vector.load %arg1[%c0_126, %c0_127, %c116] : memref<1x32x512xbf16, #tpu.memory_space<vmem>>, vector<1x32x352xbf16>
    %127 = vector.shape_cast %126 : vector<1x32x352xbf16> to vector<32x352xbf16>
    %c1312 = arith.constant 1312 : index
    %c0_128 = arith.constant 0 : index
    %128 = vector.load %arg6[%c1312, %c0_128] : memref<1568x352xbf16, #tpu.memory_space<vmem>>, vector<32x352xbf16>
    tpu.vector_store %arg6[%c1312, %c0_128], %127 {strides = array<i32>} : memref<1568x352xbf16, #tpu.memory_space<vmem>>, vector<32x352xbf16>,
    %c0_129 = arith.constant 0 : index
    %c0_130 = arith.constant 0 : index
    %c132 = arith.constant 132 : index
    %129 = vector.load %arg1[%c0_129, %c0_130, %c132] : memref<1x32x512xbf16, #tpu.memory_space<vmem>>, vector<1x32x352xbf16>
    %130 = vector.shape_cast %129 : vector<1x32x352xbf16> to vector<32x352xbf16>
    %c1344 = arith.constant 1344 : index
    %c0_131 = arith.constant 0 : index
    %131 = vector.load %arg6[%c1344, %c0_131] : memref<1568x352xbf16, #tpu.memory_space<vmem>>, vector<32x352xbf16>
    tpu.vector_store %arg6[%c1344, %c0_131], %130 {strides = array<i32>} : memref<1568x352xbf16, #tpu.memory_space<vmem>>, vector<32x352xbf16>,
    %c0_132 = arith.constant 0 : index
    %c0_133 = arith.constant 0 : index
    %c133 = arith.constant 133 : index
    %132 = vector.load %arg1[%c0_132, %c0_133, %c133] : memref<1x32x512xbf16, #tpu.memory_space<vmem>>, vector<1x32x352xbf16>
    %133 = vector.shape_cast %132 : vector<1x32x352xbf16> to vector<32x352xbf16>
    %c1376 = arith.constant 1376 : index
    %c0_134 = arith.constant 0 : index
    %134 = vector.load %arg6[%c1376, %c0_134] : memref<1568x352xbf16, #tpu.memory_space<vmem>>, vector<32x352xbf16>
    tpu.vector_store %arg6[%c1376, %c0_134], %133 {strides = array<i32>} : memref<1568x352xbf16, #tpu.memory_space<vmem>>, vector<32x352xbf16>,
    %c0_135 = arith.constant 0 : index
    %c0_136 = arith.constant 0 : index
    %c134 = arith.constant 134 : index
    %135 = vector.load %arg1[%c0_135, %c0_136, %c134] : memref<1x32x512xbf16, #tpu.memory_space<vmem>>, vector<1x32x352xbf16>
    %136 = vector.shape_cast %135 : vector<1x32x352xbf16> to vector<32x352xbf16>
    %c1408 = arith.constant 1408 : index
    %c0_137 = arith.constant 0 : index
    %137 = vector.load %arg6[%c1408, %c0_137] : memref<1568x352xbf16, #tpu.memory_space<vmem>>, vector<32x352xbf16>
    tpu.vector_store %arg6[%c1408, %c0_137], %136 {strides = array<i32>} : memref<1568x352xbf16, #tpu.memory_space<vmem>>, vector<32x352xbf16>,
    %c0_138 = arith.constant 0 : index
    %c0_139 = arith.constant 0 : index
    %c135 = arith.constant 135 : index
    %138 = vector.load %arg1[%c0_138, %c0_139, %c135] : memref<1x32x512xbf16, #tpu.memory_space<vmem>>, vector<1x32x352xbf16>
    %139 = vector.shape_cast %138 : vector<1x32x352xbf16> to vector<32x352xbf16>
    %c1440 = arith.constant 1440 : index
    %c0_140 = arith.constant 0 : index
    %140 = vector.load %arg6[%c1440, %c0_140] : memref<1568x352xbf16, #tpu.memory_space<vmem>>, vector<32x352xbf16>
    tpu.vector_store %arg6[%c1440, %c0_140], %139 {strides = array<i32>} : memref<1568x352xbf16, #tpu.memory_space<vmem>>, vector<32x352xbf16>,
    %c0_141 = arith.constant 0 : index
    %c0_142 = arith.constant 0 : index
    %c136 = arith.constant 136 : index
    %141 = vector.load %arg1[%c0_141, %c0_142, %c136] : memref<1x32x512xbf16, #tpu.memory_space<vmem>>, vector<1x32x352xbf16>
    %142 = vector.shape_cast %141 : vector<1x32x352xbf16> to vector<32x352xbf16>
    %c1472 = arith.constant 1472 : index
    %c0_143 = arith.constant 0 : index
    %143 = vector.load %arg6[%c1472, %c0_143] : memref<1568x352xbf16, #tpu.memory_space<vmem>>, vector<32x352xbf16>
    tpu.vector_store %arg6[%c1472, %c0_143], %142 {strides = array<i32>} : memref<1568x352xbf16, #tpu.memory_space<vmem>>, vector<32x352xbf16>,
    %c0_144 = arith.constant 0 : index
    %c0_145 = arith.constant 0 : index
    %c137 = arith.constant 137 : index
    %144 = vector.load %arg1[%c0_144, %c0_145, %c137] : memref<1x32x512xbf16, #tpu.memory_space<vmem>>, vector<1x32x352xbf16>
    %145 = vector.shape_cast %144 : vector<1x32x352xbf16> to vector<32x352xbf16>
    %c1504 = arith.constant 1504 : index
    %c0_146 = arith.constant 0 : index
    %146 = vector.load %arg6[%c1504, %c0_146] : memref<1568x352xbf16, #tpu.memory_space<vmem>>, vector<32x352xbf16>
    tpu.vector_store %arg6[%c1504, %c0_146], %145 {strides = array<i32>} : memref<1568x352xbf16, #tpu.memory_space<vmem>>, vector<32x352xbf16>,
    %c0_147 = arith.constant 0 : index
    %c0_148 = arith.constant 0 : index
    %c138 = arith.constant 138 : index
    %147 = vector.load %arg1[%c0_147, %c0_148, %c138] : memref<1x32x512xbf16, #tpu.memory_space<vmem>>, vector<1x32x352xbf16>
    %148 = vector.shape_cast %147 : vector<1x32x352xbf16> to vector<32x352xbf16>
    %c1536 = arith.constant 1536 : index
    %c0_149 = arith.constant 0 : index
    %149 = vector.load %arg6[%c1536, %c0_149] : memref<1568x352xbf16, #tpu.memory_space<vmem>>, vector<32x352xbf16>
    tpu.vector_store %arg6[%c1536, %c0_149], %148 {strides = array<i32>} : memref<1568x352xbf16, #tpu.memory_space<vmem>>, vector<32x352xbf16>,
    %c0_150 = arith.constant 0 : index
    %c0_151 = arith.constant 0 : index
    %150 = vector.load %arg2[%c0_150, %c0_151] : memref<8x1568xbf16, #tpu.memory_space<vmem>>, vector<8x1568xbf16>
    %c0_152 = arith.constant 0 : index
    %c0_153 = arith.constant 0 : index
    %151 = vector.load %arg6[%c0_152, %c0_153] : memref<1568x352xbf16, #tpu.memory_space<vmem>>, vector<1568x352xbf16>
    %cst_154 = arith.constant dense<0.000000e+00> : vector<8x352xf32>
    %152 = tpu.matmul %150, %151, %cst_154 {dimension_numbers = #tpu.dot_dimension_numbers<[1], [0], [0], [1], [0, 0, 1, 1], [], []>} : vector<8x1568xbf16>, vector<1568x352xbf16>, vector<8x352xf32> -> vector<8x352xf32>
    %153 = vector.extract_strided_slice %152 {offsets = [0, 0], sizes = [2, 352], strides = [1, 1]} : vector<8x352xf32> to vector<2x352xf32>
    %cst_155 = arith.constant 0.000000e+00 : f32
    %154 = vector.shape_cast %2 : vector<1x352xi1> to vector<1x352xi1>
    %155 = vector.broadcast %154 : vector<1x352xi1> to vector<2x352xi1>
    %156 = vector.broadcast %cst_155 : f32 to vector<2x352xf32>
    %157 = arith.select %155, %153, %156 : vector<2x352xi1>, vector<2x352xf32>
    %cst_156 = arith.constant dense<0.000000e+00> : vector<2xf32>
    %158 = vector.multi_reduction <add>, %157, %cst_156 [1] : vector<2x352xf32> to vector<2xf32>
    %159 = vector.shape_cast %158 : vector<2xf32> to vector<2x1xf32>
    %160 = arith.mulf %157, %157 : vector<2x352xf32>
    %cst_157 = arith.constant dense<0.000000e+00> : vector<2xf32>
    %161 = vector.multi_reduction <add>, %160, %cst_157 [1] : vector<2x352xf32> to vector<2xf32>
    %162 = vector.shape_cast %161 : vector<2xf32> to vector<2x1xf32>
    %cst_158 = arith.constant 3.906250e-03 : f32
    %163 = vector.broadcast %cst_158 : f32 to vector<2x1xf32>
    %164 = arith.mulf %159, %163 : vector<2x1xf32>
    %cst_159 = arith.constant 3.906250e-03 : f32
    %165 = vector.broadcast %cst_159 : f32 to vector<2x1xf32>
    %166 = arith.mulf %162, %165 : vector<2x1xf32>
    %167 = arith.mulf %164, %164 : vector<2x1xf32>
    %168 = arith.subf %166, %167 : vector<2x1xf32>
    %169 = vector.broadcast %164 : vector<2x1xf32> to vector<2x352xf32>
    %170 = arith.subf %153, %169 : vector<2x352xf32>
    %cst_160 = arith.constant 9.99999974E-6 : f32
    %171 = vector.broadcast %cst_160 : f32 to vector<2x1xf32>
    %172 = arith.addf %168, %171 : vector<2x1xf32>
    %173 = math.rsqrt %172 : vector<2x1xf32>
    %174 = vector.broadcast %173 : vector<2x1xf32> to vector<2x352xf32>
    %175 = arith.mulf %170, %174 : vector<2x352xf32>
    %cst_161 = arith.constant 0.000000e+00 : f32
    %176 = vector.broadcast %cst_161 : f32 to vector<2x352xf32>
    %177 = arith.maximumf %175, %176 : vector<2x352xf32>
    %178 = arith.truncf %177 : vector<2x352xf32> to vector<2x352xbf16>
    %cst_162 = arith.constant 0.000000e+00 : bf16
    %179 = vector.broadcast %cst_162 : bf16 to vector<2x512xbf16>
    %c0_163 = arith.constant 0 : index
    %c0_164 = arith.constant 0 : index
    %180 = vector.load %arg7[%c0_163, %c0_164] : memref<2x512xbf16, #tpu.memory_space<vmem>>, vector<2x512xbf16>
    tpu.vector_store %arg7[%c0_163, %c0_164], %179 {strides = array<i32>} : memref<2x512xbf16, #tpu.memory_space<vmem>>, vector<2x512xbf16>,
    %c0_165 = arith.constant 0 : index
    %c69_166 = arith.constant 69 : index
    %181 = vector.load %arg7[%c0_165, %c69_166] : memref<2x512xbf16, #tpu.memory_space<vmem>>, vector<2x352xbf16>
    tpu.vector_store %arg7[%c0_165, %c69_166], %178 {strides = array<i32>} : memref<2x512xbf16, #tpu.memory_space<vmem>>, vector<2x352xbf16>,
    %182 = vector.extract_strided_slice %178 {offsets = [0, 0], sizes = [2, 1], strides = [1, 1]} : vector<2x352xbf16> to vector<2x1xbf16>
    %183 = vector.shape_cast %182 : vector<2x1xbf16> to vector<2x1xbf16>
    %184 = vector.broadcast %183 : vector<2x1xbf16> to vector<2x3xbf16>
    %c0_167 = arith.constant 0 : index
    %c66_168 = arith.constant 66 : index
    %185 = vector.load %arg7[%c0_167, %c66_168] : memref<2x512xbf16, #tpu.memory_space<vmem>>, vector<2x3xbf16>
    tpu.vector_store %arg7[%c0_167, %c66_168], %184 {strides = array<i32>} : memref<2x512xbf16, #tpu.memory_space<vmem>>, vector<2x3xbf16>,
    %186 = vector.extract_strided_slice %178 {offsets = [0, 15], sizes = [2, 1], strides = [1, 1]} : vector<2x352xbf16> to vector<2x1xbf16>
    %187 = vector.shape_cast %186 : vector<2x1xbf16> to vector<2x1xbf16>
    %188 = vector.broadcast %187 : vector<2x1xbf16> to vector<2x3xbf16>
    %c0_169 = arith.constant 0 : index
    %c85 = arith.constant 85 : index
    %189 = vector.load %arg7[%c0_169, %c85] : memref<2x512xbf16, #tpu.memory_space<vmem>>, vector<2x3xbf16>
    tpu.vector_store %arg7[%c0_169, %c85], %188 {strides = array<i32>} : memref<2x512xbf16, #tpu.memory_space<vmem>>, vector<2x3xbf16>,
    %190 = vector.extract_strided_slice %178 {offsets = [0, 22], sizes = [2, 1], strides = [1, 1]} : vector<2x352xbf16> to vector<2x1xbf16>
    %191 = vector.shape_cast %190 : vector<2x1xbf16> to vector<2x1xbf16>
    %192 = vector.broadcast %191 : vector<2x1xbf16> to vector<2x3xbf16>
    %c0_170 = arith.constant 0 : index
    %c88_171 = arith.constant 88 : index
    %193 = vector.load %arg7[%c0_170, %c88_171] : memref<2x512xbf16, #tpu.memory_space<vmem>>, vector<2x3xbf16>
    tpu.vector_store %arg7[%c0_170, %c88_171], %192 {strides = array<i32>} : memref<2x512xbf16, #tpu.memory_space<vmem>>, vector<2x3xbf16>,
    %194 = vector.extract_strided_slice %178 {offsets = [0, 37], sizes = [2, 1], strides = [1, 1]} : vector<2x352xbf16> to vector<2x1xbf16>
    %195 = vector.shape_cast %194 : vector<2x1xbf16> to vector<2x1xbf16>
    %196 = vector.broadcast %195 : vector<2x1xbf16> to vector<2x3xbf16>
    %c0_172 = arith.constant 0 : index
    %c107 = arith.constant 107 : index
    %197 = vector.load %arg7[%c0_172, %c107] : memref<2x512xbf16, #tpu.memory_space<vmem>>, vector<2x3xbf16>
    tpu.vector_store %arg7[%c0_172, %c107], %196 {strides = array<i32>} : memref<2x512xbf16, #tpu.memory_space<vmem>>, vector<2x3xbf16>,
    %198 = vector.extract_strided_slice %178 {offsets = [0, 44], sizes = [2, 1], strides = [1, 1]} : vector<2x352xbf16> to vector<2x1xbf16>
    %199 = vector.shape_cast %198 : vector<2x1xbf16> to vector<2x1xbf16>
    %200 = vector.broadcast %199 : vector<2x1xbf16> to vector<2x3xbf16>
    %c0_173 = arith.constant 0 : index
    %c110_174 = arith.constant 110 : index
    %201 = vector.load %arg7[%c0_173, %c110_174] : memref<2x512xbf16, #tpu.memory_space<vmem>>, vector<2x3xbf16>
    tpu.vector_store %arg7[%c0_173, %c110_174], %200 {strides = array<i32>} : memref<2x512xbf16, #tpu.memory_space<vmem>>, vector<2x3xbf16>,
    %202 = vector.extract_strided_slice %178 {offsets = [0, 59], sizes = [2, 1], strides = [1, 1]} : vector<2x352xbf16> to vector<2x1xbf16>
    %203 = vector.shape_cast %202 : vector<2x1xbf16> to vector<2x1xbf16>
    %204 = vector.broadcast %203 : vector<2x1xbf16> to vector<2x3xbf16>
    %c0_175 = arith.constant 0 : index
    %c129 = arith.constant 129 : index
    %205 = vector.load %arg7[%c0_175, %c129] : memref<2x512xbf16, #tpu.memory_space<vmem>>, vector<2x3xbf16>
    tpu.vector_store %arg7[%c0_175, %c129], %204 {strides = array<i32>} : memref<2x512xbf16, #tpu.memory_space<vmem>>, vector<2x3xbf16>,
    %206 = vector.extract_strided_slice %178 {offsets = [0, 66], sizes = [2, 1], strides = [1, 1]} : vector<2x352xbf16> to vector<2x1xbf16>
    %207 = vector.shape_cast %206 : vector<2x1xbf16> to vector<2x1xbf16>
    %208 = vector.broadcast %207 : vector<2x1xbf16> to vector<2x3xbf16>
    %c0_176 = arith.constant 0 : index
    %c132_177 = arith.constant 132 : index
    %209 = vector.load %arg7[%c0_176, %c132_177] : memref<2x512xbf16, #tpu.memory_space<vmem>>, vector<2x3xbf16>
    tpu.vector_store %arg7[%c0_176, %c132_177], %208 {strides = array<i32>} : memref<2x512xbf16, #tpu.memory_space<vmem>>, vector<2x3xbf16>,
    %210 = vector.extract_strided_slice %178 {offsets = [0, 81], sizes = [2, 1], strides = [1, 1]} : vector<2x352xbf16> to vector<2x1xbf16>
    %211 = vector.shape_cast %210 : vector<2x1xbf16> to vector<2x1xbf16>
    %212 = vector.broadcast %211 : vector<2x1xbf16> to vector<2x3xbf16>
    %c0_178 = arith.constant 0 : index
    %c151 = arith.constant 151 : index
    %213 = vector.load %arg7[%c0_178, %c151] : memref<2x512xbf16, #tpu.memory_space<vmem>>, vector<2x3xbf16>
    tpu.vector_store %arg7[%c0_178, %c151], %212 {strides = array<i32>} : memref<2x512xbf16, #tpu.memory_space<vmem>>, vector<2x3xbf16>,
    %214 = vector.extract_strided_slice %178 {offsets = [0, 88], sizes = [2, 1], strides = [1, 1]} : vector<2x352xbf16> to vector<2x1xbf16>
    %215 = vector.shape_cast %214 : vector<2x1xbf16> to vector<2x1xbf16>
    %216 = vector.broadcast %215 : vector<2x1xbf16> to vector<2x3xbf16>
    %c0_179 = arith.constant 0 : index
    %c154 = arith.constant 154 : index
    %217 = vector.load %arg7[%c0_179, %c154] : memref<2x512xbf16, #tpu.memory_space<vmem>>, vector<2x3xbf16>
    tpu.vector_store %arg7[%c0_179, %c154], %216 {strides = array<i32>} : memref<2x512xbf16, #tpu.memory_space<vmem>>, vector<2x3xbf16>,
    %218 = vector.extract_strided_slice %178 {offsets = [0, 103], sizes = [2, 1], strides = [1, 1]} : vector<2x352xbf16> to vector<2x1xbf16>
    %219 = vector.shape_cast %218 : vector<2x1xbf16> to vector<2x1xbf16>
    %220 = vector.broadcast %219 : vector<2x1xbf16> to vector<2x3xbf16>
    %c0_180 = arith.constant 0 : index
    %c173 = arith.constant 173 : index
    %221 = vector.load %arg7[%c0_180, %c173] : memref<2x512xbf16, #tpu.memory_space<vmem>>, vector<2x3xbf16>
    tpu.vector_store %arg7[%c0_180, %c173], %220 {strides = array<i32>} : memref<2x512xbf16, #tpu.memory_space<vmem>>, vector<2x3xbf16>,
    %222 = vector.extract_strided_slice %178 {offsets = [0, 110], sizes = [2, 1], strides = [1, 1]} : vector<2x352xbf16> to vector<2x1xbf16>
    %223 = vector.shape_cast %222 : vector<2x1xbf16> to vector<2x1xbf16>
    %224 = vector.broadcast %223 : vector<2x1xbf16> to vector<2x3xbf16>
    %c0_181 = arith.constant 0 : index
    %c176 = arith.constant 176 : index
    %225 = vector.load %arg7[%c0_181, %c176] : memref<2x512xbf16, #tpu.memory_space<vmem>>, vector<2x3xbf16>
    tpu.vector_store %arg7[%c0_181, %c176], %224 {strides = array<i32>} : memref<2x512xbf16, #tpu.memory_space<vmem>>, vector<2x3xbf16>,
    %226 = vector.extract_strided_slice %178 {offsets = [0, 125], sizes = [2, 1], strides = [1, 1]} : vector<2x352xbf16> to vector<2x1xbf16>
    %227 = vector.shape_cast %226 : vector<2x1xbf16> to vector<2x1xbf16>
    %228 = vector.broadcast %227 : vector<2x1xbf16> to vector<2x3xbf16>
    %c0_182 = arith.constant 0 : index
    %c195 = arith.constant 195 : index
    %229 = vector.load %arg7[%c0_182, %c195] : memref<2x512xbf16, #tpu.memory_space<vmem>>, vector<2x3xbf16>
    tpu.vector_store %arg7[%c0_182, %c195], %228 {strides = array<i32>} : memref<2x512xbf16, #tpu.memory_space<vmem>>, vector<2x3xbf16>,
    %230 = vector.extract_strided_slice %178 {offsets = [0, 132], sizes = [2, 1], strides = [1, 1]} : vector<2x352xbf16> to vector<2x1xbf16>
    %231 = vector.shape_cast %230 : vector<2x1xbf16> to vector<2x1xbf16>
    %232 = vector.broadcast %231 : vector<2x1xbf16> to vector<2x3xbf16>
    %c0_183 = arith.constant 0 : index
    %c198 = arith.constant 198 : index
    %233 = vector.load %arg7[%c0_183, %c198] : memref<2x512xbf16, #tpu.memory_space<vmem>>, vector<2x3xbf16>
    tpu.vector_store %arg7[%c0_183, %c198], %232 {strides = array<i32>} : memref<2x512xbf16, #tpu.memory_space<vmem>>, vector<2x3xbf16>,
    %234 = vector.extract_strided_slice %178 {offsets = [0, 147], sizes = [2, 1], strides = [1, 1]} : vector<2x352xbf16> to vector<2x1xbf16>
    %235 = vector.shape_cast %234 : vector<2x1xbf16> to vector<2x1xbf16>
    %236 = vector.broadcast %235 : vector<2x1xbf16> to vector<2x3xbf16>
    %c0_184 = arith.constant 0 : index
    %c217 = arith.constant 217 : index
    %237 = vector.load %arg7[%c0_184, %c217] : memref<2x512xbf16, #tpu.memory_space<vmem>>, vector<2x3xbf16>
    tpu.vector_store %arg7[%c0_184, %c217], %236 {strides = array<i32>} : memref<2x512xbf16, #tpu.memory_space<vmem>>, vector<2x3xbf16>,
    %238 = vector.extract_strided_slice %178 {offsets = [0, 154], sizes = [2, 1], strides = [1, 1]} : vector<2x352xbf16> to vector<2x1xbf16>
    %239 = vector.shape_cast %238 : vector<2x1xbf16> to vector<2x1xbf16>
    %240 = vector.broadcast %239 : vector<2x1xbf16> to vector<2x3xbf16>
    %c0_185 = arith.constant 0 : index
    %c220 = arith.constant 220 : index
    %241 = vector.load %arg7[%c0_185, %c220] : memref<2x512xbf16, #tpu.memory_space<vmem>>, vector<2x3xbf16>
    tpu.vector_store %arg7[%c0_185, %c220], %240 {strides = array<i32>} : memref<2x512xbf16, #tpu.memory_space<vmem>>, vector<2x3xbf16>,
    %242 = vector.extract_strided_slice %178 {offsets = [0, 169], sizes = [2, 1], strides = [1, 1]} : vector<2x352xbf16> to vector<2x1xbf16>
    %243 = vector.shape_cast %242 : vector<2x1xbf16> to vector<2x1xbf16>
    %244 = vector.broadcast %243 : vector<2x1xbf16> to vector<2x3xbf16>
    %c0_186 = arith.constant 0 : index
    %c239 = arith.constant 239 : index
    %245 = vector.load %arg7[%c0_186, %c239] : memref<2x512xbf16, #tpu.memory_space<vmem>>, vector<2x3xbf16>
    tpu.vector_store %arg7[%c0_186, %c239], %244 {strides = array<i32>} : memref<2x512xbf16, #tpu.memory_space<vmem>>, vector<2x3xbf16>,
    %246 = vector.extract_strided_slice %178 {offsets = [0, 176], sizes = [2, 1], strides = [1, 1]} : vector<2x352xbf16> to vector<2x1xbf16>
    %247 = vector.shape_cast %246 : vector<2x1xbf16> to vector<2x1xbf16>
    %248 = vector.broadcast %247 : vector<2x1xbf16> to vector<2x3xbf16>
    %c0_187 = arith.constant 0 : index
    %c242 = arith.constant 242 : index
    %249 = vector.load %arg7[%c0_187, %c242] : memref<2x512xbf16, #tpu.memory_space<vmem>>, vector<2x3xbf16>
    tpu.vector_store %arg7[%c0_187, %c242], %248 {strides = array<i32>} : memref<2x512xbf16, #tpu.memory_space<vmem>>, vector<2x3xbf16>,
    %250 = vector.extract_strided_slice %178 {offsets = [0, 191], sizes = [2, 1], strides = [1, 1]} : vector<2x352xbf16> to vector<2x1xbf16>
    %251 = vector.shape_cast %250 : vector<2x1xbf16> to vector<2x1xbf16>
    %252 = vector.broadcast %251 : vector<2x1xbf16> to vector<2x3xbf16>
    %c0_188 = arith.constant 0 : index
    %c261 = arith.constant 261 : index
    %253 = vector.load %arg7[%c0_188, %c261] : memref<2x512xbf16, #tpu.memory_space<vmem>>, vector<2x3xbf16>
    tpu.vector_store %arg7[%c0_188, %c261], %252 {strides = array<i32>} : memref<2x512xbf16, #tpu.memory_space<vmem>>, vector<2x3xbf16>,
    %254 = vector.extract_strided_slice %178 {offsets = [0, 198], sizes = [2, 1], strides = [1, 1]} : vector<2x352xbf16> to vector<2x1xbf16>
    %255 = vector.shape_cast %254 : vector<2x1xbf16> to vector<2x1xbf16>
    %256 = vector.broadcast %255 : vector<2x1xbf16> to vector<2x3xbf16>
    %c0_189 = arith.constant 0 : index
    %c264 = arith.constant 264 : index
    %257 = vector.load %arg7[%c0_189, %c264] : memref<2x512xbf16, #tpu.memory_space<vmem>>, vector<2x3xbf16>
    tpu.vector_store %arg7[%c0_189, %c264], %256 {strides = array<i32>} : memref<2x512xbf16, #tpu.memory_space<vmem>>, vector<2x3xbf16>,
    %258 = vector.extract_strided_slice %178 {offsets = [0, 213], sizes = [2, 1], strides = [1, 1]} : vector<2x352xbf16> to vector<2x1xbf16>
    %259 = vector.shape_cast %258 : vector<2x1xbf16> to vector<2x1xbf16>
    %260 = vector.broadcast %259 : vector<2x1xbf16> to vector<2x3xbf16>
    %c0_190 = arith.constant 0 : index
    %c283 = arith.constant 283 : index
    %261 = vector.load %arg7[%c0_190, %c283] : memref<2x512xbf16, #tpu.memory_space<vmem>>, vector<2x3xbf16>
    tpu.vector_store %arg7[%c0_190, %c283], %260 {strides = array<i32>} : memref<2x512xbf16, #tpu.memory_space<vmem>>, vector<2x3xbf16>,
    %262 = vector.extract_strided_slice %178 {offsets = [0, 220], sizes = [2, 1], strides = [1, 1]} : vector<2x352xbf16> to vector<2x1xbf16>
    %263 = vector.shape_cast %262 : vector<2x1xbf16> to vector<2x1xbf16>
    %264 = vector.broadcast %263 : vector<2x1xbf16> to vector<2x3xbf16>
    %c0_191 = arith.constant 0 : index
    %c286 = arith.constant 286 : index
    %265 = vector.load %arg7[%c0_191, %c286] : memref<2x512xbf16, #tpu.memory_space<vmem>>, vector<2x3xbf16>
    tpu.vector_store %arg7[%c0_191, %c286], %264 {strides = array<i32>} : memref<2x512xbf16, #tpu.memory_space<vmem>>, vector<2x3xbf16>,
    %266 = vector.extract_strided_slice %178 {offsets = [0, 235], sizes = [2, 1], strides = [1, 1]} : vector<2x352xbf16> to vector<2x1xbf16>
    %267 = vector.shape_cast %266 : vector<2x1xbf16> to vector<2x1xbf16>
    %268 = vector.broadcast %267 : vector<2x1xbf16> to vector<2x3xbf16>
    %c0_192 = arith.constant 0 : index
    %c305 = arith.constant 305 : index
    %269 = vector.load %arg7[%c0_192, %c305] : memref<2x512xbf16, #tpu.memory_space<vmem>>, vector<2x3xbf16>
    tpu.vector_store %arg7[%c0_192, %c305], %268 {strides = array<i32>} : memref<2x512xbf16, #tpu.memory_space<vmem>>, vector<2x3xbf16>,
    %270 = vector.extract_strided_slice %178 {offsets = [0, 242], sizes = [2, 1], strides = [1, 1]} : vector<2x352xbf16> to vector<2x1xbf16>
    %271 = vector.shape_cast %270 : vector<2x1xbf16> to vector<2x1xbf16>
    %272 = vector.broadcast %271 : vector<2x1xbf16> to vector<2x3xbf16>
    %c0_193 = arith.constant 0 : index
    %c308 = arith.constant 308 : index
    %273 = vector.load %arg7[%c0_193, %c308] : memref<2x512xbf16, #tpu.memory_space<vmem>>, vector<2x3xbf16>
    tpu.vector_store %arg7[%c0_193, %c308], %272 {strides = array<i32>} : memref<2x512xbf16, #tpu.memory_space<vmem>>, vector<2x3xbf16>,
    %274 = vector.extract_strided_slice %178 {offsets = [0, 257], sizes = [2, 1], strides = [1, 1]} : vector<2x352xbf16> to vector<2x1xbf16>
    %275 = vector.shape_cast %274 : vector<2x1xbf16> to vector<2x1xbf16>
    %276 = vector.broadcast %275 : vector<2x1xbf16> to vector<2x3xbf16>
    %c0_194 = arith.constant 0 : index
    %c327 = arith.constant 327 : index
    %277 = vector.load %arg7[%c0_194, %c327] : memref<2x512xbf16, #tpu.memory_space<vmem>>, vector<2x3xbf16>
    tpu.vector_store %arg7[%c0_194, %c327], %276 {strides = array<i32>} : memref<2x512xbf16, #tpu.memory_space<vmem>>, vector<2x3xbf16>,
    %278 = vector.extract_strided_slice %178 {offsets = [0, 264], sizes = [2, 1], strides = [1, 1]} : vector<2x352xbf16> to vector<2x1xbf16>
    %279 = vector.shape_cast %278 : vector<2x1xbf16> to vector<2x1xbf16>
    %280 = vector.broadcast %279 : vector<2x1xbf16> to vector<2x3xbf16>
    %c0_195 = arith.constant 0 : index
    %c330 = arith.constant 330 : index
    %281 = vector.load %arg7[%c0_195, %c330] : memref<2x512xbf16, #tpu.memory_space<vmem>>, vector<2x3xbf16>
    tpu.vector_store %arg7[%c0_195, %c330], %280 {strides = array<i32>} : memref<2x512xbf16, #tpu.memory_space<vmem>>, vector<2x3xbf16>,
    %282 = vector.extract_strided_slice %178 {offsets = [0, 279], sizes = [2, 1], strides = [1, 1]} : vector<2x352xbf16> to vector<2x1xbf16>
    %283 = vector.shape_cast %282 : vector<2x1xbf16> to vector<2x1xbf16>
    %284 = vector.broadcast %283 : vector<2x1xbf16> to vector<2x3xbf16>
    %c0_196 = arith.constant 0 : index
    %c349 = arith.constant 349 : index
    %285 = vector.load %arg7[%c0_196, %c349] : memref<2x512xbf16, #tpu.memory_space<vmem>>, vector<2x3xbf16>
    tpu.vector_store %arg7[%c0_196, %c349], %284 {strides = array<i32>} : memref<2x512xbf16, #tpu.memory_space<vmem>>, vector<2x3xbf16>,
    %286 = vector.extract_strided_slice %178 {offsets = [0, 286], sizes = [2, 1], strides = [1, 1]} : vector<2x352xbf16> to vector<2x1xbf16>
    %287 = vector.shape_cast %286 : vector<2x1xbf16> to vector<2x1xbf16>
    %288 = vector.broadcast %287 : vector<2x1xbf16> to vector<2x3xbf16>
    %c0_197 = arith.constant 0 : index
    %c352_198 = arith.constant 352 : index
    %289 = vector.load %arg7[%c0_197, %c352_198] : memref<2x512xbf16, #tpu.memory_space<vmem>>, vector<2x3xbf16>
    tpu.vector_store %arg7[%c0_197, %c352_198], %288 {strides = array<i32>} : memref<2x512xbf16, #tpu.memory_space<vmem>>, vector<2x3xbf16>,
    %290 = vector.extract_strided_slice %178 {offsets = [0, 301], sizes = [2, 1], strides = [1, 1]} : vector<2x352xbf16> to vector<2x1xbf16>
    %291 = vector.shape_cast %290 : vector<2x1xbf16> to vector<2x1xbf16>
    %292 = vector.broadcast %291 : vector<2x1xbf16> to vector<2x3xbf16>
    %c0_199 = arith.constant 0 : index
    %c371 = arith.constant 371 : index
    %293 = vector.load %arg7[%c0_199, %c371] : memref<2x512xbf16, #tpu.memory_space<vmem>>, vector<2x3xbf16>
    tpu.vector_store %arg7[%c0_199, %c371], %292 {strides = array<i32>} : memref<2x512xbf16, #tpu.memory_space<vmem>>, vector<2x3xbf16>,
    %294 = vector.extract_strided_slice %178 {offsets = [0, 308], sizes = [2, 1], strides = [1, 1]} : vector<2x352xbf16> to vector<2x1xbf16>
    %295 = vector.shape_cast %294 : vector<2x1xbf16> to vector<2x1xbf16>
    %296 = vector.broadcast %295 : vector<2x1xbf16> to vector<2x3xbf16>
    %c0_200 = arith.constant 0 : index
    %c374 = arith.constant 374 : index
    %297 = vector.load %arg7[%c0_200, %c374] : memref<2x512xbf16, #tpu.memory_space<vmem>>, vector<2x3xbf16>
    tpu.vector_store %arg7[%c0_200, %c374], %296 {strides = array<i32>} : memref<2x512xbf16, #tpu.memory_space<vmem>>, vector<2x3xbf16>,
    %298 = vector.extract_strided_slice %178 {offsets = [0, 323], sizes = [2, 1], strides = [1, 1]} : vector<2x352xbf16> to vector<2x1xbf16>
    %299 = vector.shape_cast %298 : vector<2x1xbf16> to vector<2x1xbf16>
    %300 = vector.broadcast %299 : vector<2x1xbf16> to vector<2x3xbf16>
    %c0_201 = arith.constant 0 : index
    %c393 = arith.constant 393 : index
    %301 = vector.load %arg7[%c0_201, %c393] : memref<2x512xbf16, #tpu.memory_space<vmem>>, vector<2x3xbf16>
    tpu.vector_store %arg7[%c0_201, %c393], %300 {strides = array<i32>} : memref<2x512xbf16, #tpu.memory_space<vmem>>, vector<2x3xbf16>,
    %302 = vector.extract_strided_slice %178 {offsets = [0, 330], sizes = [2, 1], strides = [1, 1]} : vector<2x352xbf16> to vector<2x1xbf16>
    %303 = vector.shape_cast %302 : vector<2x1xbf16> to vector<2x1xbf16>
    %304 = vector.broadcast %303 : vector<2x1xbf16> to vector<2x3xbf16>
    %c0_202 = arith.constant 0 : index
    %c396 = arith.constant 396 : index
    %305 = vector.load %arg7[%c0_202, %c396] : memref<2x512xbf16, #tpu.memory_space<vmem>>, vector<2x3xbf16>
    tpu.vector_store %arg7[%c0_202, %c396], %304 {strides = array<i32>} : memref<2x512xbf16, #tpu.memory_space<vmem>>, vector<2x3xbf16>,
    %306 = vector.extract_strided_slice %178 {offsets = [0, 345], sizes = [2, 1], strides = [1, 1]} : vector<2x352xbf16> to vector<2x1xbf16>
    %307 = vector.shape_cast %306 : vector<2x1xbf16> to vector<2x1xbf16>
    %308 = vector.broadcast %307 : vector<2x1xbf16> to vector<2x3xbf16>
    %c0_203 = arith.constant 0 : index
    %c415 = arith.constant 415 : index
    %309 = vector.load %arg7[%c0_203, %c415] : memref<2x512xbf16, #tpu.memory_space<vmem>>, vector<2x3xbf16>
    tpu.vector_store %arg7[%c0_203, %c415], %308 {strides = array<i32>} : memref<2x512xbf16, #tpu.memory_space<vmem>>, vector<2x3xbf16>,
    %310 = vector.extract_strided_slice %178 {offsets = [0, 0], sizes = [2, 1], strides = [1, 1]} : vector<2x352xbf16> to vector<2x1xbf16>
    %311 = vector.shape_cast %310 : vector<2x1xbf16> to vector<2x1xbf16>
    %312 = vector.broadcast %311 : vector<2x1xbf16> to vector<2x3xbf16>
    %313 = vector.extract_strided_slice %178 {offsets = [0, 15], sizes = [2, 1], strides = [1, 1]} : vector<2x352xbf16> to vector<2x1xbf16>
    %314 = vector.shape_cast %313 : vector<2x1xbf16> to vector<2x1xbf16>
    %315 = vector.broadcast %314 : vector<2x1xbf16> to vector<2x3xbf16>
    %316 = vector.extract_strided_slice %178 {offsets = [0, 330], sizes = [2, 1], strides = [1, 1]} : vector<2x352xbf16> to vector<2x1xbf16>
    %317 = vector.shape_cast %316 : vector<2x1xbf16> to vector<2x1xbf16>
    %318 = vector.broadcast %317 : vector<2x1xbf16> to vector<2x3xbf16>
    %319 = vector.extract_strided_slice %178 {offsets = [0, 345], sizes = [2, 1], strides = [1, 1]} : vector<2x352xbf16> to vector<2x1xbf16>
    %320 = vector.shape_cast %319 : vector<2x1xbf16> to vector<2x1xbf16>
    %321 = vector.broadcast %320 : vector<2x1xbf16> to vector<2x3xbf16>
    %c0_204 = arith.constant 0 : index
    %c0_205 = arith.constant 0 : index
    %322 = vector.load %arg7[%c0_204, %c0_205] : memref<2x512xbf16, #tpu.memory_space<vmem>>, vector<2x3xbf16>
    tpu.vector_store %arg7[%c0_204, %c0_205], %312 {strides = array<i32>} : memref<2x512xbf16, #tpu.memory_space<vmem>>, vector<2x3xbf16>,
    %323 = vector.extract_strided_slice %178 {offsets = [0, 0], sizes = [2, 16], strides = [1, 1]} : vector<2x352xbf16> to vector<2x16xbf16>
    %c0_206 = arith.constant 0 : index
    %c3_207 = arith.constant 3 : index
    %324 = vector.load %arg7[%c0_206, %c3_207] : memref<2x512xbf16, #tpu.memory_space<vmem>>, vector<2x16xbf16>
    tpu.vector_store %arg7[%c0_206, %c3_207], %323 {strides = array<i32>} : memref<2x512xbf16, #tpu.memory_space<vmem>>, vector<2x16xbf16>,
    %c0_208 = arith.constant 0 : index
    %c19 = arith.constant 19 : index
    %325 = vector.load %arg7[%c0_208, %c19] : memref<2x512xbf16, #tpu.memory_space<vmem>>, vector<2x3xbf16>
    tpu.vector_store %arg7[%c0_208, %c19], %315 {strides = array<i32>} : memref<2x512xbf16, #tpu.memory_space<vmem>>, vector<2x3xbf16>,
    %c0_209 = arith.constant 0 : index
    %c418 = arith.constant 418 : index
    %326 = vector.load %arg7[%c0_209, %c418] : memref<2x512xbf16, #tpu.memory_space<vmem>>, vector<2x3xbf16>
    tpu.vector_store %arg7[%c0_209, %c418], %318 {strides = array<i32>} : memref<2x512xbf16, #tpu.memory_space<vmem>>, vector<2x3xbf16>,
    %327 = vector.extract_strided_slice %178 {offsets = [0, 330], sizes = [2, 16], strides = [1, 1]} : vector<2x352xbf16> to vector<2x16xbf16>
    %c0_210 = arith.constant 0 : index
    %c421 = arith.constant 421 : index
    %328 = vector.load %arg7[%c0_210, %c421] : memref<2x512xbf16, #tpu.memory_space<vmem>>, vector<2x16xbf16>
    tpu.vector_store %arg7[%c0_210, %c421], %327 {strides = array<i32>} : memref<2x512xbf16, #tpu.memory_space<vmem>>, vector<2x16xbf16>,
    %c0_211 = arith.constant 0 : index
    %c437 = arith.constant 437 : index
    %329 = vector.load %arg7[%c0_211, %c437] : memref<2x512xbf16, #tpu.memory_space<vmem>>, vector<2x3xbf16>
    tpu.vector_store %arg7[%c0_211, %c437], %321 {strides = array<i32>} : memref<2x512xbf16, #tpu.memory_space<vmem>>, vector<2x3xbf16>,
    %c0_212 = arith.constant 0 : index
    %c22_213 = arith.constant 22 : index
    %330 = vector.load %arg7[%c0_212, %c22_213] : memref<2x512xbf16, #tpu.memory_space<vmem>>, vector<2x3xbf16>
    tpu.vector_store %arg7[%c0_212, %c22_213], %312 {strides = array<i32>} : memref<2x512xbf16, #tpu.memory_space<vmem>>, vector<2x3xbf16>,
    %331 = vector.extract_strided_slice %178 {offsets = [0, 0], sizes = [2, 16], strides = [1, 1]} : vector<2x352xbf16> to vector<2x16xbf16>
    %c0_214 = arith.constant 0 : index
    %c25_215 = arith.constant 25 : index
    %332 = vector.load %arg7[%c0_214, %c25_215] : memref<2x512xbf16, #tpu.memory_space<vmem>>, vector<2x16xbf16>
    tpu.vector_store %arg7[%c0_214, %c25_215], %331 {strides = array<i32>} : memref<2x512xbf16, #tpu.memory_space<vmem>>, vector<2x16xbf16>,
    %c0_216 = arith.constant 0 : index
    %c41 = arith.constant 41 : index
    %333 = vector.load %arg7[%c0_216, %c41] : memref<2x512xbf16, #tpu.memory_space<vmem>>, vector<2x3xbf16>
    tpu.vector_store %arg7[%c0_216, %c41], %315 {strides = array<i32>} : memref<2x512xbf16, #tpu.memory_space<vmem>>, vector<2x3xbf16>,
    %c0_217 = arith.constant 0 : index
    %c440 = arith.constant 440 : index
    %334 = vector.load %arg7[%c0_217, %c440] : memref<2x512xbf16, #tpu.memory_space<vmem>>, vector<2x3xbf16>
    tpu.vector_store %arg7[%c0_217, %c440], %318 {strides = array<i32>} : memref<2x512xbf16, #tpu.memory_space<vmem>>, vector<2x3xbf16>,
    %335 = vector.extract_strided_slice %178 {offsets = [0, 330], sizes = [2, 16], strides = [1, 1]} : vector<2x352xbf16> to vector<2x16xbf16>
    %c0_218 = arith.constant 0 : index
    %c443 = arith.constant 443 : index
    %336 = vector.load %arg7[%c0_218, %c443] : memref<2x512xbf16, #tpu.memory_space<vmem>>, vector<2x16xbf16>
    tpu.vector_store %arg7[%c0_218, %c443], %335 {strides = array<i32>} : memref<2x512xbf16, #tpu.memory_space<vmem>>, vector<2x16xbf16>,
    %c0_219 = arith.constant 0 : index
    %c459 = arith.constant 459 : index
    %337 = vector.load %arg7[%c0_219, %c459] : memref<2x512xbf16, #tpu.memory_space<vmem>>, vector<2x3xbf16>
    tpu.vector_store %arg7[%c0_219, %c459], %321 {strides = array<i32>} : memref<2x512xbf16, #tpu.memory_space<vmem>>, vector<2x3xbf16>,
    %c0_220 = arith.constant 0 : index
    %c44_221 = arith.constant 44 : index
    %338 = vector.load %arg7[%c0_220, %c44_221] : memref<2x512xbf16, #tpu.memory_space<vmem>>, vector<2x3xbf16>
    tpu.vector_store %arg7[%c0_220, %c44_221], %312 {strides = array<i32>} : memref<2x512xbf16, #tpu.memory_space<vmem>>, vector<2x3xbf16>,
    %339 = vector.extract_strided_slice %178 {offsets = [0, 0], sizes = [2, 16], strides = [1, 1]} : vector<2x352xbf16> to vector<2x16xbf16>
    %c0_222 = arith.constant 0 : index
    %c47_223 = arith.constant 47 : index
    %340 = vector.load %arg7[%c0_222, %c47_223] : memref<2x512xbf16, #tpu.memory_space<vmem>>, vector<2x16xbf16>
    tpu.vector_store %arg7[%c0_222, %c47_223], %339 {strides = array<i32>} : memref<2x512xbf16, #tpu.memory_space<vmem>>, vector<2x16xbf16>,
    %c0_224 = arith.constant 0 : index
    %c63 = arith.constant 63 : index
    %341 = vector.load %arg7[%c0_224, %c63] : memref<2x512xbf16, #tpu.memory_space<vmem>>, vector<2x3xbf16>
    tpu.vector_store %arg7[%c0_224, %c63], %315 {strides = array<i32>} : memref<2x512xbf16, #tpu.memory_space<vmem>>, vector<2x3xbf16>,
    %c0_225 = arith.constant 0 : index
    %c462 = arith.constant 462 : index
    %342 = vector.load %arg7[%c0_225, %c462] : memref<2x512xbf16, #tpu.memory_space<vmem>>, vector<2x3xbf16>
    tpu.vector_store %arg7[%c0_225, %c462], %318 {strides = array<i32>} : memref<2x512xbf16, #tpu.memory_space<vmem>>, vector<2x3xbf16>,
    %343 = vector.extract_strided_slice %178 {offsets = [0, 330], sizes = [2, 16], strides = [1, 1]} : vector<2x352xbf16> to vector<2x16xbf16>
    %c0_226 = arith.constant 0 : index
    %c465 = arith.constant 465 : index
    %344 = vector.load %arg7[%c0_226, %c465] : memref<2x512xbf16, #tpu.memory_space<vmem>>, vector<2x16xbf16>
    tpu.vector_store %arg7[%c0_226, %c465], %343 {strides = array<i32>} : memref<2x512xbf16, #tpu.memory_space<vmem>>, vector<2x16xbf16>,
    %c0_227 = arith.constant 0 : index
    %c481 = arith.constant 481 : index
    %345 = vector.load %arg7[%c0_227, %c481] : memref<2x512xbf16, #tpu.memory_space<vmem>>, vector<2x3xbf16>
    tpu.vector_store %arg7[%c0_227, %c481], %321 {strides = array<i32>} : memref<2x512xbf16, #tpu.memory_space<vmem>>, vector<2x3xbf16>,
    %c0_228 = arith.constant 0 : index
    %c0_229 = arith.constant 0 : index
    %346 = vector.load %arg7[%c0_228, %c0_229] : memref<2x512xbf16, #tpu.memory_space<vmem>>, vector<2x352xbf16>
    %c0_230 = arith.constant 0 : index
    %c0_231 = arith.constant 0 : index
    %347 = vector.load %arg8[%c0_230, %c0_231] : memref<98x352xbf16, #tpu.memory_space<vmem>>, vector<2x352xbf16>
    tpu.vector_store %arg8[%c0_230, %c0_231], %346 {strides = array<i32>} : memref<98x352xbf16, #tpu.memory_space<vmem>>, vector<2x352xbf16>,
    %c0_232 = arith.constant 0 : index
    %c1_233 = arith.constant 1 : index
    %348 = vector.load %arg7[%c0_232, %c1_233] : memref<2x512xbf16, #tpu.memory_space<vmem>>, vector<2x352xbf16>
    %c2_234 = arith.constant 2 : index
    %c0_235 = arith.constant 0 : index
    %349 = vector.load %arg8[%c2_234, %c0_235] : memref<98x352xbf16, #tpu.memory_space<vmem>>, vector<2x352xbf16>
    tpu.vector_store %arg8[%c2_234, %c0_235], %348 {strides = array<i32>} : memref<98x352xbf16, #tpu.memory_space<vmem>>, vector<2x352xbf16>,
    %c0_236 = arith.constant 0 : index
    %c2_237 = arith.constant 2 : index
    %350 = vector.load %arg7[%c0_236, %c2_237] : memref<2x512xbf16, #tpu.memory_space<vmem>>, vector<2x352xbf16>
    %c4_238 = arith.constant 4 : index
    %c0_239 = arith.constant 0 : index
    %351 = vector.load %arg8[%c4_238, %c0_239] : memref<98x352xbf16, #tpu.memory_space<vmem>>, vector<2x352xbf16>
    tpu.vector_store %arg8[%c4_238, %c0_239], %350 {strides = array<i32>} : memref<98x352xbf16, #tpu.memory_space<vmem>>, vector<2x352xbf16>,
    %c0_240 = arith.constant 0 : index
    %c3_241 = arith.constant 3 : index
    %352 = vector.load %arg7[%c0_240, %c3_241] : memref<2x512xbf16, #tpu.memory_space<vmem>>, vector<2x352xbf16>
    %c6_242 = arith.constant 6 : index
    %c0_243 = arith.constant 0 : index
    %353 = vector.load %arg8[%c6_242, %c0_243] : memref<98x352xbf16, #tpu.memory_space<vmem>>, vector<2x352xbf16>
    tpu.vector_store %arg8[%c6_242, %c0_243], %352 {strides = array<i32>} : memref<98x352xbf16, #tpu.memory_space<vmem>>, vector<2x352xbf16>,
    %c0_244 = arith.constant 0 : index
    %c4_245 = arith.constant 4 : index
    %354 = vector.load %arg7[%c0_244, %c4_245] : memref<2x512xbf16, #tpu.memory_space<vmem>>, vector<2x352xbf16>
    %c8 = arith.constant 8 : index
    %c0_246 = arith.constant 0 : index
    %355 = vector.load %arg8[%c8, %c0_246] : memref<98x352xbf16, #tpu.memory_space<vmem>>, vector<2x352xbf16>
    tpu.vector_store %arg8[%c8, %c0_246], %354 {strides = array<i32>} : memref<98x352xbf16, #tpu.memory_space<vmem>>, vector<2x352xbf16>,
    %c0_247 = arith.constant 0 : index
    %c5_248 = arith.constant 5 : index
    %356 = vector.load %arg7[%c0_247, %c5_248] : memref<2x512xbf16, #tpu.memory_space<vmem>>, vector<2x352xbf16>
    %c10 = arith.constant 10 : index
    %c0_249 = arith.constant 0 : index
    %357 = vector.load %arg8[%c10, %c0_249] : memref<98x352xbf16, #tpu.memory_space<vmem>>, vector<2x352xbf16>
    tpu.vector_store %arg8[%c10, %c0_249], %356 {strides = array<i32>} : memref<98x352xbf16, #tpu.memory_space<vmem>>, vector<2x352xbf16>,
    %c0_250 = arith.constant 0 : index
    %c6_251 = arith.constant 6 : index
    %358 = vector.load %arg7[%c0_250, %c6_251] : memref<2x512xbf16, #tpu.memory_space<vmem>>, vector<2x352xbf16>
    %c12 = arith.constant 12 : index
    %c0_252 = arith.constant 0 : index
    %359 = vector.load %arg8[%c12, %c0_252] : memref<98x352xbf16, #tpu.memory_space<vmem>>, vector<2x352xbf16>
    tpu.vector_store %arg8[%c12, %c0_252], %358 {strides = array<i32>} : memref<98x352xbf16, #tpu.memory_space<vmem>>, vector<2x352xbf16>,
    %c0_253 = arith.constant 0 : index
    %c22_254 = arith.constant 22 : index
    %360 = vector.load %arg7[%c0_253, %c22_254] : memref<2x512xbf16, #tpu.memory_space<vmem>>, vector<2x352xbf16>
    %c14 = arith.constant 14 : index
    %c0_255 = arith.constant 0 : index
    %361 = vector.load %arg8[%c14, %c0_255] : memref<98x352xbf16, #tpu.memory_space<vmem>>, vector<2x352xbf16>
    tpu.vector_store %arg8[%c14, %c0_255], %360 {strides = array<i32>} : memref<98x352xbf16, #tpu.memory_space<vmem>>, vector<2x352xbf16>,
    %c0_256 = arith.constant 0 : index
    %c23_257 = arith.constant 23 : index
    %362 = vector.load %arg7[%c0_256, %c23_257] : memref<2x512xbf16, #tpu.memory_space<vmem>>, vector<2x352xbf16>
    %c16 = arith.constant 16 : index
    %c0_258 = arith.constant 0 : index
    %363 = vector.load %arg8[%c16, %c0_258] : memref<98x352xbf16, #tpu.memory_space<vmem>>, vector<2x352xbf16>
    tpu.vector_store %arg8[%c16, %c0_258], %362 {strides = array<i32>} : memref<98x352xbf16, #tpu.memory_space<vmem>>, vector<2x352xbf16>,
    %c0_259 = arith.constant 0 : index
    %c24_260 = arith.constant 24 : index
    %364 = vector.load %arg7[%c0_259, %c24_260] : memref<2x512xbf16, #tpu.memory_space<vmem>>, vector<2x352xbf16>
    %c18 = arith.constant 18 : index
    %c0_261 = arith.constant 0 : index
    %365 = vector.load %arg8[%c18, %c0_261] : memref<98x352xbf16, #tpu.memory_space<vmem>>, vector<2x352xbf16>
    tpu.vector_store %arg8[%c18, %c0_261], %364 {strides = array<i32>} : memref<98x352xbf16, #tpu.memory_space<vmem>>, vector<2x352xbf16>,
    %c0_262 = arith.constant 0 : index
    %c25_263 = arith.constant 25 : index
    %366 = vector.load %arg7[%c0_262, %c25_263] : memref<2x512xbf16, #tpu.memory_space<vmem>>, vector<2x352xbf16>
    %c20 = arith.constant 20 : index
    %c0_264 = arith.constant 0 : index
    %367 = vector.load %arg8[%c20, %c0_264] : memref<98x352xbf16, #tpu.memory_space<vmem>>, vector<2x352xbf16>
    tpu.vector_store %arg8[%c20, %c0_264], %366 {strides = array<i32>} : memref<98x352xbf16, #tpu.memory_space<vmem>>, vector<2x352xbf16>,
    %c0_265 = arith.constant 0 : index
    %c26_266 = arith.constant 26 : index
    %368 = vector.load %arg7[%c0_265, %c26_266] : memref<2x512xbf16, #tpu.memory_space<vmem>>, vector<2x352xbf16>
    %c22_267 = arith.constant 22 : index
    %c0_268 = arith.constant 0 : index
    %369 = vector.load %arg8[%c22_267, %c0_268] : memref<98x352xbf16, #tpu.memory_space<vmem>>, vector<2x352xbf16>
    tpu.vector_store %arg8[%c22_267, %c0_268], %368 {strides = array<i32>} : memref<98x352xbf16, #tpu.memory_space<vmem>>, vector<2x352xbf16>,
    %c0_269 = arith.constant 0 : index
    %c27_270 = arith.constant 27 : index
    %370 = vector.load %arg7[%c0_269, %c27_270] : memref<2x512xbf16, #tpu.memory_space<vmem>>, vector<2x352xbf16>
    %c24_271 = arith.constant 24 : index
    %c0_272 = arith.constant 0 : index
    %371 = vector.load %arg8[%c24_271, %c0_272] : memref<98x352xbf16, #tpu.memory_space<vmem>>, vector<2x352xbf16>
    tpu.vector_store %arg8[%c24_271, %c0_272], %370 {strides = array<i32>} : memref<98x352xbf16, #tpu.memory_space<vmem>>, vector<2x352xbf16>,
    %c0_273 = arith.constant 0 : index
    %c28_274 = arith.constant 28 : index
    %372 = vector.load %arg7[%c0_273, %c28_274] : memref<2x512xbf16, #tpu.memory_space<vmem>>, vector<2x352xbf16>
    %c26_275 = arith.constant 26 : index
    %c0_276 = arith.constant 0 : index
    %373 = vector.load %arg8[%c26_275, %c0_276] : memref<98x352xbf16, #tpu.memory_space<vmem>>, vector<2x352xbf16>
    tpu.vector_store %arg8[%c26_275, %c0_276], %372 {strides = array<i32>} : memref<98x352xbf16, #tpu.memory_space<vmem>>, vector<2x352xbf16>,
    %c0_277 = arith.constant 0 : index
    %c44_278 = arith.constant 44 : index
    %374 = vector.load %arg7[%c0_277, %c44_278] : memref<2x512xbf16, #tpu.memory_space<vmem>>, vector<2x352xbf16>
    %c28_279 = arith.constant 28 : index
    %c0_280 = arith.constant 0 : index
    %375 = vector.load %arg8[%c28_279, %c0_280] : memref<98x352xbf16, #tpu.memory_space<vmem>>, vector<2x352xbf16>
    tpu.vector_store %arg8[%c28_279, %c0_280], %374 {strides = array<i32>} : memref<98x352xbf16, #tpu.memory_space<vmem>>, vector<2x352xbf16>,
    %c0_281 = arith.constant 0 : index
    %c45_282 = arith.constant 45 : index
    %376 = vector.load %arg7[%c0_281, %c45_282] : memref<2x512xbf16, #tpu.memory_space<vmem>>, vector<2x352xbf16>
    %c30 = arith.constant 30 : index
    %c0_283 = arith.constant 0 : index
    %377 = vector.load %arg8[%c30, %c0_283] : memref<98x352xbf16, #tpu.memory_space<vmem>>, vector<2x352xbf16>
    tpu.vector_store %arg8[%c30, %c0_283], %376 {strides = array<i32>} : memref<98x352xbf16, #tpu.memory_space<vmem>>, vector<2x352xbf16>,
    %c0_284 = arith.constant 0 : index
    %c46_285 = arith.constant 46 : index
    %378 = vector.load %arg7[%c0_284, %c46_285] : memref<2x512xbf16, #tpu.memory_space<vmem>>, vector<2x352xbf16>
    %c32_286 = arith.constant 32 : index
    %c0_287 = arith.constant 0 : index
    %379 = vector.load %arg8[%c32_286, %c0_287] : memref<98x352xbf16, #tpu.memory_space<vmem>>, vector<2x352xbf16>
    tpu.vector_store %arg8[%c32_286, %c0_287], %378 {strides = array<i32>} : memref<98x352xbf16, #tpu.memory_space<vmem>>, vector<2x352xbf16>,
    %c0_288 = arith.constant 0 : index
    %c47_289 = arith.constant 47 : index
    %380 = vector.load %arg7[%c0_288, %c47_289] : memref<2x512xbf16, #tpu.memory_space<vmem>>, vector<2x352xbf16>
    %c34 = arith.constant 34 : index
    %c0_290 = arith.constant 0 : index
    %381 = vector.load %arg8[%c34, %c0_290] : memref<98x352xbf16, #tpu.memory_space<vmem>>, vector<2x352xbf16>
    tpu.vector_store %arg8[%c34, %c0_290], %380 {strides = array<i32>} : memref<98x352xbf16, #tpu.memory_space<vmem>>, vector<2x352xbf16>,
    %c0_291 = arith.constant 0 : index
    %c48_292 = arith.constant 48 : index
    %382 = vector.load %arg7[%c0_291, %c48_292] : memref<2x512xbf16, #tpu.memory_space<vmem>>, vector<2x352xbf16>
    %c36 = arith.constant 36 : index
    %c0_293 = arith.constant 0 : index
    %383 = vector.load %arg8[%c36, %c0_293] : memref<98x352xbf16, #tpu.memory_space<vmem>>, vector<2x352xbf16>
    tpu.vector_store %arg8[%c36, %c0_293], %382 {strides = array<i32>} : memref<98x352xbf16, #tpu.memory_space<vmem>>, vector<2x352xbf16>,
    %c0_294 = arith.constant 0 : index
    %c49_295 = arith.constant 49 : index
    %384 = vector.load %arg7[%c0_294, %c49_295] : memref<2x512xbf16, #tpu.memory_space<vmem>>, vector<2x352xbf16>
    %c38 = arith.constant 38 : index
    %c0_296 = arith.constant 0 : index
    %385 = vector.load %arg8[%c38, %c0_296] : memref<98x352xbf16, #tpu.memory_space<vmem>>, vector<2x352xbf16>
    tpu.vector_store %arg8[%c38, %c0_296], %384 {strides = array<i32>} : memref<98x352xbf16, #tpu.memory_space<vmem>>, vector<2x352xbf16>,
    %c0_297 = arith.constant 0 : index
    %c50_298 = arith.constant 50 : index
    %386 = vector.load %arg7[%c0_297, %c50_298] : memref<2x512xbf16, #tpu.memory_space<vmem>>, vector<2x352xbf16>
    %c40 = arith.constant 40 : index
    %c0_299 = arith.constant 0 : index
    %387 = vector.load %arg8[%c40, %c0_299] : memref<98x352xbf16, #tpu.memory_space<vmem>>, vector<2x352xbf16>
    tpu.vector_store %arg8[%c40, %c0_299], %386 {strides = array<i32>} : memref<98x352xbf16, #tpu.memory_space<vmem>>, vector<2x352xbf16>,
    %c0_300 = arith.constant 0 : index
    %c66_301 = arith.constant 66 : index
    %388 = vector.load %arg7[%c0_300, %c66_301] : memref<2x512xbf16, #tpu.memory_space<vmem>>, vector<2x352xbf16>
    %c42 = arith.constant 42 : index
    %c0_302 = arith.constant 0 : index
    %389 = vector.load %arg8[%c42, %c0_302] : memref<98x352xbf16, #tpu.memory_space<vmem>>, vector<2x352xbf16>
    tpu.vector_store %arg8[%c42, %c0_302], %388 {strides = array<i32>} : memref<98x352xbf16, #tpu.memory_space<vmem>>, vector<2x352xbf16>,
    %c0_303 = arith.constant 0 : index
    %c67_304 = arith.constant 67 : index
    %390 = vector.load %arg7[%c0_303, %c67_304] : memref<2x512xbf16, #tpu.memory_space<vmem>>, vector<2x352xbf16>
    %c44_305 = arith.constant 44 : index
    %c0_306 = arith.constant 0 : index
    %391 = vector.load %arg8[%c44_305, %c0_306] : memref<98x352xbf16, #tpu.memory_space<vmem>>, vector<2x352xbf16>
    tpu.vector_store %arg8[%c44_305, %c0_306], %390 {strides = array<i32>} : memref<98x352xbf16, #tpu.memory_space<vmem>>, vector<2x352xbf16>,
    %c0_307 = arith.constant 0 : index
    %c68_308 = arith.constant 68 : index
    %392 = vector.load %arg7[%c0_307, %c68_308] : memref<2x512xbf16, #tpu.memory_space<vmem>>, vector<2x352xbf16>
    %c46_309 = arith.constant 46 : index
    %c0_310 = arith.constant 0 : index
    %393 = vector.load %arg8[%c46_309, %c0_310] : memref<98x352xbf16, #tpu.memory_space<vmem>>, vector<2x352xbf16>
    tpu.vector_store %arg8[%c46_309, %c0_310], %392 {strides = array<i32>} : memref<98x352xbf16, #tpu.memory_space<vmem>>, vector<2x352xbf16>,
    %c0_311 = arith.constant 0 : index
    %c69_312 = arith.constant 69 : index
    %394 = vector.load %arg7[%c0_311, %c69_312] : memref<2x512xbf16, #tpu.memory_space<vmem>>, vector<2x352xbf16>
    %c48_313 = arith.constant 48 : index
    %c0_314 = arith.constant 0 : index
    %395 = vector.load %arg8[%c48_313, %c0_314] : memref<98x352xbf16, #tpu.memory_space<vmem>>, vector<2x352xbf16>
    tpu.vector_store %arg8[%c48_313, %c0_314], %394 {strides = array<i32>} : memref<98x352xbf16, #tpu.memory_space<vmem>>, vector<2x352xbf16>,
    %c0_315 = arith.constant 0 : index
    %c70_316 = arith.constant 70 : index
    %396 = vector.load %arg7[%c0_315, %c70_316] : memref<2x512xbf16, #tpu.memory_space<vmem>>, vector<2x352xbf16>
    %c50_317 = arith.constant 50 : index
    %c0_318 = arith.constant 0 : index
    %397 = vector.load %arg8[%c50_317, %c0_318] : memref<98x352xbf16, #tpu.memory_space<vmem>>, vector<2x352xbf16>
    tpu.vector_store %arg8[%c50_317, %c0_318], %396 {strides = array<i32>} : memref<98x352xbf16, #tpu.memory_space<vmem>>, vector<2x352xbf16>,
    %c0_319 = arith.constant 0 : index
    %c71_320 = arith.constant 71 : index
    %398 = vector.load %arg7[%c0_319, %c71_320] : memref<2x512xbf16, #tpu.memory_space<vmem>>, vector<2x352xbf16>
    %c52 = arith.constant 52 : index
    %c0_321 = arith.constant 0 : index
    %399 = vector.load %arg8[%c52, %c0_321] : memref<98x352xbf16, #tpu.memory_space<vmem>>, vector<2x352xbf16>
    tpu.vector_store %arg8[%c52, %c0_321], %398 {strides = array<i32>} : memref<98x352xbf16, #tpu.memory_space<vmem>>, vector<2x352xbf16>,
    %c0_322 = arith.constant 0 : index
    %c72_323 = arith.constant 72 : index
    %400 = vector.load %arg7[%c0_322, %c72_323] : memref<2x512xbf16, #tpu.memory_space<vmem>>, vector<2x352xbf16>
    %c54 = arith.constant 54 : index
    %c0_324 = arith.constant 0 : index
    %401 = vector.load %arg8[%c54, %c0_324] : memref<98x352xbf16, #tpu.memory_space<vmem>>, vector<2x352xbf16>
    tpu.vector_store %arg8[%c54, %c0_324], %400 {strides = array<i32>} : memref<98x352xbf16, #tpu.memory_space<vmem>>, vector<2x352xbf16>,
    %c0_325 = arith.constant 0 : index
    %c88_326 = arith.constant 88 : index
    %402 = vector.load %arg7[%c0_325, %c88_326] : memref<2x512xbf16, #tpu.memory_space<vmem>>, vector<2x352xbf16>
    %c56 = arith.constant 56 : index
    %c0_327 = arith.constant 0 : index
    %403 = vector.load %arg8[%c56, %c0_327] : memref<98x352xbf16, #tpu.memory_space<vmem>>, vector<2x352xbf16>
    tpu.vector_store %arg8[%c56, %c0_327], %402 {strides = array<i32>} : memref<98x352xbf16, #tpu.memory_space<vmem>>, vector<2x352xbf16>,
    %c0_328 = arith.constant 0 : index
    %c89_329 = arith.constant 89 : index
    %404 = vector.load %arg7[%c0_328, %c89_329] : memref<2x512xbf16, #tpu.memory_space<vmem>>, vector<2x352xbf16>
    %c58 = arith.constant 58 : index
    %c0_330 = arith.constant 0 : index
    %405 = vector.load %arg8[%c58, %c0_330] : memref<98x352xbf16, #tpu.memory_space<vmem>>, vector<2x352xbf16>
    tpu.vector_store %arg8[%c58, %c0_330], %404 {strides = array<i32>} : memref<98x352xbf16, #tpu.memory_space<vmem>>, vector<2x352xbf16>,
    %c0_331 = arith.constant 0 : index
    %c90_332 = arith.constant 90 : index
    %406 = vector.load %arg7[%c0_331, %c90_332] : memref<2x512xbf16, #tpu.memory_space<vmem>>, vector<2x352xbf16>
    %c60 = arith.constant 60 : index
    %c0_333 = arith.constant 0 : index
    %407 = vector.load %arg8[%c60, %c0_333] : memref<98x352xbf16, #tpu.memory_space<vmem>>, vector<2x352xbf16>
    tpu.vector_store %arg8[%c60, %c0_333], %406 {strides = array<i32>} : memref<98x352xbf16, #tpu.memory_space<vmem>>, vector<2x352xbf16>,
    %c0_334 = arith.constant 0 : index
    %c91_335 = arith.constant 91 : index
    %408 = vector.load %arg7[%c0_334, %c91_335] : memref<2x512xbf16, #tpu.memory_space<vmem>>, vector<2x352xbf16>
    %c62 = arith.constant 62 : index
    %c0_336 = arith.constant 0 : index
    %409 = vector.load %arg8[%c62, %c0_336] : memref<98x352xbf16, #tpu.memory_space<vmem>>, vector<2x352xbf16>
    tpu.vector_store %arg8[%c62, %c0_336], %408 {strides = array<i32>} : memref<98x352xbf16, #tpu.memory_space<vmem>>, vector<2x352xbf16>,
    %c0_337 = arith.constant 0 : index
    %c92_338 = arith.constant 92 : index
    %410 = vector.load %arg7[%c0_337, %c92_338] : memref<2x512xbf16, #tpu.memory_space<vmem>>, vector<2x352xbf16>
    %c64_339 = arith.constant 64 : index
    %c0_340 = arith.constant 0 : index
    %411 = vector.load %arg8[%c64_339, %c0_340] : memref<98x352xbf16, #tpu.memory_space<vmem>>, vector<2x352xbf16>
    tpu.vector_store %arg8[%c64_339, %c0_340], %410 {strides = array<i32>} : memref<98x352xbf16, #tpu.memory_space<vmem>>, vector<2x352xbf16>,
    %c0_341 = arith.constant 0 : index
    %c93_342 = arith.constant 93 : index
    %412 = vector.load %arg7[%c0_341, %c93_342] : memref<2x512xbf16, #tpu.memory_space<vmem>>, vector<2x352xbf16>
    %c66_343 = arith.constant 66 : index
    %c0_344 = arith.constant 0 : index
    %413 = vector.load %arg8[%c66_343, %c0_344] : memref<98x352xbf16, #tpu.memory_space<vmem>>, vector<2x352xbf16>
    tpu.vector_store %arg8[%c66_343, %c0_344], %412 {strides = array<i32>} : memref<98x352xbf16, #tpu.memory_space<vmem>>, vector<2x352xbf16>,
    %c0_345 = arith.constant 0 : index
    %c94_346 = arith.constant 94 : index
    %414 = vector.load %arg7[%c0_345, %c94_346] : memref<2x512xbf16, #tpu.memory_space<vmem>>, vector<2x352xbf16>
    %c68_347 = arith.constant 68 : index
    %c0_348 = arith.constant 0 : index
    %415 = vector.load %arg8[%c68_347, %c0_348] : memref<98x352xbf16, #tpu.memory_space<vmem>>, vector<2x352xbf16>
    tpu.vector_store %arg8[%c68_347, %c0_348], %414 {strides = array<i32>} : memref<98x352xbf16, #tpu.memory_space<vmem>>, vector<2x352xbf16>,
    %c0_349 = arith.constant 0 : index
    %c110_350 = arith.constant 110 : index
    %416 = vector.load %arg7[%c0_349, %c110_350] : memref<2x512xbf16, #tpu.memory_space<vmem>>, vector<2x352xbf16>
    %c70_351 = arith.constant 70 : index
    %c0_352 = arith.constant 0 : index
    %417 = vector.load %arg8[%c70_351, %c0_352] : memref<98x352xbf16, #tpu.memory_space<vmem>>, vector<2x352xbf16>
    tpu.vector_store %arg8[%c70_351, %c0_352], %416 {strides = array<i32>} : memref<98x352xbf16, #tpu.memory_space<vmem>>, vector<2x352xbf16>,
    %c0_353 = arith.constant 0 : index
    %c111_354 = arith.constant 111 : index
    %418 = vector.load %arg7[%c0_353, %c111_354] : memref<2x512xbf16, #tpu.memory_space<vmem>>, vector<2x352xbf16>
    %c72_355 = arith.constant 72 : index
    %c0_356 = arith.constant 0 : index
    %419 = vector.load %arg8[%c72_355, %c0_356] : memref<98x352xbf16, #tpu.memory_space<vmem>>, vector<2x352xbf16>
    tpu.vector_store %arg8[%c72_355, %c0_356], %418 {strides = array<i32>} : memref<98x352xbf16, #tpu.memory_space<vmem>>, vector<2x352xbf16>,
    %c0_357 = arith.constant 0 : index
    %c112_358 = arith.constant 112 : index
    %420 = vector.load %arg7[%c0_357, %c112_358] : memref<2x512xbf16, #tpu.memory_space<vmem>>, vector<2x352xbf16>
    %c74 = arith.constant 74 : index
    %c0_359 = arith.constant 0 : index
    %421 = vector.load %arg8[%c74, %c0_359] : memref<98x352xbf16, #tpu.memory_space<vmem>>, vector<2x352xbf16>
    tpu.vector_store %arg8[%c74, %c0_359], %420 {strides = array<i32>} : memref<98x352xbf16, #tpu.memory_space<vmem>>, vector<2x352xbf16>,
    %c0_360 = arith.constant 0 : index
    %c113_361 = arith.constant 113 : index
    %422 = vector.load %arg7[%c0_360, %c113_361] : memref<2x512xbf16, #tpu.memory_space<vmem>>, vector<2x352xbf16>
    %c76 = arith.constant 76 : index
    %c0_362 = arith.constant 0 : index
    %423 = vector.load %arg8[%c76, %c0_362] : memref<98x352xbf16, #tpu.memory_space<vmem>>, vector<2x352xbf16>
    tpu.vector_store %arg8[%c76, %c0_362], %422 {strides = array<i32>} : memref<98x352xbf16, #tpu.memory_space<vmem>>, vector<2x352xbf16>,
    %c0_363 = arith.constant 0 : index
    %c114_364 = arith.constant 114 : index
    %424 = vector.load %arg7[%c0_363, %c114_364] : memref<2x512xbf16, #tpu.memory_space<vmem>>, vector<2x352xbf16>
    %c78 = arith.constant 78 : index
    %c0_365 = arith.constant 0 : index
    %425 = vector.load %arg8[%c78, %c0_365] : memref<98x352xbf16, #tpu.memory_space<vmem>>, vector<2x352xbf16>
    tpu.vector_store %arg8[%c78, %c0_365], %424 {strides = array<i32>} : memref<98x352xbf16, #tpu.memory_space<vmem>>, vector<2x352xbf16>,
    %c0_366 = arith.constant 0 : index
    %c115_367 = arith.constant 115 : index
    %426 = vector.load %arg7[%c0_366, %c115_367] : memref<2x512xbf16, #tpu.memory_space<vmem>>, vector<2x352xbf16>
    %c80 = arith.constant 80 : index
    %c0_368 = arith.constant 0 : index
    %427 = vector.load %arg8[%c80, %c0_368] : memref<98x352xbf16, #tpu.memory_space<vmem>>, vector<2x352xbf16>
    tpu.vector_store %arg8[%c80, %c0_368], %426 {strides = array<i32>} : memref<98x352xbf16, #tpu.memory_space<vmem>>, vector<2x352xbf16>,
    %c0_369 = arith.constant 0 : index
    %c116_370 = arith.constant 116 : index
    %428 = vector.load %arg7[%c0_369, %c116_370] : memref<2x512xbf16, #tpu.memory_space<vmem>>, vector<2x352xbf16>
    %c82 = arith.constant 82 : index
    %c0_371 = arith.constant 0 : index
    %429 = vector.load %arg8[%c82, %c0_371] : memref<98x352xbf16, #tpu.memory_space<vmem>>, vector<2x352xbf16>
    tpu.vector_store %arg8[%c82, %c0_371], %428 {strides = array<i32>} : memref<98x352xbf16, #tpu.memory_space<vmem>>, vector<2x352xbf16>,
    %c0_372 = arith.constant 0 : index
    %c132_373 = arith.constant 132 : index
    %430 = vector.load %arg7[%c0_372, %c132_373] : memref<2x512xbf16, #tpu.memory_space<vmem>>, vector<2x352xbf16>
    %c84 = arith.constant 84 : index
    %c0_374 = arith.constant 0 : index
    %431 = vector.load %arg8[%c84, %c0_374] : memref<98x352xbf16, #tpu.memory_space<vmem>>, vector<2x352xbf16>
    tpu.vector_store %arg8[%c84, %c0_374], %430 {strides = array<i32>} : memref<98x352xbf16, #tpu.memory_space<vmem>>, vector<2x352xbf16>,
    %c0_375 = arith.constant 0 : index
    %c133_376 = arith.constant 133 : index
    %432 = vector.load %arg7[%c0_375, %c133_376] : memref<2x512xbf16, #tpu.memory_space<vmem>>, vector<2x352xbf16>
    %c86 = arith.constant 86 : index
    %c0_377 = arith.constant 0 : index
    %433 = vector.load %arg8[%c86, %c0_377] : memref<98x352xbf16, #tpu.memory_space<vmem>>, vector<2x352xbf16>
    tpu.vector_store %arg8[%c86, %c0_377], %432 {strides = array<i32>} : memref<98x352xbf16, #tpu.memory_space<vmem>>, vector<2x352xbf16>,
    %c0_378 = arith.constant 0 : index
    %c134_379 = arith.constant 134 : index
    %434 = vector.load %arg7[%c0_378, %c134_379] : memref<2x512xbf16, #tpu.memory_space<vmem>>, vector<2x352xbf16>
    %c88_380 = arith.constant 88 : index
    %c0_381 = arith.constant 0 : index
    %435 = vector.load %arg8[%c88_380, %c0_381] : memref<98x352xbf16, #tpu.memory_space<vmem>>, vector<2x352xbf16>
    tpu.vector_store %arg8[%c88_380, %c0_381], %434 {strides = array<i32>} : memref<98x352xbf16, #tpu.memory_space<vmem>>, vector<2x352xbf16>,
    %c0_382 = arith.constant 0 : index
    %c135_383 = arith.constant 135 : index
    %436 = vector.load %arg7[%c0_382, %c135_383] : memref<2x512xbf16, #tpu.memory_space<vmem>>, vector<2x352xbf16>
    %c90_384 = arith.constant 90 : index
    %c0_385 = arith.constant 0 : index
    %437 = vector.load %arg8[%c90_384, %c0_385] : memref<98x352xbf16, #tpu.memory_space<vmem>>, vector<2x352xbf16>
    tpu.vector_store %arg8[%c90_384, %c0_385], %436 {strides = array<i32>} : memref<98x352xbf16, #tpu.memory_space<vmem>>, vector<2x352xbf16>,
    %c0_386 = arith.constant 0 : index
    %c136_387 = arith.constant 136 : index
    %438 = vector.load %arg7[%c0_386, %c136_387] : memref<2x512xbf16, #tpu.memory_space<vmem>>, vector<2x352xbf16>
    %c92_388 = arith.constant 92 : index
    %c0_389 = arith.constant 0 : index
    %439 = vector.load %arg8[%c92_388, %c0_389] : memref<98x352xbf16, #tpu.memory_space<vmem>>, vector<2x352xbf16>
    tpu.vector_store %arg8[%c92_388, %c0_389], %438 {strides = array<i32>} : memref<98x352xbf16, #tpu.memory_space<vmem>>, vector<2x352xbf16>,
    %c0_390 = arith.constant 0 : index
    %c137_391 = arith.constant 137 : index
    %440 = vector.load %arg7[%c0_390, %c137_391] : memref<2x512xbf16, #tpu.memory_space<vmem>>, vector<2x352xbf16>
    %c94_392 = arith.constant 94 : index
    %c0_393 = arith.constant 0 : index
    %441 = vector.load %arg8[%c94_392, %c0_393] : memref<98x352xbf16, #tpu.memory_space<vmem>>, vector<2x352xbf16>
    tpu.vector_store %arg8[%c94_392, %c0_393], %440 {strides = array<i32>} : memref<98x352xbf16, #tpu.memory_space<vmem>>, vector<2x352xbf16>,
    %c0_394 = arith.constant 0 : index
    %c138_395 = arith.constant 138 : index
    %442 = vector.load %arg7[%c0_394, %c138_395] : memref<2x512xbf16, #tpu.memory_space<vmem>>, vector<2x352xbf16>
    %c96_396 = arith.constant 96 : index
    %c0_397 = arith.constant 0 : index
    %443 = vector.load %arg8[%c96_396, %c0_397] : memref<98x352xbf16, #tpu.memory_space<vmem>>, vector<2x352xbf16>
    tpu.vector_store %arg8[%c96_396, %c0_397], %442 {strides = array<i32>} : memref<98x352xbf16, #tpu.memory_space<vmem>>, vector<2x352xbf16>,
    %c0_398 = arith.constant 0 : index
    %c0_399 = arith.constant 0 : index
    %444 = vector.load %arg3[%c0_398, %c0_399] : memref<32x98xbf16, #tpu.memory_space<vmem>>, vector<32x98xbf16>
    %c0_400 = arith.constant 0 : index
    %c0_401 = arith.constant 0 : index
    %445 = vector.load %arg8[%c0_400, %c0_401] : memref<98x352xbf16, #tpu.memory_space<vmem>>, vector<98x352xbf16>
    %cst_402 = arith.constant dense<0.000000e+00> : vector<32x352xf32>
    %446 = tpu.matmul %444, %445, %cst_402 {dimension_numbers = #tpu.dot_dimension_numbers<[1], [0], [0], [1], [0, 0, 1, 1], [], []>} : vector<32x98xbf16>, vector<98x352xbf16>, vector<32x352xf32> -> vector<32x352xf32>
    %cst_403 = arith.constant 0.000000e+00 : f32
    %447 = vector.shape_cast %2 : vector<1x352xi1> to vector<1x352xi1>
    %448 = vector.broadcast %447 : vector<1x352xi1> to vector<32x352xi1>
    %449 = vector.broadcast %cst_403 : f32 to vector<32x352xf32>
    %450 = arith.select %448, %446, %449 : vector<32x352xi1>, vector<32x352xf32>
    %cst_404 = arith.constant dense<0.000000e+00> : vector<32xf32>
    %451 = vector.multi_reduction <add>, %450, %cst_404 [1] : vector<32x352xf32> to vector<32xf32>
    %452 = vector.shape_cast %451 : vector<32xf32> to vector<32x1xf32>
    %453 = arith.mulf %450, %450 : vector<32x352xf32>
    %cst_405 = arith.constant dense<0.000000e+00> : vector<32xf32>
    %454 = vector.multi_reduction <add>, %453, %cst_405 [1] : vector<32x352xf32> to vector<32xf32>
    %455 = vector.shape_cast %454 : vector<32xf32> to vector<32x1xf32>
    %cst_406 = arith.constant 3.906250e-03 : f32
    %456 = vector.broadcast %cst_406 : f32 to vector<32x1xf32>
    %457 = arith.mulf %452, %456 : vector<32x1xf32>
    %cst_407 = arith.constant 3.906250e-03 : f32
    %458 = vector.broadcast %cst_407 : f32 to vector<32x1xf32>
    %459 = arith.mulf %455, %458 : vector<32x1xf32>
    %460 = arith.mulf %457, %457 : vector<32x1xf32>
    %461 = arith.subf %459, %460 : vector<32x1xf32>
    %462 = vector.broadcast %457 : vector<32x1xf32> to vector<32x352xf32>
    %463 = arith.subf %446, %462 : vector<32x352xf32>
    %cst_408 = arith.constant 9.99999974E-6 : f32
    %464 = vector.broadcast %cst_408 : f32 to vector<32x1xf32>
    %465 = arith.addf %461, %464 : vector<32x1xf32>
    %466 = math.rsqrt %465 : vector<32x1xf32>
    %467 = vector.broadcast %466 : vector<32x1xf32> to vector<32x352xf32>
    %468 = arith.mulf %463, %467 : vector<32x352xf32>
    %469 = arith.negf %468 : vector<32x352xf32>
    %470 = math.exp %469 : vector<32x352xf32>
    %cst_409 = arith.constant 1.000000e+00 : f32
    %471 = vector.broadcast %cst_409 : f32 to vector<32x352xf32>
    %472 = arith.addf %471, %470 : vector<32x352xf32>
    %473 = arith.divf %471, %472 : vector<32x352xf32>
    %c0_410 = arith.constant 0 : index
    %c0_411 = arith.constant 0 : index
    %c0_412 = arith.constant 0 : index
    %474 = vector.load %arg5[%c0_410, %c0_411, %c0_412] : memref<1x32x352xf32, #tpu.memory_space<vmem>>, vector<1x32x352xf32>
    %475 = vector.shape_cast %474 : vector<1x32x352xf32> to vector<32x352xf32>
    %476 = vector.shape_cast %473 : vector<32x352xf32> to vector<1x32x352xf32>
    tpu.vector_store %arg5[%c0_410, %c0_411, %c0_412], %476 {strides = array<i32>} : memref<1x32x352xf32, #tpu.memory_space<vmem>>, vector<1x32x352xf32>,
    return
  }
  func.func @transform_0(%arg0: i32) -> (i32, i32, i32) {
    %c0_i32 = arith.constant 0 : i32
    %c0_i32_0 = arith.constant 0 : i32
    %c0_i32_1 = arith.constant 0 : i32
    return %arg0, %c0_i32, %c0_i32_0 : i32, i32, i32
  }
  func.func @transform_1(%arg0: i32) -> (i32, i32) {
    %c0_i32 = arith.constant 0 : i32
    %c0_i32_0 = arith.constant 0 : i32
    %c0_i32_1 = arith.constant 0 : i32
    return %c0_i32, %c0_i32_0 : i32, i32
  }
  func.func @transform_2(%arg0: i32) -> (i32, i32) {
    %c0_i32 = arith.constant 0 : i32
    %c0_i32_0 = arith.constant 0 : i32
    %c0_i32_1 = arith.constant 0 : i32
    return %c0_i32, %c0_i32_0 : i32, i32
  }
  func.func @transform_3(%arg0: i32) -> (i32, i32) {
    %c0_i32 = arith.constant 0 : i32
    %c0_i32_0 = arith.constant 0 : i32
    %c0_i32_1 = arith.constant 0 : i32
    return %c0_i32, %c0_i32_0 : i32, i32
  }
  func.func @transform_4(%arg0: i32) -> (i32, i32, i32) {
    %c0_i32 = arith.constant 0 : i32
    %c0_i32_0 = arith.constant 0 : i32
    %c0_i32_1 = arith.constant 0 : i32
    return %arg0, %c0_i32, %c0_i32_0 : i32, i32, i32
  }
}

</mosaic_0001>

<llo_original>
// kernel: gam_spatial_forward.1
$region0: #{gam_spatial_forward.1}
  #allocation0 [shape = 'u32[]', space=smem, size = 0x4, offset = 0x4, fixed_abs, tag = 'smem constant byte address 0x4 - core index']
  #allocation1 [shape = 'u32[144,128]{1,0:T(1,128)}', space=vmem, size = 0x12000, scoped, tag = 'internal scratch']
  #allocation2 [shape = 'bf16[1568,352]{1,0:T(16,128)(2,1)}', space=vmem, size = 0x126000, scoped, tag = 'scratch operand']
  #allocation3 [shape = 'bf16[2,512]{1,0:T(2,128)(2,1)}', space=vmem, size = 0x800, scoped, tag = 'scratch operand']
  #allocation4 [shape = 'bf16[98,352]{1,0:T(8,128)(2,1)}', space=vmem, size = 0x13800, scoped, tag = 'scratch operand']
  %s0 = inlined_call_operand.vmem [shape: bf16[2,32,512], index: 0, kind: input, shape index: {}]
  %s1 = inlined_call_operand.vmem [shape: bf16[8,1568], index: 1, kind: input, shape index: {}]
  %s2 = inlined_call_operand.vmem [shape: bf16[32,98], index: 2, kind: input, shape index: {}]
  %s3 = inlined_call_operand.vmem [shape: f32[1,352], index: 3, kind: input, shape index: {}]
  %s4 = inlined_call_operand.vmem [shape: f32[2,32,352], index: 4, kind: output, shape index: {}]
  %s5 = sld [smem:[#allocation0]]
  $region49: #{gam_spatial_forward.1} parent=0
    _
  %s7 = ssub.s32 1, %s5
  %s8 = scalar_select 0, %s7, %s5
  loop: start=0, step=1, limit=4
  $region2: #{gam_spatial_forward.1} parent=0 // loop_pre_header
    _
  $region3: #{gam_spatial_forward.1} parent=0 // loop_header
    %s10 = sphi 0, %s14
    %p11 = scmp.ge.s32.totalorder %s10, 4
    %s20 = sphi 0, %s22
    %s23 = sphi 0, %s20
    %s24 = sphi 0, %s23
    %s40 = sphi 0, %s24
    %s44 = sphi 0, %s44
    %s46 = sphi 0, %s44
    %s47 = sphi 0, %s46
    %s61 = sphi 0, %s47
    %s65 = sphi 0, %s65
    %s67 = sphi 0, %s65
    %s68 = sphi 0, %s67
    %s82 = sphi 0, %s68
    %s86 = sphi 0, %s86
    %s88 = sphi 0, %s86
    %s89 = sphi 0, %s88
    %s103 = sphi 0, %s89
    %s109 = sphi 0, %s111
    %s112 = sphi 0, %s109
    %s113 = sphi 0, %s112
    %s129 = sphi 0, %s113
  $region4: #{gam_spatial_forward.1} parent=0 // loop_header_branch
    %13 = sbr.rel (%p11) target = $region8
  $region5: #{gam_spatial_forward.1} parent=0 // loop_body
    %s15 = ssub.s32 %s10, 1
    %s16 = ssub.s32 %s10, 2
    %s17 = sadd.s32 %s10, 1
    %s18 = ssub.s32 %s10, %s17
    %p19 = scmp.eq.s32.totalorder %s18, 0
    %s21 = sadd.s32 %s20, 1
    %s22 = scalar_select %p19, %s20, %s21
    %p25 = pneg %p19
    %p26 = scmp.eq.s32.totalorder %s10, 1
    %p27 = por %p25, %p26
    %p28 = scmp.ne.s32.totalorder %s20, %s23
    %p29 = scmp.eq.s32.totalorder %s10, 0
    %p30 = por %p28, %p29
    %p31 = scmp.ne.s32.totalorder %s20, %s23
    %p32 = scmp.eq.s32.totalorder %s15, 1
    %p33 = por %p31, %p32
    %p34 = scmp.ne.s32.totalorder %s23, %s24
    %p35 = scmp.eq.s32.totalorder %s15, 0
    %p36 = por %p34, %p35
    %p37 = scmp.ne.s32.totalorder %s23, %s24
    %p38 = scmp.eq.s32.totalorder %s16, 1
    %p39 = por %p37, %p38
    %p41 = scmp.ne.s32.totalorder %s24, %s40
    %p42 = scmp.eq.s32.totalorder %s16, 0
    %p43 = por %p41, %p42
    %s45 = sadd.s32 %s44, 1
    %p48 = scmp.eq.s32.totalorder %s10, 1
    %p49 = scmp.ne.s32.totalorder %s44, %s46
    %p50 = scmp.eq.s32.totalorder %s10, 0
    %p51 = por %p49, %p50
    %p52 = scmp.ne.s32.totalorder %s44, %s46
    %p53 = scmp.eq.s32.totalorder %s15, 1
    %p54 = por %p52, %p53
    %p55 = scmp.ne.s32.totalorder %s46, %s47
    %p56 = scmp.eq.s32.totalorder %s15, 0
    %p57 = por %p55, %p56
    %p58 = scmp.ne.s32.totalorder %s46, %s47
    %p59 = scmp.eq.s32.totalorder %s16, 1
    %p60 = por %p58, %p59
    %p62 = scmp.ne.s32.totalorder %s47, %s61
    %p63 = scmp.eq.s32.totalorder %s16, 0
    %p64 = por %p62, %p63
    %s66 = sadd.s32 %s65, 1
    %p69 = scmp.eq.s32.totalorder %s10, 1
    %p70 = scmp.ne.s32.totalorder %s65, %s67
    %p71 = scmp.eq.s32.totalorder %s10, 0
    %p72 = por %p70, %p71
    %p73 = scmp.ne.s32.totalorder %s65, %s67
    %p74 = scmp.eq.s32.totalorder %s15, 1
    %p75 = por %p73, %p74
    %p76 = scmp.ne.s32.totalorder %s67, %s68
    %p77 = scmp.eq.s32.totalorder %s15, 0
    %p78 = por %p76, %p77
    %p79 = scmp.ne.s32.totalorder %s67, %s68
    %p80 = scmp.eq.s32.totalorder %s16, 1
    %p81 = por %p79, %p80
    %p83 = scmp.ne.s32.totalorder %s68, %s82
    %p84 = scmp.eq.s32.totalorder %s16, 0
    %p85 = por %p83, %p84
    %s87 = sadd.s32 %s86, 1
    %p90 = scmp.eq.s32.totalorder %s10, 1
    %p91 = scmp.ne.s32.totalorder %s86, %s88
    %p92 = scmp.eq.s32.totalorder %s10, 0
    %p93 = por %p91, %p92
    %p94 = scmp.ne.s32.totalorder %s86, %s88
    %p95 = scmp.eq.s32.totalorder %s15, 1
    %p96 = por %p94, %p95
    %p97 = scmp.ne.s32.totalorder %s88, %s89
    %p98 = scmp.eq.s32.totalorder %s15, 0
    %p99 = por %p97, %p98
    %p100 = scmp.ne.s32.totalorder %s88, %s89
    %p101 = scmp.eq.s32.totalorder %s16, 1
    %p102 = por %p100, %p101
    %p104 = scmp.ne.s32.totalorder %s89, %s103
    %p105 = scmp.eq.s32.totalorder %s16, 0
    %p106 = por %p104, %p105
    %s107 = ssub.s32 %s10, %s17
    %p108 = scmp.eq.s32.totalorder %s107, 0
    %s110 = sadd.s32 %s109, 1
    %s111 = scalar_select %p108, %s109, %s110
    %p114 = pneg %p108
    %p115 = scmp.eq.s32.totalorder %s10, 1
    %p116 = por %p114, %p115
    %p117 = scmp.ne.s32.totalorder %s109, %s112
    %p118 = scmp.eq.s32.totalorder %s10, 0
    %p119 = por %p117, %p118
    %p120 = scmp.ne.s32.totalorder %s109, %s112
    %p121 = scmp.eq.s32.totalorder %s15, 1
    %p122 = por %p120, %p121
    %p123 = scmp.ne.s32.totalorder %s112, %s113
    %p124 = scmp.eq.s32.totalorder %s15, 0
    %p125 = por %p123, %p124
    %p126 = scmp.ne.s32.totalorder %s112, %s113
    %p127 = scmp.eq.s32.totalorder %s16, 1
    %p128 = por %p126, %p127
    %p130 = scmp.ne.s32.totalorder %s113, %s129
    %p131 = scmp.eq.s32.totalorder %s16, 0
    %p132 = por %p130, %p131
    %p133 = scmp.le.s32.totalorder 1, %s10
    %p134 = scmp.lt.s32.totalorder %s10, 3
    %p135 = pnand %p133, %p134
    %p136 = pneg %p135
    // Predicated region
    $region9: #{gam_spatial_forward.1} parent=5 // pred_check
      _
    $region10: #{gam_spatial_forward.1} parent=5 // pred_check_branch
      %138 = sbr.rel (%p135) target = $region12
    $region11: #{gam_spatial_forward.1} parent=5 // pred_region
      %s139 = ssub.s32 %s10, 1
      // Predicated region
      $region13: #{gam_spatial_forward.1} parent=11 // pred_check
        %p140 = pneg %p57
      $region14: #{gam_spatial_forward.1} parent=11 // pred_check_branch
        %142 = sbr.rel (%p140) target = $region16
      $region15: #{gam_spatial_forward.1} parent=11 // pred_region
        _
      $region16: #{gam_spatial_forward.1} parent=11 // pred_fallthru
        _
      // Predicated region
      $region17: #{gam_spatial_forward.1} parent=11 // pred_check
        %p143 = pneg %p78
      $region18: #{gam_spatial_forward.1} parent=11 // pred_check_branch
        %145 = sbr.rel (%p143) target = $region20
      $region19: #{gam_spatial_forward.1} parent=11 // pred_region
        _
      $region20: #{gam_spatial_forward.1} parent=11 // pred_fallthru
        _
      // Predicated region
      $region21: #{gam_spatial_forward.1} parent=11 // pred_check
        %p146 = pneg %p99
      $region22: #{gam_spatial_forward.1} parent=11 // pred_check_branch
        %148 = sbr.rel (%p146) target = $region24
      $region23: #{gam_spatial_forward.1} parent=11 // pred_region
        _
      $region24: #{gam_spatial_forward.1} parent=11 // pred_fallthru
        _
    $region12: #{gam_spatial_forward.1} parent=5 // pred_fallthru
      _
    %p149 = scmp.lt.s32.totalorder %s10, 2
    // Predicated region
    $region25: #{gam_spatial_forward.1} parent=5 // pred_check
      %p150 = pneg %p149
    $region26: #{gam_spatial_forward.1} parent=5 // pred_check_branch
      %152 = sbr.rel (%p150) target = $region28
    $region27: #{gam_spatial_forward.1} parent=5 // pred_region
      // Predicated region
      $region29: #{gam_spatial_forward.1} parent=27 // pred_check
        %p153 = pneg %p30
      $region30: #{gam_spatial_forward.1} parent=27 // pred_check_branch
        %155 = sbr.rel (%p153) target = $region32
      $region31: #{gam_spatial_forward.1} parent=27 // pred_region
        %p156 = scmp.lt.s32.totalorder %s10, 1
        %s157 = scalar_select %p156, %s10, 1
        %s158 = smul.addr %s157, 16
        %s159 = smul.addr %s158, 4
        %s160 = scalar_lea.vmem %s0, %s159
      $region32: #{gam_spatial_forward.1} parent=27 // pred_fallthru
        _
    $region28: #{gam_spatial_forward.1} parent=5 // pred_fallthru
      _
    %p161 = scmp.le.s32.totalorder 1, %s10
    %p162 = scmp.lt.s32.totalorder %s10, 3
    %p163 = pnand %p161, %p162
    %p164 = pneg %p163
    // Predicated region
    $region33: #{gam_spatial_forward.1} parent=5 // pred_check
      _
    $region34: #{gam_spatial_forward.1} parent=5 // pred_check_branch
      %166 = sbr.rel (%p163) target = $region36
    $region35: #{gam_spatial_forward.1} parent=5 // pred_region
      %s167 = ssub.s32 %s10, 1
      %p168 = scmp.lt.s32.totalorder %s15, 1
      %s169 = scalar_select %p168, %s15, 1
      %s170 = smul.addr %s169, 16
      %s171 = smul.addr %s170, 4
      %s172 = scalar_lea.vmem %s0, %s171
      %p173 = pneg %p36
      %p174 = pneg %p33
      %p175 = pneg %p57
      %p176 = pneg %p54
      %p177 = pneg %p78
      %p178 = pneg %p75
      %p179 = pneg %p99
      %p180 = pneg %p96
      %p181 = pneg %p125
      %p182 = pneg %p122
      %p183 = scmp.lt.s32.totalorder %s15, 1
      %s184 = scalar_select %p183, %s15, 1
      %s185 = smul.addr %s184, 12
      %s186 = smul.addr %s185, 8
      %s187 = scalar_lea.vmem %s4, %s186
      %p188 = scmp.lt.s32.totalorder %s15, 1
      %s189 = scalar_select %p188, %s15, 1
      %s190 = smul.addr %s189, 16
      %s191 = smul.addr %s190, 4
      %s192 = scalar_lea.vmem %s0, %s191
      %p193 = scmp.lt.s32.totalorder %s15, 1
      %s194 = scalar_select %p193, %s15, 1
      %s195 = smul.addr %s194, 12
      %s196 = smul.addr %s195, 8
      %s197 = scalar_lea.vmem %s4, %s196
      %v199 = vld [vmem:[%s3] sm:$0x7]
      %vm200 = vcmp.gt.f32.partialorder %v199, 0.0
      %v201 = vld [vmem:[%s192] sm:$0xff]
      %v202 = vld [vmem:[%s192 + $0x8] sm:$0xf]
      %v203 = vld [vmem:[%s192 + $0x10] sm:$0xff]
      %v204 = vld [vmem:[%s192 + $0x18] sm:$0xf]
      %v205 = vld [vmem:[%s192 + $0x20] sm:$0xff]
      %v206 = vld [vmem:[%s192 + $0x28] sm:$0xf]
      %v207 = vld [vmem:[%s192 + $0x30] sm:$0xff]
      %v208 = vld [vmem:[%s192 + $0x38] sm:$0xf]
      %v217 = vunpack.c.l.b16 %v201
      %v218 = vunpack.c.h.b16 %v201
      %v219 = vunpack.c.l.b16 %v202
      %v220 = vunpack.c.l.b16 %v203
      %v221 = vunpack.c.h.b16 %v203
      %v222 = vunpack.c.l.b16 %v204
      %v223 = vunpack.c.l.b16 %v205
      %v224 = vunpack.c.h.b16 %v205
      %v225 = vunpack.c.l.b16 %v206
      %v226 = vunpack.c.l.b16 %v207
      %v227 = vunpack.c.h.b16 %v207
      %v228 = vunpack.c.l.b16 %v208
      %v229 = vpack.c.b16 %v220, %v217
      %v230 = vpack.c.b16 %v221, %v218
      %v231 = vpack.c.b16 %v222, %v219
      %v232 = vpack.c.b16 %v226, %v223
      %v233 = vpack.c.b16 %v227, %v224
      %v234 = vpack.c.b16 %v228, %v225
      %241 = vst [vmem:[#allocation2] sm:$0xff] %v229
      %242 = vst [vmem:[#allocation2 + $0x8] sm:$0xff] %v230
      %vm243 = vcmask 785408
      %244 = vst.msk [vmem:[#allocation2 + $0x10] sm:$0xff] %vm243, %v231
      %245 = vst [vmem:[#allocation2 + $0x18] sm:$0xff] %v232
      %246 = vst [vmem:[#allocation2 + $0x20] sm:$0xff] %v233
      %247 = vst.msk [vmem:[#allocation2 + $0x28] sm:$0xff] %vm243, %v234
      %v248 = vld [vmem:[%s192] sm:$0xff]
      %v249 = vld [vmem:[%s192 + $0x8] sm:$0xf]
      %v250 = vld [vmem:[%s192 + $0x10] sm:$0xff]
      %v251 = vld [vmem:[%s192 + $0x18] sm:$0xf]
      %v252 = vld [vmem:[%s192 + $0x20] sm:$0xff]
      %v253 = vld [vmem:[%s192 + $0x28] sm:$0xf]
      %v254 = vld [vmem:[%s192 + $0x30] sm:$0xff]
      %v255 = vld [vmem:[%s192 + $0x38] sm:$0xf]
      %v264 = vunpack.c.l.b16 %v248
      %v265 = vunpack.c.h.b16 %v248
      %v266 = vunpack.c.l.b16 %v249
      %v267 = vunpack.c.l.b16 %v250
      %v268 = vunpack.c.h.b16 %v250
      %v269 = vunpack.c.l.b16 %v251
      %v270 = vunpack.c.l.b16 %v252
      %v271 = vunpack.c.h.b16 %v252
      %v272 = vunpack.c.l.b16 %v253
      %v273 = vunpack.c.l.b16 %v254
      %v274 = vunpack.c.h.b16 %v254
      %v275 = vunpack.c.l.b16 %v255
      %v276 = vpack.c.b16 %v267, %v264
      %v277 = vpack.c.b16 %v268, %v265
      %v278 = vpack.c.b16 %v269, %v266
      %v279 = vpack.c.b16 %v273, %v270
      %v280 = vpack.c.b16 %v274, %v271
      %v281 = vpack.c.b16 %v275, %v272
      %282 = vrot.lane.b32.xlu0 %v276, 127
      %v283 = vpop.permute.xlu0 %282
      %284 = vrot.lane.b32.xlu0 %v277, 127
      %v285 = vpop.permute.xlu0 %284
      %286 = vrot.lane.b32.xlu0 %v278, 127
      %v287 = vpop.permute.xlu0 %286
      %288 = vrot.lane.b32.xlu0 %v279, 127
      %v289 = vpop.permute.xlu0 %288
      %290 = vrot.lane.b32.xlu0 %v280, 127
      %v291 = vpop.permute.xlu0 %290
      %292 = vrot.lane.b32.xlu0 %v281, 127
      %v293 = vpop.permute.xlu0 %292
      %vm294 = vcmask 1039360
      %v295 = vsel %vm294, %v283, %v285
      %v296 = vsel %vm294, %v285, %v287
      %v297 = vsel %vm294, %v289, %v291
      %v298 = vsel %vm294, %v291, %v293
      %305 = vst [vmem:[#allocation2 + $0x30] sm:$0xff] %v295
      %306 = vst [vmem:[#allocation2 + $0x38] sm:$0xff] %v296
      %307 = vst.msk [vmem:[#allocation2 + $0x40] sm:$0xff] %vm243, %v287
      %308 = vst [vmem:[#allocation2 + $0x48] sm:$0xff] %v297
      %309 = vst [vmem:[#allocation2 + $0x50] sm:$0xff] %v298
      %310 = vst.msk [vmem:[#allocation2 + $0x58] sm:$0xff] %vm243, %v293
      %v311 = vld [vmem:[%s192] sm:$0xff]
      %v312 = vld [vmem:[%s192 + $0x8] sm:$0xf]
      %v313 = vld [vmem:[%s192 + $0x10] sm:$0xff]
      %v314 = vld [vmem:[%s192 + $0x18] sm:$0xf]
      %v315 = vld [vmem:[%s192 + $0x20] sm:$0xff]
      %v316 = vld [vmem:[%s192 + $0x28] sm:$0xf]
      %v317 = vld [vmem:[%s192 + $0x30] sm:$0xff]
      %v318 = vld [vmem:[%s192 + $0x38] sm:$0xf]
      %v327 = vunpack.c.l.b16 %v311
      %v328 = vunpack.c.h.b16 %v311
      %v329 = vunpack.c.l.b16 %v312
      %v330 = vunpack.c.l.b16 %v313
      %v331 = vunpack.c.h.b16 %v313
      %v332 = vunpack.c.l.b16 %v314
      %v333 = vunpack.c.l.b16 %v315
      %v334 = vunpack.c.h.b16 %v315
      %v335 = vunpack.c.l.b16 %v316
      %v336 = vunpack.c.l.b16 %v317
      %v337 = vunpack.c.h.b16 %v317
      %v338 = vunpack.c.l.b16 %v318
      %v339 = vpack.c.b16 %v330, %v327
      %v340 = vpack.c.b16 %v331, %v328
      %v341 = vpack.c.b16 %v332, %v329
      %v342 = vpack.c.b16 %v336, %v333
      %v343 = vpack.c.b16 %v337, %v334
      %v344 = vpack.c.b16 %v338, %v335
      %345 = vrot.lane.b32.xlu0 %v339, 126
      %v346 = vpop.permute.xlu0 %345
      %347 = vrot.lane.b32.xlu0 %v340, 126
      %v348 = vpop.permute.xlu0 %347
      %349 = vrot.lane.b32.xlu0 %v341, 126
      %v350 = vpop.permute.xlu0 %349
      %351 = vrot.lane.b32.xlu0 %v342, 126
      %v352 = vpop.permute.xlu0 %351
      %353 = vrot.lane.b32.xlu0 %v343, 126
      %v354 = vpop.permute.xlu0 %353
      %355 = vrot.lane.b32.xlu0 %v344, 126
      %v356 = vpop.permute.xlu0 %355
      %vm357 = vcmask 1031168
      %v358 = vsel %vm357, %v346, %v348
      %v359 = vsel %vm357, %v348, %v350
      %v360 = vsel %vm357, %v352, %v354
      %v361 = vsel %vm357, %v354, %v356
      %368 = vst [vmem:[#allocation2 + $0x60] sm:$0xff] %v358
      %369 = vst [vmem:[#allocation2 + $0x68] sm:$0xff] %v359
      %370 = vst.msk [vmem:[#allocation2 + $0x70] sm:$0xff] %vm243, %v350
      %371 = vst [vmem:[#allocation2 + $0x78] sm:$0xff] %v360
      %372 = vst [vmem:[#allocation2 + $0x80] sm:$0xff] %v361
      %373 = vst.msk [vmem:[#allocation2 + $0x88] sm:$0xff] %vm243, %v356
      %v374 = vld [vmem:[%s192] sm:$0xff]
      %v375 = vld [vmem:[%s192 + $0x8] sm:$0xf]
      %v376 = vld [vmem:[%s192 + $0x10] sm:$0xff]
      %v377 = vld [vmem:[%s192 + $0x18] sm:$0xf]
      %v378 = vld [vmem:[%s192 + $0x20] sm:$0xff]
      %v379 = vld [vmem:[%s192 + $0x28] sm:$0xf]
      %v380 = vld [vmem:[%s192 + $0x30] sm:$0xff]
      %v381 = vld [vmem:[%s192 + $0x38] sm:$0xf]
      %v390 = vunpack.c.l.b16 %v374
      %v391 = vunpack.c.h.b16 %v374
      %v392 = vunpack.c.l.b16 %v375
      %v393 = vunpack.c.l.b16 %v376
      %v394 = vunpack.c.h.b16 %v376
      %v395 = vunpack.c.l.b16 %v377
      %v396 = vunpack.c.l.b16 %v378
      %v397 = vunpack.c.h.b16 %v378
      %v398 = vunpack.c.l.b16 %v379
      %v399 = vunpack.c.l.b16 %v380
      %v400 = vunpack.c.h.b16 %v380
      %v401 = vunpack.c.l.b16 %v381
      %v402 = vpack.c.b16 %v393, %v390
      %v403 = vpack.c.b16 %v394, %v391
      %v404 = vpack.c.b16 %v395, %v392
      %v405 = vpack.c.b16 %v399, %v396
      %v406 = vpack.c.b16 %v400, %v397
      %v407 = vpack.c.b16 %v401, %v398
      %408 = vrot.lane.b32.xlu0 %v402, 125
      %v409 = vpop.permute.xlu0 %408
      %410 = vrot.lane.b32.xlu0 %v403, 125
      %v411 = vpop.permute.xlu0 %410
      %412 = vrot.lane.b32.xlu0 %v404, 125
      %v413 = vpop.permute.xlu0 %412
      %414 = vrot.lane.b32.xlu0 %v405, 125
      %v415 = vpop.permute.xlu0 %414
      %416 = vrot.lane.b32.xlu0 %v406, 125
      %v417 = vpop.permute.xlu0 %416
      %418 = vrot.lane.b32.xlu0 %v407, 125
      %v419 = vpop.permute.xlu0 %418
      %vm420 = vcmask 1022976
      %v421 = vsel %vm420, %v409, %v411
      %v422 = vsel %vm420, %v411, %v413
      %v423 = vsel %vm420, %v415, %v417
      %v424 = vsel %vm420, %v417, %v419
      %431 = vst [vmem:[#allocation2 + $0x90] sm:$0xff] %v421
      %432 = vst [vmem:[#allocation2 + $0x98] sm:$0xff] %v422
      %433 = vst.msk [vmem:[#allocation2 + $0xa0] sm:$0xff] %vm243, %v413
      %434 = vst [vmem:[#allocation2 + $0xa8] sm:$0xff] %v423
      %435 = vst [vmem:[#allocation2 + $0xb0] sm:$0xff] %v424
      %436 = vst.msk [vmem:[#allocation2 + $0xb8] sm:$0xff] %vm243, %v419
      %v437 = vld [vmem:[%s192] sm:$0xff]
      %v438 = vld [vmem:[%s192 + $0x8] sm:$0xf]
      %v439 = vld [vmem:[%s192 + $0x10] sm:$0xff]
      %v440 = vld [vmem:[%s192 + $0x18] sm:$0xf]
      %v441 = vld [vmem:[%s192 + $0x20] sm:$0xff]
      %v442 = vld [vmem:[%s192 + $0x28] sm:$0xf]
      %v443 = vld [vmem:[%s192 + $0x30] sm:$0xff]
      %v444 = vld [vmem:[%s192 + $0x38] sm:$0xf]
      %v453 = vunpack.c.l.b16 %v437
      %v454 = vunpack.c.h.b16 %v437
      %v455 = vunpack.c.l.b16 %v438
      %v456 = vunpack.c.l.b16 %v439
      %v457 = vunpack.c.h.b16 %v439
      %v458 = vunpack.c.l.b16 %v440
      %v459 = vunpack.c.l.b16 %v441
      %v460 = vunpack.c.h.b16 %v441
      %v461 = vunpack.c.l.b16 %v442
      %v462 = vunpack.c.l.b16 %v443
      %v463 = vunpack.c.h.b16 %v443
      %v464 = vunpack.c.l.b16 %v444
      %v465 = vpack.c.b16 %v456, %v453
      %v466 = vpack.c.b16 %v457, %v454
      %v467 = vpack.c.b16 %v458, %v455
      %v468 = vpack.c.b16 %v462, %v459
      %v469 = vpack.c.b16 %v463, %v460
      %v470 = vpack.c.b16 %v464, %v461
      %471 = vrot.lane.b32.xlu0 %v465, 124
      %v472 = vpop.permute.xlu0 %471
      %473 = vrot.lane.b32.xlu0 %v466, 124
      %v474 = vpop.permute.xlu0 %473
      %475 = vrot.lane.b32.xlu0 %v467, 124
      %v476 = vpop.permute.xlu0 %475
      %477 = vrot.lane.b32.xlu0 %v468, 124
      %v478 = vpop.permute.xlu0 %477
      %479 = vrot.lane.b32.xlu0 %v469, 124
      %v480 = vpop.permute.xlu0 %479
      %481 = vrot.lane.b32.xlu0 %v470, 124
      %v482 = vpop.permute.xlu0 %481
      %vm483 = vcmask 1014784
      %v484 = vsel %vm483, %v472, %v474
      %v485 = vsel %vm483, %v474, %v476
      %v486 = vsel %vm483, %v478, %v480
      %v487 = vsel %vm483, %v480, %v482
      %494 = vst [vmem:[#allocation2 + $0xc0] sm:$0xff] %v484
      %495 = vst [vmem:[#allocation2 + $0xc8] sm:$0xff] %v485
      %496 = vst.msk [vmem:[#allocation2 + $0xd0] sm:$0xff] %vm243, %v476
      %497 = vst [vmem:[#allocation2 + $0xd8] sm:$0xff] %v486
      %498 = vst [vmem:[#allocation2 + $0xe0] sm:$0xff] %v487
      %499 = vst.msk [vmem:[#allocation2 + $0xe8] sm:$0xff] %vm243, %v482
      %v500 = vld [vmem:[%s192] sm:$0xff]
      %v501 = vld [vmem:[%s192 + $0x8] sm:$0xf]
      %v502 = vld [vmem:[%s192 + $0x10] sm:$0xff]
      %v503 = vld [vmem:[%s192 + $0x18] sm:$0xf]
      %v504 = vld [vmem:[%s192 + $0x20] sm:$0xff]
      %v505 = vld [vmem:[%s192 + $0x28] sm:$0xf]
      %v506 = vld [vmem:[%s192 + $0x30] sm:$0xff]
      %v507 = vld [vmem:[%s192 + $0x38] sm:$0xf]
      %v516 = vunpack.c.l.b16 %v500
      %v517 = vunpack.c.h.b16 %v500
      %v518 = vunpack.c.l.b16 %v501
      %v519 = vunpack.c.l.b16 %v502
      %v520 = vunpack.c.h.b16 %v502
      %v521 = vunpack.c.l.b16 %v503
      %v522 = vunpack.c.l.b16 %v504
      %v523 = vunpack.c.h.b16 %v504
      %v524 = vunpack.c.l.b16 %v505
      %v525 = vunpack.c.l.b16 %v506
      %v526 = vunpack.c.h.b16 %v506
      %v527 = vunpack.c.l.b16 %v507
      %v528 = vpack.c.b16 %v519, %v516
      %v529 = vpack.c.b16 %v520, %v517
      %v530 = vpack.c.b16 %v521, %v518
      %v531 = vpack.c.b16 %v525, %v522
      %v532 = vpack.c.b16 %v526, %v523
      %v533 = vpack.c.b16 %v527, %v524
      %534 = vrot.lane.b32.xlu0 %v528, 123
      %v535 = vpop.permute.xlu0 %534
      %536 = vrot.lane.b32.xlu0 %v529, 123
      %v537 = vpop.permute.xlu0 %536
      %538 = vrot.lane.b32.xlu0 %v530, 123
      %v539 = vpop.permute.xlu0 %538
      %540 = vrot.lane.b32.xlu0 %v531, 123
      %v541 = vpop.permute.xlu0 %540
      %542 = vrot.lane.b32.xlu0 %v532, 123
      %v543 = vpop.permute.xlu0 %542
      %544 = vrot.lane.b32.xlu0 %v533, 123
      %v545 = vpop.permute.xlu0 %544
      %vm546 = vcmask 1006592
      %v547 = vsel %vm546, %v535, %v537
      %v548 = vsel %vm546, %v537, %v539
      %v549 = vsel %vm546, %v541, %v543
      %v550 = vsel %vm546, %v543, %v545
      %557 = vst [vmem:[#allocation2 + $0xf0] sm:$0xff] %v547
      %558 = vst [vmem:[#allocation2 + $0xf8] sm:$0xff] %v548
      %559 = vst.msk [vmem:[#allocation2 + $0x100] sm:$0xff] %vm243, %v539
      %560 = vst [vmem:[#allocation2 + $0x108] sm:$0xff] %v549
      %561 = vst [vmem:[#allocation2 + $0x110] sm:$0xff] %v550
      %562 = vst.msk [vmem:[#allocation2 + $0x118] sm:$0xff] %vm243, %v545
      %v563 = vld [vmem:[%s192] sm:$0xff]
      %v564 = vld [vmem:[%s192 + $0x8] sm:$0xf]
      %v565 = vld [vmem:[%s192 + $0x10] sm:$0xff]
      %v566 = vld [vmem:[%s192 + $0x18] sm:$0xf]
      %v567 = vld [vmem:[%s192 + $0x20] sm:$0xff]
      %v568 = vld [vmem:[%s192 + $0x28] sm:$0xf]
      %v569 = vld [vmem:[%s192 + $0x30] sm:$0xff]
      %v570 = vld [vmem:[%s192 + $0x38] sm:$0xf]
      %v579 = vunpack.c.l.b16 %v563
      %v580 = vunpack.c.h.b16 %v563
      %v581 = vunpack.c.l.b16 %v564
      %v582 = vunpack.c.l.b16 %v565
      %v583 = vunpack.c.h.b16 %v565
      %v584 = vunpack.c.l.b16 %v566
      %v585 = vunpack.c.l.b16 %v567
      %v586 = vunpack.c.h.b16 %v567
      %v587 = vunpack.c.l.b16 %v568
      %v588 = vunpack.c.l.b16 %v569
      %v589 = vunpack.c.h.b16 %v569
      %v590 = vunpack.c.l.b16 %v570
      %v591 = vpack.c.b16 %v582, %v579
      %v592 = vpack.c.b16 %v583, %v580
      %v593 = vpack.c.b16 %v584, %v581
      %v594 = vpack.c.b16 %v588, %v585
      %v595 = vpack.c.b16 %v589, %v586
      %v596 = vpack.c.b16 %v590, %v587
      %597 = vrot.lane.b32.xlu0 %v591, 122
      %v598 = vpop.permute.xlu0 %597
      %599 = vrot.lane.b32.xlu0 %v592, 122
      %v600 = vpop.permute.xlu0 %599
      %601 = vrot.lane.b32.xlu0 %v593, 122
      %v602 = vpop.permute.xlu0 %601
      %603 = vrot.lane.b32.xlu0 %v594, 122
      %v604 = vpop.permute.xlu0 %603
      %605 = vrot.lane.b32.xlu0 %v595, 122
      %v606 = vpop.permute.xlu0 %605
      %607 = vrot.lane.b32.xlu0 %v596, 122
      %v608 = vpop.permute.xlu0 %607
      %vm609 = vcmask 998400
      %v610 = vsel %vm609, %v598, %v600
      %v611 = vsel %vm609, %v600, %v602
      %v612 = vsel %vm609, %v604, %v606
      %v613 = vsel %vm609, %v606, %v608
      %620 = vst [vmem:[#allocation2 + $0x120] sm:$0xff] %v610
      %621 = vst [vmem:[#allocation2 + $0x128] sm:$0xff] %v611
      %622 = vst.msk [vmem:[#allocation2 + $0x130] sm:$0xff] %vm243, %v602
      %623 = vst [vmem:[#allocation2 + $0x138] sm:$0xff] %v612
      %624 = vst [vmem:[#allocation2 + $0x140] sm:$0xff] %v613
      %625 = vst.msk [vmem:[#allocation2 + $0x148] sm:$0xff] %vm243, %v608
      %v626 = vld [vmem:[%s192] sm:$0xff]
      %v627 = vld [vmem:[%s192 + $0x8] sm:$0xf]
      %v628 = vld [vmem:[%s192 + $0x10] sm:$0xff]
      %v629 = vld [vmem:[%s192 + $0x18] sm:$0xf]
      %v630 = vld [vmem:[%s192 + $0x20] sm:$0xff]
      %v631 = vld [vmem:[%s192 + $0x28] sm:$0xf]
      %v632 = vld [vmem:[%s192 + $0x30] sm:$0xff]
      %v633 = vld [vmem:[%s192 + $0x38] sm:$0xf]
      %v642 = vunpack.c.l.b16 %v626
      %v643 = vunpack.c.h.b16 %v626
      %v644 = vunpack.c.l.b16 %v627
      %v645 = vunpack.c.l.b16 %v628
      %v646 = vunpack.c.h.b16 %v628
      %v647 = vunpack.c.l.b16 %v629
      %v648 = vunpack.c.l.b16 %v630
      %v649 = vunpack.c.h.b16 %v630
      %v650 = vunpack.c.l.b16 %v631
      %v651 = vunpack.c.l.b16 %v632
      %v652 = vunpack.c.h.b16 %v632
      %v653 = vunpack.c.l.b16 %v633
      %v654 = vpack.c.b16 %v645, %v642
      %v655 = vpack.c.b16 %v646, %v643
      %v656 = vpack.c.b16 %v647, %v644
      %v657 = vpack.c.b16 %v651, %v648
      %v658 = vpack.c.b16 %v652, %v649
      %v659 = vpack.c.b16 %v653, %v650
      %660 = vrot.lane.b32.xlu0 %v654, 106
      %v661 = vpop.permute.xlu0 %660
      %662 = vrot.lane.b32.xlu0 %v655, 106
      %v663 = vpop.permute.xlu0 %662
      %664 = vrot.lane.b32.xlu0 %v656, 106
      %v665 = vpop.permute.xlu0 %664
      %666 = vrot.lane.b32.xlu0 %v657, 106
      %v667 = vpop.permute.xlu0 %666
      %668 = vrot.lane.b32.xlu0 %v658, 106
      %v669 = vpop.permute.xlu0 %668
      %670 = vrot.lane.b32.xlu0 %v659, 106
      %v671 = vpop.permute.xlu0 %670
      %vm672 = vcmask 867328
      %v673 = vsel %vm672, %v661, %v663
      %v674 = vsel %vm672, %v663, %v665
      %v675 = vsel %vm672, %v667, %v669
      %v676 = vsel %vm672, %v669, %v671
      %683 = vst [vmem:[#allocation2 + $0x150] sm:$0xff] %v673
      %684 = vst [vmem:[#allocation2 + $0x158] sm:$0xff] %v674
      %685 = vst.msk [vmem:[#allocation2 + $0x160] sm:$0xff] %vm243, %v665
      %686 = vst [vmem:[#allocation2 + $0x168] sm:$0xff] %v675
      %687 = vst [vmem:[#allocation2 + $0x170] sm:$0xff] %v676
      %688 = vst.msk [vmem:[#allocation2 + $0x178] sm:$0xff] %vm243, %v671
      %v689 = vld [vmem:[%s192] sm:$0xff]
      %v690 = vld [vmem:[%s192 + $0x8] sm:$0xf]
      %v691 = vld [vmem:[%s192 + $0x10] sm:$0xff]
      %v692 = vld [vmem:[%s192 + $0x18] sm:$0xf]
      %v693 = vld [vmem:[%s192 + $0x20] sm:$0xff]
      %v694 = vld [vmem:[%s192 + $0x28] sm:$0xf]
      %v695 = vld [vmem:[%s192 + $0x30] sm:$0xff]
      %v696 = vld [vmem:[%s192 + $0x38] sm:$0xf]
      %v705 = vunpack.c.l.b16 %v689
      %v706 = vunpack.c.h.b16 %v689
      %v707 = vunpack.c.l.b16 %v690
      %v708 = vunpack.c.l.b16 %v691
      %v709 = vunpack.c.h.b16 %v691
      %v710 = vunpack.c.l.b16 %v692
      %v711 = vunpack.c.l.b16 %v693
      %v712 = vunpack.c.h.b16 %v693
      %v713 = vunpack.c.l.b16 %v694
      %v714 = vunpack.c.l.b16 %v695
      %v715 = vunpack.c.h.b16 %v695
      %v716 = vunpack.c.l.b16 %v696
      %v717 = vpack.c.b16 %v708, %v705
      %v718 = vpack.c.b16 %v709, %v706
      %v719 = vpack.c.b16 %v710, %v707
      %v720 = vpack.c.b16 %v714, %v711
      %v721 = vpack.c.b16 %v715, %v712
      %v722 = vpack.c.b16 %v716, %v713
      %723 = vrot.lane.b32.xlu0 %v717, 105
      %v724 = vpop.permute.xlu0 %723
      %725 = vrot.lane.b32.xlu0 %v718, 105
      %v726 = vpop.permute.xlu0 %725
      %727 = vrot.lane.b32.xlu0 %v719, 105
      %v728 = vpop.permute.xlu0 %727
      %729 = vrot.lane.b32.xlu0 %v720, 105
      %v730 = vpop.permute.xlu0 %729
      %731 = vrot.lane.b32.xlu0 %v721, 105
      %v732 = vpop.permute.xlu0 %731
      %733 = vrot.lane.b32.xlu0 %v722, 105
      %v734 = vpop.permute.xlu0 %733
      %vm735 = vcmask 859136
      %v736 = vsel %vm735, %v724, %v726
      %v737 = vsel %vm735, %v726, %v728
      %v738 = vsel %vm735, %v730, %v732
      %v739 = vsel %vm735, %v732, %v734
      %746 = vst [vmem:[#allocation2 + $0x180] sm:$0xff] %v736
      %747 = vst [vmem:[#allocation2 + $0x188] sm:$0xff] %v737
      %748 = vst.msk [vmem:[#allocation2 + $0x190] sm:$0xff] %vm243, %v728
      %749 = vst [vmem:[#allocation2 + $0x198] sm:$0xff] %v738
      %750 = vst [vmem:[#allocation2 + $0x1a0] sm:$0xff] %v739
      %751 = vst.msk [vmem:[#allocation2 + $0x1a8] sm:$0xff] %vm243, %v734
      %v752 = vld [vmem:[%s192] sm:$0xff]
      %v753 = vld [vmem:[%s192 + $0x8] sm:$0xf]
      %v754 = vld [vmem:[%s192 + $0x10] sm:$0xff]
      %v755 = vld [vmem:[%s192 + $0x18] sm:$0xf]
      %v756 = vld [vmem:[%s192 + $0x20] sm:$0xff]
      %v757 = vld [vmem:[%s192 + $0x28] sm:$0xf]
      %v758 = vld [vmem:[%s192 + $0x30] sm:$0xff]
      %v759 = vld [vmem:[%s192 + $0x38] sm:$0xf]
      %v768 = vunpack.c.l.b16 %v752
      %v769 = vunpack.c.h.b16 %v752
      %v770 = vunpack.c.l.b16 %v753
      %v771 = vunpack.c.l.b16 %v754
      %v772 = vunpack.c.h.b16 %v754
      %v773 = vunpack.c.l.b16 %v755
      %v774 = vunpack.c.l.b16 %v756
      %v775 = vunpack.c.h.b16 %v756
      %v776 = vunpack.c.l.b16 %v757
      %v777 = vunpack.c.l.b16 %v758
      %v778 = vunpack.c.h.b16 %v758
      %v779 = vunpack.c.l.b16 %v759
      %v780 = vpack.c.b16 %v771, %v768
      %v781 = vpack.c.b16 %v772, %v769
      %v782 = vpack.c.b16 %v773, %v770
      %v783 = vpack.c.b16 %v777, %v774
      %v784 = vpack.c.b16 %v778, %v775
      %v785 = vpack.c.b16 %v779, %v776
      %786 = vrot.lane.b32.xlu0 %v780, 104
      %v787 = vpop.permute.xlu0 %786
      %788 = vrot.lane.b32.xlu0 %v781, 104
      %v789 = vpop.permute.xlu0 %788
      %790 = vrot.lane.b32.xlu0 %v782, 104
      %v791 = vpop.permute.xlu0 %790
      %792 = vrot.lane.b32.xlu0 %v783, 104
      %v793 = vpop.permute.xlu0 %792
      %794 = vrot.lane.b32.xlu0 %v784, 104
      %v795 = vpop.permute.xlu0 %794
      %796 = vrot.lane.b32.xlu0 %v785, 104
      %v797 = vpop.permute.xlu0 %796
      %vm798 = vcmask 850944
      %v799 = vsel %vm798, %v787, %v789
      %v800 = vsel %vm798, %v789, %v791
      %v801 = vsel %vm798, %v793, %v795
      %v802 = vsel %vm798, %v795, %v797
      %809 = vst [vmem:[#allocation2 + $0x1b0] sm:$0xff] %v799
      %810 = vst [vmem:[#allocation2 + $0x1b8] sm:$0xff] %v800
      %811 = vst.msk [vmem:[#allocation2 + $0x1c0] sm:$0xff] %vm243, %v791
      %812 = vst [vmem:[#allocation2 + $0x1c8] sm:$0xff] %v801
      %813 = vst [vmem:[#allocation2 + $0x1d0] sm:$0xff] %v802
      %814 = vst.msk [vmem:[#allocation2 + $0x1d8] sm:$0xff] %vm243, %v797
      %v815 = vld [vmem:[%s192] sm:$0xff]
      %v816 = vld [vmem:[%s192 + $0x8] sm:$0xf]
      %v817 = vld [vmem:[%s192 + $0x10] sm:$0xff]
      %v818 = vld [vmem:[%s192 + $0x18] sm:$0xf]
      %v819 = vld [vmem:[%s192 + $0x20] sm:$0xff]
      %v820 = vld [vmem:[%s192 + $0x28] sm:$0xf]
      %v821 = vld [vmem:[%s192 + $0x30] sm:$0xff]
      %v822 = vld [vmem:[%s192 + $0x38] sm:$0xf]
      %v831 = vunpack.c.l.b16 %v815
      %v832 = vunpack.c.h.b16 %v815
      %v833 = vunpack.c.l.b16 %v816
      %v834 = vunpack.c.l.b16 %v817
      %v835 = vunpack.c.h.b16 %v817
      %v836 = vunpack.c.l.b16 %v818
      %v837 = vunpack.c.l.b16 %v819
      %v838 = vunpack.c.h.b16 %v819
      %v839 = vunpack.c.l.b16 %v820
      %v840 = vunpack.c.l.b16 %v821
      %v841 = vunpack.c.h.b16 %v821
      %v842 = vunpack.c.l.b16 %v822
      %v843 = vpack.c.b16 %v834, %v831
      %v844 = vpack.c.b16 %v835, %v832
      %v845 = vpack.c.b16 %v836, %v833
      %v846 = vpack.c.b16 %v840, %v837
      %v847 = vpack.c.b16 %v841, %v838
      %v848 = vpack.c.b16 %v842, %v839
      %849 = vrot.lane.b32.xlu0 %v843, 103
      %v850 = vpop.permute.xlu0 %849
      %851 = vrot.lane.b32.xlu0 %v844, 103
      %v852 = vpop.permute.xlu0 %851
      %853 = vrot.lane.b32.xlu0 %v845, 103
      %v854 = vpop.permute.xlu0 %853
      %855 = vrot.lane.b32.xlu0 %v846, 103
      %v856 = vpop.permute.xlu0 %855
      %857 = vrot.lane.b32.xlu0 %v847, 103
      %v858 = vpop.permute.xlu0 %857
      %859 = vrot.lane.b32.xlu0 %v848, 103
      %v860 = vpop.permute.xlu0 %859
      %vm861 = vcmask 842752
      %v862 = vsel %vm861, %v850, %v852
      %v863 = vsel %vm861, %v852, %v854
      %v864 = vsel %vm861, %v856, %v858
      %v865 = vsel %vm861, %v858, %v860
      %872 = vst [vmem:[#allocation2 + $0x1e0] sm:$0xff] %v862
      %873 = vst [vmem:[#allocation2 + $0x1e8] sm:$0xff] %v863
      %874 = vst.msk [vmem:[#allocation2 + $0x1f0] sm:$0xff] %vm243, %v854
      %875 = vst [vmem:[#allocation2 + $0x1f8] sm:$0xff] %v864
      %876 = vst [vmem:[#allocation2 + $0x200] sm:$0xff] %v865
      %877 = vst.msk [vmem:[#allocation2 + $0x208] sm:$0xff] %vm243, %v860
      %v878 = vld [vmem:[%s192] sm:$0xff]
      %v879 = vld [vmem:[%s192 + $0x8] sm:$0xf]
      %v880 = vld [vmem:[%s192 + $0x10] sm:$0xff]
      %v881 = vld [vmem:[%s192 + $0x18] sm:$0xf]
      %v882 = vld [vmem:[%s192 + $0x20] sm:$0xff]
      %v883 = vld [vmem:[%s192 + $0x28] sm:$0xf]
      %v884 = vld [vmem:[%s192 + $0x30] sm:$0xff]
      %v885 = vld [vmem:[%s192 + $0x38] sm:$0xf]
      %v894 = vunpack.c.l.b16 %v878
      %v895 = vunpack.c.h.b16 %v878
      %v896 = vunpack.c.l.b16 %v879
      %v897 = vunpack.c.l.b16 %v880
      %v898 = vunpack.c.h.b16 %v880
      %v899 = vunpack.c.l.b16 %v881
      %v900 = vunpack.c.l.b16 %v882
      %v901 = vunpack.c.h.b16 %v882
      %v902 = vunpack.c.l.b16 %v883
      %v903 = vunpack.c.l.b16 %v884
      %v904 = vunpack.c.h.b16 %v884
      %v905 = vunpack.c.l.b16 %v885
      %v906 = vpack.c.b16 %v897, %v894
      %v907 = vpack.c.b16 %v898, %v895
      %v908 = vpack.c.b16 %v899, %v896
      %v909 = vpack.c.b16 %v903, %v900
      %v910 = vpack.c.b16 %v904, %v901
      %v911 = vpack.c.b16 %v905, %v902
      %912 = vrot.lane.b32.xlu0 %v906, 102
      %v913 = vpop.permute.xlu0 %912
      %914 = vrot.lane.b32.xlu0 %v907, 102
      %v915 = vpop.permute.xlu0 %914
      %916 = vrot.lane.b32.xlu0 %v908, 102
      %v917 = vpop.permute.xlu0 %916
      %918 = vrot.lane.b32.xlu0 %v909, 102
      %v919 = vpop.permute.xlu0 %918
      %920 = vrot.lane.b32.xlu0 %v910, 102
      %v921 = vpop.permute.xlu0 %920
      %922 = vrot.lane.b32.xlu0 %v911, 102
      %v923 = vpop.permute.xlu0 %922
      %vm924 = vcmask 834560
      %v925 = vsel %vm924, %v913, %v915
      %v926 = vsel %vm924, %v915, %v917
      %v927 = vsel %vm924, %v919, %v921
      %v928 = vsel %vm924, %v921, %v923
      %935 = vst [vmem:[#allocation2 + $0x210] sm:$0xff] %v925
      %936 = vst [vmem:[#allocation2 + $0x218] sm:$0xff] %v926
      %937 = vst.msk [vmem:[#allocation2 + $0x220] sm:$0xff] %vm243, %v917
      %938 = vst [vmem:[#allocation2 + $0x228] sm:$0xff] %v927
      %939 = vst [vmem:[#allocation2 + $0x230] sm:$0xff] %v928
      %940 = vst.msk [vmem:[#allocation2 + $0x238] sm:$0xff] %vm243, %v923
      %v941 = vld [vmem:[%s192] sm:$0xff]
      %v942 = vld [vmem:[%s192 + $0x8] sm:$0xf]
      %v943 = vld [vmem:[%s192 + $0x10] sm:$0xff]
      %v944 = vld [vmem:[%s192 + $0x18] sm:$0xf]
      %v945 = vld [vmem:[%s192 + $0x20] sm:$0xff]
      %v946 = vld [vmem:[%s192 + $0x28] sm:$0xf]
      %v947 = vld [vmem:[%s192 + $0x30] sm:$0xff]
      %v948 = vld [vmem:[%s192 + $0x38] sm:$0xf]
      %v957 = vunpack.c.l.b16 %v941
      %v958 = vunpack.c.h.b16 %v941
      %v959 = vunpack.c.l.b16 %v942
      %v960 = vunpack.c.l.b16 %v943
      %v961 = vunpack.c.h.b16 %v943
      %v962 = vunpack.c.l.b16 %v944
      %v963 = vunpack.c.l.b16 %v945
      %v964 = vunpack.c.h.b16 %v945
      %v965 = vunpack.c.l.b16 %v946
      %v966 = vunpack.c.l.b16 %v947
      %v967 = vunpack.c.h.b16 %v947
      %v968 = vunpack.c.l.b16 %v948
      %v969 = vpack.c.b16 %v960, %v957
      %v970 = vpack.c.b16 %v961, %v958
      %v971 = vpack.c.b16 %v962, %v959
      %v972 = vpack.c.b16 %v966, %v963
      %v973 = vpack.c.b16 %v967, %v964
      %v974 = vpack.c.b16 %v968, %v965
      %975 = vrot.lane.b32.xlu0 %v969, 101
      %v976 = vpop.permute.xlu0 %975
      %977 = vrot.lane.b32.xlu0 %v970, 101
      %v978 = vpop.permute.xlu0 %977
      %979 = vrot.lane.b32.xlu0 %v971, 101
      %v980 = vpop.permute.xlu0 %979
      %981 = vrot.lane.b32.xlu0 %v972, 101
      %v982 = vpop.permute.xlu0 %981
      %983 = vrot.lane.b32.xlu0 %v973, 101
      %v984 = vpop.permute.xlu0 %983
      %985 = vrot.lane.b32.xlu0 %v974, 101
      %v986 = vpop.permute.xlu0 %985
      %vm987 = vcmask 826368
      %v988 = vsel %vm987, %v976, %v978
      %v989 = vsel %vm987, %v978, %v980
      %v990 = vsel %vm987, %v982, %v984
      %v991 = vsel %vm987, %v984, %v986
      %998 = vst [vmem:[#allocation2 + $0x240] sm:$0xff] %v988
      %999 = vst [vmem:[#allocation2 + $0x248] sm:$0xff] %v989
      %1000 = vst.msk [vmem:[#allocation2 + $0x250] sm:$0xff] %vm243, %v980
      %1001 = vst [vmem:[#allocation2 + $0x258] sm:$0xff] %v990
      %1002 = vst [vmem:[#allocation2 + $0x260] sm:$0xff] %v991
      %1003 = vst.msk [vmem:[#allocation2 + $0x268] sm:$0xff] %vm243, %v986
      %v1004 = vld [vmem:[%s192] sm:$0xff]
      %v1005 = vld [vmem:[%s192 + $0x8] sm:$0xf]
      %v1006 = vld [vmem:[%s192 + $0x10] sm:$0xff]
      %v1007 = vld [vmem:[%s192 + $0x18] sm:$0xf]
      %v1008 = vld [vmem:[%s192 + $0x20] sm:$0xff]
      %v1009 = vld [vmem:[%s192 + $0x28] sm:$0xf]
      %v1010 = vld [vmem:[%s192 + $0x30] sm:$0xff]
      %v1011 = vld [vmem:[%s192 + $0x38] sm:$0xf]
      %v1020 = vunpack.c.l.b16 %v1004
      %v1021 = vunpack.c.h.b16 %v1004
      %v1022 = vunpack.c.l.b16 %v1005
      %v1023 = vunpack.c.l.b16 %v1006
      %v1024 = vunpack.c.h.b16 %v1006
      %v1025 = vunpack.c.l.b16 %v1007
      %v1026 = vunpack.c.l.b16 %v1008
      %v1027 = vunpack.c.h.b16 %v1008
      %v1028 = vunpack.c.l.b16 %v1009
      %v1029 = vunpack.c.l.b16 %v1010
      %v1030 = vunpack.c.h.b16 %v1010
      %v1031 = vunpack.c.l.b16 %v1011
      %v1032 = vpack.c.b16 %v1023, %v1020
      %v1033 = vpack.c.b16 %v1024, %v1021
      %v1034 = vpack.c.b16 %v1025, %v1022
      %v1035 = vpack.c.b16 %v1029, %v1026
      %v1036 = vpack.c.b16 %v1030, %v1027
      %v1037 = vpack.c.b16 %v1031, %v1028
      %1038 = vrot.lane.b32.xlu0 %v1032, 100
      %v1039 = vpop.permute.xlu0 %1038
      %1040 = vrot.lane.b32.xlu0 %v1033, 100
      %v1041 = vpop.permute.xlu0 %1040
      %1042 = vrot.lane.b32.xlu0 %v1034, 100
      %v1043 = vpop.permute.xlu0 %1042
      %1044 = vrot.lane.b32.xlu0 %v1035, 100
      %v1045 = vpop.permute.xlu0 %1044
      %1046 = vrot.lane.b32.xlu0 %v1036, 100
      %v1047 = vpop.permute.xlu0 %1046
      %1048 = vrot.lane.b32.xlu0 %v1037, 100
      %v1049 = vpop.permute.xlu0 %1048
      %vm1050 = vcmask 818176
      %v1051 = vsel %vm1050, %v1039, %v1041
      %v1052 = vsel %vm1050, %v1041, %v1043
      %v1053 = vsel %vm1050, %v1045, %v1047
      %v1054 = vsel %vm1050, %v1047, %v1049
      %1061 = vst [vmem:[#allocation2 + $0x270] sm:$0xff] %v1051
      %1062 = vst [vmem:[#allocation2 + $0x278] sm:$0xff] %v1052
      %1063 = vst.msk [vmem:[#allocation2 + $0x280] sm:$0xff] %vm243, %v1043
      %1064 = vst [vmem:[#allocation2 + $0x288] sm:$0xff] %v1053
      %1065 = vst [vmem:[#allocation2 + $0x290] sm:$0xff] %v1054
      %1066 = vst.msk [vmem:[#allocation2 + $0x298] sm:$0xff] %vm243, %v1049
      %v1067 = vld [vmem:[%s192] sm:$0xff]
      %v1068 = vld [vmem:[%s192 + $0x8] sm:$0xff]
      %v1069 = vld [vmem:[%s192 + $0x10] sm:$0xff]
      %v1070 = vld [vmem:[%s192 + $0x18] sm:$0xff]
      %v1071 = vld [vmem:[%s192 + $0x20] sm:$0xff]
      %v1072 = vld [vmem:[%s192 + $0x28] sm:$0xff]
      %v1073 = vld [vmem:[%s192 + $0x30] sm:$0xff]
      %v1074 = vld [vmem:[%s192 + $0x38] sm:$0xff]
      %v1083 = vunpack.c.l.b16 %v1067
      %v1084 = vunpack.c.h.b16 %v1067
      %v1085 = vunpack.c.l.b16 %v1068
      %v1086 = vunpack.c.h.b16 %v1068
      %v1087 = vunpack.c.l.b16 %v1069
      %v1088 = vunpack.c.h.b16 %v1069
      %v1089 = vunpack.c.l.b16 %v1070
      %v1090 = vunpack.c.h.b16 %v1070
      %v1091 = vunpack.c.l.b16 %v1071
      %v1092 = vunpack.c.h.b16 %v1071
      %v1093 = vunpack.c.l.b16 %v1072
      %v1094 = vunpack.c.h.b16 %v1072
      %v1095 = vunpack.c.l.b16 %v1073
      %v1096 = vunpack.c.h.b16 %v1073
      %v1097 = vunpack.c.l.b16 %v1074
      %v1098 = vunpack.c.h.b16 %v1074
      %v1099 = vpack.c.b16 %v1087, %v1083
      %v1100 = vpack.c.b16 %v1088, %v1084
      %v1101 = vpack.c.b16 %v1089, %v1085
      %v1102 = vpack.c.b16 %v1090, %v1086
      %v1103 = vpack.c.b16 %v1095, %v1091
      %v1104 = vpack.c.b16 %v1096, %v1092
      %v1105 = vpack.c.b16 %v1097, %v1093
      %v1106 = vpack.c.b16 %v1098, %v1094
      %1107 = vrot.lane.b32.xlu0 %v1099, 84
      %v1108 = vpop.permute.xlu0 %1107
      %1109 = vrot.lane.b32.xlu0 %v1100, 84
      %v1110 = vpop.permute.xlu0 %1109
      %1111 = vrot.lane.b32.xlu0 %v1101, 84
      %v1112 = vpop.permute.xlu0 %1111
      %1113 = vrot.lane.b32.xlu0 %v1102, 84
      %v1114 = vpop.permute.xlu0 %1113
      %1115 = vrot.lane.b32.xlu0 %v1103, 84
      %v1116 = vpop.permute.xlu0 %1115
      %1117 = vrot.lane.b32.xlu0 %v1104, 84
      %v1118 = vpop.permute.xlu0 %1117
      %1119 = vrot.lane.b32.xlu0 %v1105, 84
      %v1120 = vpop.permute.xlu0 %1119
      %1121 = vrot.lane.b32.xlu0 %v1106, 84
      %v1122 = vpop.permute.xlu0 %1121
      %vm1123 = vcmask 687104
      %v1124 = vsel %vm1123, %v1108, %v1110
      %v1125 = vsel %vm1123, %v1110, %v1112
      %v1126 = vsel %vm1123, %v1112, %v1114
      %v1127 = vsel %vm1123, %v1116, %v1118
      %v1128 = vsel %vm1123, %v1118, %v1120
      %v1129 = vsel %vm1123, %v1120, %v1122
      %1136 = vst [vmem:[#allocation2 + $0x2a0] sm:$0xff] %v1124
      %1137 = vst [vmem:[#allocation2 + $0x2a8] sm:$0xff] %v1125
      %1138 = vst.msk [vmem:[#allocation2 + $0x2b0] sm:$0xff] %vm243, %v1126
      %1139 = vst [vmem:[#allocation2 + $0x2b8] sm:$0xff] %v1127
      %1140 = vst [vmem:[#allocation2 + $0x2c0] sm:$0xff] %v1128
      %1141 = vst.msk [vmem:[#allocation2 + $0x2c8] sm:$0xff] %vm243, %v1129
      %v1142 = vld [vmem:[%s192] sm:$0xff]
      %v1143 = vld [vmem:[%s192 + $0x8] sm:$0xff]
      %v1144 = vld [vmem:[%s192 + $0x10] sm:$0xff]
      %v1145 = vld [vmem:[%s192 + $0x18] sm:$0xff]
      %v1146 = vld [vmem:[%s192 + $0x20] sm:$0xff]
      %v1147 = vld [vmem:[%s192 + $0x28] sm:$0xff]
      %v1148 = vld [vmem:[%s192 + $0x30] sm:$0xff]
      %v1149 = vld [vmem:[%s192 + $0x38] sm:$0xff]
      %v1158 = vunpack.c.l.b16 %v1142
      %v1159 = vunpack.c.h.b16 %v1142
      %v1160 = vunpack.c.l.b16 %v1143
      %v1161 = vunpack.c.h.b16 %v1143
      %v1162 = vunpack.c.l.b16 %v1144
      %v1163 = vunpack.c.h.b16 %v1144
      %v1164 = vunpack.c.l.b16 %v1145
      %v1165 = vunpack.c.h.b16 %v1145
      %v1166 = vunpack.c.l.b16 %v1146
      %v1167 = vunpack.c.h.b16 %v1146
      %v1168 = vunpack.c.l.b16 %v1147
      %v1169 = vunpack.c.h.b16 %v1147
      %v1170 = vunpack.c.l.b16 %v1148
      %v1171 = vunpack.c.h.b16 %v1148
      %v1172 = vunpack.c.l.b16 %v1149
      %v1173 = vunpack.c.h.b16 %v1149
      %v1174 = vpack.c.b16 %v1162, %v1158
      %v1175 = vpack.c.b16 %v1163, %v1159
      %v1176 = vpack.c.b16 %v1164, %v1160
      %v1177 = vpack.c.b16 %v1165, %v1161
      %v1178 = vpack.c.b16 %v1170, %v1166
      %v1179 = vpack.c.b16 %v1171, %v1167
      %v1180 = vpack.c.b16 %v1172, %v1168
      %v1181 = vpack.c.b16 %v1173, %v1169
      %1182 = vrot.lane.b32.xlu0 %v1174, 83
      %v1183 = vpop.permute.xlu0 %1182
      %1184 = vrot.lane.b32.xlu0 %v1175, 83
      %v1185 = vpop.permute.xlu0 %1184
      %1186 = vrot.lane.b32.xlu0 %v1176, 83
      %v1187 = vpop.permute.xlu0 %1186
      %1188 = vrot.lane.b32.xlu0 %v1177, 83
      %v1189 = vpop.permute.xlu0 %1188
      %1190 = vrot.lane.b32.xlu0 %v1178, 83
      %v1191 = vpop.permute.xlu0 %1190
      %1192 = vrot.lane.b32.xlu0 %v1179, 83
      %v1193 = vpop.permute.xlu0 %1192
      %1194 = vrot.lane.b32.xlu0 %v1180, 83
      %v1195 = vpop.permute.xlu0 %1194
      %1196 = vrot.lane.b32.xlu0 %v1181, 83
      %v1197 = vpop.permute.xlu0 %1196
      %vm1198 = vcmask 678912
      %v1199 = vsel %vm1198, %v1183, %v1185
      %v1200 = vsel %vm1198, %v1185, %v1187
      %v1201 = vsel %vm1198, %v1187, %v1189
      %v1202 = vsel %vm1198, %v1191, %v1193
      %v1203 = vsel %vm1198, %v1193, %v1195
      %v1204 = vsel %vm1198, %v1195, %v1197
      %1211 = vst [vmem:[#allocation2 + $0x2d0] sm:$0xff] %v1199
      %1212 = vst [vmem:[#allocation2 + $0x2d8] sm:$0xff] %v1200
      %1213 = vst.msk [vmem:[#allocation2 + $0x2e0] sm:$0xff] %vm243, %v1201
      %1214 = vst [vmem:[#allocation2 + $0x2e8] sm:$0xff] %v1202
      %1215 = vst [vmem:[#allocation2 + $0x2f0] sm:$0xff] %v1203
      %1216 = vst.msk [vmem:[#allocation2 + $0x2f8] sm:$0xff] %vm243, %v1204
      %v1217 = vld [vmem:[%s192] sm:$0xff]
      %v1218 = vld [vmem:[%s192 + $0x8] sm:$0xff]
      %v1219 = vld [vmem:[%s192 + $0x10] sm:$0xff]
      %v1220 = vld [vmem:[%s192 + $0x18] sm:$0xff]
      %v1221 = vld [vmem:[%s192 + $0x20] sm:$0xff]
      %v1222 = vld [vmem:[%s192 + $0x28] sm:$0xff]
      %v1223 = vld [vmem:[%s192 + $0x30] sm:$0xff]
      %v1224 = vld [vmem:[%s192 + $0x38] sm:$0xff]
      %v1233 = vunpack.c.l.b16 %v1217
      %v1234 = vunpack.c.h.b16 %v1217
      %v1235 = vunpack.c.l.b16 %v1218
      %v1236 = vunpack.c.h.b16 %v1218
      %v1237 = vunpack.c.l.b16 %v1219
      %v1238 = vunpack.c.h.b16 %v1219
      %v1239 = vunpack.c.l.b16 %v1220
      %v1240 = vunpack.c.h.b16 %v1220
      %v1241 = vunpack.c.l.b16 %v1221
      %v1242 = vunpack.c.h.b16 %v1221
      %v1243 = vunpack.c.l.b16 %v1222
      %v1244 = vunpack.c.h.b16 %v1222
      %v1245 = vunpack.c.l.b16 %v1223
      %v1246 = vunpack.c.h.b16 %v1223
      %v1247 = vunpack.c.l.b16 %v1224
      %v1248 = vunpack.c.h.b16 %v1224
      %v1249 = vpack.c.b16 %v1237, %v1233
      %v1250 = vpack.c.b16 %v1238, %v1234
      %v1251 = vpack.c.b16 %v1239, %v1235
      %v1252 = vpack.c.b16 %v1240, %v1236
      %v1253 = vpack.c.b16 %v1245, %v1241
      %v1254 = vpack.c.b16 %v1246, %v1242
      %v1255 = vpack.c.b16 %v1247, %v1243
      %v1256 = vpack.c.b16 %v1248, %v1244
      %1257 = vrot.lane.b32.xlu0 %v1249, 82
      %v1258 = vpop.permute.xlu0 %1257
      %1259 = vrot.lane.b32.xlu0 %v1250, 82
      %v1260 = vpop.permute.xlu0 %1259
      %1261 = vrot.lane.b32.xlu0 %v1251, 82
      %v1262 = vpop.permute.xlu0 %1261
      %1263 = vrot.lane.b32.xlu0 %v1252, 82
      %v1264 = vpop.permute.xlu0 %1263
      %1265 = vrot.lane.b32.xlu0 %v1253, 82
      %v1266 = vpop.permute.xlu0 %1265
      %1267 = vrot.lane.b32.xlu0 %v1254, 82
      %v1268 = vpop.permute.xlu0 %1267
      %1269 = vrot.lane.b32.xlu0 %v1255, 82
      %v1270 = vpop.permute.xlu0 %1269
      %1271 = vrot.lane.b32.xlu0 %v1256, 82
      %v1272 = vpop.permute.xlu0 %1271
      %vm1273 = vcmask 670720
      %v1274 = vsel %vm1273, %v1258, %v1260
      %v1275 = vsel %vm1273, %v1260, %v1262
      %v1276 = vsel %vm1273, %v1262, %v1264
      %v1277 = vsel %vm1273, %v1266, %v1268
      %v1278 = vsel %vm1273, %v1268, %v1270
      %v1279 = vsel %vm1273, %v1270, %v1272
      %1286 = vst [vmem:[#allocation2 + $0x300] sm:$0xff] %v1274
      %1287 = vst [vmem:[#allocation2 + $0x308] sm:$0xff] %v1275
      %1288 = vst.msk [vmem:[#allocation2 + $0x310] sm:$0xff] %vm243, %v1276
      %1289 = vst [vmem:[#allocation2 + $0x318] sm:$0xff] %v1277
      %1290 = vst [vmem:[#allocation2 + $0x320] sm:$0xff] %v1278
      %1291 = vst.msk [vmem:[#allocation2 + $0x328] sm:$0xff] %vm243, %v1279
      %v1292 = vld [vmem:[%s192] sm:$0xff]
      %v1293 = vld [vmem:[%s192 + $0x8] sm:$0xff]
      %v1294 = vld [vmem:[%s192 + $0x10] sm:$0xff]
      %v1295 = vld [vmem:[%s192 + $0x18] sm:$0xff]
      %v1296 = vld [vmem:[%s192 + $0x20] sm:$0xff]
      %v1297 = vld [vmem:[%s192 + $0x28] sm:$0xff]
      %v1298 = vld [vmem:[%s192 + $0x30] sm:$0xff]
      %v1299 = vld [vmem:[%s192 + $0x38] sm:$0xff]
      %v1308 = vunpack.c.l.b16 %v1292
      %v1309 = vunpack.c.h.b16 %v1292
      %v1310 = vunpack.c.l.b16 %v1293
      %v1311 = vunpack.c.h.b16 %v1293
      %v1312 = vunpack.c.l.b16 %v1294
      %v1313 = vunpack.c.h.b16 %v1294
      %v1314 = vunpack.c.l.b16 %v1295
      %v1315 = vunpack.c.h.b16 %v1295
      %v1316 = vunpack.c.l.b16 %v1296
      %v1317 = vunpack.c.h.b16 %v1296
      %v1318 = vunpack.c.l.b16 %v1297
      %v1319 = vunpack.c.h.b16 %v1297
      %v1320 = vunpack.c.l.b16 %v1298
      %v1321 = vunpack.c.h.b16 %v1298
      %v1322 = vunpack.c.l.b16 %v1299
      %v1323 = vunpack.c.h.b16 %v1299
      %v1324 = vpack.c.b16 %v1312, %v1308
      %v1325 = vpack.c.b16 %v1313, %v1309
      %v1326 = vpack.c.b16 %v1314, %v1310
      %v1327 = vpack.c.b16 %v1315, %v1311
      %v1328 = vpack.c.b16 %v1320, %v1316
      %v1329 = vpack.c.b16 %v1321, %v1317
      %v1330 = vpack.c.b16 %v1322, %v1318
      %v1331 = vpack.c.b16 %v1323, %v1319
      %1332 = vrot.lane.b32.xlu0 %v1324, 81
      %v1333 = vpop.permute.xlu0 %1332
      %1334 = vrot.lane.b32.xlu0 %v1325, 81
      %v1335 = vpop.permute.xlu0 %1334
      %1336 = vrot.lane.b32.xlu0 %v1326, 81
      %v1337 = vpop.permute.xlu0 %1336
      %1338 = vrot.lane.b32.xlu0 %v1327, 81
      %v1339 = vpop.permute.xlu0 %1338
      %1340 = vrot.lane.b32.xlu0 %v1328, 81
      %v1341 = vpop.permute.xlu0 %1340
      %1342 = vrot.lane.b32.xlu0 %v1329, 81
      %v1343 = vpop.permute.xlu0 %1342
      %1344 = vrot.lane.b32.xlu0 %v1330, 81
      %v1345 = vpop.permute.xlu0 %1344
      %1346 = vrot.lane.b32.xlu0 %v1331, 81
      %v1347 = vpop.permute.xlu0 %1346
      %vm1348 = vcmask 662528
      %v1349 = vsel %vm1348, %v1333, %v1335
      %v1350 = vsel %vm1348, %v1335, %v1337
      %v1351 = vsel %vm1348, %v1337, %v1339
      %v1352 = vsel %vm1348, %v1341, %v1343
      %v1353 = vsel %vm1348, %v1343, %v1345
      %v1354 = vsel %vm1348, %v1345, %v1347
      %1361 = vst [vmem:[#allocation2 + $0x330] sm:$0xff] %v1349
      %1362 = vst [vmem:[#allocation2 + $0x338] sm:$0xff] %v1350
      %1363 = vst.msk [vmem:[#allocation2 + $0x340] sm:$0xff] %vm243, %v1351
      %1364 = vst [vmem:[#allocation2 + $0x348] sm:$0xff] %v1352
      %1365 = vst [vmem:[#allocation2 + $0x350] sm:$0xff] %v1353
      %1366 = vst.msk [vmem:[#allocation2 + $0x358] sm:$0xff] %vm243, %v1354
      %v1367 = vld [vmem:[%s192] sm:$0xff]
      %v1368 = vld [vmem:[%s192 + $0x8] sm:$0xff]
      %v1369 = vld [vmem:[%s192 + $0x10] sm:$0xff]
      %v1370 = vld [vmem:[%s192 + $0x18] sm:$0xff]
      %v1371 = vld [vmem:[%s192 + $0x20] sm:$0xff]
      %v1372 = vld [vmem:[%s192 + $0x28] sm:$0xff]
      %v1373 = vld [vmem:[%s192 + $0x30] sm:$0xff]
      %v1374 = vld [vmem:[%s192 + $0x38] sm:$0xff]
      %v1383 = vunpack.c.l.b16 %v1367
      %v1384 = vunpack.c.h.b16 %v1367
      %v1385 = vunpack.c.l.b16 %v1368
      %v1386 = vunpack.c.h.b16 %v1368
      %v1387 = vunpack.c.l.b16 %v1369
      %v1388 = vunpack.c.h.b16 %v1369
      %v1389 = vunpack.c.l.b16 %v1370
      %v1390 = vunpack.c.h.b16 %v1370
      %v1391 = vunpack.c.l.b16 %v1371
      %v1392 = vunpack.c.h.b16 %v1371
      %v1393 = vunpack.c.l.b16 %v1372
      %v1394 = vunpack.c.h.b16 %v1372
      %v1395 = vunpack.c.l.b16 %v1373
      %v1396 = vunpack.c.h.b16 %v1373
      %v1397 = vunpack.c.l.b16 %v1374
      %v1398 = vunpack.c.h.b16 %v1374
      %v1399 = vpack.c.b16 %v1387, %v1383
      %v1400 = vpack.c.b16 %v1388, %v1384
      %v1401 = vpack.c.b16 %v1389, %v1385
      %v1402 = vpack.c.b16 %v1390, %v1386
      %v1403 = vpack.c.b16 %v1395, %v1391
      %v1404 = vpack.c.b16 %v1396, %v1392
      %v1405 = vpack.c.b16 %v1397, %v1393
      %v1406 = vpack.c.b16 %v1398, %v1394
      %1407 = vrot.lane.b32.xlu0 %v1399, 80
      %v1408 = vpop.permute.xlu0 %1407
      %1409 = vrot.lane.b32.xlu0 %v1400, 80
      %v1410 = vpop.permute.xlu0 %1409
      %1411 = vrot.lane.b32.xlu0 %v1401, 80
      %v1412 = vpop.permute.xlu0 %1411
      %1413 = vrot.lane.b32.xlu0 %v1402, 80
      %v1414 = vpop.permute.xlu0 %1413
      %1415 = vrot.lane.b32.xlu0 %v1403, 80
      %v1416 = vpop.permute.xlu0 %1415
      %1417 = vrot.lane.b32.xlu0 %v1404, 80
      %v1418 = vpop.permute.xlu0 %1417
      %1419 = vrot.lane.b32.xlu0 %v1405, 80
      %v1420 = vpop.permute.xlu0 %1419
      %1421 = vrot.lane.b32.xlu0 %v1406, 80
      %v1422 = vpop.permute.xlu0 %1421
      %vm1423 = vcmask 654336
      %v1424 = vsel %vm1423, %v1408, %v1410
      %v1425 = vsel %vm1423, %v1410, %v1412
      %v1426 = vsel %vm1423, %v1412, %v1414
      %v1427 = vsel %vm1423, %v1416, %v1418
      %v1428 = vsel %vm1423, %v1418, %v1420
      %v1429 = vsel %vm1423, %v1420, %v1422
      %1436 = vst [vmem:[#allocation2 + $0x360] sm:$0xff] %v1424
      %1437 = vst [vmem:[#allocation2 + $0x368] sm:$0xff] %v1425
      %1438 = vst.msk [vmem:[#allocation2 + $0x370] sm:$0xff] %vm243, %v1426
      %1439 = vst [vmem:[#allocation2 + $0x378] sm:$0xff] %v1427
      %1440 = vst [vmem:[#allocation2 + $0x380] sm:$0xff] %v1428
      %1441 = vst.msk [vmem:[#allocation2 + $0x388] sm:$0xff] %vm243, %v1429
      %v1442 = vld [vmem:[%s192] sm:$0xff]
      %v1443 = vld [vmem:[%s192 + $0x8] sm:$0xff]
      %v1444 = vld [vmem:[%s192 + $0x10] sm:$0xff]
      %v1445 = vld [vmem:[%s192 + $0x18] sm:$0xff]
      %v1446 = vld [vmem:[%s192 + $0x20] sm:$0xff]
      %v1447 = vld [vmem:[%s192 + $0x28] sm:$0xff]
      %v1448 = vld [vmem:[%s192 + $0x30] sm:$0xff]
      %v1449 = vld [vmem:[%s192 + $0x38] sm:$0xff]
      %v1458 = vunpack.c.l.b16 %v1442
      %v1459 = vunpack.c.h.b16 %v1442
      %v1460 = vunpack.c.l.b16 %v1443
      %v1461 = vunpack.c.h.b16 %v1443
      %v1462 = vunpack.c.l.b16 %v1444
      %v1463 = vunpack.c.h.b16 %v1444
      %v1464 = vunpack.c.l.b16 %v1445
      %v1465 = vunpack.c.h.b16 %v1445
      %v1466 = vunpack.c.l.b16 %v1446
      %v1467 = vunpack.c.h.b16 %v1446
      %v1468 = vunpack.c.l.b16 %v1447
      %v1469 = vunpack.c.h.b16 %v1447
      %v1470 = vunpack.c.l.b16 %v1448
      %v1471 = vunpack.c.h.b16 %v1448
      %v1472 = vunpack.c.l.b16 %v1449
      %v1473 = vunpack.c.h.b16 %v1449
      %v1474 = vpack.c.b16 %v1462, %v1458
      %v1475 = vpack.c.b16 %v1463, %v1459
      %v1476 = vpack.c.b16 %v1464, %v1460
      %v1477 = vpack.c.b16 %v1465, %v1461
      %v1478 = vpack.c.b16 %v1470, %v1466
      %v1479 = vpack.c.b16 %v1471, %v1467
      %v1480 = vpack.c.b16 %v1472, %v1468
      %v1481 = vpack.c.b16 %v1473, %v1469
      %1482 = vrot.lane.b32.xlu0 %v1474, 79
      %v1483 = vpop.permute.xlu0 %1482
      %1484 = vrot.lane.b32.xlu0 %v1475, 79
      %v1485 = vpop.permute.xlu0 %1484
      %1486 = vrot.lane.b32.xlu0 %v1476, 79
      %v1487 = vpop.permute.xlu0 %1486
      %1488 = vrot.lane.b32.xlu0 %v1477, 79
      %v1489 = vpop.permute.xlu0 %1488
      %1490 = vrot.lane.b32.xlu0 %v1478, 79
      %v1491 = vpop.permute.xlu0 %1490
      %1492 = vrot.lane.b32.xlu0 %v1479, 79
      %v1493 = vpop.permute.xlu0 %1492
      %1494 = vrot.lane.b32.xlu0 %v1480, 79
      %v1495 = vpop.permute.xlu0 %1494
      %1496 = vrot.lane.b32.xlu0 %v1481, 79
      %v1497 = vpop.permute.xlu0 %1496
      %vm1498 = vcmask 646144
      %v1499 = vsel %vm1498, %v1483, %v1485
      %v1500 = vsel %vm1498, %v1485, %v1487
      %v1501 = vsel %vm1498, %v1487, %v1489
      %v1502 = vsel %vm1498, %v1491, %v1493
      %v1503 = vsel %vm1498, %v1493, %v1495
      %v1504 = vsel %vm1498, %v1495, %v1497
      %1511 = vst [vmem:[#allocation2 + $0x390] sm:$0xff] %v1499
      %1512 = vst [vmem:[#allocation2 + $0x398] sm:$0xff] %v1500
      %1513 = vst.msk [vmem:[#allocation2 + $0x3a0] sm:$0xff] %vm243, %v1501
      %1514 = vst [vmem:[#allocation2 + $0x3a8] sm:$0xff] %v1502
      %1515 = vst [vmem:[#allocation2 + $0x3b0] sm:$0xff] %v1503
      %1516 = vst.msk [vmem:[#allocation2 + $0x3b8] sm:$0xff] %vm243, %v1504
      %v1517 = vld [vmem:[%s192] sm:$0xff]
      %v1518 = vld [vmem:[%s192 + $0x8] sm:$0xff]
      %v1519 = vld [vmem:[%s192 + $0x10] sm:$0xff]
      %v1520 = vld [vmem:[%s192 + $0x18] sm:$0xff]
      %v1521 = vld [vmem:[%s192 + $0x20] sm:$0xff]
      %v1522 = vld [vmem:[%s192 + $0x28] sm:$0xff]
      %v1523 = vld [vmem:[%s192 + $0x30] sm:$0xff]
      %v1524 = vld [vmem:[%s192 + $0x38] sm:$0xff]
      %v1533 = vunpack.c.l.b16 %v1517
      %v1534 = vunpack.c.h.b16 %v1517
      %v1535 = vunpack.c.l.b16 %v1518
      %v1536 = vunpack.c.h.b16 %v1518
      %v1537 = vunpack.c.l.b16 %v1519
      %v1538 = vunpack.c.h.b16 %v1519
      %v1539 = vunpack.c.l.b16 %v1520
      %v1540 = vunpack.c.h.b16 %v1520
      %v1541 = vunpack.c.l.b16 %v1521
      %v1542 = vunpack.c.h.b16 %v1521
      %v1543 = vunpack.c.l.b16 %v1522
      %v1544 = vunpack.c.h.b16 %v1522
      %v1545 = vunpack.c.l.b16 %v1523
      %v1546 = vunpack.c.h.b16 %v1523
      %v1547 = vunpack.c.l.b16 %v1524
      %v1548 = vunpack.c.h.b16 %v1524
      %v1549 = vpack.c.b16 %v1537, %v1533
      %v1550 = vpack.c.b16 %v1538, %v1534
      %v1551 = vpack.c.b16 %v1539, %v1535
      %v1552 = vpack.c.b16 %v1540, %v1536
      %v1553 = vpack.c.b16 %v1545, %v1541
      %v1554 = vpack.c.b16 %v1546, %v1542
      %v1555 = vpack.c.b16 %v1547, %v1543
      %v1556 = vpack.c.b16 %v1548, %v1544
      %1557 = vrot.lane.b32.xlu0 %v1549, 78
      %v1558 = vpop.permute.xlu0 %1557
      %1559 = vrot.lane.b32.xlu0 %v1550, 78
      %v1560 = vpop.permute.xlu0 %1559
      %1561 = vrot.lane.b32.xlu0 %v1551, 78
      %v1562 = vpop.permute.xlu0 %1561
      %1563 = vrot.lane.b32.xlu0 %v1552, 78
      %v1564 = vpop.permute.xlu0 %1563
      %1565 = vrot.lane.b32.xlu0 %v1553, 78
      %v1566 = vpop.permute.xlu0 %1565
      %1567 = vrot.lane.b32.xlu0 %v1554, 78
      %v1568 = vpop.permute.xlu0 %1567
      %1569 = vrot.lane.b32.xlu0 %v1555, 78
      %v1570 = vpop.permute.xlu0 %1569
      %1571 = vrot.lane.b32.xlu0 %v1556, 78
      %v1572 = vpop.permute.xlu0 %1571
      %vm1573 = vcmask 637952
      %v1574 = vsel %vm1573, %v1558, %v1560
      %v1575 = vsel %vm1573, %v1560, %v1562
      %v1576 = vsel %vm1573, %v1562, %v1564
      %v1577 = vsel %vm1573, %v1566, %v1568
      %v1578 = vsel %vm1573, %v1568, %v1570
      %v1579 = vsel %vm1573, %v1570, %v1572
      %1586 = vst [vmem:[#allocation2 + $0x3c0] sm:$0xff] %v1574
      %1587 = vst [vmem:[#allocation2 + $0x3c8] sm:$0xff] %v1575
      %1588 = vst.msk [vmem:[#allocation2 + $0x3d0] sm:$0xff] %vm243, %v1576
      %1589 = vst [vmem:[#allocation2 + $0x3d8] sm:$0xff] %v1577
      %1590 = vst [vmem:[#allocation2 + $0x3e0] sm:$0xff] %v1578
      %1591 = vst.msk [vmem:[#allocation2 + $0x3e8] sm:$0xff] %vm243, %v1579
      %v1592 = vld [vmem:[%s192] sm:$0xff]
      %v1593 = vld [vmem:[%s192 + $0x8] sm:$0xff]
      %v1594 = vld [vmem:[%s192 + $0x10] sm:$0xff]
      %v1595 = vld [vmem:[%s192 + $0x18] sm:$0xff]
      %v1596 = vld [vmem:[%s192 + $0x20] sm:$0xff]
      %v1597 = vld [vmem:[%s192 + $0x28] sm:$0xff]
      %v1598 = vld [vmem:[%s192 + $0x30] sm:$0xff]
      %v1599 = vld [vmem:[%s192 + $0x38] sm:$0xff]
      %v1608 = vunpack.c.l.b16 %v1592
      %v1609 = vunpack.c.h.b16 %v1592
      %v1610 = vunpack.c.l.b16 %v1593
      %v1611 = vunpack.c.h.b16 %v1593
      %v1612 = vunpack.c.l.b16 %v1594
      %v1613 = vunpack.c.h.b16 %v1594
      %v1614 = vunpack.c.l.b16 %v1595
      %v1615 = vunpack.c.h.b16 %v1595
      %v1616 = vunpack.c.l.b16 %v1596
      %v1617 = vunpack.c.h.b16 %v1596
      %v1618 = vunpack.c.l.b16 %v1597
      %v1619 = vunpack.c.h.b16 %v1597
      %v1620 = vunpack.c.l.b16 %v1598
      %v1621 = vunpack.c.h.b16 %v1598
      %v1622 = vunpack.c.l.b16 %v1599
      %v1623 = vunpack.c.h.b16 %v1599
      %v1624 = vpack.c.b16 %v1612, %v1608
      %v1625 = vpack.c.b16 %v1613, %v1609
      %v1626 = vpack.c.b16 %v1614, %v1610
      %v1627 = vpack.c.b16 %v1615, %v1611
      %v1628 = vpack.c.b16 %v1620, %v1616
      %v1629 = vpack.c.b16 %v1621, %v1617
      %v1630 = vpack.c.b16 %v1622, %v1618
      %v1631 = vpack.c.b16 %v1623, %v1619
      %1632 = vrot.lane.b32.xlu0 %v1624, 62
      %v1633 = vpop.permute.xlu0 %1632
      %1634 = vrot.lane.b32.xlu0 %v1625, 62
      %v1635 = vpop.permute.xlu0 %1634
      %1636 = vrot.lane.b32.xlu0 %v1626, 62
      %v1637 = vpop.permute.xlu0 %1636
      %1638 = vrot.lane.b32.xlu0 %v1627, 62
      %v1639 = vpop.permute.xlu0 %1638
      %1640 = vrot.lane.b32.xlu0 %v1628, 62
      %v1641 = vpop.permute.xlu0 %1640
      %1642 = vrot.lane.b32.xlu0 %v1629, 62
      %v1643 = vpop.permute.xlu0 %1642
      %1644 = vrot.lane.b32.xlu0 %v1630, 62
      %v1645 = vpop.permute.xlu0 %1644
      %1646 = vrot.lane.b32.xlu0 %v1631, 62
      %v1647 = vpop.permute.xlu0 %1646
      %vm1648 = vcmask 506880
      %v1649 = vsel %vm1648, %v1633, %v1635
      %v1650 = vsel %vm1648, %v1635, %v1637
      %v1651 = vsel %vm1648, %v1637, %v1639
      %v1652 = vsel %vm1648, %v1641, %v1643
      %v1653 = vsel %vm1648, %v1643, %v1645
      %v1654 = vsel %vm1648, %v1645, %v1647
      %1661 = vst [vmem:[#allocation2 + $0x3f0] sm:$0xff] %v1649
      %1662 = vst [vmem:[#allocation2 + $0x3f8] sm:$0xff] %v1650
      %1663 = vst.msk [vmem:[#allocation2 + $0x400] sm:$0xff] %vm243, %v1651
      %1664 = vst [vmem:[#allocation2 + $0x408] sm:$0xff] %v1652
      %1665 = vst [vmem:[#allocation2 + $0x410] sm:$0xff] %v1653
      %1666 = vst.msk [vmem:[#allocation2 + $0x418] sm:$0xff] %vm243, %v1654
      %v1667 = vld [vmem:[%s192] sm:$0xff]
      %v1668 = vld [vmem:[%s192 + $0x8] sm:$0xff]
      %v1669 = vld [vmem:[%s192 + $0x10] sm:$0xff]
      %v1670 = vld [vmem:[%s192 + $0x18] sm:$0xff]
      %v1671 = vld [vmem:[%s192 + $0x20] sm:$0xff]
      %v1672 = vld [vmem:[%s192 + $0x28] sm:$0xff]
      %v1673 = vld [vmem:[%s192 + $0x30] sm:$0xff]
      %v1674 = vld [vmem:[%s192 + $0x38] sm:$0xff]
      %v1683 = vunpack.c.l.b16 %v1667
      %v1684 = vunpack.c.h.b16 %v1667
      %v1685 = vunpack.c.l.b16 %v1668
      %v1686 = vunpack.c.h.b16 %v1668
      %v1687 = vunpack.c.l.b16 %v1669
      %v1688 = vunpack.c.h.b16 %v1669
      %v1689 = vunpack.c.l.b16 %v1670
      %v1690 = vunpack.c.h.b16 %v1670
      %v1691 = vunpack.c.l.b16 %v1671
      %v1692 = vunpack.c.h.b16 %v1671
      %v1693 = vunpack.c.l.b16 %v1672
      %v1694 = vunpack.c.h.b16 %v1672
      %v1695 = vunpack.c.l.b16 %v1673
      %v1696 = vunpack.c.h.b16 %v1673
      %v1697 = vunpack.c.l.b16 %v1674
      %v1698 = vunpack.c.h.b16 %v1674
      %v1699 = vpack.c.b16 %v1687, %v1683
      %v1700 = vpack.c.b16 %v1688, %v1684
      %v1701 = vpack.c.b16 %v1689, %v1685
      %v1702 = vpack.c.b16 %v1690, %v1686
      %v1703 = vpack.c.b16 %v1695, %v1691
      %v1704 = vpack.c.b16 %v1696, %v1692
      %v1705 = vpack.c.b16 %v1697, %v1693
      %v1706 = vpack.c.b16 %v1698, %v1694
      %1707 = vrot.lane.b32.xlu0 %v1699, 61
      %v1708 = vpop.permute.xlu0 %1707
      %1709 = vrot.lane.b32.xlu0 %v1700, 61
      %v1710 = vpop.permute.xlu0 %1709
      %1711 = vrot.lane.b32.xlu0 %v1701, 61
      %v1712 = vpop.permute.xlu0 %1711
      %1713 = vrot.lane.b32.xlu0 %v1702, 61
      %v1714 = vpop.permute.xlu0 %1713
      %1715 = vrot.lane.b32.xlu0 %v1703, 61
      %v1716 = vpop.permute.xlu0 %1715
      %1717 = vrot.lane.b32.xlu0 %v1704, 61
      %v1718 = vpop.permute.xlu0 %1717
      %1719 = vrot.lane.b32.xlu0 %v1705, 61
      %v1720 = vpop.permute.xlu0 %1719
      %1721 = vrot.lane.b32.xlu0 %v1706, 61
      %v1722 = vpop.permute.xlu0 %1721
      %vm1723 = vcmask 498688
      %v1724 = vsel %vm1723, %v1708, %v1710
      %v1725 = vsel %vm1723, %v1710, %v1712
      %v1726 = vsel %vm1723, %v1712, %v1714
      %v1727 = vsel %vm1723, %v1716, %v1718
      %v1728 = vsel %vm1723, %v1718, %v1720
      %v1729 = vsel %vm1723, %v1720, %v1722
      %1736 = vst [vmem:[#allocation2 + $0x420] sm:$0xff] %v1724
      %1737 = vst [vmem:[#allocation2 + $0x428] sm:$0xff] %v1725
      %1738 = vst.msk [vmem:[#allocation2 + $0x430] sm:$0xff] %vm243, %v1726
      %1739 = vst [vmem:[#allocation2 + $0x438] sm:$0xff] %v1727
      %1740 = vst [vmem:[#allocation2 + $0x440] sm:$0xff] %v1728
      %1741 = vst.msk [vmem:[#allocation2 + $0x448] sm:$0xff] %vm243, %v1729
      %v1742 = vld [vmem:[%s192] sm:$0xff]
      %v1743 = vld [vmem:[%s192 + $0x8] sm:$0xff]
      %v1744 = vld [vmem:[%s192 + $0x10] sm:$0xff]
      %v1745 = vld [vmem:[%s192 + $0x18] sm:$0xff]
      %v1746 = vld [vmem:[%s192 + $0x20] sm:$0xff]
      %v1747 = vld [vmem:[%s192 + $0x28] sm:$0xff]
      %v1748 = vld [vmem:[%s192 + $0x30] sm:$0xff]
      %v1749 = vld [vmem:[%s192 + $0x38] sm:$0xff]
      %v1758 = vunpack.c.l.b16 %v1742
      %v1759 = vunpack.c.h.b16 %v1742
      %v1760 = vunpack.c.l.b16 %v1743
      %v1761 = vunpack.c.h.b16 %v1743
      %v1762 = vunpack.c.l.b16 %v1744
      %v1763 = vunpack.c.h.b16 %v1744
      %v1764 = vunpack.c.l.b16 %v1745
      %v1765 = vunpack.c.h.b16 %v1745
      %v1766 = vunpack.c.l.b16 %v1746
      %v1767 = vunpack.c.h.b16 %v1746
      %v1768 = vunpack.c.l.b16 %v1747
      %v1769 = vunpack.c.h.b16 %v1747
      %v1770 = vunpack.c.l.b16 %v1748
      %v1771 = vunpack.c.h.b16 %v1748
      %v1772 = vunpack.c.l.b16 %v1749
      %v1773 = vunpack.c.h.b16 %v1749
      %v1774 = vpack.c.b16 %v1762, %v1758
      %v1775 = vpack.c.b16 %v1763, %v1759
      %v1776 = vpack.c.b16 %v1764, %v1760
      %v1777 = vpack.c.b16 %v1765, %v1761
      %v1778 = vpack.c.b16 %v1770, %v1766
      %v1779 = vpack.c.b16 %v1771, %v1767
      %v1780 = vpack.c.b16 %v1772, %v1768
      %v1781 = vpack.c.b16 %v1773, %v1769
      %1782 = vrot.lane.b32.xlu0 %v1774, 60
      %v1783 = vpop.permute.xlu0 %1782
      %1784 = vrot.lane.b32.xlu0 %v1775, 60
      %v1785 = vpop.permute.xlu0 %1784
      %1786 = vrot.lane.b32.xlu0 %v1776, 60
      %v1787 = vpop.permute.xlu0 %1786
      %1788 = vrot.lane.b32.xlu0 %v1777, 60
      %v1789 = vpop.permute.xlu0 %1788
      %1790 = vrot.lane.b32.xlu0 %v1778, 60
      %v1791 = vpop.permute.xlu0 %1790
      %1792 = vrot.lane.b32.xlu0 %v1779, 60
      %v1793 = vpop.permute.xlu0 %1792
      %1794 = vrot.lane.b32.xlu0 %v1780, 60
      %v1795 = vpop.permute.xlu0 %1794
      %1796 = vrot.lane.b32.xlu0 %v1781, 60
      %v1797 = vpop.permute.xlu0 %1796
      %vm1798 = vcmask 490496
      %v1799 = vsel %vm1798, %v1783, %v1785
      %v1800 = vsel %vm1798, %v1785, %v1787
      %v1801 = vsel %vm1798, %v1787, %v1789
      %v1802 = vsel %vm1798, %v1791, %v1793
      %v1803 = vsel %vm1798, %v1793, %v1795
      %v1804 = vsel %vm1798, %v1795, %v1797
      %1811 = vst [vmem:[#allocation2 + $0x450] sm:$0xff] %v1799
      %1812 = vst [vmem:[#allocation2 + $0x458] sm:$0xff] %v1800
      %1813 = vst.msk [vmem:[#allocation2 + $0x460] sm:$0xff] %vm243, %v1801
      %1814 = vst [vmem:[#allocation2 + $0x468] sm:$0xff] %v1802
      %1815 = vst [vmem:[#allocation2 + $0x470] sm:$0xff] %v1803
      %1816 = vst.msk [vmem:[#allocation2 + $0x478] sm:$0xff] %vm243, %v1804
      %v1817 = vld [vmem:[%s192] sm:$0xff]
      %v1818 = vld [vmem:[%s192 + $0x8] sm:$0xff]
      %v1819 = vld [vmem:[%s192 + $0x10] sm:$0xff]
      %v1820 = vld [vmem:[%s192 + $0x18] sm:$0xff]
      %v1821 = vld [vmem:[%s192 + $0x20] sm:$0xff]
      %v1822 = vld [vmem:[%s192 + $0x28] sm:$0xff]
      %v1823 = vld [vmem:[%s192 + $0x30] sm:$0xff]
      %v1824 = vld [vmem:[%s192 + $0x38] sm:$0xff]
      %v1833 = vunpack.c.l.b16 %v1817
      %v1834 = vunpack.c.h.b16 %v1817
      %v1835 = vunpack.c.l.b16 %v1818
      %v1836 = vunpack.c.h.b16 %v1818
      %v1837 = vunpack.c.l.b16 %v1819
      %v1838 = vunpack.c.h.b16 %v1819
      %v1839 = vunpack.c.l.b16 %v1820
      %v1840 = vunpack.c.h.b16 %v1820
      %v1841 = vunpack.c.l.b16 %v1821
      %v1842 = vunpack.c.h.b16 %v1821
      %v1843 = vunpack.c.l.b16 %v1822
      %v1844 = vunpack.c.h.b16 %v1822
      %v1845 = vunpack.c.l.b16 %v1823
      %v1846 = vunpack.c.h.b16 %v1823
      %v1847 = vunpack.c.l.b16 %v1824
      %v1848 = vunpack.c.h.b16 %v1824
      %v1849 = vpack.c.b16 %v1837, %v1833
      %v1850 = vpack.c.b16 %v1838, %v1834
      %v1851 = vpack.c.b16 %v1839, %v1835
      %v1852 = vpack.c.b16 %v1840, %v1836
      %v1853 = vpack.c.b16 %v1845, %v1841
      %v1854 = vpack.c.b16 %v1846, %v1842
      %v1855 = vpack.c.b16 %v1847, %v1843
      %v1856 = vpack.c.b16 %v1848, %v1844
      %1857 = vrot.lane.b32.xlu0 %v1849, 59
      %v1858 = vpop.permute.xlu0 %1857
      %1859 = vrot.lane.b32.xlu0 %v1850, 59
      %v1860 = vpop.permute.xlu0 %1859
      %1861 = vrot.lane.b32.xlu0 %v1851, 59
      %v1862 = vpop.permute.xlu0 %1861
      %1863 = vrot.lane.b32.xlu0 %v1852, 59
      %v1864 = vpop.permute.xlu0 %1863
      %1865 = vrot.lane.b32.xlu0 %v1853, 59
      %v1866 = vpop.permute.xlu0 %1865
      %1867 = vrot.lane.b32.xlu0 %v1854, 59
      %v1868 = vpop.permute.xlu0 %1867
      %1869 = vrot.lane.b32.xlu0 %v1855, 59
      %v1870 = vpop.permute.xlu0 %1869
      %1871 = vrot.lane.b32.xlu0 %v1856, 59
      %v1872 = vpop.permute.xlu0 %1871
      %vm1873 = vcmask 482304
      %v1874 = vsel %vm1873, %v1858, %v1860
      %v1875 = vsel %vm1873, %v1860, %v1862
      %v1876 = vsel %vm1873, %v1862, %v1864
      %v1877 = vsel %vm1873, %v1866, %v1868
      %v1878 = vsel %vm1873, %v1868, %v1870
      %v1879 = vsel %vm1873, %v1870, %v1872
      %1886 = vst [vmem:[#allocation2 + $0x480] sm:$0xff] %v1874
      %1887 = vst [vmem:[#allocation2 + $0x488] sm:$0xff] %v1875
      %1888 = vst.msk [vmem:[#allocation2 + $0x490] sm:$0xff] %vm243, %v1876
      %1889 = vst [vmem:[#allocation2 + $0x498] sm:$0xff] %v1877
      %1890 = vst [vmem:[#allocation2 + $0x4a0] sm:$0xff] %v1878
      %1891 = vst.msk [vmem:[#allocation2 + $0x4a8] sm:$0xff] %vm243, %v1879
      %v1892 = vld [vmem:[%s192] sm:$0xff]
      %v1893 = vld [vmem:[%s192 + $0x8] sm:$0xff]
      %v1894 = vld [vmem:[%s192 + $0x10] sm:$0xff]
      %v1895 = vld [vmem:[%s192 + $0x18] sm:$0xff]
      %v1896 = vld [vmem:[%s192 + $0x20] sm:$0xff]
      %v1897 = vld [vmem:[%s192 + $0x28] sm:$0xff]
      %v1898 = vld [vmem:[%s192 + $0x30] sm:$0xff]
      %v1899 = vld [vmem:[%s192 + $0x38] sm:$0xff]
      %v1908 = vunpack.c.l.b16 %v1892
      %v1909 = vunpack.c.h.b16 %v1892
      %v1910 = vunpack.c.l.b16 %v1893
      %v1911 = vunpack.c.h.b16 %v1893
      %v1912 = vunpack.c.l.b16 %v1894
      %v1913 = vunpack.c.h.b16 %v1894
      %v1914 = vunpack.c.l.b16 %v1895
      %v1915 = vunpack.c.h.b16 %v1895
      %v1916 = vunpack.c.l.b16 %v1896
      %v1917 = vunpack.c.h.b16 %v1896
      %v1918 = vunpack.c.l.b16 %v1897
      %v1919 = vunpack.c.h.b16 %v1897
      %v1920 = vunpack.c.l.b16 %v1898
      %v1921 = vunpack.c.h.b16 %v1898
      %v1922 = vunpack.c.l.b16 %v1899
      %v1923 = vunpack.c.h.b16 %v1899
      %v1924 = vpack.c.b16 %v1912, %v1908
      %v1925 = vpack.c.b16 %v1913, %v1909
      %v1926 = vpack.c.b16 %v1914, %v1910
      %v1927 = vpack.c.b16 %v1915, %v1911
      %v1928 = vpack.c.b16 %v1920, %v1916
      %v1929 = vpack.c.b16 %v1921, %v1917
      %v1930 = vpack.c.b16 %v1922, %v1918
      %v1931 = vpack.c.b16 %v1923, %v1919
      %1932 = vrot.lane.b32.xlu0 %v1924, 58
      %v1933 = vpop.permute.xlu0 %1932
      %1934 = vrot.lane.b32.xlu0 %v1925, 58
      %v1935 = vpop.permute.xlu0 %1934
      %1936 = vrot.lane.b32.xlu0 %v1926, 58
      %v1937 = vpop.permute.xlu0 %1936
      %1938 = vrot.lane.b32.xlu0 %v1927, 58
      %v1939 = vpop.permute.xlu0 %1938
      %1940 = vrot.lane.b32.xlu0 %v1928, 58
      %v1941 = vpop.permute.xlu0 %1940
      %1942 = vrot.lane.b32.xlu0 %v1929, 58
      %v1943 = vpop.permute.xlu0 %1942
      %1944 = vrot.lane.b32.xlu0 %v1930, 58
      %v1945 = vpop.permute.xlu0 %1944
      %1946 = vrot.lane.b32.xlu0 %v1931, 58
      %v1947 = vpop.permute.xlu0 %1946
      %vm1948 = vcmask 474112
      %v1949 = vsel %vm1948, %v1933, %v1935
      %v1950 = vsel %vm1948, %v1935, %v1937
      %v1951 = vsel %vm1948, %v1937, %v1939
      %v1952 = vsel %vm1948, %v1941, %v1943
      %v1953 = vsel %vm1948, %v1943, %v1945
      %v1954 = vsel %vm1948, %v1945, %v1947
      %1961 = vst [vmem:[#allocation2 + $0x4b0] sm:$0xff] %v1949
      %1962 = vst [vmem:[#allocation2 + $0x4b8] sm:$0xff] %v1950
      %1963 = vst.msk [vmem:[#allocation2 + $0x4c0] sm:$0xff] %vm243, %v1951
      %1964 = vst [vmem:[#allocation2 + $0x4c8] sm:$0xff] %v1952
      %1965 = vst [vmem:[#allocation2 + $0x4d0] sm:$0xff] %v1953
      %1966 = vst.msk [vmem:[#allocation2 + $0x4d8] sm:$0xff] %vm243, %v1954
      %v1967 = vld [vmem:[%s192] sm:$0xff]
      %v1968 = vld [vmem:[%s192 + $0x8] sm:$0xff]
      %v1969 = vld [vmem:[%s192 + $0x10] sm:$0xff]
      %v1970 = vld [vmem:[%s192 + $0x18] sm:$0xff]
      %v1971 = vld [vmem:[%s192 + $0x20] sm:$0xff]
      %v1972 = vld [vmem:[%s192 + $0x28] sm:$0xff]
      %v1973 = vld [vmem:[%s192 + $0x30] sm:$0xff]
      %v1974 = vld [vmem:[%s192 + $0x38] sm:$0xff]
      %v1983 = vunpack.c.l.b16 %v1967
      %v1984 = vunpack.c.h.b16 %v1967
      %v1985 = vunpack.c.l.b16 %v1968
      %v1986 = vunpack.c.h.b16 %v1968
      %v1987 = vunpack.c.l.b16 %v1969
      %v1988 = vunpack.c.h.b16 %v1969
      %v1989 = vunpack.c.l.b16 %v1970
      %v1990 = vunpack.c.h.b16 %v1970
      %v1991 = vunpack.c.l.b16 %v1971
      %v1992 = vunpack.c.h.b16 %v1971
      %v1993 = vunpack.c.l.b16 %v1972
      %v1994 = vunpack.c.h.b16 %v1972
      %v1995 = vunpack.c.l.b16 %v1973
      %v1996 = vunpack.c.h.b16 %v1973
      %v1997 = vunpack.c.l.b16 %v1974
      %v1998 = vunpack.c.h.b16 %v1974
      %v1999 = vpack.c.b16 %v1987, %v1983
      %v2000 = vpack.c.b16 %v1988, %v1984
      %v2001 = vpack.c.b16 %v1989, %v1985
      %v2002 = vpack.c.b16 %v1990, %v1986
      %v2003 = vpack.c.b16 %v1995, %v1991
      %v2004 = vpack.c.b16 %v1996, %v1992
      %v2005 = vpack.c.b16 %v1997, %v1993
      %v2006 = vpack.c.b16 %v1998, %v1994
      %2007 = vrot.lane.b32.xlu0 %v1999, 57
      %v2008 = vpop.permute.xlu0 %2007
      %2009 = vrot.lane.b32.xlu0 %v2000, 57
      %v2010 = vpop.permute.xlu0 %2009
      %2011 = vrot.lane.b32.xlu0 %v2001, 57
      %v2012 = vpop.permute.xlu0 %2011
      %2013 = vrot.lane.b32.xlu0 %v2002, 57
      %v2014 = vpop.permute.xlu0 %2013
      %2015 = vrot.lane.b32.xlu0 %v2003, 57
      %v2016 = vpop.permute.xlu0 %2015
      %2017 = vrot.lane.b32.xlu0 %v2004, 57
      %v2018 = vpop.permute.xlu0 %2017
      %2019 = vrot.lane.b32.xlu0 %v2005, 57
      %v2020 = vpop.permute.xlu0 %2019
      %2021 = vrot.lane.b32.xlu0 %v2006, 57
      %v2022 = vpop.permute.xlu0 %2021
      %vm2023 = vcmask 465920
      %v2024 = vsel %vm2023, %v2008, %v2010
      %v2025 = vsel %vm2023, %v2010, %v2012
      %v2026 = vsel %vm2023, %v2012, %v2014
      %v2027 = vsel %vm2023, %v2016, %v2018
      %v2028 = vsel %vm2023, %v2018, %v2020
      %v2029 = vsel %vm2023, %v2020, %v2022
      %2036 = vst [vmem:[#allocation2 + $0x4e0] sm:$0xff] %v2024
      %2037 = vst [vmem:[#allocation2 + $0x4e8] sm:$0xff] %v2025
      %2038 = vst.msk [vmem:[#allocation2 + $0x4f0] sm:$0xff] %vm243, %v2026
      %2039 = vst [vmem:[#allocation2 + $0x4f8] sm:$0xff] %v2027
      %2040 = vst [vmem:[#allocation2 + $0x500] sm:$0xff] %v2028
      %2041 = vst.msk [vmem:[#allocation2 + $0x508] sm:$0xff] %vm243, %v2029
      %v2042 = vld [vmem:[%s192] sm:$0xff]
      %v2043 = vld [vmem:[%s192 + $0x8] sm:$0xff]
      %v2044 = vld [vmem:[%s192 + $0x10] sm:$0xff]
      %v2045 = vld [vmem:[%s192 + $0x18] sm:$0xff]
      %v2046 = vld [vmem:[%s192 + $0x20] sm:$0xff]
      %v2047 = vld [vmem:[%s192 + $0x28] sm:$0xff]
      %v2048 = vld [vmem:[%s192 + $0x30] sm:$0xff]
      %v2049 = vld [vmem:[%s192 + $0x38] sm:$0xff]
      %v2058 = vunpack.c.l.b16 %v2042
      %v2059 = vunpack.c.h.b16 %v2042
      %v2060 = vunpack.c.l.b16 %v2043
      %v2061 = vunpack.c.h.b16 %v2043
      %v2062 = vunpack.c.l.b16 %v2044
      %v2063 = vunpack.c.h.b16 %v2044
      %v2064 = vunpack.c.l.b16 %v2045
      %v2065 = vunpack.c.h.b16 %v2045
      %v2066 = vunpack.c.l.b16 %v2046
      %v2067 = vunpack.c.h.b16 %v2046
      %v2068 = vunpack.c.l.b16 %v2047
      %v2069 = vunpack.c.h.b16 %v2047
      %v2070 = vunpack.c.l.b16 %v2048
      %v2071 = vunpack.c.h.b16 %v2048
      %v2072 = vunpack.c.l.b16 %v2049
      %v2073 = vunpack.c.h.b16 %v2049
      %v2074 = vpack.c.b16 %v2062, %v2058
      %v2075 = vpack.c.b16 %v2063, %v2059
      %v2076 = vpack.c.b16 %v2064, %v2060
      %v2077 = vpack.c.b16 %v2065, %v2061
      %v2078 = vpack.c.b16 %v2070, %v2066
      %v2079 = vpack.c.b16 %v2071, %v2067
      %v2080 = vpack.c.b16 %v2072, %v2068
      %v2081 = vpack.c.b16 %v2073, %v2069
      %2082 = vrot.lane.b32.xlu0 %v2074, 56
      %v2083 = vpop.permute.xlu0 %2082
      %2084 = vrot.lane.b32.xlu0 %v2075, 56
      %v2085 = vpop.permute.xlu0 %2084
      %2086 = vrot.lane.b32.xlu0 %v2076, 56
      %v2087 = vpop.permute.xlu0 %2086
      %2088 = vrot.lane.b32.xlu0 %v2077, 56
      %v2089 = vpop.permute.xlu0 %2088
      %2090 = vrot.lane.b32.xlu0 %v2078, 56
      %v2091 = vpop.permute.xlu0 %2090
      %2092 = vrot.lane.b32.xlu0 %v2079, 56
      %v2093 = vpop.permute.xlu0 %2092
      %2094 = vrot.lane.b32.xlu0 %v2080, 56
      %v2095 = vpop.permute.xlu0 %2094
      %2096 = vrot.lane.b32.xlu0 %v2081, 56
      %v2097 = vpop.permute.xlu0 %2096
      %vm2098 = vcmask 457728
      %v2099 = vsel %vm2098, %v2083, %v2085
      %v2100 = vsel %vm2098, %v2085, %v2087
      %v2101 = vsel %vm2098, %v2087, %v2089
      %v2102 = vsel %vm2098, %v2091, %v2093
      %v2103 = vsel %vm2098, %v2093, %v2095
      %v2104 = vsel %vm2098, %v2095, %v2097
      %2111 = vst [vmem:[#allocation2 + $0x510] sm:$0xff] %v2099
      %2112 = vst [vmem:[#allocation2 + $0x518] sm:$0xff] %v2100
      %2113 = vst.msk [vmem:[#allocation2 + $0x520] sm:$0xff] %vm243, %v2101
      %2114 = vst [vmem:[#allocation2 + $0x528] sm:$0xff] %v2102
      %2115 = vst [vmem:[#allocation2 + $0x530] sm:$0xff] %v2103
      %2116 = vst.msk [vmem:[#allocation2 + $0x538] sm:$0xff] %vm243, %v2104
      %v2117 = vld [vmem:[%s192] sm:$0xff]
      %v2118 = vld [vmem:[%s192 + $0x8] sm:$0xff]
      %v2119 = vld [vmem:[%s192 + $0x10] sm:$0xff]
      %v2120 = vld [vmem:[%s192 + $0x18] sm:$0xff]
      %v2121 = vld [vmem:[%s192 + $0x20] sm:$0xff]
      %v2122 = vld [vmem:[%s192 + $0x28] sm:$0xff]
      %v2123 = vld [vmem:[%s192 + $0x30] sm:$0xff]
      %v2124 = vld [vmem:[%s192 + $0x38] sm:$0xff]
      %v2133 = vunpack.c.l.b16 %v2117
      %v2134 = vunpack.c.h.b16 %v2117
      %v2135 = vunpack.c.l.b16 %v2118
      %v2136 = vunpack.c.h.b16 %v2118
      %v2137 = vunpack.c.l.b16 %v2119
      %v2138 = vunpack.c.h.b16 %v2119
      %v2139 = vunpack.c.l.b16 %v2120
      %v2140 = vunpack.c.h.b16 %v2120
      %v2141 = vunpack.c.l.b16 %v2121
      %v2142 = vunpack.c.h.b16 %v2121
      %v2143 = vunpack.c.l.b16 %v2122
      %v2144 = vunpack.c.h.b16 %v2122
      %v2145 = vunpack.c.l.b16 %v2123
      %v2146 = vunpack.c.h.b16 %v2123
      %v2147 = vunpack.c.l.b16 %v2124
      %v2148 = vunpack.c.h.b16 %v2124
      %v2149 = vpack.c.b16 %v2137, %v2133
      %v2150 = vpack.c.b16 %v2138, %v2134
      %v2151 = vpack.c.b16 %v2139, %v2135
      %v2152 = vpack.c.b16 %v2140, %v2136
      %v2153 = vpack.c.b16 %v2145, %v2141
      %v2154 = vpack.c.b16 %v2146, %v2142
      %v2155 = vpack.c.b16 %v2147, %v2143
      %v2156 = vpack.c.b16 %v2148, %v2144
      %2157 = vrot.lane.b32.xlu0 %v2149, 40
      %v2158 = vpop.permute.xlu0 %2157
      %2159 = vrot.lane.b32.xlu0 %v2150, 40
      %v2160 = vpop.permute.xlu0 %2159
      %2161 = vrot.lane.b32.xlu0 %v2151, 40
      %v2162 = vpop.permute.xlu0 %2161
      %2163 = vrot.lane.b32.xlu0 %v2152, 40
      %v2164 = vpop.permute.xlu0 %2163
      %2165 = vrot.lane.b32.xlu0 %v2153, 40
      %v2166 = vpop.permute.xlu0 %2165
      %2167 = vrot.lane.b32.xlu0 %v2154, 40
      %v2168 = vpop.permute.xlu0 %2167
      %2169 = vrot.lane.b32.xlu0 %v2155, 40
      %v2170 = vpop.permute.xlu0 %2169
      %2171 = vrot.lane.b32.xlu0 %v2156, 40
      %v2172 = vpop.permute.xlu0 %2171
      %vm2173 = vcmask 326656
      %v2174 = vsel %vm2173, %v2158, %v2160
      %v2175 = vsel %vm2173, %v2160, %v2162
      %v2176 = vsel %vm2173, %v2162, %v2164
      %v2177 = vsel %vm2173, %v2166, %v2168
      %v2178 = vsel %vm2173, %v2168, %v2170
      %v2179 = vsel %vm2173, %v2170, %v2172
      %2186 = vst [vmem:[#allocation2 + $0x540] sm:$0xff] %v2174
      %2187 = vst [vmem:[#allocation2 + $0x548] sm:$0xff] %v2175
      %2188 = vst.msk [vmem:[#allocation2 + $0x550] sm:$0xff] %vm243, %v2176
      %2189 = vst [vmem:[#allocation2 + $0x558] sm:$0xff] %v2177
      %2190 = vst [vmem:[#allocation2 + $0x560] sm:$0xff] %v2178
      %2191 = vst.msk [vmem:[#allocation2 + $0x568] sm:$0xff] %vm243, %v2179
      %v2192 = vld [vmem:[%s192] sm:$0xff]
      %v2193 = vld [vmem:[%s192 + $0x8] sm:$0xff]
      %v2194 = vld [vmem:[%s192 + $0x10] sm:$0xff]
      %v2195 = vld [vmem:[%s192 + $0x18] sm:$0xff]
      %v2196 = vld [vmem:[%s192 + $0x20] sm:$0xff]
      %v2197 = vld [vmem:[%s192 + $0x28] sm:$0xff]
      %v2198 = vld [vmem:[%s192 + $0x30] sm:$0xff]
      %v2199 = vld [vmem:[%s192 + $0x38] sm:$0xff]
      %v2208 = vunpack.c.l.b16 %v2192
      %v2209 = vunpack.c.h.b16 %v2192
      %v2210 = vunpack.c.l.b16 %v2193
      %v2211 = vunpack.c.h.b16 %v2193
      %v2212 = vunpack.c.l.b16 %v2194
      %v2213 = vunpack.c.h.b16 %v2194
      %v2214 = vunpack.c.l.b16 %v2195
      %v2215 = vunpack.c.h.b16 %v2195
      %v2216 = vunpack.c.l.b16 %v2196
      %v2217 = vunpack.c.h.b16 %v2196
      %v2218 = vunpack.c.l.b16 %v2197
      %v2219 = vunpack.c.h.b16 %v2197
      %v2220 = vunpack.c.l.b16 %v2198
      %v2221 = vunpack.c.h.b16 %v2198
      %v2222 = vunpack.c.l.b16 %v2199
      %v2223 = vunpack.c.h.b16 %v2199
      %v2224 = vpack.c.b16 %v2212, %v2208
      %v2225 = vpack.c.b16 %v2213, %v2209
      %v2226 = vpack.c.b16 %v2214, %v2210
      %v2227 = vpack.c.b16 %v2215, %v2211
      %v2228 = vpack.c.b16 %v2220, %v2216
      %v2229 = vpack.c.b16 %v2221, %v2217
      %v2230 = vpack.c.b16 %v2222, %v2218
      %v2231 = vpack.c.b16 %v2223, %v2219
      %2232 = vrot.lane.b32.xlu0 %v2224, 39
      %v2233 = vpop.permute.xlu0 %2232
      %2234 = vrot.lane.b32.xlu0 %v2225, 39
      %v2235 = vpop.permute.xlu0 %2234
      %2236 = vrot.lane.b32.xlu0 %v2226, 39
      %v2237 = vpop.permute.xlu0 %2236
      %2238 = vrot.lane.b32.xlu0 %v2227, 39
      %v2239 = vpop.permute.xlu0 %2238
      %2240 = vrot.lane.b32.xlu0 %v2228, 39
      %v2241 = vpop.permute.xlu0 %2240
      %2242 = vrot.lane.b32.xlu0 %v2229, 39
      %v2243 = vpop.permute.xlu0 %2242
      %2244 = vrot.lane.b32.xlu0 %v2230, 39
      %v2245 = vpop.permute.xlu0 %2244
      %2246 = vrot.lane.b32.xlu0 %v2231, 39
      %v2247 = vpop.permute.xlu0 %2246
      %vm2248 = vcmask 318464
      %v2249 = vsel %vm2248, %v2233, %v2235
      %v2250 = vsel %vm2248, %v2235, %v2237
      %v2251 = vsel %vm2248, %v2237, %v2239
      %v2252 = vsel %vm2248, %v2241, %v2243
      %v2253 = vsel %vm2248, %v2243, %v2245
      %v2254 = vsel %vm2248, %v2245, %v2247
      %2261 = vst [vmem:[#allocation2 + $0x570] sm:$0xff] %v2249
      %2262 = vst [vmem:[#allocation2 + $0x578] sm:$0xff] %v2250
      %2263 = vst.msk [vmem:[#allocation2 + $0x580] sm:$0xff] %vm243, %v2251
      %2264 = vst [vmem:[#allocation2 + $0x588] sm:$0xff] %v2252
      %2265 = vst [vmem:[#allocation2 + $0x590] sm:$0xff] %v2253
      %2266 = vst.msk [vmem:[#allocation2 + $0x598] sm:$0xff] %vm243, %v2254
      %v2267 = vld [vmem:[%s192] sm:$0xff]
      %v2268 = vld [vmem:[%s192 + $0x8] sm:$0xff]
      %v2269 = vld [vmem:[%s192 + $0x10] sm:$0xff]
      %v2270 = vld [vmem:[%s192 + $0x18] sm:$0xff]
      %v2271 = vld [vmem:[%s192 + $0x20] sm:$0xff]
      %v2272 = vld [vmem:[%s192 + $0x28] sm:$0xff]
      %v2273 = vld [vmem:[%s192 + $0x30] sm:$0xff]
      %v2274 = vld [vmem:[%s192 + $0x38] sm:$0xff]
      %v2283 = vunpack.c.l.b16 %v2267
      %v2284 = vunpack.c.h.b16 %v2267
      %v2285 = vunpack.c.l.b16 %v2268
      %v2286 = vunpack.c.h.b16 %v2268
      %v2287 = vunpack.c.l.b16 %v2269
      %v2288 = vunpack.c.h.b16 %v2269
      %v2289 = vunpack.c.l.b16 %v2270
      %v2290 = vunpack.c.h.b16 %v2270
      %v2291 = vunpack.c.l.b16 %v2271
      %v2292 = vunpack.c.h.b16 %v2271
      %v2293 = vunpack.c.l.b16 %v2272
      %v2294 = vunpack.c.h.b16 %v2272
      %v2295 = vunpack.c.l.b16 %v2273
      %v2296 = vunpack.c.h.b16 %v2273
      %v2297 = vunpack.c.l.b16 %v2274
      %v2298 = vunpack.c.h.b16 %v2274
      %v2299 = vpack.c.b16 %v2287, %v2283
      %v2300 = vpack.c.b16 %v2288, %v2284
      %v2301 = vpack.c.b16 %v2289, %v2285
      %v2302 = vpack.c.b16 %v2290, %v2286
      %v2303 = vpack.c.b16 %v2295, %v2291
      %v2304 = vpack.c.b16 %v2296, %v2292
      %v2305 = vpack.c.b16 %v2297, %v2293
      %v2306 = vpack.c.b16 %v2298, %v2294
      %2307 = vrot.lane.b32.xlu0 %v2299, 38
      %v2308 = vpop.permute.xlu0 %2307
      %2309 = vrot.lane.b32.xlu0 %v2300, 38
      %v2310 = vpop.permute.xlu0 %2309
      %2311 = vrot.lane.b32.xlu0 %v2301, 38
      %v2312 = vpop.permute.xlu0 %2311
      %2313 = vrot.lane.b32.xlu0 %v2302, 38
      %v2314 = vpop.permute.xlu0 %2313
      %2315 = vrot.lane.b32.xlu0 %v2303, 38
      %v2316 = vpop.permute.xlu0 %2315
      %2317 = vrot.lane.b32.xlu0 %v2304, 38
      %v2318 = vpop.permute.xlu0 %2317
      %2319 = vrot.lane.b32.xlu0 %v2305, 38
      %v2320 = vpop.permute.xlu0 %2319
      %2321 = vrot.lane.b32.xlu0 %v2306, 38
      %v2322 = vpop.permute.xlu0 %2321
      %vm2323 = vcmask 310272
      %v2324 = vsel %vm2323, %v2308, %v2310
      %v2325 = vsel %vm2323, %v2310, %v2312
      %v2326 = vsel %vm2323, %v2312, %v2314
      %v2327 = vsel %vm2323, %v2316, %v2318
      %v2328 = vsel %vm2323, %v2318, %v2320
      %v2329 = vsel %vm2323, %v2320, %v2322
      %2336 = vst [vmem:[#allocation2 + $0x5a0] sm:$0xff] %v2324
      %2337 = vst [vmem:[#allocation2 + $0x5a8] sm:$0xff] %v2325
      %2338 = vst.msk [vmem:[#allocation2 + $0x5b0] sm:$0xff] %vm243, %v2326
      %2339 = vst [vmem:[#allocation2 + $0x5b8] sm:$0xff] %v2327
      %2340 = vst [vmem:[#allocation2 + $0x5c0] sm:$0xff] %v2328
      %2341 = vst.msk [vmem:[#allocation2 + $0x5c8] sm:$0xff] %vm243, %v2329
      %v2342 = vld [vmem:[%s192] sm:$0xff]
      %v2343 = vld [vmem:[%s192 + $0x8] sm:$0xff]
      %v2344 = vld [vmem:[%s192 + $0x10] sm:$0xff]
      %v2345 = vld [vmem:[%s192 + $0x18] sm:$0xff]
      %v2346 = vld [vmem:[%s192 + $0x20] sm:$0xff]
      %v2347 = vld [vmem:[%s192 + $0x28] sm:$0xff]
      %v2348 = vld [vmem:[%s192 + $0x30] sm:$0xff]
      %v2349 = vld [vmem:[%s192 + $0x38] sm:$0xff]
      %v2358 = vunpack.c.l.b16 %v2342
      %v2359 = vunpack.c.h.b16 %v2342
      %v2360 = vunpack.c.l.b16 %v2343
      %v2361 = vunpack.c.h.b16 %v2343
      %v2362 = vunpack.c.l.b16 %v2344
      %v2363 = vunpack.c.h.b16 %v2344
      %v2364 = vunpack.c.l.b16 %v2345
      %v2365 = vunpack.c.h.b16 %v2345
      %v2366 = vunpack.c.l.b16 %v2346
      %v2367 = vunpack.c.h.b16 %v2346
      %v2368 = vunpack.c.l.b16 %v2347
      %v2369 = vunpack.c.h.b16 %v2347
      %v2370 = vunpack.c.l.b16 %v2348
      %v2371 = vunpack.c.h.b16 %v2348
      %v2372 = vunpack.c.l.b16 %v2349
      %v2373 = vunpack.c.h.b16 %v2349
      %v2374 = vpack.c.b16 %v2362, %v2358
      %v2375 = vpack.c.b16 %v2363, %v2359
      %v2376 = vpack.c.b16 %v2364, %v2360
      %v2377 = vpack.c.b16 %v2365, %v2361
      %v2378 = vpack.c.b16 %v2370, %v2366
      %v2379 = vpack.c.b16 %v2371, %v2367
      %v2380 = vpack.c.b16 %v2372, %v2368
      %v2381 = vpack.c.b16 %v2373, %v2369
      %2382 = vrot.lane.b32.xlu0 %v2374, 37
      %v2383 = vpop.permute.xlu0 %2382
      %2384 = vrot.lane.b32.xlu0 %v2375, 37
      %v2385 = vpop.permute.xlu0 %2384
      %2386 = vrot.lane.b32.xlu0 %v2376, 37
      %v2387 = vpop.permute.xlu0 %2386
      %2388 = vrot.lane.b32.xlu0 %v2377, 37
      %v2389 = vpop.permute.xlu0 %2388
      %2390 = vrot.lane.b32.xlu0 %v2378, 37
      %v2391 = vpop.permute.xlu0 %2390
      %2392 = vrot.lane.b32.xlu0 %v2379, 37
      %v2393 = vpop.permute.xlu0 %2392
      %2394 = vrot.lane.b32.xlu0 %v2380, 37
      %v2395 = vpop.permute.xlu0 %2394
      %2396 = vrot.lane.b32.xlu0 %v2381, 37
      %v2397 = vpop.permute.xlu0 %2396
      %vm2398 = vcmask 302080
      %v2399 = vsel %vm2398, %v2383, %v2385
      %v2400 = vsel %vm2398, %v2385, %v2387
      %v2401 = vsel %vm2398, %v2387, %v2389
      %v2402 = vsel %vm2398, %v2391, %v2393
      %v2403 = vsel %vm2398, %v2393, %v2395
      %v2404 = vsel %vm2398, %v2395, %v2397
      %2411 = vst [vmem:[#allocation2 + $0x5d0] sm:$0xff] %v2399
      %2412 = vst [vmem:[#allocation2 + $0x5d8] sm:$0xff] %v2400
      %2413 = vst.msk [vmem:[#allocation2 + $0x5e0] sm:$0xff] %vm243, %v2401
      %2414 = vst [vmem:[#allocation2 + $0x5e8] sm:$0xff] %v2402
      %2415 = vst [vmem:[#allocation2 + $0x5f0] sm:$0xff] %v2403
      %2416 = vst.msk [vmem:[#allocation2 + $0x5f8] sm:$0xff] %vm243, %v2404
      %v2417 = vld [vmem:[%s192] sm:$0xff]
      %v2418 = vld [vmem:[%s192 + $0x8] sm:$0xff]
      %v2419 = vld [vmem:[%s192 + $0x10] sm:$0xff]
      %v2420 = vld [vmem:[%s192 + $0x18] sm:$0xff]
      %v2421 = vld [vmem:[%s192 + $0x20] sm:$0xff]
      %v2422 = vld [vmem:[%s192 + $0x28] sm:$0xff]
      %v2423 = vld [vmem:[%s192 + $0x30] sm:$0xff]
      %v2424 = vld [vmem:[%s192 + $0x38] sm:$0xff]
      %v2433 = vunpack.c.l.b16 %v2417
      %v2434 = vunpack.c.h.b16 %v2417
      %v2435 = vunpack.c.l.b16 %v2418
      %v2436 = vunpack.c.h.b16 %v2418
      %v2437 = vunpack.c.l.b16 %v2419
      %v2438 = vunpack.c.h.b16 %v2419
      %v2439 = vunpack.c.l.b16 %v2420
      %v2440 = vunpack.c.h.b16 %v2420
      %v2441 = vunpack.c.l.b16 %v2421
      %v2442 = vunpack.c.h.b16 %v2421
      %v2443 = vunpack.c.l.b16 %v2422
      %v2444 = vunpack.c.h.b16 %v2422
      %v2445 = vunpack.c.l.b16 %v2423
      %v2446 = vunpack.c.h.b16 %v2423
      %v2447 = vunpack.c.l.b16 %v2424
      %v2448 = vunpack.c.h.b16 %v2424
      %v2449 = vpack.c.b16 %v2437, %v2433
      %v2450 = vpack.c.b16 %v2438, %v2434
      %v2451 = vpack.c.b16 %v2439, %v2435
      %v2452 = vpack.c.b16 %v2440, %v2436
      %v2453 = vpack.c.b16 %v2445, %v2441
      %v2454 = vpack.c.b16 %v2446, %v2442
      %v2455 = vpack.c.b16 %v2447, %v2443
      %v2456 = vpack.c.b16 %v2448, %v2444
      %2457 = vrot.lane.b32.xlu0 %v2449, 36
      %v2458 = vpop.permute.xlu0 %2457
      %2459 = vrot.lane.b32.xlu0 %v2450, 36
      %v2460 = vpop.permute.xlu0 %2459
      %2461 = vrot.lane.b32.xlu0 %v2451, 36
      %v2462 = vpop.permute.xlu0 %2461
      %2463 = vrot.lane.b32.xlu0 %v2452, 36
      %v2464 = vpop.permute.xlu0 %2463
      %2465 = vrot.lane.b32.xlu0 %v2453, 36
      %v2466 = vpop.permute.xlu0 %2465
      %2467 = vrot.lane.b32.xlu0 %v2454, 36
      %v2468 = vpop.permute.xlu0 %2467
      %2469 = vrot.lane.b32.xlu0 %v2455, 36
      %v2470 = vpop.permute.xlu0 %2469
      %2471 = vrot.lane.b32.xlu0 %v2456, 36
      %v2472 = vpop.permute.xlu0 %2471
      %vm2473 = vcmask 293888
      %v2474 = vsel %vm2473, %v2458, %v2460
      %v2475 = vsel %vm2473, %v2460, %v2462
      %v2476 = vsel %vm2473, %v2462, %v2464
      %v2477 = vsel %vm2473, %v2466, %v2468
      %v2478 = vsel %vm2473, %v2468, %v2470
      %v2479 = vsel %vm2473, %v2470, %v2472
      %2486 = vst [vmem:[#allocation2 + $0x600] sm:$0xff] %v2474
      %2487 = vst [vmem:[#allocation2 + $0x608] sm:$0xff] %v2475
      %2488 = vst.msk [vmem:[#allocation2 + $0x610] sm:$0xff] %vm243, %v2476
      %2489 = vst [vmem:[#allocation2 + $0x618] sm:$0xff] %v2477
      %2490 = vst [vmem:[#allocation2 + $0x620] sm:$0xff] %v2478
      %2491 = vst.msk [vmem:[#allocation2 + $0x628] sm:$0xff] %vm243, %v2479
      %v2492 = vld [vmem:[%s192] sm:$0xff]
      %v2493 = vld [vmem:[%s192 + $0x8] sm:$0xff]
      %v2494 = vld [vmem:[%s192 + $0x10] sm:$0xff]
      %v2495 = vld [vmem:[%s192 + $0x18] sm:$0xff]
      %v2496 = vld [vmem:[%s192 + $0x20] sm:$0xff]
      %v2497 = vld [vmem:[%s192 + $0x28] sm:$0xff]
      %v2498 = vld [vmem:[%s192 + $0x30] sm:$0xff]
      %v2499 = vld [vmem:[%s192 + $0x38] sm:$0xff]
      %v2508 = vunpack.c.l.b16 %v2492
      %v2509 = vunpack.c.h.b16 %v2492
      %v2510 = vunpack.c.l.b16 %v2493
      %v2511 = vunpack.c.h.b16 %v2493
      %v2512 = vunpack.c.l.b16 %v2494
      %v2513 = vunpack.c.h.b16 %v2494
      %v2514 = vunpack.c.l.b16 %v2495
      %v2515 = vunpack.c.h.b16 %v2495
      %v2516 = vunpack.c.l.b16 %v2496
      %v2517 = vunpack.c.h.b16 %v2496
      %v2518 = vunpack.c.l.b16 %v2497
      %v2519 = vunpack.c.h.b16 %v2497
      %v2520 = vunpack.c.l.b16 %v2498
      %v2521 = vunpack.c.h.b16 %v2498
      %v2522 = vunpack.c.l.b16 %v2499
      %v2523 = vunpack.c.h.b16 %v2499
      %v2524 = vpack.c.b16 %v2512, %v2508
      %v2525 = vpack.c.b16 %v2513, %v2509
      %v2526 = vpack.c.b16 %v2514, %v2510
      %v2527 = vpack.c.b16 %v2515, %v2511
      %v2528 = vpack.c.b16 %v2520, %v2516
      %v2529 = vpack.c.b16 %v2521, %v2517
      %v2530 = vpack.c.b16 %v2522, %v2518
      %v2531 = vpack.c.b16 %v2523, %v2519
      %2532 = vrot.lane.b32.xlu0 %v2524, 35
      %v2533 = vpop.permute.xlu0 %2532
      %2534 = vrot.lane.b32.xlu0 %v2525, 35
      %v2535 = vpop.permute.xlu0 %2534
      %2536 = vrot.lane.b32.xlu0 %v2526, 35
      %v2537 = vpop.permute.xlu0 %2536
      %2538 = vrot.lane.b32.xlu0 %v2527, 35
      %v2539 = vpop.permute.xlu0 %2538
      %2540 = vrot.lane.b32.xlu0 %v2528, 35
      %v2541 = vpop.permute.xlu0 %2540
      %2542 = vrot.lane.b32.xlu0 %v2529, 35
      %v2543 = vpop.permute.xlu0 %2542
      %2544 = vrot.lane.b32.xlu0 %v2530, 35
      %v2545 = vpop.permute.xlu0 %2544
      %2546 = vrot.lane.b32.xlu0 %v2531, 35
      %v2547 = vpop.permute.xlu0 %2546
      %vm2548 = vcmask 285696
      %v2549 = vsel %vm2548, %v2533, %v2535
      %v2550 = vsel %vm2548, %v2535, %v2537
      %v2551 = vsel %vm2548, %v2537, %v2539
      %v2552 = vsel %vm2548, %v2541, %v2543
      %v2553 = vsel %vm2548, %v2543, %v2545
      %v2554 = vsel %vm2548, %v2545, %v2547
      %2561 = vst [vmem:[#allocation2 + $0x630] sm:$0xff] %v2549
      %2562 = vst [vmem:[#allocation2 + $0x638] sm:$0xff] %v2550
      %2563 = vst.msk [vmem:[#allocation2 + $0x640] sm:$0xff] %vm243, %v2551
      %2564 = vst [vmem:[#allocation2 + $0x648] sm:$0xff] %v2552
      %2565 = vst [vmem:[#allocation2 + $0x650] sm:$0xff] %v2553
      %2566 = vst.msk [vmem:[#allocation2 + $0x658] sm:$0xff] %vm243, %v2554
      %v2567 = vld [vmem:[%s192] sm:$0xff]
      %v2568 = vld [vmem:[%s192 + $0x8] sm:$0xff]
      %v2569 = vld [vmem:[%s192 + $0x10] sm:$0xff]
      %v2570 = vld [vmem:[%s192 + $0x18] sm:$0xff]
      %v2571 = vld [vmem:[%s192 + $0x20] sm:$0xff]
      %v2572 = vld [vmem:[%s192 + $0x28] sm:$0xff]
      %v2573 = vld [vmem:[%s192 + $0x30] sm:$0xff]
      %v2574 = vld [vmem:[%s192 + $0x38] sm:$0xff]
      %v2583 = vunpack.c.l.b16 %v2567
      %v2584 = vunpack.c.h.b16 %v2567
      %v2585 = vunpack.c.l.b16 %v2568
      %v2586 = vunpack.c.h.b16 %v2568
      %v2587 = vunpack.c.l.b16 %v2569
      %v2588 = vunpack.c.h.b16 %v2569
      %v2589 = vunpack.c.l.b16 %v2570
      %v2590 = vunpack.c.h.b16 %v2570
      %v2591 = vunpack.c.l.b16 %v2571
      %v2592 = vunpack.c.h.b16 %v2571
      %v2593 = vunpack.c.l.b16 %v2572
      %v2594 = vunpack.c.h.b16 %v2572
      %v2595 = vunpack.c.l.b16 %v2573
      %v2596 = vunpack.c.h.b16 %v2573
      %v2597 = vunpack.c.l.b16 %v2574
      %v2598 = vunpack.c.h.b16 %v2574
      %v2599 = vpack.c.b16 %v2587, %v2583
      %v2600 = vpack.c.b16 %v2588, %v2584
      %v2601 = vpack.c.b16 %v2589, %v2585
      %v2602 = vpack.c.b16 %v2590, %v2586
      %v2603 = vpack.c.b16 %v2595, %v2591
      %v2604 = vpack.c.b16 %v2596, %v2592
      %v2605 = vpack.c.b16 %v2597, %v2593
      %v2606 = vpack.c.b16 %v2598, %v2594
      %2607 = vrot.lane.b32.xlu0 %v2599, 34
      %v2608 = vpop.permute.xlu0 %2607
      %2609 = vrot.lane.b32.xlu0 %v2600, 34
      %v2610 = vpop.permute.xlu0 %2609
      %2611 = vrot.lane.b32.xlu0 %v2601, 34
      %v2612 = vpop.permute.xlu0 %2611
      %2613 = vrot.lane.b32.xlu0 %v2602, 34
      %v2614 = vpop.permute.xlu0 %2613
      %2615 = vrot.lane.b32.xlu0 %v2603, 34
      %v2616 = vpop.permute.xlu0 %2615
      %2617 = vrot.lane.b32.xlu0 %v2604, 34
      %v2618 = vpop.permute.xlu0 %2617
      %2619 = vrot.lane.b32.xlu0 %v2605, 34
      %v2620 = vpop.permute.xlu0 %2619
      %2621 = vrot.lane.b32.xlu0 %v2606, 34
      %v2622 = vpop.permute.xlu0 %2621
      %vm2623 = vcmask 277504
      %v2624 = vsel %vm2623, %v2608, %v2610
      %v2625 = vsel %vm2623, %v2610, %v2612
      %v2626 = vsel %vm2623, %v2612, %v2614
      %v2627 = vsel %vm2623, %v2616, %v2618
      %v2628 = vsel %vm2623, %v2618, %v2620
      %v2629 = vsel %vm2623, %v2620, %v2622
      %2636 = vst [vmem:[#allocation2 + $0x660] sm:$0xff] %v2624
      %2637 = vst [vmem:[#allocation2 + $0x668] sm:$0xff] %v2625
      %2638 = vst.msk [vmem:[#allocation2 + $0x670] sm:$0xff] %vm243, %v2626
      %2639 = vst [vmem:[#allocation2 + $0x678] sm:$0xff] %v2627
      %2640 = vst [vmem:[#allocation2 + $0x680] sm:$0xff] %v2628
      %2641 = vst.msk [vmem:[#allocation2 + $0x688] sm:$0xff] %vm243, %v2629
      %v2642 = vld [vmem:[%s192] sm:$0xff]
      %v2643 = vld [vmem:[%s192 + $0x8] sm:$0xff]
      %v2644 = vld [vmem:[%s192 + $0x10] sm:$0xff]
      %v2645 = vld [vmem:[%s192 + $0x18] sm:$0xff]
      %v2646 = vld [vmem:[%s192 + $0x20] sm:$0xff]
      %v2647 = vld [vmem:[%s192 + $0x28] sm:$0xff]
      %v2648 = vld [vmem:[%s192 + $0x30] sm:$0xff]
      %v2649 = vld [vmem:[%s192 + $0x38] sm:$0xff]
      %v2658 = vunpack.c.l.b16 %v2642
      %v2659 = vunpack.c.h.b16 %v2642
      %v2660 = vunpack.c.l.b16 %v2643
      %v2661 = vunpack.c.h.b16 %v2643
      %v2662 = vunpack.c.l.b16 %v2644
      %v2663 = vunpack.c.h.b16 %v2644
      %v2664 = vunpack.c.l.b16 %v2645
      %v2665 = vunpack.c.h.b16 %v2645
      %v2666 = vunpack.c.l.b16 %v2646
      %v2667 = vunpack.c.h.b16 %v2646
      %v2668 = vunpack.c.l.b16 %v2647
      %v2669 = vunpack.c.h.b16 %v2647
      %v2670 = vunpack.c.l.b16 %v2648
      %v2671 = vunpack.c.h.b16 %v2648
      %v2672 = vunpack.c.l.b16 %v2649
      %v2673 = vunpack.c.h.b16 %v2649
      %v2674 = vpack.c.b16 %v2662, %v2658
      %v2675 = vpack.c.b16 %v2663, %v2659
      %v2676 = vpack.c.b16 %v2664, %v2660
      %v2677 = vpack.c.b16 %v2665, %v2661
      %v2678 = vpack.c.b16 %v2670, %v2666
      %v2679 = vpack.c.b16 %v2671, %v2667
      %v2680 = vpack.c.b16 %v2672, %v2668
      %v2681 = vpack.c.b16 %v2673, %v2669
      %2682 = vrot.lane.b32.xlu0 %v2674, 18
      %v2683 = vpop.permute.xlu0 %2682
      %2684 = vrot.lane.b32.xlu0 %v2675, 18
      %v2685 = vpop.permute.xlu0 %2684
      %2686 = vrot.lane.b32.xlu0 %v2676, 18
      %v2687 = vpop.permute.xlu0 %2686
      %2688 = vrot.lane.b32.xlu0 %v2677, 18
      %v2689 = vpop.permute.xlu0 %2688
      %2690 = vrot.lane.b32.xlu0 %v2678, 18
      %v2691 = vpop.permute.xlu0 %2690
      %2692 = vrot.lane.b32.xlu0 %v2679, 18
      %v2693 = vpop.permute.xlu0 %2692
      %2694 = vrot.lane.b32.xlu0 %v2680, 18
      %v2695 = vpop.permute.xlu0 %2694
      %2696 = vrot.lane.b32.xlu0 %v2681, 18
      %v2697 = vpop.permute.xlu0 %2696
      %vm2698 = vcmask 146432
      %v2699 = vsel %vm2698, %v2683, %v2685
      %v2700 = vsel %vm2698, %v2685, %v2687
      %v2701 = vsel %vm2698, %v2687, %v2689
      %v2702 = vsel %vm2698, %v2691, %v2693
      %v2703 = vsel %vm2698, %v2693, %v2695
      %v2704 = vsel %vm2698, %v2695, %v2697
      %2711 = vst [vmem:[#allocation2 + $0x690] sm:$0xff] %v2699
      %2712 = vst [vmem:[#allocation2 + $0x698] sm:$0xff] %v2700
      %2713 = vst.msk [vmem:[#allocation2 + $0x6a0] sm:$0xff] %vm243, %v2701
      %2714 = vst [vmem:[#allocation2 + $0x6a8] sm:$0xff] %v2702
      %2715 = vst [vmem:[#allocation2 + $0x6b0] sm:$0xff] %v2703
      %2716 = vst.msk [vmem:[#allocation2 + $0x6b8] sm:$0xff] %vm243, %v2704
      %v2717 = vld [vmem:[%s192] sm:$0xff]
      %v2718 = vld [vmem:[%s192 + $0x8] sm:$0xff]
      %v2719 = vld [vmem:[%s192 + $0x10] sm:$0xff]
      %v2720 = vld [vmem:[%s192 + $0x18] sm:$0xff]
      %v2721 = vld [vmem:[%s192 + $0x20] sm:$0xff]
      %v2722 = vld [vmem:[%s192 + $0x28] sm:$0xff]
      %v2723 = vld [vmem:[%s192 + $0x30] sm:$0xff]
      %v2724 = vld [vmem:[%s192 + $0x38] sm:$0xff]
      %v2733 = vunpack.c.l.b16 %v2717
      %v2734 = vunpack.c.h.b16 %v2717
      %v2735 = vunpack.c.l.b16 %v2718
      %v2736 = vunpack.c.h.b16 %v2718
      %v2737 = vunpack.c.l.b16 %v2719
      %v2738 = vunpack.c.h.b16 %v2719
      %v2739 = vunpack.c.l.b16 %v2720
      %v2740 = vunpack.c.h.b16 %v2720
      %v2741 = vunpack.c.l.b16 %v2721
      %v2742 = vunpack.c.h.b16 %v2721
      %v2743 = vunpack.c.l.b16 %v2722
      %v2744 = vunpack.c.h.b16 %v2722
      %v2745 = vunpack.c.l.b16 %v2723
      %v2746 = vunpack.c.h.b16 %v2723
      %v2747 = vunpack.c.l.b16 %v2724
      %v2748 = vunpack.c.h.b16 %v2724
      %v2749 = vpack.c.b16 %v2737, %v2733
      %v2750 = vpack.c.b16 %v2738, %v2734
      %v2751 = vpack.c.b16 %v2739, %v2735
      %v2752 = vpack.c.b16 %v2740, %v2736
      %v2753 = vpack.c.b16 %v2745, %v2741
      %v2754 = vpack.c.b16 %v2746, %v2742
      %v2755 = vpack.c.b16 %v2747, %v2743
      %v2756 = vpack.c.b16 %v2748, %v2744
      %2757 = vrot.lane.b32.xlu0 %v2749, 17
      %v2758 = vpop.permute.xlu0 %2757
      %2759 = vrot.lane.b32.xlu0 %v2750, 17
      %v2760 = vpop.permute.xlu0 %2759
      %2761 = vrot.lane.b32.xlu0 %v2751, 17
      %v2762 = vpop.permute.xlu0 %2761
      %2763 = vrot.lane.b32.xlu0 %v2752, 17
      %v2764 = vpop.permute.xlu0 %2763
      %2765 = vrot.lane.b32.xlu0 %v2753, 17
      %v2766 = vpop.permute.xlu0 %2765
      %2767 = vrot.lane.b32.xlu0 %v2754, 17
      %v2768 = vpop.permute.xlu0 %2767
      %2769 = vrot.lane.b32.xlu0 %v2755, 17
      %v2770 = vpop.permute.xlu0 %2769
      %2771 = vrot.lane.b32.xlu0 %v2756, 17
      %v2772 = vpop.permute.xlu0 %2771
      %vm2773 = vcmask 138240
      %v2774 = vsel %vm2773, %v2758, %v2760
      %v2775 = vsel %vm2773, %v2760, %v2762
      %v2776 = vsel %vm2773, %v2762, %v2764
      %v2777 = vsel %vm2773, %v2766, %v2768
      %v2778 = vsel %vm2773, %v2768, %v2770
      %v2779 = vsel %vm2773, %v2770, %v2772
      %2786 = vst [vmem:[#allocation2 + $0x6c0] sm:$0xff] %v2774
      %2787 = vst [vmem:[#allocation2 + $0x6c8] sm:$0xff] %v2775
      %2788 = vst.msk [vmem:[#allocation2 + $0x6d0] sm:$0xff] %vm243, %v2776
      %2789 = vst [vmem:[#allocation2 + $0x6d8] sm:$0xff] %v2777
      %2790 = vst [vmem:[#allocation2 + $0x6e0] sm:$0xff] %v2778
      %2791 = vst.msk [vmem:[#allocation2 + $0x6e8] sm:$0xff] %vm243, %v2779
      %v2792 = vld [vmem:[%s192] sm:$0xff]
      %v2793 = vld [vmem:[%s192 + $0x8] sm:$0xff]
      %v2794 = vld [vmem:[%s192 + $0x10] sm:$0xff]
      %v2795 = vld [vmem:[%s192 + $0x18] sm:$0xff]
      %v2796 = vld [vmem:[%s192 + $0x20] sm:$0xff]
      %v2797 = vld [vmem:[%s192 + $0x28] sm:$0xff]
      %v2798 = vld [vmem:[%s192 + $0x30] sm:$0xff]
      %v2799 = vld [vmem:[%s192 + $0x38] sm:$0xff]
      %v2808 = vunpack.c.l.b16 %v2792
      %v2809 = vunpack.c.h.b16 %v2792
      %v2810 = vunpack.c.l.b16 %v2793
      %v2811 = vunpack.c.h.b16 %v2793
      %v2812 = vunpack.c.l.b16 %v2794
      %v2813 = vunpack.c.h.b16 %v2794
      %v2814 = vunpack.c.l.b16 %v2795
      %v2815 = vunpack.c.h.b16 %v2795
      %v2816 = vunpack.c.l.b16 %v2796
      %v2817 = vunpack.c.h.b16 %v2796
      %v2818 = vunpack.c.l.b16 %v2797
      %v2819 = vunpack.c.h.b16 %v2797
      %v2820 = vunpack.c.l.b16 %v2798
      %v2821 = vunpack.c.h.b16 %v2798
      %v2822 = vunpack.c.l.b16 %v2799
      %v2823 = vunpack.c.h.b16 %v2799
      %v2824 = vpack.c.b16 %v2812, %v2808
      %v2825 = vpack.c.b16 %v2813, %v2809
      %v2826 = vpack.c.b16 %v2814, %v2810
      %v2827 = vpack.c.b16 %v2815, %v2811
      %v2828 = vpack.c.b16 %v2820, %v2816
      %v2829 = vpack.c.b16 %v2821, %v2817
      %v2830 = vpack.c.b16 %v2822, %v2818
      %v2831 = vpack.c.b16 %v2823, %v2819
      %2832 = vrot.lane.b32.xlu0 %v2824, 16
      %v2833 = vpop.permute.xlu0 %2832
      %2834 = vrot.lane.b32.xlu0 %v2825, 16
      %v2835 = vpop.permute.xlu0 %2834
      %2836 = vrot.lane.b32.xlu0 %v2826, 16
      %v2837 = vpop.permute.xlu0 %2836
      %2838 = vrot.lane.b32.xlu0 %v2827, 16
      %v2839 = vpop.permute.xlu0 %2838
      %2840 = vrot.lane.b32.xlu0 %v2828, 16
      %v2841 = vpop.permute.xlu0 %2840
      %2842 = vrot.lane.b32.xlu0 %v2829, 16
      %v2843 = vpop.permute.xlu0 %2842
      %2844 = vrot.lane.b32.xlu0 %v2830, 16
      %v2845 = vpop.permute.xlu0 %2844
      %2846 = vrot.lane.b32.xlu0 %v2831, 16
      %v2847 = vpop.permute.xlu0 %2846
      %vm2848 = vcmask 130048
      %v2849 = vsel %vm2848, %v2833, %v2835
      %v2850 = vsel %vm2848, %v2835, %v2837
      %v2851 = vsel %vm2848, %v2837, %v2839
      %v2852 = vsel %vm2848, %v2841, %v2843
      %v2853 = vsel %vm2848, %v2843, %v2845
      %v2854 = vsel %vm2848, %v2845, %v2847
      %2861 = vst [vmem:[#allocation2 + $0x6f0] sm:$0xff] %v2849
      %2862 = vst [vmem:[#allocation2 + $0x6f8] sm:$0xff] %v2850
      %2863 = vst.msk [vmem:[#allocation2 + $0x700] sm:$0xff] %vm243, %v2851
      %2864 = vst [vmem:[#allocation2 + $0x708] sm:$0xff] %v2852
      %2865 = vst [vmem:[#allocation2 + $0x710] sm:$0xff] %v2853
      %2866 = vst.msk [vmem:[#allocation2 + $0x718] sm:$0xff] %vm243, %v2854
      %v2867 = vld [vmem:[%s192] sm:$0xff]
      %v2868 = vld [vmem:[%s192 + $0x8] sm:$0xff]
      %v2869 = vld [vmem:[%s192 + $0x10] sm:$0xff]
      %v2870 = vld [vmem:[%s192 + $0x18] sm:$0xff]
      %v2871 = vld [vmem:[%s192 + $0x20] sm:$0xff]
      %v2872 = vld [vmem:[%s192 + $0x28] sm:$0xff]
      %v2873 = vld [vmem:[%s192 + $0x30] sm:$0xff]
      %v2874 = vld [vmem:[%s192 + $0x38] sm:$0xff]
      %v2883 = vunpack.c.l.b16 %v2867
      %v2884 = vunpack.c.h.b16 %v2867
      %v2885 = vunpack.c.l.b16 %v2868
      %v2886 = vunpack.c.h.b16 %v2868
      %v2887 = vunpack.c.l.b16 %v2869
      %v2888 = vunpack.c.h.b16 %v2869
      %v2889 = vunpack.c.l.b16 %v2870
      %v2890 = vunpack.c.h.b16 %v2870
      %v2891 = vunpack.c.l.b16 %v2871
      %v2892 = vunpack.c.h.b16 %v2871
      %v2893 = vunpack.c.l.b16 %v2872
      %v2894 = vunpack.c.h.b16 %v2872
      %v2895 = vunpack.c.l.b16 %v2873
      %v2896 = vunpack.c.h.b16 %v2873
      %v2897 = vunpack.c.l.b16 %v2874
      %v2898 = vunpack.c.h.b16 %v2874
      %v2899 = vpack.c.b16 %v2887, %v2883
      %v2900 = vpack.c.b16 %v2888, %v2884
      %v2901 = vpack.c.b16 %v2889, %v2885
      %v2902 = vpack.c.b16 %v2890, %v2886
      %v2903 = vpack.c.b16 %v2895, %v2891
      %v2904 = vpack.c.b16 %v2896, %v2892
      %v2905 = vpack.c.b16 %v2897, %v2893
      %v2906 = vpack.c.b16 %v2898, %v2894
      %2907 = vrot.lane.b32.xlu0 %v2899, 15
      %v2908 = vpop.permute.xlu0 %2907
      %2909 = vrot.lane.b32.xlu0 %v2900, 15
      %v2910 = vpop.permute.xlu0 %2909
      %2911 = vrot.lane.b32.xlu0 %v2901, 15
      %v2912 = vpop.permute.xlu0 %2911
      %2913 = vrot.lane.b32.xlu0 %v2902, 15
      %v2914 = vpop.permute.xlu0 %2913
      %2915 = vrot.lane.b32.xlu0 %v2903, 15
      %v2916 = vpop.permute.xlu0 %2915
      %2917 = vrot.lane.b32.xlu0 %v2904, 15
      %v2918 = vpop.permute.xlu0 %2917
      %2919 = vrot.lane.b32.xlu0 %v2905, 15
      %v2920 = vpop.permute.xlu0 %2919
      %2921 = vrot.lane.b32.xlu0 %v2906, 15
      %v2922 = vpop.permute.xlu0 %2921
      %vm2923 = vcmask 121856
      %v2924 = vsel %vm2923, %v2908, %v2910
      %v2925 = vsel %vm2923, %v2910, %v2912
      %v2926 = vsel %vm2923, %v2912, %v2914
      %v2927 = vsel %vm2923, %v2916, %v2918
      %v2928 = vsel %vm2923, %v2918, %v2920
      %v2929 = vsel %vm2923, %v2920, %v2922
      %2936 = vst [vmem:[#allocation2 + $0x720] sm:$0xff] %v2924
      %2937 = vst [vmem:[#allocation2 + $0x728] sm:$0xff] %v2925
      %2938 = vst.msk [vmem:[#allocation2 + $0x730] sm:$0xff] %vm243, %v2926
      %2939 = vst [vmem:[#allocation2 + $0x738] sm:$0xff] %v2927
      %2940 = vst [vmem:[#allocation2 + $0x740] sm:$0xff] %v2928
      %2941 = vst.msk [vmem:[#allocation2 + $0x748] sm:$0xff] %vm243, %v2929
      %v2942 = vld [vmem:[%s192] sm:$0xff]
      %v2943 = vld [vmem:[%s192 + $0x8] sm:$0xff]
      %v2944 = vld [vmem:[%s192 + $0x10] sm:$0xff]
      %v2945 = vld [vmem:[%s192 + $0x18] sm:$0xff]
      %v2946 = vld [vmem:[%s192 + $0x20] sm:$0xff]
      %v2947 = vld [vmem:[%s192 + $0x28] sm:$0xff]
      %v2948 = vld [vmem:[%s192 + $0x30] sm:$0xff]
      %v2949 = vld [vmem:[%s192 + $0x38] sm:$0xff]
      %v2958 = vunpack.c.l.b16 %v2942
      %v2959 = vunpack.c.h.b16 %v2942
      %v2960 = vunpack.c.l.b16 %v2943
      %v2961 = vunpack.c.h.b16 %v2943
      %v2962 = vunpack.c.l.b16 %v2944
      %v2963 = vunpack.c.h.b16 %v2944
      %v2964 = vunpack.c.l.b16 %v2945
      %v2965 = vunpack.c.h.b16 %v2945
      %v2966 = vunpack.c.l.b16 %v2946
      %v2967 = vunpack.c.h.b16 %v2946
      %v2968 = vunpack.c.l.b16 %v2947
      %v2969 = vunpack.c.h.b16 %v2947
      %v2970 = vunpack.c.l.b16 %v2948
      %v2971 = vunpack.c.h.b16 %v2948
      %v2972 = vunpack.c.l.b16 %v2949
      %v2973 = vunpack.c.h.b16 %v2949
      %v2974 = vpack.c.b16 %v2962, %v2958
      %v2975 = vpack.c.b16 %v2963, %v2959
      %v2976 = vpack.c.b16 %v2964, %v2960
      %v2977 = vpack.c.b16 %v2965, %v2961
      %v2978 = vpack.c.b16 %v2970, %v2966
      %v2979 = vpack.c.b16 %v2971, %v2967
      %v2980 = vpack.c.b16 %v2972, %v2968
      %v2981 = vpack.c.b16 %v2973, %v2969
      %2982 = vrot.lane.b32.xlu0 %v2974, 14
      %v2983 = vpop.permute.xlu0 %2982
      %2984 = vrot.lane.b32.xlu0 %v2975, 14
      %v2985 = vpop.permute.xlu0 %2984
      %2986 = vrot.lane.b32.xlu0 %v2976, 14
      %v2987 = vpop.permute.xlu0 %2986
      %2988 = vrot.lane.b32.xlu0 %v2977, 14
      %v2989 = vpop.permute.xlu0 %2988
      %2990 = vrot.lane.b32.xlu0 %v2978, 14
      %v2991 = vpop.permute.xlu0 %2990
      %2992 = vrot.lane.b32.xlu0 %v2979, 14
      %v2993 = vpop.permute.xlu0 %2992
      %2994 = vrot.lane.b32.xlu0 %v2980, 14
      %v2995 = vpop.permute.xlu0 %2994
      %2996 = vrot.lane.b32.xlu0 %v2981, 14
      %v2997 = vpop.permute.xlu0 %2996
      %vm2998 = vcmask 113664
      %v2999 = vsel %vm2998, %v2983, %v2985
      %v3000 = vsel %vm2998, %v2985, %v2987
      %v3001 = vsel %vm2998, %v2987, %v2989
      %v3002 = vsel %vm2998, %v2991, %v2993
      %v3003 = vsel %vm2998, %v2993, %v2995
      %v3004 = vsel %vm2998, %v2995, %v2997
      %3011 = vst [vmem:[#allocation2 + $0x750] sm:$0xff] %v2999
      %3012 = vst [vmem:[#allocation2 + $0x758] sm:$0xff] %v3000
      %3013 = vst.msk [vmem:[#allocation2 + $0x760] sm:$0xff] %vm243, %v3001
      %3014 = vst [vmem:[#allocation2 + $0x768] sm:$0xff] %v3002
      %3015 = vst [vmem:[#allocation2 + $0x770] sm:$0xff] %v3003
      %3016 = vst.msk [vmem:[#allocation2 + $0x778] sm:$0xff] %vm243, %v3004
      %v3017 = vld [vmem:[%s192] sm:$0xff]
      %v3018 = vld [vmem:[%s192 + $0x8] sm:$0xff]
      %v3019 = vld [vmem:[%s192 + $0x10] sm:$0xff]
      %v3020 = vld [vmem:[%s192 + $0x18] sm:$0xff]
      %v3021 = vld [vmem:[%s192 + $0x20] sm:$0xff]
      %v3022 = vld [vmem:[%s192 + $0x28] sm:$0xff]
      %v3023 = vld [vmem:[%s192 + $0x30] sm:$0xff]
      %v3024 = vld [vmem:[%s192 + $0x38] sm:$0xff]
      %v3033 = vunpack.c.l.b16 %v3017
      %v3034 = vunpack.c.h.b16 %v3017
      %v3035 = vunpack.c.l.b16 %v3018
      %v3036 = vunpack.c.h.b16 %v3018
      %v3037 = vunpack.c.l.b16 %v3019
      %v3038 = vunpack.c.h.b16 %v3019
      %v3039 = vunpack.c.l.b16 %v3020
      %v3040 = vunpack.c.h.b16 %v3020
      %v3041 = vunpack.c.l.b16 %v3021
      %v3042 = vunpack.c.h.b16 %v3021
      %v3043 = vunpack.c.l.b16 %v3022
      %v3044 = vunpack.c.h.b16 %v3022
      %v3045 = vunpack.c.l.b16 %v3023
      %v3046 = vunpack.c.h.b16 %v3023
      %v3047 = vunpack.c.l.b16 %v3024
      %v3048 = vunpack.c.h.b16 %v3024
      %v3049 = vpack.c.b16 %v3037, %v3033
      %v3050 = vpack.c.b16 %v3038, %v3034
      %v3051 = vpack.c.b16 %v3039, %v3035
      %v3052 = vpack.c.b16 %v3040, %v3036
      %v3053 = vpack.c.b16 %v3045, %v3041
      %v3054 = vpack.c.b16 %v3046, %v3042
      %v3055 = vpack.c.b16 %v3047, %v3043
      %v3056 = vpack.c.b16 %v3048, %v3044
      %3057 = vrot.lane.b32.xlu0 %v3049, 13
      %v3058 = vpop.permute.xlu0 %3057
      %3059 = vrot.lane.b32.xlu0 %v3050, 13
      %v3060 = vpop.permute.xlu0 %3059
      %3061 = vrot.lane.b32.xlu0 %v3051, 13
      %v3062 = vpop.permute.xlu0 %3061
      %3063 = vrot.lane.b32.xlu0 %v3052, 13
      %v3064 = vpop.permute.xlu0 %3063
      %3065 = vrot.lane.b32.xlu0 %v3053, 13
      %v3066 = vpop.permute.xlu0 %3065
      %3067 = vrot.lane.b32.xlu0 %v3054, 13
      %v3068 = vpop.permute.xlu0 %3067
      %3069 = vrot.lane.b32.xlu0 %v3055, 13
      %v3070 = vpop.permute.xlu0 %3069
      %3071 = vrot.lane.b32.xlu0 %v3056, 13
      %v3072 = vpop.permute.xlu0 %3071
      %vm3073 = vcmask 105472
      %v3074 = vsel %vm3073, %v3058, %v3060
      %v3075 = vsel %vm3073, %v3060, %v3062
      %v3076 = vsel %vm3073, %v3062, %v3064
      %v3077 = vsel %vm3073, %v3066, %v3068
      %v3078 = vsel %vm3073, %v3068, %v3070
      %v3079 = vsel %vm3073, %v3070, %v3072
      %3086 = vst [vmem:[#allocation2 + $0x780] sm:$0xff] %v3074
      %3087 = vst [vmem:[#allocation2 + $0x788] sm:$0xff] %v3075
      %3088 = vst.msk [vmem:[#allocation2 + $0x790] sm:$0xff] %vm243, %v3076
      %3089 = vst [vmem:[#allocation2 + $0x798] sm:$0xff] %v3077
      %3090 = vst [vmem:[#allocation2 + $0x7a0] sm:$0xff] %v3078
      %3091 = vst.msk [vmem:[#allocation2 + $0x7a8] sm:$0xff] %vm243, %v3079
      %v3092 = vld [vmem:[%s192] sm:$0xff]
      %v3093 = vld [vmem:[%s192 + $0x8] sm:$0xff]
      %v3094 = vld [vmem:[%s192 + $0x10] sm:$0xff]
      %v3095 = vld [vmem:[%s192 + $0x18] sm:$0xff]
      %v3096 = vld [vmem:[%s192 + $0x20] sm:$0xff]
      %v3097 = vld [vmem:[%s192 + $0x28] sm:$0xff]
      %v3098 = vld [vmem:[%s192 + $0x30] sm:$0xff]
      %v3099 = vld [vmem:[%s192 + $0x38] sm:$0xff]
      %v3108 = vunpack.c.l.b16 %v3092
      %v3109 = vunpack.c.h.b16 %v3092
      %v3110 = vunpack.c.l.b16 %v3093
      %v3111 = vunpack.c.h.b16 %v3093
      %v3112 = vunpack.c.l.b16 %v3094
      %v3113 = vunpack.c.h.b16 %v3094
      %v3114 = vunpack.c.l.b16 %v3095
      %v3115 = vunpack.c.h.b16 %v3095
      %v3116 = vunpack.c.l.b16 %v3096
      %v3117 = vunpack.c.h.b16 %v3096
      %v3118 = vunpack.c.l.b16 %v3097
      %v3119 = vunpack.c.h.b16 %v3097
      %v3120 = vunpack.c.l.b16 %v3098
      %v3121 = vunpack.c.h.b16 %v3098
      %v3122 = vunpack.c.l.b16 %v3099
      %v3123 = vunpack.c.h.b16 %v3099
      %v3124 = vpack.c.b16 %v3112, %v3108
      %v3125 = vpack.c.b16 %v3113, %v3109
      %v3126 = vpack.c.b16 %v3114, %v3110
      %v3127 = vpack.c.b16 %v3115, %v3111
      %v3128 = vpack.c.b16 %v3120, %v3116
      %v3129 = vpack.c.b16 %v3121, %v3117
      %v3130 = vpack.c.b16 %v3122, %v3118
      %v3131 = vpack.c.b16 %v3123, %v3119
      %3132 = vrot.lane.b32.xlu0 %v3124, 12
      %v3133 = vpop.permute.xlu0 %3132
      %3134 = vrot.lane.b32.xlu0 %v3125, 12
      %v3135 = vpop.permute.xlu0 %3134
      %3136 = vrot.lane.b32.xlu0 %v3126, 12
      %v3137 = vpop.permute.xlu0 %3136
      %3138 = vrot.lane.b32.xlu0 %v3127, 12
      %v3139 = vpop.permute.xlu0 %3138
      %3140 = vrot.lane.b32.xlu0 %v3128, 12
      %v3141 = vpop.permute.xlu0 %3140
      %3142 = vrot.lane.b32.xlu0 %v3129, 12
      %v3143 = vpop.permute.xlu0 %3142
      %3144 = vrot.lane.b32.xlu0 %v3130, 12
      %v3145 = vpop.permute.xlu0 %3144
      %3146 = vrot.lane.b32.xlu0 %v3131, 12
      %v3147 = vpop.permute.xlu0 %3146
      %vm3148 = vcmask 97280
      %v3149 = vsel %vm3148, %v3133, %v3135
      %v3150 = vsel %vm3148, %v3135, %v3137
      %v3151 = vsel %vm3148, %v3137, %v3139
      %v3152 = vsel %vm3148, %v3141, %v3143
      %v3153 = vsel %vm3148, %v3143, %v3145
      %v3154 = vsel %vm3148, %v3145, %v3147
      %3161 = vst [vmem:[#allocation2 + $0x7b0] sm:$0xff] %v3149
      %3162 = vst [vmem:[#allocation2 + $0x7b8] sm:$0xff] %v3150
      %3163 = vst.msk [vmem:[#allocation2 + $0x7c0] sm:$0xff] %vm243, %v3151
      %3164 = vst [vmem:[#allocation2 + $0x7c8] sm:$0xff] %v3152
      %3165 = vst [vmem:[#allocation2 + $0x7d0] sm:$0xff] %v3153
      %3166 = vst.msk [vmem:[#allocation2 + $0x7d8] sm:$0xff] %vm243, %v3154
      %v3167 = vld [vmem:[%s192 + $0x4] sm:$0xff]
      %v3168 = vld [vmem:[%s192 + $0xc] sm:$0xf]
      %v3169 = vld [vmem:[%s192 + $0x14] sm:$0xff]
      %v3170 = vld [vmem:[%s192 + $0x1c] sm:$0xf]
      %v3171 = vld [vmem:[%s192 + $0x24] sm:$0xff]
      %v3172 = vld [vmem:[%s192 + $0x2c] sm:$0xf]
      %v3173 = vld [vmem:[%s192 + $0x34] sm:$0xff]
      %v3174 = vld [vmem:[%s192 + $0x3c] sm:$0xf]
      %v3183 = vunpack.c.l.b16 %v3167
      %v3184 = vunpack.c.h.b16 %v3167
      %v3185 = vunpack.c.l.b16 %v3168
      %v3186 = vunpack.c.l.b16 %v3169
      %v3187 = vunpack.c.h.b16 %v3169
      %v3188 = vunpack.c.l.b16 %v3170
      %v3189 = vunpack.c.l.b16 %v3171
      %v3190 = vunpack.c.h.b16 %v3171
      %v3191 = vunpack.c.l.b16 %v3172
      %v3192 = vunpack.c.l.b16 %v3173
      %v3193 = vunpack.c.h.b16 %v3173
      %v3194 = vunpack.c.l.b16 %v3174
      %v3195 = vpack.c.b16 %v3186, %v3183
      %v3196 = vpack.c.b16 %v3187, %v3184
      %v3197 = vpack.c.b16 %v3188, %v3185
      %v3198 = vpack.c.b16 %v3192, %v3189
      %v3199 = vpack.c.b16 %v3193, %v3190
      %v3200 = vpack.c.b16 %v3194, %v3191
      %3201 = vrot.lane.b32.xlu0 %v3195, 124
      %v3202 = vpop.permute.xlu0 %3201
      %3203 = vrot.lane.b32.xlu0 %v3196, 124
      %v3204 = vpop.permute.xlu0 %3203
      %3205 = vrot.lane.b32.xlu0 %v3197, 124
      %v3206 = vpop.permute.xlu0 %3205
      %3207 = vrot.lane.b32.xlu0 %v3198, 124
      %v3208 = vpop.permute.xlu0 %3207
      %3209 = vrot.lane.b32.xlu0 %v3199, 124
      %v3210 = vpop.permute.xlu0 %3209
      %3211 = vrot.lane.b32.xlu0 %v3200, 124
      %v3212 = vpop.permute.xlu0 %3211
      %v3213 = vsel %vm483, %v3202, %v3204
      %v3214 = vsel %vm483, %v3204, %v3206
      %v3215 = vsel %vm483, %v3208, %v3210
      %v3216 = vsel %vm483, %v3210, %v3212
      %3223 = vst [vmem:[#allocation2 + $0x7e0] sm:$0xff] %v3213
      %3224 = vst [vmem:[#allocation2 + $0x7e8] sm:$0xff] %v3214
      %3225 = vst.msk [vmem:[#allocation2 + $0x7f0] sm:$0xff] %vm243, %v3206
      %3226 = vst [vmem:[#allocation2 + $0x7f8] sm:$0xff] %v3215
      %3227 = vst [vmem:[#allocation2 + $0x800] sm:$0xff] %v3216
      %3228 = vst.msk [vmem:[#allocation2 + $0x808] sm:$0xff] %vm243, %v3212
      %v3229 = vld [vmem:[%s192 + $0x4] sm:$0xff]
      %v3230 = vld [vmem:[%s192 + $0xc] sm:$0xf]
      %v3231 = vld [vmem:[%s192 + $0x14] sm:$0xff]
      %v3232 = vld [vmem:[%s192 + $0x1c] sm:$0xf]
      %v3233 = vld [vmem:[%s192 + $0x24] sm:$0xff]
      %v3234 = vld [vmem:[%s192 + $0x2c] sm:$0xf]
      %v3235 = vld [vmem:[%s192 + $0x34] sm:$0xff]
      %v3236 = vld [vmem:[%s192 + $0x3c] sm:$0xf]
      %v3245 = vunpack.c.l.b16 %v3229
      %v3246 = vunpack.c.h.b16 %v3229
      %v3247 = vunpack.c.l.b16 %v3230
      %v3248 = vunpack.c.l.b16 %v3231
      %v3249 = vunpack.c.h.b16 %v3231
      %v3250 = vunpack.c.l.b16 %v3232
      %v3251 = vunpack.c.l.b16 %v3233
      %v3252 = vunpack.c.h.b16 %v3233
      %v3253 = vunpack.c.l.b16 %v3234
      %v3254 = vunpack.c.l.b16 %v3235
      %v3255 = vunpack.c.h.b16 %v3235
      %v3256 = vunpack.c.l.b16 %v3236
      %v3257 = vpack.c.b16 %v3248, %v3245
      %v3258 = vpack.c.b16 %v3249, %v3246
      %v3259 = vpack.c.b16 %v3250, %v3247
      %v3260 = vpack.c.b16 %v3254, %v3251
      %v3261 = vpack.c.b16 %v3255, %v3252
      %v3262 = vpack.c.b16 %v3256, %v3253
      %3263 = vrot.lane.b32.xlu0 %v3257, 123
      %v3264 = vpop.permute.xlu0 %3263
      %3265 = vrot.lane.b32.xlu0 %v3258, 123
      %v3266 = vpop.permute.xlu0 %3265
      %3267 = vrot.lane.b32.xlu0 %v3259, 123
      %v3268 = vpop.permute.xlu0 %3267
      %3269 = vrot.lane.b32.xlu0 %v3260, 123
      %v3270 = vpop.permute.xlu0 %3269
      %3271 = vrot.lane.b32.xlu0 %v3261, 123
      %v3272 = vpop.permute.xlu0 %3271
      %3273 = vrot.lane.b32.xlu0 %v3262, 123
      %v3274 = vpop.permute.xlu0 %3273
      %v3275 = vsel %vm546, %v3264, %v3266
      %v3276 = vsel %vm546, %v3266, %v3268
      %v3277 = vsel %vm546, %v3270, %v3272
      %v3278 = vsel %vm546, %v3272, %v3274
      %3285 = vst [vmem:[#allocation2 + $0x810] sm:$0xff] %v3275
      %3286 = vst [vmem:[#allocation2 + $0x818] sm:$0xff] %v3276
      %3287 = vst.msk [vmem:[#allocation2 + $0x820] sm:$0xff] %vm243, %v3268
      %3288 = vst [vmem:[#allocation2 + $0x828] sm:$0xff] %v3277
      %3289 = vst [vmem:[#allocation2 + $0x830] sm:$0xff] %v3278
      %3290 = vst.msk [vmem:[#allocation2 + $0x838] sm:$0xff] %vm243, %v3274
      %v3291 = vld [vmem:[%s192 + $0x4] sm:$0xff]
      %v3292 = vld [vmem:[%s192 + $0xc] sm:$0xf]
      %v3293 = vld [vmem:[%s192 + $0x14] sm:$0xff]
      %v3294 = vld [vmem:[%s192 + $0x1c] sm:$0xf]
      %v3295 = vld [vmem:[%s192 + $0x24] sm:$0xff]
      %v3296 = vld [vmem:[%s192 + $0x2c] sm:$0xf]
      %v3297 = vld [vmem:[%s192 + $0x34] sm:$0xff]
      %v3298 = vld [vmem:[%s192 + $0x3c] sm:$0xf]
      %v3307 = vunpack.c.l.b16 %v3291
      %v3308 = vunpack.c.h.b16 %v3291
      %v3309 = vunpack.c.l.b16 %v3292
      %v3310 = vunpack.c.l.b16 %v3293
      %v3311 = vunpack.c.h.b16 %v3293
      %v3312 = vunpack.c.l.b16 %v3294
      %v3313 = vunpack.c.l.b16 %v3295
      %v3314 = vunpack.c.h.b16 %v3295
      %v3315 = vunpack.c.l.b16 %v3296
      %v3316 = vunpack.c.l.b16 %v3297
      %v3317 = vunpack.c.h.b16 %v3297
      %v3318 = vunpack.c.l.b16 %v3298
      %v3319 = vpack.c.b16 %v3310, %v3307
      %v3320 = vpack.c.b16 %v3311, %v3308
      %v3321 = vpack.c.b16 %v3312, %v3309
      %v3322 = vpack.c.b16 %v3316, %v3313
      %v3323 = vpack.c.b16 %v3317, %v3314
      %v3324 = vpack.c.b16 %v3318, %v3315
      %3325 = vrot.lane.b32.xlu0 %v3319, 122
      %v3326 = vpop.permute.xlu0 %3325
      %3327 = vrot.lane.b32.xlu0 %v3320, 122
      %v3328 = vpop.permute.xlu0 %3327
      %3329 = vrot.lane.b32.xlu0 %v3321, 122
      %v3330 = vpop.permute.xlu0 %3329
      %3331 = vrot.lane.b32.xlu0 %v3322, 122
      %v3332 = vpop.permute.xlu0 %3331
      %3333 = vrot.lane.b32.xlu0 %v3323, 122
      %v3334 = vpop.permute.xlu0 %3333
      %3335 = vrot.lane.b32.xlu0 %v3324, 122
      %v3336 = vpop.permute.xlu0 %3335
      %v3337 = vsel %vm609, %v3326, %v3328
      %v3338 = vsel %vm609, %v3328, %v3330
      %v3339 = vsel %vm609, %v3332, %v3334
      %v3340 = vsel %vm609, %v3334, %v3336
      %3347 = vst [vmem:[#allocation2 + $0x840] sm:$0xff] %v3337
      %3348 = vst [vmem:[#allocation2 + $0x848] sm:$0xff] %v3338
      %3349 = vst.msk [vmem:[#allocation2 + $0x850] sm:$0xff] %vm243, %v3330
      %3350 = vst [vmem:[#allocation2 + $0x858] sm:$0xff] %v3339
      %3351 = vst [vmem:[#allocation2 + $0x860] sm:$0xff] %v3340
      %3352 = vst.msk [vmem:[#allocation2 + $0x868] sm:$0xff] %vm243, %v3336
      %v3353 = vld [vmem:[%s192 + $0x4] sm:$0xff]
      %v3354 = vld [vmem:[%s192 + $0xc] sm:$0xf]
      %v3355 = vld [vmem:[%s192 + $0x14] sm:$0xff]
      %v3356 = vld [vmem:[%s192 + $0x1c] sm:$0xf]
      %v3357 = vld [vmem:[%s192 + $0x24] sm:$0xff]
      %v3358 = vld [vmem:[%s192 + $0x2c] sm:$0xf]
      %v3359 = vld [vmem:[%s192 + $0x34] sm:$0xff]
      %v3360 = vld [vmem:[%s192 + $0x3c] sm:$0xf]
      %v3369 = vunpack.c.l.b16 %v3353
      %v3370 = vunpack.c.h.b16 %v3353
      %v3371 = vunpack.c.l.b16 %v3354
      %v3372 = vunpack.c.l.b16 %v3355
      %v3373 = vunpack.c.h.b16 %v3355
      %v3374 = vunpack.c.l.b16 %v3356
      %v3375 = vunpack.c.l.b16 %v3357
      %v3376 = vunpack.c.h.b16 %v3357
      %v3377 = vunpack.c.l.b16 %v3358
      %v3378 = vunpack.c.l.b16 %v3359
      %v3379 = vunpack.c.h.b16 %v3359
      %v3380 = vunpack.c.l.b16 %v3360
      %v3381 = vpack.c.b16 %v3372, %v3369
      %v3382 = vpack.c.b16 %v3373, %v3370
      %v3383 = vpack.c.b16 %v3374, %v3371
      %v3384 = vpack.c.b16 %v3378, %v3375
      %v3385 = vpack.c.b16 %v3379, %v3376
      %v3386 = vpack.c.b16 %v3380, %v3377
      %3387 = vrot.lane.b32.xlu0 %v3381, 121
      %v3388 = vpop.permute.xlu0 %3387
      %3389 = vrot.lane.b32.xlu0 %v3382, 121
      %v3390 = vpop.permute.xlu0 %3389
      %3391 = vrot.lane.b32.xlu0 %v3383, 121
      %v3392 = vpop.permute.xlu0 %3391
      %3393 = vrot.lane.b32.xlu0 %v3384, 121
      %v3394 = vpop.permute.xlu0 %3393
      %3395 = vrot.lane.b32.xlu0 %v3385, 121
      %v3396 = vpop.permute.xlu0 %3395
      %3397 = vrot.lane.b32.xlu0 %v3386, 121
      %v3398 = vpop.permute.xlu0 %3397
      %vm3399 = vcmask 990208
      %v3400 = vsel %vm3399, %v3388, %v3390
      %v3401 = vsel %vm3399, %v3390, %v3392
      %v3402 = vsel %vm3399, %v3394, %v3396
      %v3403 = vsel %vm3399, %v3396, %v3398
      %3410 = vst [vmem:[#allocation2 + $0x870] sm:$0xff] %v3400
      %3411 = vst [vmem:[#allocation2 + $0x878] sm:$0xff] %v3401
      %3412 = vst.msk [vmem:[#allocation2 + $0x880] sm:$0xff] %vm243, %v3392
      %3413 = vst [vmem:[#allocation2 + $0x888] sm:$0xff] %v3402
      %3414 = vst [vmem:[#allocation2 + $0x890] sm:$0xff] %v3403
      %3415 = vst.msk [vmem:[#allocation2 + $0x898] sm:$0xff] %vm243, %v3398
      %v3416 = vld [vmem:[%s192 + $0x4] sm:$0xff]
      %v3417 = vld [vmem:[%s192 + $0xc] sm:$0xf]
      %v3418 = vld [vmem:[%s192 + $0x14] sm:$0xff]
      %v3419 = vld [vmem:[%s192 + $0x1c] sm:$0xf]
      %v3420 = vld [vmem:[%s192 + $0x24] sm:$0xff]
      %v3421 = vld [vmem:[%s192 + $0x2c] sm:$0xf]
      %v3422 = vld [vmem:[%s192 + $0x34] sm:$0xff]
      %v3423 = vld [vmem:[%s192 + $0x3c] sm:$0xf]
      %v3432 = vunpack.c.l.b16 %v3416
      %v3433 = vunpack.c.h.b16 %v3416
      %v3434 = vunpack.c.l.b16 %v3417
      %v3435 = vunpack.c.l.b16 %v3418
      %v3436 = vunpack.c.h.b16 %v3418
      %v3437 = vunpack.c.l.b16 %v3419
      %v3438 = vunpack.c.l.b16 %v3420
      %v3439 = vunpack.c.h.b16 %v3420
      %v3440 = vunpack.c.l.b16 %v3421
      %v3441 = vunpack.c.l.b16 %v3422
      %v3442 = vunpack.c.h.b16 %v3422
      %v3443 = vunpack.c.l.b16 %v3423
      %v3444 = vpack.c.b16 %v3435, %v3432
      %v3445 = vpack.c.b16 %v3436, %v3433
      %v3446 = vpack.c.b16 %v3437, %v3434
      %v3447 = vpack.c.b16 %v3441, %v3438
      %v3448 = vpack.c.b16 %v3442, %v3439
      %v3449 = vpack.c.b16 %v3443, %v3440
      %3450 = vrot.lane.b32.xlu0 %v3444, 120
      %v3451 = vpop.permute.xlu0 %3450
      %3452 = vrot.lane.b32.xlu0 %v3445, 120
      %v3453 = vpop.permute.xlu0 %3452
      %3454 = vrot.lane.b32.xlu0 %v3446, 120
      %v3455 = vpop.permute.xlu0 %3454
      %3456 = vrot.lane.b32.xlu0 %v3447, 120
      %v3457 = vpop.permute.xlu0 %3456
      %3458 = vrot.lane.b32.xlu0 %v3448, 120
      %v3459 = vpop.permute.xlu0 %3458
      %3460 = vrot.lane.b32.xlu0 %v3449, 120
      %v3461 = vpop.permute.xlu0 %3460
      %vm3462 = vcmask 982016
      %v3463 = vsel %vm3462, %v3451, %v3453
      %v3464 = vsel %vm3462, %v3453, %v3455
      %v3465 = vsel %vm3462, %v3457, %v3459
      %v3466 = vsel %vm3462, %v3459, %v3461
      %3473 = vst [vmem:[#allocation2 + $0x8a0] sm:$0xff] %v3463
      %3474 = vst [vmem:[#allocation2 + $0x8a8] sm:$0xff] %v3464
      %3475 = vst.msk [vmem:[#allocation2 + $0x8b0] sm:$0xff] %vm243, %v3455
      %3476 = vst [vmem:[#allocation2 + $0x8b8] sm:$0xff] %v3465
      %3477 = vst [vmem:[#allocation2 + $0x8c0] sm:$0xff] %v3466
      %3478 = vst.msk [vmem:[#allocation2 + $0x8c8] sm:$0xff] %vm243, %v3461
      %v3479 = vld [vmem:[%s192 + $0x4] sm:$0xff]
      %v3480 = vld [vmem:[%s192 + $0xc] sm:$0xf]
      %v3481 = vld [vmem:[%s192 + $0x14] sm:$0xff]
      %v3482 = vld [vmem:[%s192 + $0x1c] sm:$0xf]
      %v3483 = vld [vmem:[%s192 + $0x24] sm:$0xff]
      %v3484 = vld [vmem:[%s192 + $0x2c] sm:$0xf]
      %v3485 = vld [vmem:[%s192 + $0x34] sm:$0xff]
      %v3486 = vld [vmem:[%s192 + $0x3c] sm:$0xf]
      %v3495 = vunpack.c.l.b16 %v3479
      %v3496 = vunpack.c.h.b16 %v3479
      %v3497 = vunpack.c.l.b16 %v3480
      %v3498 = vunpack.c.l.b16 %v3481
      %v3499 = vunpack.c.h.b16 %v3481
      %v3500 = vunpack.c.l.b16 %v3482
      %v3501 = vunpack.c.l.b16 %v3483
      %v3502 = vunpack.c.h.b16 %v3483
      %v3503 = vunpack.c.l.b16 %v3484
      %v3504 = vunpack.c.l.b16 %v3485
      %v3505 = vunpack.c.h.b16 %v3485
      %v3506 = vunpack.c.l.b16 %v3486
      %v3507 = vpack.c.b16 %v3498, %v3495
      %v3508 = vpack.c.b16 %v3499, %v3496
      %v3509 = vpack.c.b16 %v3500, %v3497
      %v3510 = vpack.c.b16 %v3504, %v3501
      %v3511 = vpack.c.b16 %v3505, %v3502
      %v3512 = vpack.c.b16 %v3506, %v3503
      %3513 = vrot.lane.b32.xlu0 %v3507, 119
      %v3514 = vpop.permute.xlu0 %3513
      %3515 = vrot.lane.b32.xlu0 %v3508, 119
      %v3516 = vpop.permute.xlu0 %3515
      %3517 = vrot.lane.b32.xlu0 %v3509, 119
      %v3518 = vpop.permute.xlu0 %3517
      %3519 = vrot.lane.b32.xlu0 %v3510, 119
      %v3520 = vpop.permute.xlu0 %3519
      %3521 = vrot.lane.b32.xlu0 %v3511, 119
      %v3522 = vpop.permute.xlu0 %3521
      %3523 = vrot.lane.b32.xlu0 %v3512, 119
      %v3524 = vpop.permute.xlu0 %3523
      %vm3525 = vcmask 973824
      %v3526 = vsel %vm3525, %v3514, %v3516
      %v3527 = vsel %vm3525, %v3516, %v3518
      %v3528 = vsel %vm3525, %v3520, %v3522
      %v3529 = vsel %vm3525, %v3522, %v3524
      %3536 = vst [vmem:[#allocation2 + $0x8d0] sm:$0xff] %v3526
      %3537 = vst [vmem:[#allocation2 + $0x8d8] sm:$0xff] %v3527
      %3538 = vst.msk [vmem:[#allocation2 + $0x8e0] sm:$0xff] %vm243, %v3518
      %3539 = vst [vmem:[#allocation2 + $0x8e8] sm:$0xff] %v3528
      %3540 = vst [vmem:[#allocation2 + $0x8f0] sm:$0xff] %v3529
      %3541 = vst.msk [vmem:[#allocation2 + $0x8f8] sm:$0xff] %vm243, %v3524
      %v3542 = vld [vmem:[%s192 + $0x4] sm:$0xff]
      %v3543 = vld [vmem:[%s192 + $0xc] sm:$0xf]
      %v3544 = vld [vmem:[%s192 + $0x14] sm:$0xff]
      %v3545 = vld [vmem:[%s192 + $0x1c] sm:$0xf]
      %v3546 = vld [vmem:[%s192 + $0x24] sm:$0xff]
      %v3547 = vld [vmem:[%s192 + $0x2c] sm:$0xf]
      %v3548 = vld [vmem:[%s192 + $0x34] sm:$0xff]
      %v3549 = vld [vmem:[%s192 + $0x3c] sm:$0xf]
      %v3558 = vunpack.c.l.b16 %v3542
      %v3559 = vunpack.c.h.b16 %v3542
      %v3560 = vunpack.c.l.b16 %v3543
      %v3561 = vunpack.c.l.b16 %v3544
      %v3562 = vunpack.c.h.b16 %v3544
      %v3563 = vunpack.c.l.b16 %v3545
      %v3564 = vunpack.c.l.b16 %v3546
      %v3565 = vunpack.c.h.b16 %v3546
      %v3566 = vunpack.c.l.b16 %v3547
      %v3567 = vunpack.c.l.b16 %v3548
      %v3568 = vunpack.c.h.b16 %v3548
      %v3569 = vunpack.c.l.b16 %v3549
      %v3570 = vpack.c.b16 %v3561, %v3558
      %v3571 = vpack.c.b16 %v3562, %v3559
      %v3572 = vpack.c.b16 %v3563, %v3560
      %v3573 = vpack.c.b16 %v3567, %v3564
      %v3574 = vpack.c.b16 %v3568, %v3565
      %v3575 = vpack.c.b16 %v3569, %v3566
      %3576 = vrot.lane.b32.xlu0 %v3570, 118
      %v3577 = vpop.permute.xlu0 %3576
      %3578 = vrot.lane.b32.xlu0 %v3571, 118
      %v3579 = vpop.permute.xlu0 %3578
      %3580 = vrot.lane.b32.xlu0 %v3572, 118
      %v3581 = vpop.permute.xlu0 %3580
      %3582 = vrot.lane.b32.xlu0 %v3573, 118
      %v3583 = vpop.permute.xlu0 %3582
      %3584 = vrot.lane.b32.xlu0 %v3574, 118
      %v3585 = vpop.permute.xlu0 %3584
      %3586 = vrot.lane.b32.xlu0 %v3575, 118
      %v3587 = vpop.permute.xlu0 %3586
      %vm3588 = vcmask 965632
      %v3589 = vsel %vm3588, %v3577, %v3579
      %v3590 = vsel %vm3588, %v3579, %v3581
      %v3591 = vsel %vm3588, %v3583, %v3585
      %v3592 = vsel %vm3588, %v3585, %v3587
      %3599 = vst [vmem:[#allocation2 + $0x900] sm:$0xff] %v3589
      %3600 = vst [vmem:[#allocation2 + $0x908] sm:$0xff] %v3590
      %3601 = vst.msk [vmem:[#allocation2 + $0x910] sm:$0xff] %vm243, %v3581
      %3602 = vst [vmem:[#allocation2 + $0x918] sm:$0xff] %v3591
      %3603 = vst [vmem:[#allocation2 + $0x920] sm:$0xff] %v3592
      %3604 = vst.msk [vmem:[#allocation2 + $0x928] sm:$0xff] %vm243, %v3587
      %v3605 = vld [vmem:[%s1] sm:$0xff]
      %v3606 = vld [vmem:[%s1 + $0x8] sm:$0xff]
      %v3607 = vld [vmem:[%s1 + $0x10] sm:$0xff]
      %v3608 = vld [vmem:[%s1 + $0x18] sm:$0xff]
      %v3609 = vld [vmem:[%s1 + $0x20] sm:$0xff]
      %v3610 = vld [vmem:[%s1 + $0x28] sm:$0xff]
      %v3611 = vld [vmem:[%s1 + $0x30] sm:$0xf]
      %v3612 = vld [vmem:[#allocation2] sm:$0xff]
      %v3613 = vld [vmem:[#allocation2 + $0x8] sm:$0xff]
      %v3614 = vld [vmem:[#allocation2 + $0x10] sm:$0xff]
      %v3615 = vld [vmem:[#allocation2 + $0x18] sm:$0xff]
      %v3616 = vld [vmem:[#allocation2 + $0x20] sm:$0xff]
      %v3617 = vld [vmem:[#allocation2 + $0x28] sm:$0xff]
      %v3618 = vld [vmem:[#allocation2 + $0x30] sm:$0xff]
      %v3619 = vld [vmem:[#allocation2 + $0x38] sm:$0xff]
      %v3620 = vld [vmem:[#allocation2 + $0x40] sm:$0xff]
      %v3621 = vld [vmem:[#allocation2 + $0x48] sm:$0xff]
      %v3622 = vld [vmem:[#allocation2 + $0x50] sm:$0xff]
      %v3623 = vld [vmem:[#allocation2 + $0x58] sm:$0xff]
      %v3624 = vld [vmem:[#allocation2 + $0x60] sm:$0xff]
      %v3625 = vld [vmem:[#allocation2 + $0x68] sm:$0xff]
      %v3626 = vld [vmem:[#allocation2 + $0x70] sm:$0xff]
      %v3627 = vld [vmem:[#allocation2 + $0x78] sm:$0xff]
      %v3628 = vld [vmem:[#allocation2 + $0x80] sm:$0xff]
      %v3629 = vld [vmem:[#allocation2 + $0x88] sm:$0xff]
      %v3630 = vld [vmem:[#allocation2 + $0x90] sm:$0xff]
      %v3631 = vld [vmem:[#allocation2 + $0x98] sm:$0xff]
      %v3632 = vld [vmem:[#allocation2 + $0xa0] sm:$0xff]
      %v3633 = vld [vmem:[#allocation2 + $0xa8] sm:$0xff]
      %v3634 = vld [vmem:[#allocation2 + $0xb0] sm:$0xff]
      %v3635 = vld [vmem:[#allocation2 + $0xb8] sm:$0xff]
      %v3636 = vld [vmem:[#allocation2 + $0xc0] sm:$0xff]
      %v3637 = vld [vmem:[#allocation2 + $0xc8] sm:$0xff]
      %v3638 = vld [vmem:[#allocation2 + $0xd0] sm:$0xff]
      %v3639 = vld [vmem:[#allocation2 + $0xd8] sm:$0xff]
      %v3640 = vld [vmem:[#allocation2 + $0xe0] sm:$0xff]
      %v3641 = vld [vmem:[#allocation2 + $0xe8] sm:$0xff]
      %v3642 = vld [vmem:[#allocation2 + $0xf0] sm:$0xff]
      %v3643 = vld [vmem:[#allocation2 + $0xf8] sm:$0xff]
      %v3644 = vld [vmem:[#allocation2 + $0x100] sm:$0xff]
      %v3645 = vld [vmem:[#allocation2 + $0x108] sm:$0xff]
      %v3646 = vld [vmem:[#allocation2 + $0x110] sm:$0xff]
      %v3647 = vld [vmem:[#allocation2 + $0x118] sm:$0xff]
      %v3648 = vld [vmem:[#allocation2 + $0x120] sm:$0xff]
      %v3649 = vld [vmem:[#allocation2 + $0x128] sm:$0xff]
      %v3650 = vld [vmem:[#allocation2 + $0x130] sm:$0xff]
      %v3651 = vld [vmem:[#allocation2 + $0x138] sm:$0xff]
      %v3652 = vld [vmem:[#allocation2 + $0x140] sm:$0xff]
      %v3653 = vld [vmem:[#allocation2 + $0x148] sm:$0xff]
      %v3654 = vld [vmem:[#allocation2 + $0x150] sm:$0xff]
      %v3655 = vld [vmem:[#allocation2 + $0x158] sm:$0xff]
      %v3656 = vld [vmem:[#allocation2 + $0x160] sm:$0xff]
      %v3657 = vld [vmem:[#allocation2 + $0x168] sm:$0xff]
      %v3658 = vld [vmem:[#allocation2 + $0x170] sm:$0xff]
      %v3659 = vld [vmem:[#allocation2 + $0x178] sm:$0xff]
      %v3660 = vld [vmem:[#allocation2 + $0x180] sm:$0xff]
      %v3661 = vld [vmem:[#allocation2 + $0x188] sm:$0xff]
      %v3662 = vld [vmem:[#allocation2 + $0x190] sm:$0xff]
      %v3663 = vld [vmem:[#allocation2 + $0x198] sm:$0xff]
      %v3664 = vld [vmem:[#allocation2 + $0x1a0] sm:$0xff]
      %v3665 = vld [vmem:[#allocation2 + $0x1a8] sm:$0xff]
      %v3666 = vld [vmem:[#allocation2 + $0x1b0] sm:$0xff]
      %v3667 = vld [vmem:[#allocation2 + $0x1b8] sm:$0xff]
      %v3668 = vld [vmem:[#allocation2 + $0x1c0] sm:$0xff]
      %v3669 = vld [vmem:[#allocation2 + $0x1c8] sm:$0xff]
      %v3670 = vld [vmem:[#allocation2 + $0x1d0] sm:$0xff]
      %v3671 = vld [vmem:[#allocation2 + $0x1d8] sm:$0xff]
      %v3672 = vld [vmem:[#allocation2 + $0x1e0] sm:$0xff]
      %v3673 = vld [vmem:[#allocation2 + $0x1e8] sm:$0xff]
      %v3674 = vld [vmem:[#allocation2 + $0x1f0] sm:$0xff]
      %v3675 = vld [vmem:[#allocation2 + $0x1f8] sm:$0xff]
      %v3676 = vld [vmem:[#allocation2 + $0x200] sm:$0xff]
      %v3677 = vld [vmem:[#allocation2 + $0x208] sm:$0xff]
      %v3678 = vld [vmem:[#allocation2 + $0x210] sm:$0xff]
      %v3679 = vld [vmem:[#allocation2 + $0x218] sm:$0xff]
      %v3680 = vld [vmem:[#allocation2 + $0x220] sm:$0xff]
      %v3681 = vld [vmem:[#allocation2 + $0x228] sm:$0xff]
      %v3682 = vld [vmem:[#allocation2 + $0x230] sm:$0xff]
      %v3683 = vld [vmem:[#allocation2 + $0x238] sm:$0xff]
      %v3684 = vld [vmem:[#allocation2 + $0x240] sm:$0xff]
      %v3685 = vld [vmem:[#allocation2 + $0x248] sm:$0xff]
      %v3686 = vld [vmem:[#allocation2 + $0x250] sm:$0xff]
      %v3687 = vld [vmem:[#allocation2 + $0x258] sm:$0xff]
      %v3688 = vld [vmem:[#allocation2 + $0x260] sm:$0xff]
      %v3689 = vld [vmem:[#allocation2 + $0x268] sm:$0xff]
      %v3690 = vld [vmem:[#allocation2 + $0x270] sm:$0xff]
      %v3691 = vld [vmem:[#allocation2 + $0x278] sm:$0xff]
      %v3692 = vld [vmem:[#allocation2 + $0x280] sm:$0xff]
      %v3693 = vld [vmem:[#allocation2 + $0x288] sm:$0xff]
      %v3694 = vld [vmem:[#allocation2 + $0x290] sm:$0xff]
      %v3695 = vld [vmem:[#allocation2 + $0x298] sm:$0xff]
      %v3696 = vld [vmem:[#allocation2 + $0x2a0] sm:$0xff]
      %v3697 = vld [vmem:[#allocation2 + $0x2a8] sm:$0xff]
      %v3698 = vld [vmem:[#allocation2 + $0x2b0] sm:$0xff]
      %v3699 = vld [vmem:[#allocation2 + $0x2b8] sm:$0xff]
      %v3700 = vld [vmem:[#allocation2 + $0x2c0] sm:$0xff]
      %v3701 = vld [vmem:[#allocation2 + $0x2c8] sm:$0xff]
      %v3702 = vld [vmem:[#allocation2 + $0x2d0] sm:$0xff]
      %v3703 = vld [vmem:[#allocation2 + $0x2d8] sm:$0xff]
      %v3704 = vld [vmem:[#allocation2 + $0x2e0] sm:$0xff]
      %v3705 = vld [vmem:[#allocation2 + $0x2e8] sm:$0xff]
      %v3706 = vld [vmem:[#allocation2 + $0x2f0] sm:$0xff]
      %v3707 = vld [vmem:[#allocation2 + $0x2f8] sm:$0xff]
      %v3708 = vld [vmem:[#allocation2 + $0x300] sm:$0xff]
      %v3709 = vld [vmem:[#allocation2 + $0x308] sm:$0xff]
      %v3710 = vld [vmem:[#allocation2 + $0x310] sm:$0xff]
      %v3711 = vld [vmem:[#allocation2 + $0x318] sm:$0xff]
      %v3712 = vld [vmem:[#allocation2 + $0x320] sm:$0xff]
      %v3713 = vld [vmem:[#allocation2 + $0x328] sm:$0xff]
      %v3714 = vld [vmem:[#allocation2 + $0x330] sm:$0xff]
      %v3715 = vld [vmem:[#allocation2 + $0x338] sm:$0xff]
      %v3716 = vld [vmem:[#allocation2 + $0x340] sm:$0xff]
      %v3717 = vld [vmem:[#allocation2 + $0x348] sm:$0xff]
      %v3718 = vld [vmem:[#allocation2 + $0x350] sm:$0xff]
      %v3719 = vld [vmem:[#allocation2 + $0x358] sm:$0xff]
      %v3720 = vld [vmem:[#allocation2 + $0x360] sm:$0xff]
      %v3721 = vld [vmem:[#allocation2 + $0x368] sm:$0xff]
      %v3722 = vld [vmem:[#allocation2 + $0x370] sm:$0xff]
      %v3723 = vld [vmem:[#allocation2 + $0x378] sm:$0xff]
      %v3724 = vld [vmem:[#allocation2 + $0x380] sm:$0xff]
      %v3725 = vld [vmem:[#allocation2 + $0x388] sm:$0xff]
      %v3726 = vld [vmem:[#allocation2 + $0x390] sm:$0xff]
      %v3727 = vld [vmem:[#allocation2 + $0x398] sm:$0xff]
      %v3728 = vld [vmem:[#allocation2 + $0x3a0] sm:$0xff]
      %v3729 = vld [vmem:[#allocation2 + $0x3a8] sm:$0xff]
      %v3730 = vld [vmem:[#allocation2 + $0x3b0] sm:$0xff]
      %v3731 = vld [vmem:[#allocation2 + $0x3b8] sm:$0xff]
      %v3732 = vld [vmem:[#allocation2 + $0x3c0] sm:$0xff]
      %v3733 = vld [vmem:[#allocation2 + $0x3c8] sm:$0xff]
      %v3734 = vld [vmem:[#allocation2 + $0x3d0] sm:$0xff]
      %v3735 = vld [vmem:[#allocation2 + $0x3d8] sm:$0xff]
      %v3736 = vld [vmem:[#allocation2 + $0x3e0] sm:$0xff]
      %v3737 = vld [vmem:[#allocation2 + $0x3e8] sm:$0xff]
      %v3738 = vld [vmem:[#allocation2 + $0x3f0] sm:$0xff]
      %v3739 = vld [vmem:[#allocation2 + $0x3f8] sm:$0xff]
      %v3740 = vld [vmem:[#allocation2 + $0x400] sm:$0xff]
      %v3741 = vld [vmem:[#allocation2 + $0x408] sm:$0xff]
      %v3742 = vld [vmem:[#allocation2 + $0x410] sm:$0xff]
      %v3743 = vld [vmem:[#allocation2 + $0x418] sm:$0xff]
      %v3744 = vld [vmem:[#allocation2 + $0x420] sm:$0xff]
      %v3745 = vld [vmem:[#allocation2 + $0x428] sm:$0xff]
      %v3746 = vld [vmem:[#allocation2 + $0x430] sm:$0xff]
      %v3747 = vld [vmem:[#allocation2 + $0x438] sm:$0xff]
      %v3748 = vld [vmem:[#allocation2 + $0x440] sm:$0xff]
      %v3749 = vld [vmem:[#allocation2 + $0x448] sm:$0xff]
      %v3750 = vld [vmem:[#allocation2 + $0x450] sm:$0xff]
      %v3751 = vld [vmem:[#allocation2 + $0x458] sm:$0xff]
      %v3752 = vld [vmem:[#allocation2 + $0x460] sm:$0xff]
      %v3753 = vld [vmem:[#allocation2 + $0x468] sm:$0xff]
      %v3754 = vld [vmem:[#allocation2 + $0x470] sm:$0xff]
      %v3755 = vld [vmem:[#allocation2 + $0x478] sm:$0xff]
      %v3756 = vld [vmem:[#allocation2 + $0x480] sm:$0xff]
      %v3757 = vld [vmem:[#allocation2 + $0x488] sm:$0xff]
      %v3758 = vld [vmem:[#allocation2 + $0x490] sm:$0xff]
      %v3759 = vld [vmem:[#allocation2 + $0x498] sm:$0xff]
      %v3760 = vld [vmem:[#allocation2 + $0x4a0] sm:$0xff]
      %v3761 = vld [vmem:[#allocation2 + $0x4a8] sm:$0xff]
      %v3762 = vld [vmem:[#allocation2 + $0x4b0] sm:$0xff]
      %v3763 = vld [vmem:[#allocation2 + $0x4b8] sm:$0xff]
      %v3764 = vld [vmem:[#allocation2 + $0x4c0] sm:$0xff]
      %v3765 = vld [vmem:[#allocation2 + $0x4c8] sm:$0xff]
      %v3766 = vld [vmem:[#allocation2 + $0x4d0] sm:$0xff]
      %v3767 = vld [vmem:[#allocation2 + $0x4d8] sm:$0xff]
      %v3768 = vld [vmem:[#allocation2 + $0x4e0] sm:$0xff]
      %v3769 = vld [vmem:[#allocation2 + $0x4e8] sm:$0xff]
      %v3770 = vld [vmem:[#allocation2 + $0x4f0] sm:$0xff]
      %v3771 = vld [vmem:[#allocation2 + $0x4f8] sm:$0xff]
      %v3772 = vld [vmem:[#allocation2 + $0x500] sm:$0xff]
      %v3773 = vld [vmem:[#allocation2 + $0x508] sm:$0xff]
      %v3774 = vld [vmem:[#allocation2 + $0x510] sm:$0xff]
      %v3775 = vld [vmem:[#allocation2 + $0x518] sm:$0xff]
      %v3776 = vld [vmem:[#allocation2 + $0x520] sm:$0xff]
      %v3777 = vld [vmem:[#allocation2 + $0x528] sm:$0xff]
      %v3778 = vld [vmem:[#allocation2 + $0x530] sm:$0xff]
      %v3779 = vld [vmem:[#allocation2 + $0x538] sm:$0xff]
      %v3780 = vld [vmem:[#allocation2 + $0x540] sm:$0xff]
      %v3781 = vld [vmem:[#allocation2 + $0x548] sm:$0xff]
      %v3782 = vld [vmem:[#allocation2 + $0x550] sm:$0xff]
      %v3783 = vld [vmem:[#allocation2 + $0x558] sm:$0xff]
      %v3784 = vld [vmem:[#allocation2 + $0x560] sm:$0xff]
      %v3785 = vld [vmem:[#allocation2 + $0x568] sm:$0xff]
      %v3786 = vld [vmem:[#allocation2 + $0x570] sm:$0xff]
      %v3787 = vld [vmem:[#allocation2 + $0x578] sm:$0xff]
      %v3788 = vld [vmem:[#allocation2 + $0x580] sm:$0xff]
      %v3789 = vld [vmem:[#allocation2 + $0x588] sm:$0xff]
      %v3790 = vld [vmem:[#allocation2 + $0x590] sm:$0xff]
      %v3791 = vld [vmem:[#allocation2 + $0x598] sm:$0xff]
      %v3792 = vld [vmem:[#allocation2 + $0x5a0] sm:$0xff]
      %v3793 = vld [vmem:[#allocation2 + $0x5a8] sm:$0xff]
      %v3794 = vld [vmem:[#allocation2 + $0x5b0] sm:$0xff]
      %v3795 = vld [vmem:[#allocation2 + $0x5b8] sm:$0xff]
      %v3796 = vld [vmem:[#allocation2 + $0x5c0] sm:$0xff]
      %v3797 = vld [vmem:[#allocation2 + $0x5c8] sm:$0xff]
      %v3798 = vld [vmem:[#allocation2 + $0x5d0] sm:$0xff]
      %v3799 = vld [vmem:[#allocation2 + $0x5d8] sm:$0xff]
      %v3800 = vld [vmem:[#allocation2 + $0x5e0] sm:$0xff]
      %v3801 = vld [vmem:[#allocation2 + $0x5e8] sm:$0xff]
      %v3802 = vld [vmem:[#allocation2 + $0x5f0] sm:$0xff]
      %v3803 = vld [vmem:[#allocation2 + $0x5f8] sm:$0xff]
      %v3804 = vld [vmem:[#allocation2 + $0x600] sm:$0xff]
      %v3805 = vld [vmem:[#allocation2 + $0x608] sm:$0xff]
      %v3806 = vld [vmem:[#allocation2 + $0x610] sm:$0xff]
      %v3807 = vld [vmem:[#allocation2 + $0x618] sm:$0xff]
      %v3808 = vld [vmem:[#allocation2 + $0x620] sm:$0xff]
      %v3809 = vld [vmem:[#allocation2 + $0x628] sm:$0xff]
      %v3810 = vld [vmem:[#allocation2 + $0x630] sm:$0xff]
      %v3811 = vld [vmem:[#allocation2 + $0x638] sm:$0xff]
      %v3812 = vld [vmem:[#allocation2 + $0x640] sm:$0xff]
      %v3813 = vld [vmem:[#allocation2 + $0x648] sm:$0xff]
      %v3814 = vld [vmem:[#allocation2 + $0x650] sm:$0xff]
      %v3815 = vld [vmem:[#allocation2 + $0x658] sm:$0xff]
      %v3816 = vld [vmem:[#allocation2 + $0x660] sm:$0xff]
      %v3817 = vld [vmem:[#allocation2 + $0x668] sm:$0xff]
      %v3818 = vld [vmem:[#allocation2 + $0x670] sm:$0xff]
      %v3819 = vld [vmem:[#allocation2 + $0x678] sm:$0xff]
      %v3820 = vld [vmem:[#allocation2 + $0x680] sm:$0xff]
      %v3821 = vld [vmem:[#allocation2 + $0x688] sm:$0xff]
      %v3822 = vld [vmem:[#allocation2 + $0x690] sm:$0xff]
      %v3823 = vld [vmem:[#allocation2 + $0x698] sm:$0xff]
      %v3824 = vld [vmem:[#allocation2 + $0x6a0] sm:$0xff]
      %v3825 = vld [vmem:[#allocation2 + $0x6a8] sm:$0xff]
      %v3826 = vld [vmem:[#allocation2 + $0x6b0] sm:$0xff]
      %v3827 = vld [vmem:[#allocation2 + $0x6b8] sm:$0xff]
      %v3828 = vld [vmem:[#allocation2 + $0x6c0] sm:$0xff]
      %v3829 = vld [vmem:[#allocation2 + $0x6c8] sm:$0xff]
      %v3830 = vld [vmem:[#allocation2 + $0x6d0] sm:$0xff]
      %v3831 = vld [vmem:[#allocation2 + $0x6d8] sm:$0xff]
      %v3832 = vld [vmem:[#allocation2 + $0x6e0] sm:$0xff]
      %v3833 = vld [vmem:[#allocation2 + $0x6e8] sm:$0xff]
      %v3834 = vld [vmem:[#allocation2 + $0x6f0] sm:$0xff]
      %v3835 = vld [vmem:[#allocation2 + $0x6f8] sm:$0xff]
      %v3836 = vld [vmem:[#allocation2 + $0x700] sm:$0xff]
      %v3837 = vld [vmem:[#allocation2 + $0x708] sm:$0xff]
      %v3838 = vld [vmem:[#allocation2 + $0x710] sm:$0xff]
      %v3839 = vld [vmem:[#allocation2 + $0x718] sm:$0xff]
      %v3840 = vld [vmem:[#allocation2 + $0x720] sm:$0xff]
      %v3841 = vld [vmem:[#allocation2 + $0x728] sm:$0xff]
      %v3842 = vld [vmem:[#allocation2 + $0x730] sm:$0xff]
      %v3843 = vld [vmem:[#allocation2 + $0x738] sm:$0xff]
      %v3844 = vld [vmem:[#allocation2 + $0x740] sm:$0xff]
      %v3845 = vld [vmem:[#allocation2 + $0x748] sm:$0xff]
      %v3846 = vld [vmem:[#allocation2 + $0x750] sm:$0xff]
      %v3847 = vld [vmem:[#allocation2 + $0x758] sm:$0xff]
      %v3848 = vld [vmem:[#allocation2 + $0x760] sm:$0xff]
      %v3849 = vld [vmem:[#allocation2 + $0x768] sm:$0xff]
      %v3850 = vld [vmem:[#allocation2 + $0x770] sm:$0xff]
      %v3851 = vld [vmem:[#allocation2 + $0x778] sm:$0xff]
      %v3852 = vld [vmem:[#allocation2 + $0x780] sm:$0xff]
      %v3853 = vld [vmem:[#allocation2 + $0x788] sm:$0xff]
      %v3854 = vld [vmem:[#allocation2 + $0x790] sm:$0xff]
      %v3855 = vld [vmem:[#allocation2 + $0x798] sm:$0xff]
      %v3856 = vld [vmem:[#allocation2 + $0x7a0] sm:$0xff]
      %v3857 = vld [vmem:[#allocation2 + $0x7a8] sm:$0xff]
      %v3858 = vld [vmem:[#allocation2 + $0x7b0] sm:$0xff]
      %v3859 = vld [vmem:[#allocation2 + $0x7b8] sm:$0xff]
      %v3860 = vld [vmem:[#allocation2 + $0x7c0] sm:$0xff]
      %v3861 = vld [vmem:[#allocation2 + $0x7c8] sm:$0xff]
      %v3862 = vld [vmem:[#allocation2 + $0x7d0] sm:$0xff]
      %v3863 = vld [vmem:[#allocation2 + $0x7d8] sm:$0xff]
      %v3864 = vld [vmem:[#allocation2 + $0x7e0] sm:$0xff]
      %v3865 = vld [vmem:[#allocation2 + $0x7e8] sm:$0xff]
      %v3866 = vld [vmem:[#allocation2 + $0x7f0] sm:$0xff]
      %v3867 = vld [vmem:[#allocation2 + $0x7f8] sm:$0xff]
      %v3868 = vld [vmem:[#allocation2 + $0x800] sm:$0xff]
      %v3869 = vld [vmem:[#allocation2 + $0x808] sm:$0xff]
      %v3870 = vld [vmem:[#allocation2 + $0x810] sm:$0xff]
      %v3871 = vld [vmem:[#allocation2 + $0x818] sm:$0xff]
      %v3872 = vld [vmem:[#allocation2 + $0x820] sm:$0xff]
      %v3873 = vld [vmem:[#allocation2 + $0x828] sm:$0xff]
      %v3874 = vld [vmem:[#allocation2 + $0x830] sm:$0xff]
      %v3875 = vld [vmem:[#allocation2 + $0x838] sm:$0xff]
      %v3876 = vld [vmem:[#allocation2 + $0x840] sm:$0xff]
      %v3877 = vld [vmem:[#allocation2 + $0x848] sm:$0xff]
      %v3878 = vld [vmem:[#allocation2 + $0x850] sm:$0xff]
      %v3879 = vld [vmem:[#allocation2 + $0x858] sm:$0xff]
      %v3880 = vld [vmem:[#allocation2 + $0x860] sm:$0xff]
      %v3881 = vld [vmem:[#allocation2 + $0x868] sm:$0xff]
      %v3882 = vld [vmem:[#allocation2 + $0x870] sm:$0xff]
      %v3883 = vld [vmem:[#allocation2 + $0x878] sm:$0xff]
      %v3884 = vld [vmem:[#allocation2 + $0x880] sm:$0xff]
      %v3885 = vld [vmem:[#allocation2 + $0x888] sm:$0xff]
      %v3886 = vld [vmem:[#allocation2 + $0x890] sm:$0xff]
      %v3887 = vld [vmem:[#allocation2 + $0x898] sm:$0xff]
      %v3888 = vld [vmem:[#allocation2 + $0x8a0] sm:$0xff]
      %v3889 = vld [vmem:[#allocation2 + $0x8a8] sm:$0xff]
      %v3890 = vld [vmem:[#allocation2 + $0x8b0] sm:$0xff]
      %v3891 = vld [vmem:[#allocation2 + $0x8b8] sm:$0xff]
      %v3892 = vld [vmem:[#allocation2 + $0x8c0] sm:$0xff]
      %v3893 = vld [vmem:[#allocation2 + $0x8c8] sm:$0xff]
      %v3894 = vld [vmem:[#allocation2 + $0x8d0] sm:$0xff]
      %v3895 = vld [vmem:[#allocation2 + $0x8d8] sm:$0xff]
      %v3896 = vld [vmem:[#allocation2 + $0x8e0] sm:$0xff]
      %v3897 = vld [vmem:[#allocation2 + $0x8e8] sm:$0xff]
      %v3898 = vld [vmem:[#allocation2 + $0x8f0] sm:$0xff]
      %v3899 = vld [vmem:[#allocation2 + $0x8f8] sm:$0xff]
      %v3900 = vld [vmem:[#allocation2 + $0x900] sm:$0xff]
      %v3901 = vld [vmem:[#allocation2 + $0x908] sm:$0xff]
      %v3902 = vld [vmem:[#allocation2 + $0x910] sm:$0xff]
      %v3903 = vld [vmem:[#allocation2 + $0x918] sm:$0xff]
      %v3904 = vld [vmem:[#allocation2 + $0x920] sm:$0xff]
      %v3905 = vld [vmem:[#allocation2 + $0x928] sm:$0xff]
      %v3913 = vunpack.c.l.b16 %v3605
      %v3914 = vunpack.c.h.b16 %v3605
      %v3915 = vunpack.c.l.b16 %v3606
      %v3916 = vunpack.c.h.b16 %v3606
      %v3917 = vunpack.c.l.b16 %v3607
      %v3918 = vunpack.c.h.b16 %v3607
      %v3919 = vunpack.c.l.b16 %v3608
      %v3920 = vunpack.c.h.b16 %v3608
      %v3921 = vunpack.c.l.b16 %v3609
      %v3922 = vunpack.c.h.b16 %v3609
      %v3923 = vunpack.c.l.b16 %v3610
      %v3924 = vunpack.c.h.b16 %v3610
      %v3925 = vunpack.c.l.b16 %v3611
      %v3926 = vpack.c.b16 %v3913, %v3913
      %v3927 = vpack.c.b16 %v3914, %v3914
      %v3928 = vpack.c.b16 %v3915, %v3915
      %v3929 = vpack.c.b16 %v3916, %v3916
      %v3930 = vpack.c.b16 %v3917, %v3917
      %v3931 = vpack.c.b16 %v3918, %v3918
      %v3932 = vpack.c.b16 %v3919, %v3919
      %v3933 = vpack.c.b16 %v3920, %v3920
      %v3934 = vpack.c.b16 %v3921, %v3921
      %v3935 = vpack.c.b16 %v3922, %v3922
      %v3936 = vpack.c.b16 %v3923, %v3923
      %v3937 = vpack.c.b16 %v3924, %v3924
      %v3938 = vpack.c.b16 %v3925, %v3925
      %vm3951 = vcmask 261120
      %v3953 = vsel %vm3951, %v3938, 0
      %3955 = vmatprep.subr.bf16.mxu0 %v3613
      %3956 = vmatpush1.bf16.msra.mxu0 %v3612
      %3957 = vmatprep.subr.bf16.mxu0 %v3616
      %3958 = vmatpush1.bf16.msra.mxu0 %v3615
      %3959 = vmatprep.subr.bf16.mxu0 %v3619
      %3960 = vmatpush1.bf16.msra.mxu0 %v3618
      %3961 = vmatprep.subr.bf16.mxu0 %v3622
      %3962 = vmatpush1.bf16.msra.mxu0 %v3621
      %3963 = vmatprep.subr.bf16.mxu0 %v3625
      %3964 = vmatpush1.bf16.msra.mxu0 %v3624
      %3965 = vmatprep.subr.bf16.mxu0 %v3628
      %3966 = vmatpush1.bf16.msra.mxu0 %v3627
      %3967 = vmatprep.subr.bf16.mxu0 %v3631
      %3968 = vmatpush1.bf16.msra.mxu0 %v3630
      %3969 = vmatprep.subr.bf16.mxu0 %v3634
      %3970 = vmatpush1.bf16.msra.mxu0 %v3633
      %3971 = vmatprep.subr.bf16.mxu0 %v3637
      %3972 = vmatpush1.bf16.msra.mxu0 %v3636
      %3973 = vmatprep.subr.bf16.mxu0 %v3640
      %3974 = vmatpush1.bf16.msra.mxu0 %v3639
      %3975 = vmatprep.subr.bf16.mxu0 %v3643
      %3976 = vmatpush1.bf16.msra.mxu0 %v3642
      %3977 = vmatprep.subr.bf16.mxu0 %v3646
      %3978 = vmatpush1.bf16.msra.mxu0 %v3645
      %3979 = vmatprep.subr.bf16.mxu0 %v3649
      %3980 = vmatpush1.bf16.msra.mxu0 %v3648
      %3981 = vmatprep.subr.bf16.mxu0 %v3652
      %3982 = vmatpush1.bf16.msra.mxu0 %v3651
      %3983 = vmatprep.subr.bf16.mxu0 %v3655
      %3984 = vmatpush1.bf16.msra.mxu0 %v3654
      %3985 = vmatprep.subr.bf16.mxu0 %v3658
      %3986 = vmatpush1.bf16.msra.mxu0 %v3657
      %3987 = vmatprep.mubr.bf16.mxu0 %v3927
      %3988 = vmatmul.mubr.bf16.gmra.mrb[0].mxu0 %v3926
      %v3989 = vpop.f32.mrb[0].mxu0
      %v3990 = vadd.f32 0.0, %v3989
      %v3991 = vpop.f32.mrb[0].mxu0
      %v3992 = vadd.f32 0.0, %v3991
      %v3993 = vpop.f32.mrb[0].mxu0
      %v3994 = vpop.f32.mrb[0].mxu0
      %3995 = vdwg.mxu0
      %3996 = vmatprep.subr.bf16.mxu0 %v3661
      %3997 = vmatpush1.bf16.msra.mxu0 %v3660
      %3998 = vmatprep.subr.bf16.mxu0 %v3664
      %3999 = vmatpush1.bf16.msra.mxu0 %v3663
      %4000 = vmatprep.subr.bf16.mxu0 %v3667
      %4001 = vmatpush1.bf16.msra.mxu0 %v3666
      %4002 = vmatprep.subr.bf16.mxu0 %v3670
      %4003 = vmatpush1.bf16.msra.mxu0 %v3669
      %4004 = vmatprep.subr.bf16.mxu0 %v3673
      %4005 = vmatpush1.bf16.msra.mxu0 %v3672
      %4006 = vmatprep.subr.bf16.mxu0 %v3676
      %4007 = vmatpush1.bf16.msra.mxu0 %v3675
      %4008 = vmatprep.subr.bf16.mxu0 %v3679
      %4009 = vmatpush1.bf16.msra.mxu0 %v3678
      %4010 = vmatprep.subr.bf16.mxu0 %v3682
      %4011 = vmatpush1.bf16.msra.mxu0 %v3681
      %4012 = vmatprep.subr.bf16.mxu0 %v3685
      %4013 = vmatpush1.bf16.msra.mxu0 %v3684
      %4014 = vmatprep.subr.bf16.mxu0 %v3688
      %4015 = vmatpush1.bf16.msra.mxu0 %v3687
      %4016 = vmatprep.subr.bf16.mxu0 %v3691
      %4017 = vmatpush1.bf16.msra.mxu0 %v3690
      %4018 = vmatprep.subr.bf16.mxu0 %v3694
      %4019 = vmatpush1.bf16.msra.mxu0 %v3693
      %4020 = vmatprep.subr.bf16.mxu0 %v3697
      %4021 = vmatpush1.bf16.msra.mxu0 %v3696
      %4022 = vmatprep.subr.bf16.mxu0 %v3700
      %4023 = vmatpush1.bf16.msra.mxu0 %v3699
      %4024 = vmatprep.subr.bf16.mxu0 %v3703
      %4025 = vmatpush1.bf16.msra.mxu0 %v3702
      %4026 = vmatprep.subr.bf16.mxu0 %v3706
      %4027 = vmatpush1.bf16.msra.mxu0 %v3705
      %4028 = vmatprep.mubr.bf16.mxu0 %v3929
      %4029 = vmatmul.mubr.bf16.gmra.mrb[0].mxu0 %v3928
      %v4030 = vpop.f32.mrb[0].mxu0
      %v4031 = vadd.f32 %v3990, %v4030
      %v4032 = vpop.f32.mrb[0].mxu0
      %v4033 = vadd.f32 %v3992, %v4032
      %v4034 = vpop.f32.mrb[0].mxu0
      %v4035 = vpop.f32.mrb[0].mxu0
      %4036 = vdwg.mxu0
      %4037 = vmatprep.subr.bf16.mxu0 %v3709
      %4038 = vmatpush1.bf16.msra.mxu0 %v3708
      %4039 = vmatprep.subr.bf16.mxu0 %v3712
      %4040 = vmatpush1.bf16.msra.mxu0 %v3711
      %4041 = vmatprep.subr.bf16.mxu0 %v3715
      %4042 = vmatpush1.bf16.msra.mxu0 %v3714
      %4043 = vmatprep.subr.bf16.mxu0 %v3718
      %4044 = vmatpush1.bf16.msra.mxu0 %v3717
      %4045 = vmatprep.subr.bf16.mxu0 %v3721
      %4046 = vmatpush1.bf16.msra.mxu0 %v3720
      %4047 = vmatprep.subr.bf16.mxu0 %v3724
      %4048 = vmatpush1.bf16.msra.mxu0 %v3723
      %4049 = vmatprep.subr.bf16.mxu0 %v3727
      %4050 = vmatpush1.bf16.msra.mxu0 %v3726
      %4051 = vmatprep.subr.bf16.mxu0 %v3730
      %4052 = vmatpush1.bf16.msra.mxu0 %v3729
      %4053 = vmatprep.subr.bf16.mxu0 %v3733
      %4054 = vmatpush1.bf16.msra.mxu0 %v3732
      %4055 = vmatprep.subr.bf16.mxu0 %v3736
      %4056 = vmatpush1.bf16.msra.mxu0 %v3735
      %4057 = vmatprep.subr.bf16.mxu0 %v3739
      %4058 = vmatpush1.bf16.msra.mxu0 %v3738
      %4059 = vmatprep.subr.bf16.mxu0 %v3742
      %4060 = vmatpush1.bf16.msra.mxu0 %v3741
      %4061 = vmatprep.subr.bf16.mxu0 %v3745
      %4062 = vmatpush1.bf16.msra.mxu0 %v3744
      %4063 = vmatprep.subr.bf16.mxu0 %v3748
      %4064 = vmatpush1.bf16.msra.mxu0 %v3747
      %4065 = vmatprep.subr.bf16.mxu0 %v3751
      %4066 = vmatpush1.bf16.msra.mxu0 %v3750
      %4067 = vmatprep.subr.bf16.mxu0 %v3754
      %4068 = vmatpush1.bf16.msra.mxu0 %v3753
      %4069 = vmatprep.mubr.bf16.mxu0 %v3931
      %4070 = vmatmul.mubr.bf16.gmra.mrb[0].mxu0 %v3930
      %v4071 = vpop.f32.mrb[0].mxu0
      %v4072 = vadd.f32 %v4031, %v4071
      %v4073 = vpop.f32.mrb[0].mxu0
      %v4074 = vadd.f32 %v4033, %v4073
      %v4075 = vpop.f32.mrb[0].mxu0
      %v4076 = vpop.f32.mrb[0].mxu0
      %4077 = vdwg.mxu0
      %4078 = vmatprep.subr.bf16.mxu0 %v3757
      %4079 = vmatpush1.bf16.msra.mxu0 %v3756
      %4080 = vmatprep.subr.bf16.mxu0 %v3760
      %4081 = vmatpush1.bf16.msra.mxu0 %v3759
      %4082 = vmatprep.subr.bf16.mxu0 %v3763
      %4083 = vmatpush1.bf16.msra.mxu0 %v3762
      %4084 = vmatprep.subr.bf16.mxu0 %v3766
      %4085 = vmatpush1.bf16.msra.mxu0 %v3765
      %4086 = vmatprep.subr.bf16.mxu0 %v3769
      %4087 = vmatpush1.bf16.msra.mxu0 %v3768
      %4088 = vmatprep.subr.bf16.mxu0 %v3772
      %4089 = vmatpush1.bf16.msra.mxu0 %v3771
      %4090 = vmatprep.subr.bf16.mxu0 %v3775
      %4091 = vmatpush1.bf16.msra.mxu0 %v3774
      %4092 = vmatprep.subr.bf16.mxu0 %v3778
      %4093 = vmatpush1.bf16.msra.mxu0 %v3777
      %4094 = vmatprep.subr.bf16.mxu0 %v3781
      %4095 = vmatpush1.bf16.msra.mxu0 %v3780
      %4096 = vmatprep.subr.bf16.mxu0 %v3784
      %4097 = vmatpush1.bf16.msra.mxu0 %v3783
      %4098 = vmatprep.subr.bf16.mxu0 %v3787
      %4099 = vmatpush1.bf16.msra.mxu0 %v3786
      %4100 = vmatprep.subr.bf16.mxu0 %v3790
      %4101 = vmatpush1.bf16.msra.mxu0 %v3789
      %4102 = vmatprep.subr.bf16.mxu0 %v3793
      %4103 = vmatpush1.bf16.msra.mxu0 %v3792
      %4104 = vmatprep.subr.bf16.mxu0 %v3796
      %4105 = vmatpush1.bf16.msra.mxu0 %v3795
      %4106 = vmatprep.subr.bf16.mxu0 %v3799
      %4107 = vmatpush1.bf16.msra.mxu0 %v3798
      %4108 = vmatprep.subr.bf16.mxu0 %v3802
      %4109 = vmatpush1.bf16.msra.mxu0 %v3801
      %4110 = vmatprep.mubr.bf16.mxu0 %v3933
      %4111 = vmatmul.mubr.bf16.gmra.mrb[0].mxu0 %v3932
      %v4112 = vpop.f32.mrb[0].mxu0
      %v4113 = vadd.f32 %v4072, %v4112
      %v4114 = vpop.f32.mrb[0].mxu0
      %v4115 = vadd.f32 %v4074, %v4114
      %v4116 = vpop.f32.mrb[0].mxu0
      %v4117 = vpop.f32.mrb[0].mxu0
      %4118 = vdwg.mxu0
      %4119 = vmatprep.subr.bf16.mxu0 %v3805
      %4120 = vmatpush1.bf16.msra.mxu0 %v3804
      %4121 = vmatprep.subr.bf16.mxu0 %v3808
      %4122 = vmatpush1.bf16.msra.mxu0 %v3807
      %4123 = vmatprep.subr.bf16.mxu0 %v3811
      %4124 = vmatpush1.bf16.msra.mxu0 %v3810
      %4125 = vmatprep.subr.bf16.mxu0 %v3814
      %4126 = vmatpush1.bf16.msra.mxu0 %v3813
      %4127 = vmatprep.subr.bf16.mxu0 %v3817
      %4128 = vmatpush1.bf16.msra.mxu0 %v3816
      %4129 = vmatprep.subr.bf16.mxu0 %v3820
      %4130 = vmatpush1.bf16.msra.mxu0 %v3819
      %4131 = vmatprep.subr.bf16.mxu0 %v3823
      %4132 = vmatpush1.bf16.msra.mxu0 %v3822
      %4133 = vmatprep.subr.bf16.mxu0 %v3826
      %4134 = vmatpush1.bf16.msra.mxu0 %v3825
      %4135 = vmatprep.subr.bf16.mxu0 %v3829
      %4136 = vmatpush1.bf16.msra.mxu0 %v3828
      %4137 = vmatprep.subr.bf16.mxu0 %v3832
      %4138 = vmatpush1.bf16.msra.mxu0 %v3831
      %4139 = vmatprep.subr.bf16.mxu0 %v3835
      %4140 = vmatpush1.bf16.msra.mxu0 %v3834
      %4141 = vmatprep.subr.bf16.mxu0 %v3838
      %4142 = vmatpush1.bf16.msra.mxu0 %v3837
      %4143 = vmatprep.subr.bf16.mxu0 %v3841
      %4144 = vmatpush1.bf16.msra.mxu0 %v3840
      %4145 = vmatprep.subr.bf16.mxu0 %v3844
      %4146 = vmatpush1.bf16.msra.mxu0 %v3843
      %4147 = vmatprep.subr.bf16.mxu0 %v3847
      %4148 = vmatpush1.bf16.msra.mxu0 %v3846
      %4149 = vmatprep.subr.bf16.mxu0 %v3850
      %4150 = vmatpush1.bf16.msra.mxu0 %v3849
      %4151 = vmatprep.mubr.bf16.mxu0 %v3935
      %4152 = vmatmul.mubr.bf16.gmra.mrb[0].mxu0 %v3934
      %v4153 = vpop.f32.mrb[0].mxu0
      %v4154 = vadd.f32 %v4113, %v4153
      %v4155 = vpop.f32.mrb[0].mxu0
      %v4156 = vadd.f32 %v4115, %v4155
      %v4157 = vpop.f32.mrb[0].mxu0
      %v4158 = vpop.f32.mrb[0].mxu0
      %4159 = vdwg.mxu0
      %4160 = vmatprep.subr.bf16.mxu0 %v3853
      %4161 = vmatpush1.bf16.msra.mxu0 %v3852
      %4162 = vmatprep.subr.bf16.mxu0 %v3856
      %4163 = vmatpush1.bf16.msra.mxu0 %v3855
      %4164 = vmatprep.subr.bf16.mxu0 %v3859
      %4165 = vmatpush1.bf16.msra.mxu0 %v3858
      %4166 = vmatprep.subr.bf16.mxu0 %v3862
      %4167 = vmatpush1.bf16.msra.mxu0 %v3861
      %4168 = vmatprep.subr.bf16.mxu0 %v3865
      %4169 = vmatpush1.bf16.msra.mxu0 %v3864
      %4170 = vmatprep.subr.bf16.mxu0 %v3868
      %4171 = vmatpush1.bf16.msra.mxu0 %v3867
      %4172 = vmatprep.subr.bf16.mxu0 %v3871
      %4173 = vmatpush1.bf16.msra.mxu0 %v3870
      %4174 = vmatprep.subr.bf16.mxu0 %v3874
      %4175 = vmatpush1.bf16.msra.mxu0 %v3873
      %4176 = vmatprep.subr.bf16.mxu0 %v3877
      %4177 = vmatpush1.bf16.msra.mxu0 %v3876
      %4178 = vmatprep.subr.bf16.mxu0 %v3880
      %4179 = vmatpush1.bf16.msra.mxu0 %v3879
      %4180 = vmatprep.subr.bf16.mxu0 %v3883
      %4181 = vmatpush1.bf16.msra.mxu0 %v3882
      %4182 = vmatprep.subr.bf16.mxu0 %v3886
      %4183 = vmatpush1.bf16.msra.mxu0 %v3885
      %4184 = vmatprep.subr.bf16.mxu0 %v3889
      %4185 = vmatpush1.bf16.msra.mxu0 %v3888
      %4186 = vmatprep.subr.bf16.mxu0 %v3892
      %4187 = vmatpush1.bf16.msra.mxu0 %v3891
      %4188 = vmatprep.subr.bf16.mxu0 %v3895
      %4189 = vmatpush1.bf16.msra.mxu0 %v3894
      %4190 = vmatprep.subr.bf16.mxu0 %v3898
      %4191 = vmatpush1.bf16.msra.mxu0 %v3897
      %4192 = vmatprep.mubr.bf16.mxu0 %v3937
      %4193 = vmatmul.mubr.bf16.gmra.mrb[0].mxu0 %v3936
      %v4194 = vpop.f32.mrb[0].mxu0
      %v4195 = vadd.f32 %v4154, %v4194
      %v4196 = vpop.f32.mrb[0].mxu0
      %v4197 = vadd.f32 %v4156, %v4196
      %v4198 = vpop.f32.mrb[0].mxu0
      %v4199 = vpop.f32.mrb[0].mxu0
      %4200 = vdwg.mxu0
      %4201 = vmatprep.subr.bf16.mxu0 %v3901
      %4202 = vmatpush1.bf16.msra.mxu0 %v3900
      %4203 = vmatprep.subr.bf16.mxu0 %v3904
      %4204 = vmatpush1.bf16.msra.mxu0 %v3903
      %4205 = vmatprep.subr.bf16.mxu0 0
      %4206 = vmatpush1.bf16.msra.mxu0 0
      %4207 = vmatprep.subr.bf16.mxu0 0
      %4208 = vmatpush1.bf16.msra.mxu0 0
      %4209 = vmatprep.subr.bf16.mxu0 0
      %4210 = vmatpush1.bf16.msra.mxu0 0
      %4211 = vmatprep.subr.bf16.mxu0 0
      %4212 = vmatpush1.bf16.msra.mxu0 0
      %4213 = vmatprep.subr.bf16.mxu0 0
      %4214 = vmatpush1.bf16.msra.mxu0 0
      %4215 = vmatprep.subr.bf16.mxu0 0
      %4216 = vmatpush1.bf16.msra.mxu0 0
      %4217 = vmatprep.subr.bf16.mxu0 0
      %4218 = vmatpush1.bf16.msra.mxu0 0
      %4219 = vmatprep.subr.bf16.mxu0 0
      %4220 = vmatpush1.bf16.msra.mxu0 0
      %4221 = vmatprep.subr.bf16.mxu0 0
      %4222 = vmatpush1.bf16.msra.mxu0 0
      %4223 = vmatprep.subr.bf16.mxu0 0
      %4224 = vmatpush1.bf16.msra.mxu0 0
      %4225 = vmatprep.subr.bf16.mxu0 0
      %4226 = vmatpush1.bf16.msra.mxu0 0
      %4227 = vmatprep.subr.bf16.mxu0 0
      %4228 = vmatpush1.bf16.msra.mxu0 0
      %4229 = vmatprep.subr.bf16.mxu0 0
      %4230 = vmatpush1.bf16.msra.mxu0 0
      %4231 = vmatprep.subr.bf16.mxu0 0
      %4232 = vmatpush1.bf16.msra.mxu0 0
      %4233 = vmatprep.mubr.bf16.mxu0 0
      %4234 = vmatmul.mubr.bf16.gmra.mrb[0].mxu0 %v3953
      %v4235 = vpop.f32.mrb[0].mxu0
      %v4236 = vadd.f32 %v4195, %v4235
      %v4237 = vpop.f32.mrb[0].mxu0
      %v4238 = vadd.f32 %v4197, %v4237
      %v4239 = vpop.f32.mrb[0].mxu0
      %v4240 = vpop.f32.mrb[0].mxu0
      %4241 = vdwg.mxu0
      %4242 = vmatprep.subr.bf16.mxu0 0
      %4243 = vmatpush1.bf16.msra.mxu0 %v3614
      %4244 = vmatprep.subr.bf16.mxu0 0
      %4245 = vmatpush1.bf16.msra.mxu0 %v3617
      %4246 = vmatprep.subr.bf16.mxu0 0
      %4247 = vmatpush1.bf16.msra.mxu0 %v3620
      %4248 = vmatprep.subr.bf16.mxu0 0
      %4249 = vmatpush1.bf16.msra.mxu0 %v3623
      %4250 = vmatprep.subr.bf16.mxu0 0
      %4251 = vmatpush1.bf16.msra.mxu0 %v3626
      %4252 = vmatprep.subr.bf16.mxu0 0
      %4253 = vmatpush1.bf16.msra.mxu0 %v3629
      %4254 = vmatprep.subr.bf16.mxu0 0
      %4255 = vmatpush1.bf16.msra.mxu0 %v3632
      %4256 = vmatprep.subr.bf16.mxu0 0
      %4257 = vmatpush1.bf16.msra.mxu0 %v3635
      %4258 = vmatprep.subr.bf16.mxu0 0
      %4259 = vmatpush1.bf16.msra.mxu0 %v3638
      %4260 = vmatprep.subr.bf16.mxu0 0
      %4261 = vmatpush1.bf16.msra.mxu0 %v3641
      %4262 = vmatprep.subr.bf16.mxu0 0
      %4263 = vmatpush1.bf16.msra.mxu0 %v3644
      %4264 = vmatprep.subr.bf16.mxu0 0
      %4265 = vmatpush1.bf16.msra.mxu0 %v3647
      %4266 = vmatprep.subr.bf16.mxu0 0
      %4267 = vmatpush1.bf16.msra.mxu0 %v3650
      %4268 = vmatprep.subr.bf16.mxu0 0
      %4269 = vmatpush1.bf16.msra.mxu0 %v3653
      %4270 = vmatprep.subr.bf16.mxu0 0
      %4271 = vmatpush1.bf16.msra.mxu0 %v3656
      %4272 = vmatprep.subr.bf16.mxu0 0
      %4273 = vmatpush1.bf16.msra.mxu0 %v3659
      %4274 = vmatprep.mubr.bf16.mxu0 %v3927
      %4275 = vmatmul.mubr.bf16.gmra.mrb[0].mxu0 %v3926
      %v4276 = vpop.f32.mrb[0].mxu0
      %v4277 = vadd.f32 0.0, %v4276
      %v4278 = vpop.f32.mrb[0].mxu0
      %v4279 = vpop.f32.mrb[0].mxu0
      %v4280 = vpop.f32.mrb[0].mxu0
      %4281 = vdwg.mxu0
      %4282 = vmatprep.subr.bf16.mxu0 0
      %4283 = vmatpush1.bf16.msra.mxu0 %v3662
      %4284 = vmatprep.subr.bf16.mxu0 0
      %4285 = vmatpush1.bf16.msra.mxu0 %v3665
      %4286 = vmatprep.subr.bf16.mxu0 0
      %4287 = vmatpush1.bf16.msra.mxu0 %v3668
      %4288 = vmatprep.subr.bf16.mxu0 0
      %4289 = vmatpush1.bf16.msra.mxu0 %v3671
      %4290 = vmatprep.subr.bf16.mxu0 0
      %4291 = vmatpush1.bf16.msra.mxu0 %v3674
      %4292 = vmatprep.subr.bf16.mxu0 0
      %4293 = vmatpush1.bf16.msra.mxu0 %v3677
      %4294 = vmatprep.subr.bf16.mxu0 0
      %4295 = vmatpush1.bf16.msra.mxu0 %v3680
      %4296 = vmatprep.subr.bf16.mxu0 0
      %4297 = vmatpush1.bf16.msra.mxu0 %v3683
      %4298 = vmatprep.subr.bf16.mxu0 0
      %4299 = vmatpush1.bf16.msra.mxu0 %v3686
      %4300 = vmatprep.subr.bf16.mxu0 0
      %4301 = vmatpush1.bf16.msra.mxu0 %v3689
      %4302 = vmatprep.subr.bf16.mxu0 0
      %4303 = vmatpush1.bf16.msra.mxu0 %v3692
      %4304 = vmatprep.subr.bf16.mxu0 0
      %4305 = vmatpush1.bf16.msra.mxu0 %v3695
      %4306 = vmatprep.subr.bf16.mxu0 0
      %4307 = vmatpush1.bf16.msra.mxu0 %v3698
      %4308 = vmatprep.subr.bf16.mxu0 0
      %4309 = vmatpush1.bf16.msra.mxu0 %v3701
      %4310 = vmatprep.subr.bf16.mxu0 0
      %4311 = vmatpush1.bf16.msra.mxu0 %v3704
      %4312 = vmatprep.subr.bf16.mxu0 0
      %4313 = vmatpush1.bf16.msra.mxu0 %v3707
      %4314 = vmatprep.mubr.bf16.mxu0 %v3929
      %4315 = vmatmul.mubr.bf16.gmra.mrb[0].mxu0 %v3928
      %v4316 = vpop.f32.mrb[0].mxu0
      %v4317 = vadd.f32 %v4277, %v4316
      %v4318 = vpop.f32.mrb[0].mxu0
      %v4319 = vpop.f32.mrb[0].mxu0
      %v4320 = vpop.f32.mrb[0].mxu0
      %4321 = vdwg.mxu0
      %4322 = vmatprep.subr.bf16.mxu0 0
      %4323 = vmatpush1.bf16.msra.mxu0 %v3710
      %4324 = vmatprep.subr.bf16.mxu0 0
      %4325 = vmatpush1.bf16.msra.mxu0 %v3713
      %4326 = vmatprep.subr.bf16.mxu0 0
      %4327 = vmatpush1.bf16.msra.mxu0 %v3716
      %4328 = vmatprep.subr.bf16.mxu0 0
      %4329 = vmatpush1.bf16.msra.mxu0 %v3719
      %4330 = vmatprep.subr.bf16.mxu0 0
      %4331 = vmatpush1.bf16.msra.mxu0 %v3722
      %4332 = vmatprep.subr.bf16.mxu0 0
      %4333 = vmatpush1.bf16.msra.mxu0 %v3725
      %4334 = vmatprep.subr.bf16.mxu0 0
      %4335 = vmatpush1.bf16.msra.mxu0 %v3728
      %4336 = vmatprep.subr.bf16.mxu0 0
      %4337 = vmatpush1.bf16.msra.mxu0 %v3731
      %4338 = vmatprep.subr.bf16.mxu0 0
      %4339 = vmatpush1.bf16.msra.mxu0 %v3734
      %4340 = vmatprep.subr.bf16.mxu0 0
      %4341 = vmatpush1.bf16.msra.mxu0 %v3737
      %4342 = vmatprep.subr.bf16.mxu0 0
      %4343 = vmatpush1.bf16.msra.mxu0 %v3740
      %4344 = vmatprep.subr.bf16.mxu0 0
      %4345 = vmatpush1.bf16.msra.mxu0 %v3743
      %4346 = vmatprep.subr.bf16.mxu0 0
      %4347 = vmatpush1.bf16.msra.mxu0 %v3746
      %4348 = vmatprep.subr.bf16.mxu0 0
      %4349 = vmatpush1.bf16.msra.mxu0 %v3749
      %4350 = vmatprep.subr.bf16.mxu0 0
      %4351 = vmatpush1.bf16.msra.mxu0 %v3752
      %4352 = vmatprep.subr.bf16.mxu0 0
      %4353 = vmatpush1.bf16.msra.mxu0 %v3755
      %4354 = vmatprep.mubr.bf16.mxu0 %v3931
      %4355 = vmatmul.mubr.bf16.gmra.mrb[0].mxu0 %v3930
      %v4356 = vpop.f32.mrb[0].mxu0
      %v4357 = vadd.f32 %v4317, %v4356
      %v4358 = vpop.f32.mrb[0].mxu0
      %v4359 = vpop.f32.mrb[0].mxu0
      %v4360 = vpop.f32.mrb[0].mxu0
      %4361 = vdwg.mxu0
      %4362 = vmatprep.subr.bf16.mxu0 0
      %4363 = vmatpush1.bf16.msra.mxu0 %v3758
      %4364 = vmatprep.subr.bf16.mxu0 0
      %4365 = vmatpush1.bf16.msra.mxu0 %v3761
      %4366 = vmatprep.subr.bf16.mxu0 0
      %4367 = vmatpush1.bf16.msra.mxu0 %v3764
      %4368 = vmatprep.subr.bf16.mxu0 0
      %4369 = vmatpush1.bf16.msra.mxu0 %v3767
      %4370 = vmatprep.subr.bf16.mxu0 0
      %4371 = vmatpush1.bf16.msra.mxu0 %v3770
      %4372 = vmatprep.subr.bf16.mxu0 0
      %4373 = vmatpush1.bf16.msra.mxu0 %v3773
      %4374 = vmatprep.subr.bf16.mxu0 0
      %4375 = vmatpush1.bf16.msra.mxu0 %v3776
      %4376 = vmatprep.subr.bf16.mxu0 0
      %4377 = vmatpush1.bf16.msra.mxu0 %v3779
      %4378 = vmatprep.subr.bf16.mxu0 0
      %4379 = vmatpush1.bf16.msra.mxu0 %v3782
      %4380 = vmatprep.subr.bf16.mxu0 0
      %4381 = vmatpush1.bf16.msra.mxu0 %v3785
      %4382 = vmatprep.subr.bf16.mxu0 0
      %4383 = vmatpush1.bf16.msra.mxu0 %v3788
      %4384 = vmatprep.subr.bf16.mxu0 0
      %4385 = vmatpush1.bf16.msra.mxu0 %v3791
      %4386 = vmatprep.subr.bf16.mxu0 0
      %4387 = vmatpush1.bf16.msra.mxu0 %v3794
      %4388 = vmatprep.subr.bf16.mxu0 0
      %4389 = vmatpush1.bf16.msra.mxu0 %v3797
      %4390 = vmatprep.subr.bf16.mxu0 0
      %4391 = vmatpush1.bf16.msra.mxu0 %v3800
      %4392 = vmatprep.subr.bf16.mxu0 0
      %4393 = vmatpush1.bf16.msra.mxu0 %v3803
      %4394 = vmatprep.mubr.bf16.mxu0 %v3933
      %4395 = vmatmul.mubr.bf16.gmra.mrb[0].mxu0 %v3932
      %v4396 = vpop.f32.mrb[0].mxu0
      %v4397 = vadd.f32 %v4357, %v4396
      %v4398 = vpop.f32.mrb[0].mxu0
      %v4399 = vpop.f32.mrb[0].mxu0
      %v4400 = vpop.f32.mrb[0].mxu0
      %4401 = vdwg.mxu0
      %4402 = vmatprep.subr.bf16.mxu0 0
      %4403 = vmatpush1.bf16.msra.mxu0 %v3806
      %4404 = vmatprep.subr.bf16.mxu0 0
      %4405 = vmatpush1.bf16.msra.mxu0 %v3809
      %4406 = vmatprep.subr.bf16.mxu0 0
      %4407 = vmatpush1.bf16.msra.mxu0 %v3812
      %4408 = vmatprep.subr.bf16.mxu0 0
      %4409 = vmatpush1.bf16.msra.mxu0 %v3815
      %4410 = vmatprep.subr.bf16.mxu0 0
      %4411 = vmatpush1.bf16.msra.mxu0 %v3818
      %4412 = vmatprep.subr.bf16.mxu0 0
      %4413 = vmatpush1.bf16.msra.mxu0 %v3821
      %4414 = vmatprep.subr.bf16.mxu0 0
      %4415 = vmatpush1.bf16.msra.mxu0 %v3824
      %4416 = vmatprep.subr.bf16.mxu0 0
      %4417 = vmatpush1.bf16.msra.mxu0 %v3827
      %4418 = vmatprep.subr.bf16.mxu0 0
      %4419 = vmatpush1.bf16.msra.mxu0 %v3830
      %4420 = vmatprep.subr.bf16.mxu0 0
      %4421 = vmatpush1.bf16.msra.mxu0 %v3833
      %4422 = vmatprep.subr.bf16.mxu0 0
      %4423 = vmatpush1.bf16.msra.mxu0 %v3836
      %4424 = vmatprep.subr.bf16.mxu0 0
      %4425 = vmatpush1.bf16.msra.mxu0 %v3839
      %4426 = vmatprep.subr.bf16.mxu0 0
      %4427 = vmatpush1.bf16.msra.mxu0 %v3842
      %4428 = vmatprep.subr.bf16.mxu0 0
      %4429 = vmatpush1.bf16.msra.mxu0 %v3845
      %4430 = vmatprep.subr.bf16.mxu0 0
      %4431 = vmatpush1.bf16.msra.mxu0 %v3848
      %4432 = vmatprep.subr.bf16.mxu0 0
      %4433 = vmatpush1.bf16.msra.mxu0 %v3851
      %4434 = vmatprep.mubr.bf16.mxu0 %v3935
      %4435 = vmatmul.mubr.bf16.gmra.mrb[0].mxu0 %v3934
      %v4436 = vpop.f32.mrb[0].mxu0
      %v4437 = vadd.f32 %v4397, %v4436
      %v4438 = vpop.f32.mrb[0].mxu0
      %v4439 = vpop.f32.mrb[0].mxu0
      %v4440 = vpop.f32.mrb[0].mxu0
      %4441 = vdwg.mxu0
      %4442 = vmatprep.subr.bf16.mxu0 0
      %4443 = vmatpush1.bf16.msra.mxu0 %v3854
      %4444 = vmatprep.subr.bf16.mxu0 0
      %4445 = vmatpush1.bf16.msra.mxu0 %v3857
      %4446 = vmatprep.subr.bf16.mxu0 0
      %4447 = vmatpush1.bf16.msra.mxu0 %v3860
      %4448 = vmatprep.subr.bf16.mxu0 0
      %4449 = vmatpush1.bf16.msra.mxu0 %v3863
      %4450 = vmatprep.subr.bf16.mxu0 0
      %4451 = vmatpush1.bf16.msra.mxu0 %v3866
      %4452 = vmatprep.subr.bf16.mxu0 0
      %4453 = vmatpush1.bf16.msra.mxu0 %v3869
      %4454 = vmatprep.subr.bf16.mxu0 0
      %4455 = vmatpush1.bf16.msra.mxu0 %v3872
      %4456 = vmatprep.subr.bf16.mxu0 0
      %4457 = vmatpush1.bf16.msra.mxu0 %v3875
      %4458 = vmatprep.subr.bf16.mxu0 0
      %4459 = vmatpush1.bf16.msra.mxu0 %v3878
      %4460 = vmatprep.subr.bf16.mxu0 0
      %4461 = vmatpush1.bf16.msra.mxu0 %v3881
      %4462 = vmatprep.subr.bf16.mxu0 0
      %4463 = vmatpush1.bf16.msra.mxu0 %v3884
      %4464 = vmatprep.subr.bf16.mxu0 0
      %4465 = vmatpush1.bf16.msra.mxu0 %v3887
      %4466 = vmatprep.subr.bf16.mxu0 0
      %4467 = vmatpush1.bf16.msra.mxu0 %v3890
      %4468 = vmatprep.subr.bf16.mxu0 0
      %4469 = vmatpush1.bf16.msra.mxu0 %v3893
      %4470 = vmatprep.subr.bf16.mxu0 0
      %4471 = vmatpush1.bf16.msra.mxu0 %v3896
      %4472 = vmatprep.subr.bf16.mxu0 0
      %4473 = vmatpush1.bf16.msra.mxu0 %v3899
      %4474 = vmatprep.mubr.bf16.mxu0 %v3937
      %4475 = vmatmul.mubr.bf16.gmra.mrb[0].mxu0 %v3936
      %v4476 = vpop.f32.mrb[0].mxu0
      %v4477 = vadd.f32 %v4437, %v4476
      %v4478 = vpop.f32.mrb[0].mxu0
      %v4479 = vpop.f32.mrb[0].mxu0
      %v4480 = vpop.f32.mrb[0].mxu0
      %4481 = vdwg.mxu0
      %4482 = vmatprep.subr.bf16.mxu0 0
      %4483 = vmatpush1.bf16.msra.mxu0 %v3902
      %4484 = vmatprep.subr.bf16.mxu0 0
      %4485 = vmatpush1.bf16.msra.mxu0 %v3905
      %4486 = vmatprep.subr.bf16.mxu0 0
      %4487 = vmatpush1.bf16.msra.mxu0 0
      %4488 = vmatprep.subr.bf16.mxu0 0
      %4489 = vmatpush1.bf16.msra.mxu0 0
      %4490 = vmatprep.subr.bf16.mxu0 0
      %4491 = vmatpush1.bf16.msra.mxu0 0
      %4492 = vmatprep.subr.bf16.mxu0 0
      %4493 = vmatpush1.bf16.msra.mxu0 0
      %4494 = vmatprep.subr.bf16.mxu0 0
      %4495 = vmatpush1.bf16.msra.mxu0 0
      %4496 = vmatprep.subr.bf16.mxu0 0
      %4497 = vmatpush1.bf16.msra.mxu0 0
      %4498 = vmatprep.subr.bf16.mxu0 0
      %4499 = vmatpush1.bf16.msra.mxu0 0
      %4500 = vmatprep.subr.bf16.mxu0 0
      %4501 = vmatpush1.bf16.msra.mxu0 0
      %4502 = vmatprep.subr.bf16.mxu0 0
      %4503 = vmatpush1.bf16.msra.mxu0 0
      %4504 = vmatprep.subr.bf16.mxu0 0
      %4505 = vmatpush1.bf16.msra.mxu0 0
      %4506 = vmatprep.subr.bf16.mxu0 0
      %4507 = vmatpush1.bf16.msra.mxu0 0
      %4508 = vmatprep.subr.bf16.mxu0 0
      %4509 = vmatpush1.bf16.msra.mxu0 0
      %4510 = vmatprep.subr.bf16.mxu0 0
      %4511 = vmatpush1.bf16.msra.mxu0 0
      %4512 = vmatprep.subr.bf16.mxu0 0
      %4513 = vmatpush1.bf16.msra.mxu0 0
      %4514 = vmatprep.mubr.bf16.mxu0 0
      %4515 = vmatmul.mubr.bf16.gmra.mrb[0].mxu0 %v3953
      %v4516 = vpop.f32.mrb[0].mxu0
      %v4517 = vadd.f32 %v4477, %v4516
      %v4518 = vpop.f32.mrb[0].mxu0
      %v4519 = vpop.f32.mrb[0].mxu0
      %v4520 = vpop.f32.mrb[0].mxu0
      %4521 = vdwg.mxu0
      %v4522 = vsel %vm200, 1, 0
      %v4523 = vlaneseq
      %v4524 = vshrl.u32 %v4523, 7
      %v4525 = vsub.s32 0, %v4524
      %v4526 = vrot.slane %v4522, %v4525
      %v4527 = vlaneseq
      %v4528 = vshrl.u32 %v4527, 7
      %v4529 = vsub.s32 1, %v4528
      %v4530 = vrot.slane %v4522, %v4529
      %v4531 = vlaneseq
      %v4532 = vshrl.u32 %v4531, 7
      %v4533 = vsub.s32 2, %v4532
      %v4534 = vrot.slane %v4522, %v4533
      %vm4535 = vcmp.eq.s32.totalorder %v4526, 1
      %vm4536 = vcmp.eq.s32.totalorder %v4530, 1
      %vm4537 = vcmp.eq.s32.totalorder %v4534, 1
      %v4538 = vsel %vm4535, %v4236, 0.0
      %v4539 = vsel %vm4536, %v4238, 0.0
      %v4540 = vsel %vm4537, %v4517, 0.0
      %vm4541 = vcmask 1041408
      %v4542 = vsel %vm4541, %v4538, 0.0
      %v4543 = vsel %vm4541, %v4539, 0.0
      %v4544 = vadd.f32 %v4542, %v4543
      %vm4545 = vcmask 779264
      %v4546 = vsel %vm4545, %v4540, 0.0
      %v4547 = vadd.f32 %v4544, %v4546
      %4548 = vadd.xlane.f32.xlu0 %v4547
      %v4549 = vpop.xlane.xlu0 %4548
      %v4550 = vmul.f32 %v4538, %v4538
      %v4551 = vmul.f32 %v4539, %v4539
      %v4552 = vmul.f32 %v4540, %v4540
      %v4553 = vsel %vm4541, %v4550, 0.0
      %v4554 = vsel %vm4541, %v4551, 0.0
      %v4555 = vadd.f32 %v4553, %v4554
      %v4556 = vsel %vm4545, %v4552, 0.0
      %v4557 = vadd.f32 %v4555, %v4556
      %4558 = vadd.xlane.f32.xlu0 %v4557
      %v4559 = vpop.xlane.xlu0 %4558
      %v4560 = vmul.f32 %v4549, 0.00390625
      %v4561 = vmul.f32 %v4559, 0.00390625
      %v4562 = vmul.f32 %v4560, %v4560
      %v4563 = vsub.f32 %v4561, %v4562
      %v4564 = vsub.f32 %v4236, %v4560
      %v4565 = vsub.f32 %v4238, %v4560
      %v4566 = vsub.f32 %v4517, %v4560
      %v4567 = vadd.f32 %v4563, 1e-05
      %v4568 = vrsqrt.pop %v4567
      %v4569 = vmul.f32 %v4564, %v4568
      %v4570 = vmul.f32 %v4565, %v4568
      %v4571 = vmul.f32 %v4566, %v4568
      %v4572 = vmax.f32 %v4569, 0.0
      %v4573 = vmax.f32 %v4570, 0.0
      %v4574 = vmax.f32 %v4571, 0.0
      %v4575 = vpack.c.bf16 %v4572, %v4572
      %v4576 = vpack.c.bf16 %v4573, %v4573
      %v4577 = vpack.c.bf16 %v4574, %v4574
      %4578 = vst [vmem:[#allocation3] sm:$0xf] 0
      %v4582 = vcombine.low %v4575, %v4576
      %v4584 = vunpack.c.l.s4 1966171168
      %v4585 = vunpack.c.0.s8 %v4584
      %v4586 = vlaneseq
      %v4587 = vshrl.u32 %v4586, 7
      %v4588 = vsub.s32 %v4585, %v4587
      %v4589 = vrot.slane %v4582, %v4588
      %v4591 = vunpack.c.l.s4 1966171168
      %v4592 = vunpack.c.0.s8 %v4591
      %v4593 = vlaneseq
      %v4594 = vshrl.u32 %v4593, 7
      %v4595 = vsub.s32 %v4592, %v4594
      %v4596 = vrot.slane %v4577, %v4595
      %v4597 = vcombine.low %v4589, %v4596
      %v4599 = vunpack.c.l.s4 1966171168
      %v4600 = vunpack.c.0.s8 %v4599
      %v4601 = vlaneseq
      %v4602 = vshrl.u32 %v4601, 7
      %v4603 = vsub.s32 %v4600, %v4602
      %v4604 = vrot.slane %v4597, %v4603
      %4605 = vrot.lane.b32.xlu0 %v4604, 69
      %v4606 = vpop.permute.xlu0 %4605
      %v4607 = vrot.slane %v4606, 7
      %vm4608 = vcmask 564224
      %v4609 = vsel %vm4608, %v4607, %v4606
      %vm4611 = vcmask 1040936
      %vm4612 = vcmask 1041409
      %vm4613 = vmor %vm4612, %vm4611
      %vm4614 = vcmask 1042434
      %vm4615 = vmor %vm4614, %vm4613
      %vm4616 = vcmask 297987
      %vm4617 = vmor %vm4616, %vm4615
      %4618 = vst.msk [vmem:[#allocation3] sm:$0xf] %vm4617, %v4609
      %4620 = vset.pattern.permute.xlu0 0
      %4621 = vperm.xlu0 %4620, %v4575
      %v4622 = vpop.permute.xlu0 %4621
      %vm4624 = vcmask 557584
      %4625 = vst.msk [vmem:[#allocation3] sm:$0x1] %vm4624, %v4622
      %4626 = vset.pattern.permute.xlu0 15
      %4627 = vperm.xlu0 %4626, %v4575
      %v4628 = vpop.permute.xlu0 %4627
      %vm4630 = vcmask 713384
      %4631 = vst.msk [vmem:[#allocation3] sm:$0x1] %vm4630, %v4628
      %4632 = vset.pattern.permute.xlu0 22
      %4633 = vperm.xlu0 %4632, %v4575
      %v4634 = vpop.permute.xlu0 %4633
      %vm4636 = vcmask 737984
      %4637 = vst.msk [vmem:[#allocation3] sm:$0x1] %vm4636, %v4634
      %4638 = vset.pattern.permute.xlu0 37
      %4639 = vperm.xlu0 %4638, %v4575
      %v4640 = vpop.permute.xlu0 %4639
      %vm4642 = vcmask 893784
      %4643 = vst.msk [vmem:[#allocation3] sm:$0x1] %vm4642, %v4640
      %4644 = vset.pattern.permute.xlu0 44
      %4645 = vperm.xlu0 %4644, %v4575
      %v4646 = vpop.permute.xlu0 %4645
      %vm4648 = vcmask 918384
      %4649 = vst.msk [vmem:[#allocation3] sm:$0x1] %vm4648, %v4646
      %4650 = vset.pattern.permute.xlu0 59
      %4651 = vperm.xlu0 %4650, %v4575
      %v4652 = vpop.permute.xlu0 %4651
      %vm4654 = vcmask 24584
      %4655 = vst.msk [vmem:[#allocation3 + $0x1] sm:$0x1] %vm4654, %v4652
      %4656 = vset.pattern.permute.xlu0 66
      %4657 = vperm.xlu0 %4656, %v4575
      %v4658 = vpop.permute.xlu0 %4657
      %vm4660 = vcmask 49184
      %4661 = vst.msk [vmem:[#allocation3 + $0x1] sm:$0x1] %vm4660, %v4658
      %4662 = vset.pattern.permute.xlu0 81
      %4663 = vperm.xlu0 %4662, %v4575
      %v4664 = vpop.permute.xlu0 %4663
      %vm4666 = vcmask 204984
      %4667 = vst.msk [vmem:[#allocation3 + $0x1] sm:$0x1] %vm4666, %v4664
      %4668 = vset.pattern.permute.xlu0 88
      %4669 = vperm.xlu0 %4668, %v4575
      %v4670 = vpop.permute.xlu0 %4669
      %vm4672 = vcmask 229584
      %4673 = vst.msk [vmem:[#allocation3 + $0x1] sm:$0x1] %vm4672, %v4670
      %4674 = vset.pattern.permute.xlu0 103
      %4675 = vperm.xlu0 %4674, %v4575
      %v4676 = vpop.permute.xlu0 %4675
      %vm4678 = vcmask 385384
      %4679 = vst.msk [vmem:[#allocation3 + $0x1] sm:$0x1] %vm4678, %v4676
      %4680 = vset.pattern.permute.xlu0 110
      %4681 = vperm.xlu0 %4680, %v4575
      %v4682 = vpop.permute.xlu0 %4681
      %vm4684 = vcmask 409984
      %4685 = vst.msk [vmem:[#allocation3 + $0x1] sm:$0x1] %vm4684, %v4682
      %4686 = vset.pattern.permute.xlu0 125
      %4687 = vperm.xlu0 %4686, %v4575
      %v4688 = vpop.permute.xlu0 %4687
      %vm4690 = vcmask 565784
      %4691 = vst.msk [vmem:[#allocation3 + $0x1] sm:$0x1] %vm4690, %v4688
      %4693 = vset.pattern.permute.xlu0 4
      %4694 = vperm.xlu0 %4693, %v4576
      %v4695 = vpop.permute.xlu0 %4694
      %vm4697 = vcmask 590384
      %4698 = vst.msk [vmem:[#allocation3 + $0x1] sm:$0x1] %vm4697, %v4695
      %4699 = vset.pattern.permute.xlu0 19
      %4700 = vperm.xlu0 %4699, %v4576
      %v4701 = vpop.permute.xlu0 %4700
      %vm4703 = vcmask 746184
      %4704 = vst.msk [vmem:[#allocation3 + $0x1] sm:$0x1] %vm4703, %v4701
      %4705 = vset.pattern.permute.xlu0 26
      %4706 = vperm.xlu0 %4705, %v4576
      %v4707 = vpop.permute.xlu0 %4706
      %vm4709 = vcmask 770784
      %4710 = vst.msk [vmem:[#allocation3 + $0x1] sm:$0x1] %vm4709, %v4707
      %4711 = vset.pattern.permute.xlu0 41
      %4712 = vperm.xlu0 %4711, %v4576
      %v4713 = vpop.permute.xlu0 %4712
      %vm4715 = vcmask 926584
      %4716 = vst.msk [vmem:[#allocation3 + $0x1] sm:$0x1] %vm4715, %v4713
      %4717 = vset.pattern.permute.xlu0 48
      %4718 = vperm.xlu0 %4717, %v4576
      %v4719 = vpop.permute.xlu0 %4718
      %vm4721 = vcmask 951184
      %4722 = vst.msk [vmem:[#allocation3 + $0x1] sm:$0x1] %vm4721, %v4719
      %4723 = vset.pattern.permute.xlu0 63
      %4724 = vperm.xlu0 %4723, %v4576
      %v4725 = vpop.permute.xlu0 %4724
      %vm4727 = vcmask 57384
      %4728 = vst.msk [vmem:[#allocation3 + $0x2] sm:$0x1] %vm4727, %v4725
      %4729 = vset.pattern.permute.xlu0 70
      %4730 = vperm.xlu0 %4729, %v4576
      %v4731 = vpop.permute.xlu0 %4730
      %vm4733 = vcmask 81984
      %4734 = vst.msk [vmem:[#allocation3 + $0x2] sm:$0x1] %vm4733, %v4731
      %4735 = vset.pattern.permute.xlu0 85
      %4736 = vperm.xlu0 %4735, %v4576
      %v4737 = vpop.permute.xlu0 %4736
      %vm4739 = vcmask 237784
      %4740 = vst.msk [vmem:[#allocation3 + $0x2] sm:$0x1] %vm4739, %v4737
      %4741 = vset.pattern.permute.xlu0 92
      %4742 = vperm.xlu0 %4741, %v4576
      %v4743 = vpop.permute.xlu0 %4742
      %vm4745 = vcmask 262384
      %4746 = vst.msk [vmem:[#allocation3 + $0x2] sm:$0x1] %vm4745, %v4743
      %4747 = vset.pattern.permute.xlu0 107
      %4748 = vperm.xlu0 %4747, %v4576
      %v4749 = vpop.permute.xlu0 %4748
      %vm4751 = vcmask 418184
      %4752 = vst.msk [vmem:[#allocation3 + $0x2] sm:$0x1] %vm4751, %v4749
      %4753 = vset.pattern.permute.xlu0 114
      %4754 = vperm.xlu0 %4753, %v4576
      %v4755 = vpop.permute.xlu0 %4754
      %vm4757 = vcmask 442784
      %4758 = vst.msk [vmem:[#allocation3 + $0x2] sm:$0x1] %vm4757, %v4755
      %4760 = vset.pattern.permute.xlu0 1
      %4761 = vperm.xlu0 %4760, %v4577
      %v4762 = vpop.permute.xlu0 %4761
      %vm4764 = vcmask 598584
      %4765 = vst.msk [vmem:[#allocation3 + $0x2] sm:$0x1] %vm4764, %v4762
      %4766 = vset.pattern.permute.xlu0 8
      %4767 = vperm.xlu0 %4766, %v4577
      %v4768 = vpop.permute.xlu0 %4767
      %vm4770 = vcmask 623184
      %4771 = vst.msk [vmem:[#allocation3 + $0x2] sm:$0x1] %vm4770, %v4768
      %4772 = vset.pattern.permute.xlu0 23
      %4773 = vperm.xlu0 %4772, %v4577
      %v4774 = vpop.permute.xlu0 %4773
      %vm4776 = vcmask 778984
      %4777 = vst.msk [vmem:[#allocation3 + $0x2] sm:$0x1] %vm4776, %v4774
      %4778 = vset.pattern.permute.xlu0 30
      %4779 = vperm.xlu0 %4778, %v4577
      %v4780 = vpop.permute.xlu0 %4779
      %vm4782 = vcmask 803584
      %4783 = vst.msk [vmem:[#allocation3 + $0x2] sm:$0x1] %vm4782, %v4780
      %4784 = vset.pattern.permute.xlu0 45
      %4785 = vperm.xlu0 %4784, %v4577
      %v4786 = vpop.permute.xlu0 %4785
      %vm4788 = vcmask 959384
      %4789 = vst.msk [vmem:[#allocation3 + $0x2] sm:$0x1] %vm4788, %v4786
      %4790 = vset.pattern.permute.xlu0 52
      %4791 = vperm.xlu0 %4790, %v4577
      %v4792 = vpop.permute.xlu0 %4791
      %vm4794 = vcmask 983984
      %4795 = vst.msk [vmem:[#allocation3 + $0x2] sm:$0x1] %vm4794, %v4792
      %4796 = vset.pattern.permute.xlu0 67
      %4797 = vperm.xlu0 %4796, %v4577
      %v4798 = vpop.permute.xlu0 %4797
      %vm4800 = vcmask 90184
      %4801 = vst.msk [vmem:[#allocation3 + $0x3] sm:$0x1] %vm4800, %v4798
      %4802 = vset.pattern.permute.xlu0 74
      %4803 = vperm.xlu0 %4802, %v4577
      %v4804 = vpop.permute.xlu0 %4803
      %vm4806 = vcmask 114784
      %4807 = vst.msk [vmem:[#allocation3 + $0x3] sm:$0x1] %vm4806, %v4804
      %4808 = vset.pattern.permute.xlu0 89
      %4809 = vperm.xlu0 %4808, %v4577
      %v4810 = vpop.permute.xlu0 %4809
      %vm4812 = vcmask 270584
      %4813 = vst.msk [vmem:[#allocation3 + $0x3] sm:$0x1] %vm4812, %v4810
      %vm4814 = vcmask 16384
      %4815 = vst.msk [vmem:[#allocation3] sm:$0x1] %vm4814, %v4622
      %v4817 = vunpack.c.l.s4 1966171168
      %v4818 = vunpack.c.0.s8 %v4817
      %v4819 = vlaneseq
      %v4820 = vshrl.u32 %v4819, 7
      %v4821 = vsub.s32 %v4818, %v4820
      %v4822 = vrot.slane %v4575, %v4821
      %v4824 = vunpack.c.l.s4 1966171168
      %v4825 = vunpack.c.0.s8 %v4824
      %v4826 = vlaneseq
      %v4827 = vshrl.u32 %v4826, 7
      %v4828 = vsub.s32 %v4825, %v4827
      %v4829 = vrot.slane %v4822, %v4828
      %4830 = vrot.lane.b32.xlu0 %v4829, 3
      %v4831 = vpop.permute.xlu0 %4830
      %vm4833 = vcmask 147480
      %4834 = vst.msk [vmem:[#allocation3] sm:$0x1] %vm4833, %v4831
      %vm4835 = vcmask 172184
      %4836 = vst.msk [vmem:[#allocation3] sm:$0x1] %vm4835, %v4628
      %vm4837 = vcmask 295184
      %4838 = vst.msk [vmem:[#allocation3 + $0x3] sm:$0x1] %vm4837, %v4804
      %v4840 = vunpack.c.l.s4 1966171168
      %v4841 = vunpack.c.0.s8 %v4840
      %v4842 = vlaneseq
      %v4843 = vshrl.u32 %v4842, 7
      %v4844 = vsub.s32 %v4841, %v4843
      %v4845 = vrot.slane %v4596, %v4844
      %4846 = vrot.lane.b32.xlu0 %v4845, 91
      %v4847 = vpop.permute.xlu0 %4846
      %vm4849 = vcmask 426280
      %4850 = vst.msk [vmem:[#allocation3 + $0x3] sm:$0x1] %vm4849, %v4847
      %vm4851 = vcmask 450984
      %4852 = vst.msk [vmem:[#allocation3 + $0x3] sm:$0x1] %vm4851, %v4810
      %vm4853 = vcmask 196784
      %4854 = vst.msk [vmem:[#allocation3] sm:$0x1] %vm4853, %v4622
      %4855 = vrot.lane.b32.xlu0 %v4829, 25
      %v4856 = vpop.permute.xlu0 %4855
      %vm4858 = vcmask 327880
      %4859 = vst.msk [vmem:[#allocation3] sm:$0x1] %vm4858, %v4856
      %vm4860 = vcmask 352584
      %4861 = vst.msk [vmem:[#allocation3] sm:$0x1] %vm4860, %v4628
      %vm4862 = vcmask 475584
      %4863 = vst.msk [vmem:[#allocation3 + $0x3] sm:$0x1] %vm4862, %v4804
      %4864 = vrot.lane.b32.xlu0 %v4845, 113
      %v4865 = vpop.permute.xlu0 %4864
      %vm4867 = vcmask 606680
      %4868 = vst.msk [vmem:[#allocation3 + $0x3] sm:$0x1] %vm4867, %v4865
      %vm4869 = vcmask 631384
      %4870 = vst.msk [vmem:[#allocation3 + $0x3] sm:$0x1] %vm4869, %v4810
      %vm4871 = vcmask 377184
      %4872 = vst.msk [vmem:[#allocation3] sm:$0x1] %vm4871, %v4622
      %4873 = vrot.lane.b32.xlu0 %v4829, 47
      %v4874 = vpop.permute.xlu0 %4873
      %vm4876 = vcmask 508280
      %4877 = vst.msk [vmem:[#allocation3] sm:$0x1] %vm4876, %v4874
      %vm4878 = vcmask 532984
      %4879 = vst.msk [vmem:[#allocation3] sm:$0x1] %vm4878, %v4628
      %vm4880 = vcmask 655984
      %4881 = vst.msk [vmem:[#allocation3 + $0x3] sm:$0x1] %vm4880, %v4804
      %4882 = vrot.lane.b32.xlu0 %v4845, 7
      %v4883 = vpop.permute.xlu0 %4882
      %vm4885 = vcmask 787080
      %4886 = vst.msk [vmem:[#allocation3 + $0x3] sm:$0x1] %vm4885, %v4883
      %vm4887 = vcmask 811784
      %4888 = vst.msk [vmem:[#allocation3 + $0x3] sm:$0x1] %vm4887, %v4810
      %v4889 = vld [vmem:[#allocation3] sm:$0x7]
      %v4892 = vunpack.c.l.s4 1935823168
      %v4893 = vunpack.c.0.s8 %v4892
      %v4894 = vlaneseq
      %v4895 = vshrl.u32 %v4894, 7
      %v4896 = vsub.s32 %v4893, %v4895
      %v4897 = vrot.slane %v4889, %v4896
      %v4898 = vcombine.high %v4897, %v4897
      %v4900 = vunpack.c.l.s4 1935823168
      %v4901 = vunpack.c.0.s8 %v4900
      %v4902 = vlaneseq
      %v4903 = vshrl.u32 %v4902, 7
      %v4904 = vsub.s32 %v4901, %v4903
      %v4905 = vrot.slane %v4897, %v4904
      %v4907 = vunpack.c.l.s4 1935823168
      %v4908 = vunpack.c.0.s8 %v4907
      %v4909 = vlaneseq
      %v4910 = vshrl.u32 %v4909, 7
      %v4911 = vsub.s32 %v4908, %v4910
      %v4912 = vrot.slane %v4898, %v4911
      %4915 = vst [vmem:[#allocation4] sm:$0x11] %v4905
      %vm4916 = vcmask 778240
      %4917 = vst.msk [vmem:[#allocation4 + $0x8] sm:$0x1] %vm4916, %v4912
      %v4918 = vld [vmem:[#allocation3] sm:$0x7]
      %v4921 = vunpack.c.l.s4 1935823168
      %v4922 = vunpack.c.0.s8 %v4921
      %v4923 = vlaneseq
      %v4924 = vshrl.u32 %v4923, 7
      %v4925 = vsub.s32 %v4922, %v4924
      %v4926 = vrot.slane %v4918, %v4925
      %v4927 = vcombine.low %v4926, %v4926
      %v4929 = vunpack.c.l.s4 1935823168
      %v4930 = vunpack.c.0.s8 %v4929
      %v4931 = vlaneseq
      %v4932 = vshrl.u32 %v4931, 7
      %v4933 = vsub.s32 %v4930, %v4932
      %v4934 = vrot.slane %v4927, %v4933
      %v4936 = vunpack.c.l.s4 1935823168
      %v4937 = vunpack.c.0.s8 %v4936
      %v4938 = vlaneseq
      %v4939 = vshrl.u32 %v4938, 7
      %v4940 = vsub.s32 %v4937, %v4939
      %v4941 = vrot.slane %v4926, %v4940
      %4942 = vrot.lane.b32.xlu0 %v4934, 127
      %v4943 = vpop.permute.xlu0 %4942
      %4944 = vrot.lane.b32.xlu0 %v4941, 127
      %v4945 = vpop.permute.xlu0 %4944
      %v4946 = vrot.slane %v4943, 4
      %v4947 = vrot.slane %v4945, 4
      %vm4948 = vcmask 1043456
      %v4949 = vsel %vm4948, %v4946, %v4947
      %v4950 = vsel %vm294, %v4943, %v4949
      %4953 = vst [vmem:[#allocation4] sm:$0x22] %v4950
      %vm4954 = vcmask 779265
      %4955 = vst.msk [vmem:[#allocation4 + $0x8] sm:$0x2] %vm4954, %v4945
      %v4956 = vld [vmem:[#allocation3] sm:$0x7]
      %v4958 = vcombine.low %v4956, %v4956
      %v4960 = vunpack.c.l.s4 1935823168
      %v4961 = vunpack.c.0.s8 %v4960
      %v4962 = vlaneseq
      %v4963 = vshrl.u32 %v4962, 7
      %v4964 = vsub.s32 %v4961, %v4963
      %v4965 = vrot.slane %v4958, %v4964
      %v4966 = vcombine.high %v4965, %v4965
      %v4968 = vunpack.c.l.s4 1935823168
      %v4969 = vunpack.c.0.s8 %v4968
      %v4970 = vlaneseq
      %v4971 = vshrl.u32 %v4970, 7
      %v4972 = vsub.s32 %v4969, %v4971
      %v4973 = vrot.slane %v4965, %v4972
      %v4975 = vunpack.c.l.s4 1935823168
      %v4976 = vunpack.c.0.s8 %v4975
      %v4977 = vlaneseq
      %v4978 = vshrl.u32 %v4977, 7
      %v4979 = vsub.s32 %v4976, %v4978
      %v4980 = vrot.slane %v4966, %v4979
      %4981 = vrot.lane.b32.xlu0 %v4973, 126
      %v4982 = vpop.permute.xlu0 %4981
      %4983 = vrot.lane.b32.xlu0 %v4980, 126
      %v4984 = vpop.permute.xlu0 %4983
      %v4985 = vrot.slane %v4982, 4
      %v4986 = vrot.slane %v4984, 4
      %v4987 = vsel %vm4948, %v4985, %v4986
      %v4988 = vsel %vm357, %v4982, %v4987
      %4991 = vst [vmem:[#allocation4] sm:$0x44] %v4988
      %vm4992 = vcmask 780290
      %4993 = vst.msk [vmem:[#allocation4 + $0x8] sm:$0x4] %vm4992, %v4984
      %v4994 = vld [vmem:[#allocation3] sm:$0x7]
      %v4996 = vcombine.low %v4994, %v4994
      %v4998 = vunpack.c.l.s4 1935823168
      %v4999 = vunpack.c.0.s8 %v4998
      %v5000 = vlaneseq
      %v5001 = vshrl.u32 %v5000, 7
      %v5002 = vsub.s32 %v4999, %v5001
      %v5003 = vrot.slane %v4996, %v5002
      %v5004 = vcombine.low %v5003, %v5003
      %v5006 = vunpack.c.l.s4 1935823168
      %v5007 = vunpack.c.0.s8 %v5006
      %v5008 = vlaneseq
      %v5009 = vshrl.u32 %v5008, 7
      %v5010 = vsub.s32 %v5007, %v5009
      %v5011 = vrot.slane %v5004, %v5010
      %v5013 = vunpack.c.l.s4 1935823168
      %v5014 = vunpack.c.0.s8 %v5013
      %v5015 = vlaneseq
      %v5016 = vshrl.u32 %v5015, 7
      %v5017 = vsub.s32 %v5014, %v5016
      %v5018 = vrot.slane %v5003, %v5017
      %5019 = vrot.lane.b32.xlu0 %v5011, 125
      %v5020 = vpop.permute.xlu0 %5019
      %5021 = vrot.lane.b32.xlu0 %v5018, 125
      %v5022 = vpop.permute.xlu0 %5021
      %v5023 = vrot.slane %v5020, 4
      %v5024 = vrot.slane %v5022, 4
      %v5025 = vsel %vm4948, %v5023, %v5024
      %v5026 = vsel %vm420, %v5020, %v5025
      %5029 = vst [vmem:[#allocation4] sm:$0x88] %v5026
      %vm5030 = vcmask 781315
      %5031 = vst.msk [vmem:[#allocation4 + $0x8] sm:$0x8] %vm5030, %v5022
      %v5032 = vld [vmem:[#allocation3] sm:$0x7]
      %v5035 = vunpack.c.l.s4 1935823168
      %v5036 = vunpack.c.0.s8 %v5035
      %v5037 = vlaneseq
      %v5038 = vshrl.u32 %v5037, 7
      %v5039 = vsub.s32 %v5036, %v5038
      %v5040 = vrot.slane %v5032, %v5039
      %v5041 = vcombine.high %v5040, %v5040
      %v5043 = vunpack.c.l.s4 1935823168
      %v5044 = vunpack.c.0.s8 %v5043
      %v5045 = vlaneseq
      %v5046 = vshrl.u32 %v5045, 7
      %v5047 = vsub.s32 %v5044, %v5046
      %v5048 = vrot.slane %v5040, %v5047
      %v5050 = vunpack.c.l.s4 1935823168
      %v5051 = vunpack.c.0.s8 %v5050
      %v5052 = vlaneseq
      %v5053 = vshrl.u32 %v5052, 7
      %v5054 = vsub.s32 %v5051, %v5053
      %v5055 = vrot.slane %v5041, %v5054
      %5056 = vrot.lane.b32.xlu0 %v5048, 124
      %v5057 = vpop.permute.xlu0 %5056
      %5058 = vrot.lane.b32.xlu0 %v5055, 124
      %v5059 = vpop.permute.xlu0 %5058
      %v5060 = vrot.slane %v5057, 4
      %v5061 = vrot.slane %v5059, 4
      %v5062 = vsel %vm4948, %v5060, %v5061
      %v5063 = vsel %vm483, %v5057, %v5062
      %5066 = vst [vmem:[#allocation4 + $0xc] sm:$0x11] %v5063
      %5067 = vst.msk [vmem:[#allocation4 + $0x14] sm:$0x1] %vm4916, %v5059
      %v5068 = vld [vmem:[#allocation3] sm:$0x7]
      %v5071 = vunpack.c.l.s4 1935823168
      %v5072 = vunpack.c.0.s8 %v5071
      %v5073 = vlaneseq
      %v5074 = vshrl.u32 %v5073, 7
      %v5075 = vsub.s32 %v5072, %v5074
      %v5076 = vrot.slane %v5068, %v5075
      %v5077 = vcombine.low %v5076, %v5076
      %v5079 = vunpack.c.l.s4 1935823168
      %v5080 = vunpack.c.0.s8 %v5079
      %v5081 = vlaneseq
      %v5082 = vshrl.u32 %v5081, 7
      %v5083 = vsub.s32 %v5080, %v5082
      %v5084 = vrot.slane %v5077, %v5083
      %v5086 = vunpack.c.l.s4 1935823168
      %v5087 = vunpack.c.0.s8 %v5086
      %v5088 = vlaneseq
      %v5089 = vshrl.u32 %v5088, 7
      %v5090 = vsub.s32 %v5087, %v5089
      %v5091 = vrot.slane %v5076, %v5090
      %5092 = vrot.lane.b32.xlu0 %v5084, 123
      %v5093 = vpop.permute.xlu0 %5092
      %5094 = vrot.lane.b32.xlu0 %v5091, 123
      %v5095 = vpop.permute.xlu0 %5094
      %v5096 = vrot.slane %v5093, 4
      %v5097 = vrot.slane %v5095, 4
      %v5098 = vsel %vm4948, %v5096, %v5097
      %v5099 = vsel %vm546, %v5093, %v5098
      %5102 = vst [vmem:[#allocation4 + $0xc] sm:$0x22] %v5099
      %5103 = vst.msk [vmem:[#allocation4 + $0x14] sm:$0x2] %vm4954, %v5095
      %v5104 = vld [vmem:[#allocation3] sm:$0x7]
      %v5106 = vcombine.low %v5104, %v5104
      %v5108 = vunpack.c.l.s4 1935823168
      %v5109 = vunpack.c.0.s8 %v5108
      %v5110 = vlaneseq
      %v5111 = vshrl.u32 %v5110, 7
      %v5112 = vsub.s32 %v5109, %v5111
      %v5113 = vrot.slane %v5106, %v5112
      %v5114 = vcombine.high %v5113, %v5113
      %v5116 = vunpack.c.l.s4 1935823168
      %v5117 = vunpack.c.0.s8 %v5116
      %v5118 = vlaneseq
      %v5119 = vshrl.u32 %v5118, 7
      %v5120 = vsub.s32 %v5117, %v5119
      %v5121 = vrot.slane %v5113, %v5120
      %v5123 = vunpack.c.l.s4 1935823168
      %v5124 = vunpack.c.0.s8 %v5123
      %v5125 = vlaneseq
      %v5126 = vshrl.u32 %v5125, 7
      %v5127 = vsub.s32 %v5124, %v5126
      %v5128 = vrot.slane %v5114, %v5127
      %5129 = vrot.lane.b32.xlu0 %v5121, 122
      %v5130 = vpop.permute.xlu0 %5129
      %5131 = vrot.lane.b32.xlu0 %v5128, 122
      %v5132 = vpop.permute.xlu0 %5131
      %v5133 = vrot.slane %v5130, 4
      %v5134 = vrot.slane %v5132, 4
      %v5135 = vsel %vm4948, %v5133, %v5134
      %v5136 = vsel %vm609, %v5130, %v5135
      %5139 = vst [vmem:[#allocation4 + $0xc] sm:$0x44] %v5136
      %5140 = vst.msk [vmem:[#allocation4 + $0x14] sm:$0x4] %vm4992, %v5132
      %v5141 = vld [vmem:[#allocation3] sm:$0x7]
      %v5143 = vcombine.low %v5141, %v5141
      %v5145 = vunpack.c.l.s4 1935823168
      %v5146 = vunpack.c.0.s8 %v5145
      %v5147 = vlaneseq
      %v5148 = vshrl.u32 %v5147, 7
      %v5149 = vsub.s32 %v5146, %v5148
      %v5150 = vrot.slane %v5143, %v5149
      %v5151 = vcombine.low %v5150, %v5150
      %v5153 = vunpack.c.l.s4 1935823168
      %v5154 = vunpack.c.0.s8 %v5153
      %v5155 = vlaneseq
      %v5156 = vshrl.u32 %v5155, 7
      %v5157 = vsub.s32 %v5154, %v5156
      %v5158 = vrot.slane %v5151, %v5157
      %v5160 = vunpack.c.l.s4 1935823168
      %v5161 = vunpack.c.0.s8 %v5160
      %v5162 = vlaneseq
      %v5163 = vshrl.u32 %v5162, 7
      %v5164 = vsub.s32 %v5161, %v5163
      %v5165 = vrot.slane %v5150, %v5164
      %5166 = vrot.lane.b32.xlu0 %v5158, 106
      %v5167 = vpop.permute.xlu0 %5166
      %5168 = vrot.lane.b32.xlu0 %v5165, 106
      %v5169 = vpop.permute.xlu0 %5168
      %v5170 = vrot.slane %v5167, 4
      %v5171 = vrot.slane %v5169, 4
      %v5172 = vsel %vm4948, %v5170, %v5171
      %v5173 = vsel %vm672, %v5167, %v5172
      %5176 = vst [vmem:[#allocation4 + $0xc] sm:$0x88] %v5173
      %5177 = vst.msk [vmem:[#allocation4 + $0x14] sm:$0x8] %vm5030, %v5169
      %v5178 = vld [vmem:[#allocation3] sm:$0x7]
      %v5181 = vunpack.c.l.s4 1935823168
      %v5182 = vunpack.c.0.s8 %v5181
      %v5183 = vlaneseq
      %v5184 = vshrl.u32 %v5183, 7
      %v5185 = vsub.s32 %v5182, %v5184
      %v5186 = vrot.slane %v5178, %v5185
      %v5187 = vcombine.high %v5186, %v5186
      %v5189 = vunpack.c.l.s4 1935823168
      %v5190 = vunpack.c.0.s8 %v5189
      %v5191 = vlaneseq
      %v5192 = vshrl.u32 %v5191, 7
      %v5193 = vsub.s32 %v5190, %v5192
      %v5194 = vrot.slane %v5186, %v5193
      %v5196 = vunpack.c.l.s4 1935823168
      %v5197 = vunpack.c.0.s8 %v5196
      %v5198 = vlaneseq
      %v5199 = vshrl.u32 %v5198, 7
      %v5200 = vsub.s32 %v5197, %v5199
      %v5201 = vrot.slane %v5187, %v5200
      %5202 = vrot.lane.b32.xlu0 %v5194, 105
      %v5203 = vpop.permute.xlu0 %5202
      %5204 = vrot.lane.b32.xlu0 %v5201, 105
      %v5205 = vpop.permute.xlu0 %5204
      %v5206 = vrot.slane %v5203, 4
      %v5207 = vrot.slane %v5205, 4
      %v5208 = vsel %vm4948, %v5206, %v5207
      %v5209 = vsel %vm735, %v5203, %v5208
      %5212 = vst [vmem:[#allocation4 + $0x18] sm:$0x11] %v5209
      %5213 = vst.msk [vmem:[#allocation4 + $0x20] sm:$0x1] %vm4916, %v5205
      %v5214 = vld [vmem:[#allocation3] sm:$0x7]
      %v5217 = vunpack.c.l.s4 1935823168
      %v5218 = vunpack.c.0.s8 %v5217
      %v5219 = vlaneseq
      %v5220 = vshrl.u32 %v5219, 7
      %v5221 = vsub.s32 %v5218, %v5220
      %v5222 = vrot.slane %v5214, %v5221
      %v5223 = vcombine.low %v5222, %v5222
      %v5225 = vunpack.c.l.s4 1935823168
      %v5226 = vunpack.c.0.s8 %v5225
      %v5227 = vlaneseq
      %v5228 = vshrl.u32 %v5227, 7
      %v5229 = vsub.s32 %v5226, %v5228
      %v5230 = vrot.slane %v5223, %v5229
      %v5232 = vunpack.c.l.s4 1935823168
      %v5233 = vunpack.c.0.s8 %v5232
      %v5234 = vlaneseq
      %v5235 = vshrl.u32 %v5234, 7
      %v5236 = vsub.s32 %v5233, %v5235
      %v5237 = vrot.slane %v5222, %v5236
      %5238 = vrot.lane.b32.xlu0 %v5230, 104
      %v5239 = vpop.permute.xlu0 %5238
      %5240 = vrot.lane.b32.xlu0 %v5237, 104
      %v5241 = vpop.permute.xlu0 %5240
      %v5242 = vrot.slane %v5239, 4
      %v5243 = vrot.slane %v5241, 4
      %v5244 = vsel %vm4948, %v5242, %v5243
      %v5245 = vsel %vm798, %v5239, %v5244
      %5248 = vst [vmem:[#allocation4 + $0x18] sm:$0x22] %v5245
      %5249 = vst.msk [vmem:[#allocation4 + $0x20] sm:$0x2] %vm4954, %v5241
      %v5250 = vld [vmem:[#allocation3] sm:$0x7]
      %v5252 = vcombine.low %v5250, %v5250
      %v5254 = vunpack.c.l.s4 1935823168
      %v5255 = vunpack.c.0.s8 %v5254
      %v5256 = vlaneseq
      %v5257 = vshrl.u32 %v5256, 7
      %v5258 = vsub.s32 %v5255, %v5257
      %v5259 = vrot.slane %v5252, %v5258
      %v5260 = vcombine.high %v5259, %v5259
      %v5262 = vunpack.c.l.s4 1935823168
      %v5263 = vunpack.c.0.s8 %v5262
      %v5264 = vlaneseq
      %v5265 = vshrl.u32 %v5264, 7
      %v5266 = vsub.s32 %v5263, %v5265
      %v5267 = vrot.slane %v5259, %v5266
      %v5269 = vunpack.c.l.s4 1935823168
      %v5270 = vunpack.c.0.s8 %v5269
      %v5271 = vlaneseq
      %v5272 = vshrl.u32 %v5271, 7
      %v5273 = vsub.s32 %v5270, %v5272
      %v5274 = vrot.slane %v5260, %v5273
      %5275 = vrot.lane.b32.xlu0 %v5267, 103
      %v5276 = vpop.permute.xlu0 %5275
      %5277 = vrot.lane.b32.xlu0 %v5274, 103
      %v5278 = vpop.permute.xlu0 %5277
      %v5279 = vrot.slane %v5276, 4
      %v5280 = vrot.slane %v5278, 4
      %v5281 = vsel %vm4948, %v5279, %v5280
      %v5282 = vsel %vm861, %v5276, %v5281
      %5285 = vst [vmem:[#allocation4 + $0x18] sm:$0x44] %v5282
      %5286 = vst.msk [vmem:[#allocation4 + $0x20] sm:$0x4] %vm4992, %v5278
      %v5287 = vld [vmem:[#allocation3] sm:$0x7]
      %v5289 = vcombine.low %v5287, %v5287
      %v5291 = vunpack.c.l.s4 1935823168
      %v5292 = vunpack.c.0.s8 %v5291
      %v5293 = vlaneseq
      %v5294 = vshrl.u32 %v5293, 7
      %v5295 = vsub.s32 %v5292, %v5294
      %v5296 = vrot.slane %v5289, %v5295
      %v5297 = vcombine.low %v5296, %v5296
      %v5299 = vunpack.c.l.s4 1935823168
      %v5300 = vunpack.c.0.s8 %v5299
      %v5301 = vlaneseq
      %v5302 = vshrl.u32 %v5301, 7
      %v5303 = vsub.s32 %v5300, %v5302
      %v5304 = vrot.slane %v5297, %v5303
      %v5306 = vunpack.c.l.s4 1935823168
      %v5307 = vunpack.c.0.s8 %v5306
      %v5308 = vlaneseq
      %v5309 = vshrl.u32 %v5308, 7
      %v5310 = vsub.s32 %v5307, %v5309
      %v5311 = vrot.slane %v5296, %v5310
      %5312 = vrot.lane.b32.xlu0 %v5304, 102
      %v5313 = vpop.permute.xlu0 %5312
      %5314 = vrot.lane.b32.xlu0 %v5311, 102
      %v5315 = vpop.permute.xlu0 %5314
      %v5316 = vrot.slane %v5313, 4
      %v5317 = vrot.slane %v5315, 4
      %v5318 = vsel %vm4948, %v5316, %v5317
      %v5319 = vsel %vm924, %v5313, %v5318
      %5322 = vst [vmem:[#allocation4 + $0x18] sm:$0x88] %v5319
      %5323 = vst.msk [vmem:[#allocation4 + $0x20] sm:$0x8] %vm5030, %v5315
      %v5324 = vld [vmem:[#allocation3] sm:$0x7]
      %v5327 = vunpack.c.l.s4 1935823168
      %v5328 = vunpack.c.0.s8 %v5327
      %v5329 = vlaneseq
      %v5330 = vshrl.u32 %v5329, 7
      %v5331 = vsub.s32 %v5328, %v5330
      %v5332 = vrot.slane %v5324, %v5331
      %v5333 = vcombine.high %v5332, %v5332
      %v5335 = vunpack.c.l.s4 1935823168
      %v5336 = vunpack.c.0.s8 %v5335
      %v5337 = vlaneseq
      %v5338 = vshrl.u32 %v5337, 7
      %v5339 = vsub.s32 %v5336, %v5338
      %v5340 = vrot.slane %v5332, %v5339
      %v5342 = vunpack.c.l.s4 1935823168
      %v5343 = vunpack.c.0.s8 %v5342
      %v5344 = vlaneseq
      %v5345 = vshrl.u32 %v5344, 7
      %v5346 = vsub.s32 %v5343, %v5345
      %v5347 = vrot.slane %v5333, %v5346
      %5348 = vrot.lane.b32.xlu0 %v5340, 101
      %v5349 = vpop.permute.xlu0 %5348
      %5350 = vrot.lane.b32.xlu0 %v5347, 101
      %v5351 = vpop.permute.xlu0 %5350
      %v5352 = vrot.slane %v5349, 4
      %v5353 = vrot.slane %v5351, 4
      %v5354 = vsel %vm4948, %v5352, %v5353
      %v5355 = vsel %vm987, %v5349, %v5354
      %5358 = vst [vmem:[#allocation4 + $0x24] sm:$0x11] %v5355
      %5359 = vst.msk [vmem:[#allocation4 + $0x2c] sm:$0x1] %vm4916, %v5351
      %v5360 = vld [vmem:[#allocation3] sm:$0x7]
      %v5363 = vunpack.c.l.s4 1935823168
      %v5364 = vunpack.c.0.s8 %v5363
      %v5365 = vlaneseq
      %v5366 = vshrl.u32 %v5365, 7
      %v5367 = vsub.s32 %v5364, %v5366
      %v5368 = vrot.slane %v5360, %v5367
      %v5369 = vcombine.low %v5368, %v5368
      %v5371 = vunpack.c.l.s4 1935823168
      %v5372 = vunpack.c.0.s8 %v5371
      %v5373 = vlaneseq
      %v5374 = vshrl.u32 %v5373, 7
      %v5375 = vsub.s32 %v5372, %v5374
      %v5376 = vrot.slane %v5369, %v5375
      %v5378 = vunpack.c.l.s4 1935823168
      %v5379 = vunpack.c.0.s8 %v5378
      %v5380 = vlaneseq
      %v5381 = vshrl.u32 %v5380, 7
      %v5382 = vsub.s32 %v5379, %v5381
      %v5383 = vrot.slane %v5368, %v5382
      %5384 = vrot.lane.b32.xlu0 %v5376, 100
      %v5385 = vpop.permute.xlu0 %5384
      %5386 = vrot.lane.b32.xlu0 %v5383, 100
      %v5387 = vpop.permute.xlu0 %5386
      %v5388 = vrot.slane %v5385, 4
      %v5389 = vrot.slane %v5387, 4
      %v5390 = vsel %vm4948, %v5388, %v5389
      %v5391 = vsel %vm1050, %v5385, %v5390
      %5394 = vst [vmem:[#allocation4 + $0x24] sm:$0x22] %v5391
      %5395 = vst.msk [vmem:[#allocation4 + $0x2c] sm:$0x2] %vm4954, %v5387
      %v5396 = vld [vmem:[#allocation3] sm:$0xf]
      %v5398 = vcombine.low %v5396, %v5396
      %v5400 = vunpack.c.l.s4 1935823168
      %v5401 = vunpack.c.0.s8 %v5400
      %v5402 = vlaneseq
      %v5403 = vshrl.u32 %v5402, 7
      %v5404 = vsub.s32 %v5401, %v5403
      %v5405 = vrot.slane %v5398, %v5404
      %v5406 = vcombine.high %v5405, %v5405
      %v5408 = vunpack.c.l.s4 1935823168
      %v5409 = vunpack.c.0.s8 %v5408
      %v5410 = vlaneseq
      %v5411 = vshrl.u32 %v5410, 7
      %v5412 = vsub.s32 %v5409, %v5411
      %v5413 = vrot.slane %v5405, %v5412
      %v5415 = vunpack.c.l.s4 1935823168
      %v5416 = vunpack.c.0.s8 %v5415
      %v5417 = vlaneseq
      %v5418 = vshrl.u32 %v5417, 7
      %v5419 = vsub.s32 %v5416, %v5418
      %v5420 = vrot.slane %v5406, %v5419
      %5421 = vrot.lane.b32.xlu0 %v5413, 84
      %v5422 = vpop.permute.xlu0 %5421
      %5423 = vrot.lane.b32.xlu0 %v5420, 84
      %v5424 = vpop.permute.xlu0 %5423
      %v5425 = vrot.slane %v5422, 4
      %v5426 = vrot.slane %v5424, 4
      %v5427 = vsel %vm4948, %v5425, %v5426
      %v5428 = vsel %vm1123, %v5422, %v5427
      %v5429 = vsel %vm1123, %v5424, %v5426
      %5432 = vst [vmem:[#allocation4 + $0x24] sm:$0x44] %v5428
      %5433 = vst.msk [vmem:[#allocation4 + $0x2c] sm:$0x4] %vm4992, %v5429
      %v5434 = vld [vmem:[#allocation3] sm:$0xf]
      %v5436 = vcombine.low %v5434, %v5434
      %v5438 = vunpack.c.l.s4 1935823168
      %v5439 = vunpack.c.0.s8 %v5438
      %v5440 = vlaneseq
      %v5441 = vshrl.u32 %v5440, 7
      %v5442 = vsub.s32 %v5439, %v5441
      %v5443 = vrot.slane %v5436, %v5442
      %v5444 = vcombine.low %v5443, %v5443
      %v5446 = vunpack.c.l.s4 1935823168
      %v5447 = vunpack.c.0.s8 %v5446
      %v5448 = vlaneseq
      %v5449 = vshrl.u32 %v5448, 7
      %v5450 = vsub.s32 %v5447, %v5449
      %v5451 = vrot.slane %v5444, %v5450
      %v5453 = vunpack.c.l.s4 1935823168
      %v5454 = vunpack.c.0.s8 %v5453
      %v5455 = vlaneseq
      %v5456 = vshrl.u32 %v5455, 7
      %v5457 = vsub.s32 %v5454, %v5456
      %v5458 = vrot.slane %v5443, %v5457
      %5459 = vrot.lane.b32.xlu0 %v5451, 83
      %v5460 = vpop.permute.xlu0 %5459
      %5461 = vrot.lane.b32.xlu0 %v5458, 83
      %v5462 = vpop.permute.xlu0 %5461
      %v5463 = vrot.slane %v5460, 4
      %v5464 = vrot.slane %v5462, 4
      %v5465 = vsel %vm4948, %v5463, %v5464
      %v5466 = vsel %vm1198, %v5460, %v5465
      %v5467 = vsel %vm1198, %v5462, %v5464
      %5470 = vst [vmem:[#allocation4 + $0x24] sm:$0x88] %v5466
      %5471 = vst.msk [vmem:[#allocation4 + $0x2c] sm:$0x8] %vm5030, %v5467
      %v5472 = vld [vmem:[#allocation3] sm:$0xf]
      %v5475 = vunpack.c.l.s4 1935823168
      %v5476 = vunpack.c.0.s8 %v5475
      %v5477 = vlaneseq
      %v5478 = vshrl.u32 %v5477, 7
      %v5479 = vsub.s32 %v5476, %v5478
      %v5480 = vrot.slane %v5472, %v5479
      %v5481 = vcombine.high %v5480, %v5480
      %v5483 = vunpack.c.l.s4 1935823168
      %v5484 = vunpack.c.0.s8 %v5483
      %v5485 = vlaneseq
      %v5486 = vshrl.u32 %v5485, 7
      %v5487 = vsub.s32 %v5484, %v5486
      %v5488 = vrot.slane %v5480, %v5487
      %v5490 = vunpack.c.l.s4 1935823168
      %v5491 = vunpack.c.0.s8 %v5490
      %v5492 = vlaneseq
      %v5493 = vshrl.u32 %v5492, 7
      %v5494 = vsub.s32 %v5491, %v5493
      %v5495 = vrot.slane %v5481, %v5494
      %5496 = vrot.lane.b32.xlu0 %v5488, 82
      %v5497 = vpop.permute.xlu0 %5496
      %5498 = vrot.lane.b32.xlu0 %v5495, 82
      %v5499 = vpop.permute.xlu0 %5498
      %v5500 = vrot.slane %v5497, 4
      %v5501 = vrot.slane %v5499, 4
      %v5502 = vsel %vm4948, %v5500, %v5501
      %v5503 = vsel %vm1273, %v5497, %v5502
      %v5504 = vsel %vm1273, %v5499, %v5501
      %5507 = vst [vmem:[#allocation4 + $0x30] sm:$0x11] %v5503
      %5508 = vst.msk [vmem:[#allocation4 + $0x38] sm:$0x1] %vm4916, %v5504
      %v5509 = vld [vmem:[#allocation3] sm:$0xf]
      %v5512 = vunpack.c.l.s4 1935823168
      %v5513 = vunpack.c.0.s8 %v5512
      %v5514 = vlaneseq
      %v5515 = vshrl.u32 %v5514, 7
      %v5516 = vsub.s32 %v5513, %v5515
      %v5517 = vrot.slane %v5509, %v5516
      %v5518 = vcombine.low %v5517, %v5517
      %v5520 = vunpack.c.l.s4 1935823168
      %v5521 = vunpack.c.0.s8 %v5520
      %v5522 = vlaneseq
      %v5523 = vshrl.u32 %v5522, 7
      %v5524 = vsub.s32 %v5521, %v5523
      %v5525 = vrot.slane %v5518, %v5524
      %v5527 = vunpack.c.l.s4 1935823168
      %v5528 = vunpack.c.0.s8 %v5527
      %v5529 = vlaneseq
      %v5530 = vshrl.u32 %v5529, 7
      %v5531 = vsub.s32 %v5528, %v5530
      %v5532 = vrot.slane %v5517, %v5531
      %5533 = vrot.lane.b32.xlu0 %v5525, 81
      %v5534 = vpop.permute.xlu0 %5533
      %5535 = vrot.lane.b32.xlu0 %v5532, 81
      %v5536 = vpop.permute.xlu0 %5535
      %v5537 = vrot.slane %v5534, 4
      %v5538 = vrot.slane %v5536, 4
      %v5539 = vsel %vm4948, %v5537, %v5538
      %v5540 = vsel %vm1348, %v5534, %v5539
      %v5541 = vsel %vm1348, %v5536, %v5538
      %5544 = vst [vmem:[#allocation4 + $0x30] sm:$0x22] %v5540
      %5545 = vst.msk [vmem:[#allocation4 + $0x38] sm:$0x2] %vm4954, %v5541
      %v5546 = vld [vmem:[#allocation3] sm:$0xf]
      %v5548 = vcombine.low %v5546, %v5546
      %v5550 = vunpack.c.l.s4 1935823168
      %v5551 = vunpack.c.0.s8 %v5550
      %v5552 = vlaneseq
      %v5553 = vshrl.u32 %v5552, 7
      %v5554 = vsub.s32 %v5551, %v5553
      %v5555 = vrot.slane %v5548, %v5554
      %v5556 = vcombine.high %v5555, %v5555
      %v5558 = vunpack.c.l.s4 1935823168
      %v5559 = vunpack.c.0.s8 %v5558
      %v5560 = vlaneseq
      %v5561 = vshrl.u32 %v5560, 7
      %v5562 = vsub.s32 %v5559, %v5561
      %v5563 = vrot.slane %v5555, %v5562
      %v5565 = vunpack.c.l.s4 1935823168
      %v5566 = vunpack.c.0.s8 %v5565
      %v5567 = vlaneseq
      %v5568 = vshrl.u32 %v5567, 7
      %v5569 = vsub.s32 %v5566, %v5568
      %v5570 = vrot.slane %v5556, %v5569
      %5571 = vrot.lane.b32.xlu0 %v5563, 80
      %v5572 = vpop.permute.xlu0 %5571
      %5573 = vrot.lane.b32.xlu0 %v5570, 80
      %v5574 = vpop.permute.xlu0 %5573
      %v5575 = vrot.slane %v5572, 4
      %v5576 = vrot.slane %v5574, 4
      %v5577 = vsel %vm4948, %v5575, %v5576
      %v5578 = vsel %vm1423, %v5572, %v5577
      %v5579 = vsel %vm1423, %v5574, %v5576
      %5582 = vst [vmem:[#allocation4 + $0x30] sm:$0x44] %v5578
      %5583 = vst.msk [vmem:[#allocation4 + $0x38] sm:$0x4] %vm4992, %v5579
      %v5584 = vld [vmem:[#allocation3] sm:$0xf]
      %v5586 = vcombine.low %v5584, %v5584
      %v5588 = vunpack.c.l.s4 1935823168
      %v5589 = vunpack.c.0.s8 %v5588
      %v5590 = vlaneseq
      %v5591 = vshrl.u32 %v5590, 7
      %v5592 = vsub.s32 %v5589, %v5591
      %v5593 = vrot.slane %v5586, %v5592
      %v5594 = vcombine.low %v5593, %v5593
      %v5596 = vunpack.c.l.s4 1935823168
      %v5597 = vunpack.c.0.s8 %v5596
      %v5598 = vlaneseq
      %v5599 = vshrl.u32 %v5598, 7
      %v5600 = vsub.s32 %v5597, %v5599
      %v5601 = vrot.slane %v5594, %v5600
      %v5603 = vunpack.c.l.s4 1935823168
      %v5604 = vunpack.c.0.s8 %v5603
      %v5605 = vlaneseq
      %v5606 = vshrl.u32 %v5605, 7
      %v5607 = vsub.s32 %v5604, %v5606
      %v5608 = vrot.slane %v5593, %v5607
      %5609 = vrot.lane.b32.xlu0 %v5601, 79
      %v5610 = vpop.permute.xlu0 %5609
      %5611 = vrot.lane.b32.xlu0 %v5608, 79
      %v5612 = vpop.permute.xlu0 %5611
      %v5613 = vrot.slane %v5610, 4
      %v5614 = vrot.slane %v5612, 4
      %v5615 = vsel %vm4948, %v5613, %v5614
      %v5616 = vsel %vm1498, %v5610, %v5615
      %v5617 = vsel %vm1498, %v5612, %v5614
      %5620 = vst [vmem:[#allocation4 + $0x30] sm:$0x88] %v5616
      %5621 = vst.msk [vmem:[#allocation4 + $0x38] sm:$0x8] %vm5030, %v5617
      %v5622 = vld [vmem:[#allocation3] sm:$0xf]
      %v5625 = vunpack.c.l.s4 1935823168
      %v5626 = vunpack.c.0.s8 %v5625
      %v5627 = vlaneseq
      %v5628 = vshrl.u32 %v5627, 7
      %v5629 = vsub.s32 %v5626, %v5628
      %v5630 = vrot.slane %v5622, %v5629
      %v5631 = vcombine.high %v5630, %v5630
      %v5633 = vunpack.c.l.s4 1935823168
      %v5634 = vunpack.c.0.s8 %v5633
      %v5635 = vlaneseq
      %v5636 = vshrl.u32 %v5635, 7
      %v5637 = vsub.s32 %v5634, %v5636
      %v5638 = vrot.slane %v5630, %v5637
      %v5640 = vunpack.c.l.s4 1935823168
      %v5641 = vunpack.c.0.s8 %v5640
      %v5642 = vlaneseq
      %v5643 = vshrl.u32 %v5642, 7
      %v5644 = vsub.s32 %v5641, %v5643
      %v5645 = vrot.slane %v5631, %v5644
      %5646 = vrot.lane.b32.xlu0 %v5638, 78
      %v5647 = vpop.permute.xlu0 %5646
      %5648 = vrot.lane.b32.xlu0 %v5645, 78
      %v5649 = vpop.permute.xlu0 %5648
      %v5650 = vrot.slane %v5647, 4
      %v5651 = vrot.slane %v5649, 4
      %v5652 = vsel %vm4948, %v5650, %v5651
      %v5653 = vsel %vm1573, %v5647, %v5652
      %v5654 = vsel %vm1573, %v5649, %v5651
      %5657 = vst [vmem:[#allocation4 + $0x3c] sm:$0x11] %v5653
      %5658 = vst.msk [vmem:[#allocation4 + $0x44] sm:$0x1] %vm4916, %v5654
      %v5659 = vld [vmem:[#allocation3] sm:$0xf]
      %v5662 = vunpack.c.l.s4 1935823168
      %v5663 = vunpack.c.0.s8 %v5662
      %v5664 = vlaneseq
      %v5665 = vshrl.u32 %v5664, 7
      %v5666 = vsub.s32 %v5663, %v5665
      %v5667 = vrot.slane %v5659, %v5666
      %v5668 = vcombine.low %v5667, %v5667
      %v5670 = vunpack.c.l.s4 1935823168
      %v5671 = vunpack.c.0.s8 %v5670
      %v5672 = vlaneseq
      %v5673 = vshrl.u32 %v5672, 7
      %v5674 = vsub.s32 %v5671, %v5673
      %v5675 = vrot.slane %v5668, %v5674
      %v5677 = vunpack.c.l.s4 1935823168
      %v5678 = vunpack.c.0.s8 %v5677
      %v5679 = vlaneseq
      %v5680 = vshrl.u32 %v5679, 7
      %v5681 = vsub.s32 %v5678, %v5680
      %v5682 = vrot.slane %v5667, %v5681
      %5683 = vrot.lane.b32.xlu0 %v5675, 62
      %v5684 = vpop.permute.xlu0 %5683
      %5685 = vrot.lane.b32.xlu0 %v5682, 62
      %v5686 = vpop.permute.xlu0 %5685
      %v5687 = vrot.slane %v5684, 4
      %v5688 = vrot.slane %v5686, 4
      %v5689 = vsel %vm4948, %v5687, %v5688
      %v5690 = vsel %vm1648, %v5684, %v5689
      %v5691 = vsel %vm1648, %v5686, %v5688
      %5694 = vst [vmem:[#allocation4 + $0x3c] sm:$0x22] %v5690
      %5695 = vst.msk [vmem:[#allocation4 + $0x44] sm:$0x2] %vm4954, %v5691
      %v5696 = vld [vmem:[#allocation3] sm:$0xf]
      %v5698 = vcombine.low %v5696, %v5696
      %v5700 = vunpack.c.l.s4 1935823168
      %v5701 = vunpack.c.0.s8 %v5700
      %v5702 = vlaneseq
      %v5703 = vshrl.u32 %v5702, 7
      %v5704 = vsub.s32 %v5701, %v5703
      %v5705 = vrot.slane %v5698, %v5704
      %v5706 = vcombine.high %v5705, %v5705
      %v5708 = vunpack.c.l.s4 1935823168
      %v5709 = vunpack.c.0.s8 %v5708
      %v5710 = vlaneseq
      %v5711 = vshrl.u32 %v5710, 7
      %v5712 = vsub.s32 %v5709, %v5711
      %v5713 = vrot.slane %v5705, %v5712
      %v5715 = vunpack.c.l.s4 1935823168
      %v5716 = vunpack.c.0.s8 %v5715
      %v5717 = vlaneseq
      %v5718 = vshrl.u32 %v5717, 7
      %v5719 = vsub.s32 %v5716, %v5718
      %v5720 = vrot.slane %v5706, %v5719
      %5721 = vrot.lane.b32.xlu0 %v5713, 61
      %v5722 = vpop.permute.xlu0 %5721
      %5723 = vrot.lane.b32.xlu0 %v5720, 61
      %v5724 = vpop.permute.xlu0 %5723
      %v5725 = vrot.slane %v5722, 4
      %v5726 = vrot.slane %v5724, 4
      %v5727 = vsel %vm4948, %v5725, %v5726
      %v5728 = vsel %vm1723, %v5722, %v5727
      %v5729 = vsel %vm1723, %v5724, %v5726
      %5732 = vst [vmem:[#allocation4 + $0x3c] sm:$0x44] %v5728
      %5733 = vst.msk [vmem:[#allocation4 + $0x44] sm:$0x4] %vm4992, %v5729
      %v5734 = vld [vmem:[#allocation3] sm:$0xf]
      %v5736 = vcombine.low %v5734, %v5734
      %v5738 = vunpack.c.l.s4 1935823168
      %v5739 = vunpack.c.0.s8 %v5738
      %v5740 = vlaneseq
      %v5741 = vshrl.u32 %v5740, 7
      %v5742 = vsub.s32 %v5739, %v5741
      %v5743 = vrot.slane %v5736, %v5742
      %v5744 = vcombine.low %v5743, %v5743
      %v5746 = vunpack.c.l.s4 1935823168
      %v5747 = vunpack.c.0.s8 %v5746
      %v5748 = vlaneseq
      %v5749 = vshrl.u32 %v5748, 7
      %v5750 = vsub.s32 %v5747, %v5749
      %v5751 = vrot.slane %v5744, %v5750
      %v5753 = vunpack.c.l.s4 1935823168
      %v5754 = vunpack.c.0.s8 %v5753
      %v5755 = vlaneseq
      %v5756 = vshrl.u32 %v5755, 7
      %v5757 = vsub.s32 %v5754, %v5756
      %v5758 = vrot.slane %v5743, %v5757
      %5759 = vrot.lane.b32.xlu0 %v5751, 60
      %v5760 = vpop.permute.xlu0 %5759
      %5761 = vrot.lane.b32.xlu0 %v5758, 60
      %v5762 = vpop.permute.xlu0 %5761
      %v5763 = vrot.slane %v5760, 4
      %v5764 = vrot.slane %v5762, 4
      %v5765 = vsel %vm4948, %v5763, %v5764
      %v5766 = vsel %vm1798, %v5760, %v5765
      %v5767 = vsel %vm1798, %v5762, %v5764
      %5770 = vst [vmem:[#allocation4 + $0x3c] sm:$0x88] %v5766
      %5771 = vst.msk [vmem:[#allocation4 + $0x44] sm:$0x8] %vm5030, %v5767
      %v5772 = vld [vmem:[#allocation3] sm:$0xf]
      %v5775 = vunpack.c.l.s4 1935823168
      %v5776 = vunpack.c.0.s8 %v5775
      %v5777 = vlaneseq
      %v5778 = vshrl.u32 %v5777, 7
      %v5779 = vsub.s32 %v5776, %v5778
      %v5780 = vrot.slane %v5772, %v5779
      %v5781 = vcombine.high %v5780, %v5780
      %v5783 = vunpack.c.l.s4 1935823168
      %v5784 = vunpack.c.0.s8 %v5783
      %v5785 = vlaneseq
      %v5786 = vshrl.u32 %v5785, 7
      %v5787 = vsub.s32 %v5784, %v5786
      %v5788 = vrot.slane %v5780, %v5787
      %v5790 = vunpack.c.l.s4 1935823168
      %v5791 = vunpack.c.0.s8 %v5790
      %v5792 = vlaneseq
      %v5793 = vshrl.u32 %v5792, 7
      %v5794 = vsub.s32 %v5791, %v5793
      %v5795 = vrot.slane %v5781, %v5794
      %5796 = vrot.lane.b32.xlu0 %v5788, 59
      %v5797 = vpop.permute.xlu0 %5796
      %5798 = vrot.lane.b32.xlu0 %v5795, 59
      %v5799 = vpop.permute.xlu0 %5798
      %v5800 = vrot.slane %v5797, 4
      %v5801 = vrot.slane %v5799, 4
      %v5802 = vsel %vm4948, %v5800, %v5801
      %v5803 = vsel %vm1873, %v5797, %v5802
      %v5804 = vsel %vm1873, %v5799, %v5801
      %5807 = vst [vmem:[#allocation4 + $0x48] sm:$0x11] %v5803
      %5808 = vst.msk [vmem:[#allocation4 + $0x50] sm:$0x1] %vm4916, %v5804
      %v5809 = vld [vmem:[#allocation3] sm:$0xf]
      %v5812 = vunpack.c.l.s4 1935823168
      %v5813 = vunpack.c.0.s8 %v5812
      %v5814 = vlaneseq
      %v5815 = vshrl.u32 %v5814, 7
      %v5816 = vsub.s32 %v5813, %v5815
      %v5817 = vrot.slane %v5809, %v5816
      %v5818 = vcombine.low %v5817, %v5817
      %v5820 = vunpack.c.l.s4 1935823168
      %v5821 = vunpack.c.0.s8 %v5820
      %v5822 = vlaneseq
      %v5823 = vshrl.u32 %v5822, 7
      %v5824 = vsub.s32 %v5821, %v5823
      %v5825 = vrot.slane %v5818, %v5824
      %v5827 = vunpack.c.l.s4 1935823168
      %v5828 = vunpack.c.0.s8 %v5827
      %v5829 = vlaneseq
      %v5830 = vshrl.u32 %v5829, 7
      %v5831 = vsub.s32 %v5828, %v5830
      %v5832 = vrot.slane %v5817, %v5831
      %5833 = vrot.lane.b32.xlu0 %v5825, 58
      %v5834 = vpop.permute.xlu0 %5833
      %5835 = vrot.lane.b32.xlu0 %v5832, 58
      %v5836 = vpop.permute.xlu0 %5835
      %v5837 = vrot.slane %v5834, 4
      %v5838 = vrot.slane %v5836, 4
      %v5839 = vsel %vm4948, %v5837, %v5838
      %v5840 = vsel %vm1948, %v5834, %v5839
      %v5841 = vsel %vm1948, %v5836, %v5838
      %5844 = vst [vmem:[#allocation4 + $0x48] sm:$0x22] %v5840
      %5845 = vst.msk [vmem:[#allocation4 + $0x50] sm:$0x2] %vm4954, %v5841
      %v5846 = vld [vmem:[#allocation3] sm:$0xf]
      %v5848 = vcombine.low %v5846, %v5846
      %v5850 = vunpack.c.l.s4 1935823168
      %v5851 = vunpack.c.0.s8 %v5850
      %v5852 = vlaneseq
      %v5853 = vshrl.u32 %v5852, 7
      %v5854 = vsub.s32 %v5851, %v5853
      %v5855 = vrot.slane %v5848, %v5854
      %v5856 = vcombine.high %v5855, %v5855
      %v5858 = vunpack.c.l.s4 1935823168
      %v5859 = vunpack.c.0.s8 %v5858
      %v5860 = vlaneseq
      %v5861 = vshrl.u32 %v5860, 7
      %v5862 = vsub.s32 %v5859, %v5861
      %v5863 = vrot.slane %v5855, %v5862
      %v5865 = vunpack.c.l.s4 1935823168
      %v5866 = vunpack.c.0.s8 %v5865
      %v5867 = vlaneseq
      %v5868 = vshrl.u32 %v5867, 7
      %v5869 = vsub.s32 %v5866, %v5868
      %v5870 = vrot.slane %v5856, %v5869
      %5871 = vrot.lane.b32.xlu0 %v5863, 57
      %v5872 = vpop.permute.xlu0 %5871
      %5873 = vrot.lane.b32.xlu0 %v5870, 57
      %v5874 = vpop.permute.xlu0 %5873
      %v5875 = vrot.slane %v5872, 4
      %v5876 = vrot.slane %v5874, 4
      %v5877 = vsel %vm4948, %v5875, %v5876
      %v5878 = vsel %vm2023, %v5872, %v5877
      %v5879 = vsel %vm2023, %v5874, %v5876
      %5882 = vst [vmem:[#allocation4 + $0x48] sm:$0x44] %v5878
      %5883 = vst.msk [vmem:[#allocation4 + $0x50] sm:$0x4] %vm4992, %v5879
      %v5884 = vld [vmem:[#allocation3] sm:$0xf]
      %v5886 = vcombine.low %v5884, %v5884
      %v5888 = vunpack.c.l.s4 1935823168
      %v5889 = vunpack.c.0.s8 %v5888
      %v5890 = vlaneseq
      %v5891 = vshrl.u32 %v5890, 7
      %v5892 = vsub.s32 %v5889, %v5891
      %v5893 = vrot.slane %v5886, %v5892
      %v5894 = vcombine.low %v5893, %v5893
      %v5896 = vunpack.c.l.s4 1935823168
      %v5897 = vunpack.c.0.s8 %v5896
      %v5898 = vlaneseq
      %v5899 = vshrl.u32 %v5898, 7
      %v5900 = vsub.s32 %v5897, %v5899
      %v5901 = vrot.slane %v5894, %v5900
      %v5903 = vunpack.c.l.s4 1935823168
      %v5904 = vunpack.c.0.s8 %v5903
      %v5905 = vlaneseq
      %v5906 = vshrl.u32 %v5905, 7
      %v5907 = vsub.s32 %v5904, %v5906
      %v5908 = vrot.slane %v5893, %v5907
      %5909 = vrot.lane.b32.xlu0 %v5901, 56
      %v5910 = vpop.permute.xlu0 %5909
      %5911 = vrot.lane.b32.xlu0 %v5908, 56
      %v5912 = vpop.permute.xlu0 %5911
      %v5913 = vrot.slane %v5910, 4
      %v5914 = vrot.slane %v5912, 4
      %v5915 = vsel %vm4948, %v5913, %v5914
      %v5916 = vsel %vm2098, %v5910, %v5915
      %v5917 = vsel %vm2098, %v5912, %v5914
      %5920 = vst [vmem:[#allocation4 + $0x48] sm:$0x88] %v5916
      %5921 = vst.msk [vmem:[#allocation4 + $0x50] sm:$0x8] %vm5030, %v5917
      %v5922 = vld [vmem:[#allocation3] sm:$0xf]
      %v5925 = vunpack.c.l.s4 1935823168
      %v5926 = vunpack.c.0.s8 %v5925
      %v5927 = vlaneseq
      %v5928 = vshrl.u32 %v5927, 7
      %v5929 = vsub.s32 %v5926, %v5928
      %v5930 = vrot.slane %v5922, %v5929
      %v5931 = vcombine.high %v5930, %v5930
      %v5933 = vunpack.c.l.s4 1935823168
      %v5934 = vunpack.c.0.s8 %v5933
      %v5935 = vlaneseq
      %v5936 = vshrl.u32 %v5935, 7
      %v5937 = vsub.s32 %v5934, %v5936
      %v5938 = vrot.slane %v5930, %v5937
      %v5940 = vunpack.c.l.s4 1935823168
      %v5941 = vunpack.c.0.s8 %v5940
      %v5942 = vlaneseq
      %v5943 = vshrl.u32 %v5942, 7
      %v5944 = vsub.s32 %v5941, %v5943
      %v5945 = vrot.slane %v5931, %v5944
      %5946 = vrot.lane.b32.xlu0 %v5938, 40
      %v5947 = vpop.permute.xlu0 %5946
      %5948 = vrot.lane.b32.xlu0 %v5945, 40
      %v5949 = vpop.permute.xlu0 %5948
      %v5950 = vrot.slane %v5947, 4
      %v5951 = vrot.slane %v5949, 4
      %v5952 = vsel %vm4948, %v5950, %v5951
      %v5953 = vsel %vm2173, %v5947, %v5952
      %v5954 = vsel %vm2173, %v5949, %v5951
      %5957 = vst [vmem:[#allocation4 + $0x54] sm:$0x11] %v5953
      %5958 = vst.msk [vmem:[#allocation4 + $0x5c] sm:$0x1] %vm4916, %v5954
      %v5959 = vld [vmem:[#allocation3] sm:$0xf]
      %v5962 = vunpack.c.l.s4 1935823168
      %v5963 = vunpack.c.0.s8 %v5962
      %v5964 = vlaneseq
      %v5965 = vshrl.u32 %v5964, 7
      %v5966 = vsub.s32 %v5963, %v5965
      %v5967 = vrot.slane %v5959, %v5966
      %v5968 = vcombine.low %v5967, %v5967
      %v5970 = vunpack.c.l.s4 1935823168
      %v5971 = vunpack.c.0.s8 %v5970
      %v5972 = vlaneseq
      %v5973 = vshrl.u32 %v5972, 7
      %v5974 = vsub.s32 %v5971, %v5973
      %v5975 = vrot.slane %v5968, %v5974
      %v5977 = vunpack.c.l.s4 1935823168
      %v5978 = vunpack.c.0.s8 %v5977
      %v5979 = vlaneseq
      %v5980 = vshrl.u32 %v5979, 7
      %v5981 = vsub.s32 %v5978, %v5980
      %v5982 = vrot.slane %v5967, %v5981
      %5983 = vrot.lane.b32.xlu0 %v5975, 39
      %v5984 = vpop.permute.xlu0 %5983
      %5985 = vrot.lane.b32.xlu0 %v5982, 39
      %v5986 = vpop.permute.xlu0 %5985
      %v5987 = vrot.slane %v5984, 4
      %v5988 = vrot.slane %v5986, 4
      %v5989 = vsel %vm4948, %v5987, %v5988
      %v5990 = vsel %vm2248, %v5984, %v5989
      %v5991 = vsel %vm2248, %v5986, %v5988
      %5994 = vst [vmem:[#allocation4 + $0x54] sm:$0x22] %v5990
      %5995 = vst.msk [vmem:[#allocation4 + $0x5c] sm:$0x2] %vm4954, %v5991
      %v5996 = vld [vmem:[#allocation3] sm:$0xf]
      %v5998 = vcombine.low %v5996, %v5996
      %v6000 = vunpack.c.l.s4 1935823168
      %v6001 = vunpack.c.0.s8 %v6000
      %v6002 = vlaneseq
      %v6003 = vshrl.u32 %v6002, 7
      %v6004 = vsub.s32 %v6001, %v6003
      %v6005 = vrot.slane %v5998, %v6004
      %v6006 = vcombine.high %v6005, %v6005
      %v6008 = vunpack.c.l.s4 1935823168
      %v6009 = vunpack.c.0.s8 %v6008
      %v6010 = vlaneseq
      %v6011 = vshrl.u32 %v6010, 7
      %v6012 = vsub.s32 %v6009, %v6011
      %v6013 = vrot.slane %v6005, %v6012
      %v6015 = vunpack.c.l.s4 1935823168
      %v6016 = vunpack.c.0.s8 %v6015
      %v6017 = vlaneseq
      %v6018 = vshrl.u32 %v6017, 7
      %v6019 = vsub.s32 %v6016, %v6018
      %v6020 = vrot.slane %v6006, %v6019
      %6021 = vrot.lane.b32.xlu0 %v6013, 38
      %v6022 = vpop.permute.xlu0 %6021
      %6023 = vrot.lane.b32.xlu0 %v6020, 38
      %v6024 = vpop.permute.xlu0 %6023
      %v6025 = vrot.slane %v6022, 4
      %v6026 = vrot.slane %v6024, 4
      %v6027 = vsel %vm4948, %v6025, %v6026
      %v6028 = vsel %vm2323, %v6022, %v6027
      %v6029 = vsel %vm2323, %v6024, %v6026
      %6032 = vst [vmem:[#allocation4 + $0x54] sm:$0x44] %v6028
      %6033 = vst.msk [vmem:[#allocation4 + $0x5c] sm:$0x4] %vm4992, %v6029
      %v6034 = vld [vmem:[#allocation3] sm:$0xf]
      %v6036 = vcombine.low %v6034, %v6034
      %v6038 = vunpack.c.l.s4 1935823168
      %v6039 = vunpack.c.0.s8 %v6038
      %v6040 = vlaneseq
      %v6041 = vshrl.u32 %v6040, 7
      %v6042 = vsub.s32 %v6039, %v6041
      %v6043 = vrot.slane %v6036, %v6042
      %v6044 = vcombine.low %v6043, %v6043
      %v6046 = vunpack.c.l.s4 1935823168
      %v6047 = vunpack.c.0.s8 %v6046
      %v6048 = vlaneseq
      %v6049 = vshrl.u32 %v6048, 7
      %v6050 = vsub.s32 %v6047, %v6049
      %v6051 = vrot.slane %v6044, %v6050
      %v6053 = vunpack.c.l.s4 1935823168
      %v6054 = vunpack.c.0.s8 %v6053
      %v6055 = vlaneseq
      %v6056 = vshrl.u32 %v6055, 7
      %v6057 = vsub.s32 %v6054, %v6056
      %v6058 = vrot.slane %v6043, %v6057
      %6059 = vrot.lane.b32.xlu0 %v6051, 37
      %v6060 = vpop.permute.xlu0 %6059
      %6061 = vrot.lane.b32.xlu0 %v6058, 37
      %v6062 = vpop.permute.xlu0 %6061
      %v6063 = vrot.slane %v6060, 4
      %v6064 = vrot.slane %v6062, 4
      %v6065 = vsel %vm4948, %v6063, %v6064
      %v6066 = vsel %vm2398, %v6060, %v6065
      %v6067 = vsel %vm2398, %v6062, %v6064
      %6070 = vst [vmem:[#allocation4 + $0x54] sm:$0x88] %v6066
      %6071 = vst.msk [vmem:[#allocation4 + $0x5c] sm:$0x8] %vm5030, %v6067
      %v6072 = vld [vmem:[#allocation3] sm:$0xf]
      %v6075 = vunpack.c.l.s4 1935823168
      %v6076 = vunpack.c.0.s8 %v6075
      %v6077 = vlaneseq
      %v6078 = vshrl.u32 %v6077, 7
      %v6079 = vsub.s32 %v6076, %v6078
      %v6080 = vrot.slane %v6072, %v6079
      %v6081 = vcombine.high %v6080, %v6080
      %v6083 = vunpack.c.l.s4 1935823168
      %v6084 = vunpack.c.0.s8 %v6083
      %v6085 = vlaneseq
      %v6086 = vshrl.u32 %v6085, 7
      %v6087 = vsub.s32 %v6084, %v6086
      %v6088 = vrot.slane %v6080, %v6087
      %v6090 = vunpack.c.l.s4 1935823168
      %v6091 = vunpack.c.0.s8 %v6090
      %v6092 = vlaneseq
      %v6093 = vshrl.u32 %v6092, 7
      %v6094 = vsub.s32 %v6091, %v6093
      %v6095 = vrot.slane %v6081, %v6094
      %6096 = vrot.lane.b32.xlu0 %v6088, 36
      %v6097 = vpop.permute.xlu0 %6096
      %6098 = vrot.lane.b32.xlu0 %v6095, 36
      %v6099 = vpop.permute.xlu0 %6098
      %v6100 = vrot.slane %v6097, 4
      %v6101 = vrot.slane %v6099, 4
      %v6102 = vsel %vm4948, %v6100, %v6101
      %v6103 = vsel %vm2473, %v6097, %v6102
      %v6104 = vsel %vm2473, %v6099, %v6101
      %6107 = vst [vmem:[#allocation4 + $0x60] sm:$0x11] %v6103
      %6108 = vst.msk [vmem:[#allocation4 + $0x68] sm:$0x1] %vm4916, %v6104
      %v6109 = vld [vmem:[#allocation3] sm:$0xf]
      %v6112 = vunpack.c.l.s4 1935823168
      %v6113 = vunpack.c.0.s8 %v6112
      %v6114 = vlaneseq
      %v6115 = vshrl.u32 %v6114, 7
      %v6116 = vsub.s32 %v6113, %v6115
      %v6117 = vrot.slane %v6109, %v6116
      %v6118 = vcombine.low %v6117, %v6117
      %v6120 = vunpack.c.l.s4 1935823168
      %v6121 = vunpack.c.0.s8 %v6120
      %v6122 = vlaneseq
      %v6123 = vshrl.u32 %v6122, 7
      %v6124 = vsub.s32 %v6121, %v6123
      %v6125 = vrot.slane %v6118, %v6124
      %v6127 = vunpack.c.l.s4 1935823168
      %v6128 = vunpack.c.0.s8 %v6127
      %v6129 = vlaneseq
      %v6130 = vshrl.u32 %v6129, 7
      %v6131 = vsub.s32 %v6128, %v6130
      %v6132 = vrot.slane %v6117, %v6131
      %6133 = vrot.lane.b32.xlu0 %v6125, 35
      %v6134 = vpop.permute.xlu0 %6133
      %6135 = vrot.lane.b32.xlu0 %v6132, 35
      %v6136 = vpop.permute.xlu0 %6135
      %v6137 = vrot.slane %v6134, 4
      %v6138 = vrot.slane %v6136, 4
      %v6139 = vsel %vm4948, %v6137, %v6138
      %v6140 = vsel %vm2548, %v6134, %v6139
      %v6141 = vsel %vm2548, %v6136, %v6138
      %6144 = vst [vmem:[#allocation4 + $0x60] sm:$0x22] %v6140
      %6145 = vst.msk [vmem:[#allocation4 + $0x68] sm:$0x2] %vm4954, %v6141
      %v6146 = vld [vmem:[#allocation3] sm:$0xf]
      %v6148 = vcombine.low %v6146, %v6146
      %v6150 = vunpack.c.l.s4 1935823168
      %v6151 = vunpack.c.0.s8 %v6150
      %v6152 = vlaneseq
      %v6153 = vshrl.u32 %v6152, 7
      %v6154 = vsub.s32 %v6151, %v6153
      %v6155 = vrot.slane %v6148, %v6154
      %v6156 = vcombine.high %v6155, %v6155
      %v6158 = vunpack.c.l.s4 1935823168
      %v6159 = vunpack.c.0.s8 %v6158
      %v6160 = vlaneseq
      %v6161 = vshrl.u32 %v6160, 7
      %v6162 = vsub.s32 %v6159, %v6161
      %v6163 = vrot.slane %v6155, %v6162
      %v6165 = vunpack.c.l.s4 1935823168
      %v6166 = vunpack.c.0.s8 %v6165
      %v6167 = vlaneseq
      %v6168 = vshrl.u32 %v6167, 7
      %v6169 = vsub.s32 %v6166, %v6168
      %v6170 = vrot.slane %v6156, %v6169
      %6171 = vrot.lane.b32.xlu0 %v6163, 34
      %v6172 = vpop.permute.xlu0 %6171
      %6173 = vrot.lane.b32.xlu0 %v6170, 34
      %v6174 = vpop.permute.xlu0 %6173
      %v6175 = vrot.slane %v6172, 4
      %v6176 = vrot.slane %v6174, 4
      %v6177 = vsel %vm4948, %v6175, %v6176
      %v6178 = vsel %vm2623, %v6172, %v6177
      %v6179 = vsel %vm2623, %v6174, %v6176
      %6182 = vst [vmem:[#allocation4 + $0x60] sm:$0x44] %v6178
      %6183 = vst.msk [vmem:[#allocation4 + $0x68] sm:$0x4] %vm4992, %v6179
      %v6184 = vld [vmem:[#allocation3] sm:$0xf]
      %v6186 = vcombine.low %v6184, %v6184
      %v6188 = vunpack.c.l.s4 1935823168
      %v6189 = vunpack.c.0.s8 %v6188
      %v6190 = vlaneseq
      %v6191 = vshrl.u32 %v6190, 7
      %v6192 = vsub.s32 %v6189, %v6191
      %v6193 = vrot.slane %v6186, %v6192
      %v6194 = vcombine.low %v6193, %v6193
      %v6196 = vunpack.c.l.s4 1935823168
      %v6197 = vunpack.c.0.s8 %v6196
      %v6198 = vlaneseq
      %v6199 = vshrl.u32 %v6198, 7
      %v6200 = vsub.s32 %v6197, %v6199
      %v6201 = vrot.slane %v6194, %v6200
      %v6203 = vunpack.c.l.s4 1935823168
      %v6204 = vunpack.c.0.s8 %v6203
      %v6205 = vlaneseq
      %v6206 = vshrl.u32 %v6205, 7
      %v6207 = vsub.s32 %v6204, %v6206
      %v6208 = vrot.slane %v6193, %v6207
      %6209 = vrot.lane.b32.xlu0 %v6201, 18
      %v6210 = vpop.permute.xlu0 %6209
      %6211 = vrot.lane.b32.xlu0 %v6208, 18
      %v6212 = vpop.permute.xlu0 %6211
      %v6213 = vrot.slane %v6210, 4
      %v6214 = vrot.slane %v6212, 4
      %v6215 = vsel %vm4948, %v6213, %v6214
      %v6216 = vsel %vm2698, %v6210, %v6215
      %v6217 = vsel %vm2698, %v6212, %v6214
      %6220 = vst [vmem:[#allocation4 + $0x60] sm:$0x88] %v6216
      %6221 = vst.msk [vmem:[#allocation4 + $0x68] sm:$0x8] %vm5030, %v6217
      %v6222 = vld [vmem:[#allocation3] sm:$0xf]
      %v6225 = vunpack.c.l.s4 1935823168
      %v6226 = vunpack.c.0.s8 %v6225
      %v6227 = vlaneseq
      %v6228 = vshrl.u32 %v6227, 7
      %v6229 = vsub.s32 %v6226, %v6228
      %v6230 = vrot.slane %v6222, %v6229
      %v6231 = vcombine.high %v6230, %v6230
      %v6233 = vunpack.c.l.s4 1935823168
      %v6234 = vunpack.c.0.s8 %v6233
      %v6235 = vlaneseq
      %v6236 = vshrl.u32 %v6235, 7
      %v6237 = vsub.s32 %v6234, %v6236
      %v6238 = vrot.slane %v6230, %v6237
      %v6240 = vunpack.c.l.s4 1935823168
      %v6241 = vunpack.c.0.s8 %v6240
      %v6242 = vlaneseq
      %v6243 = vshrl.u32 %v6242, 7
      %v6244 = vsub.s32 %v6241, %v6243
      %v6245 = vrot.slane %v6231, %v6244
      %6246 = vrot.lane.b32.xlu0 %v6238, 17
      %v6247 = vpop.permute.xlu0 %6246
      %6248 = vrot.lane.b32.xlu0 %v6245, 17
      %v6249 = vpop.permute.xlu0 %6248
      %v6250 = vrot.slane %v6247, 4
      %v6251 = vrot.slane %v6249, 4
      %v6252 = vsel %vm4948, %v6250, %v6251
      %v6253 = vsel %vm2773, %v6247, %v6252
      %v6254 = vsel %vm2773, %v6249, %v6251
      %6257 = vst [vmem:[#allocation4 + $0x6c] sm:$0x11] %v6253
      %6258 = vst.msk [vmem:[#allocation4 + $0x74] sm:$0x1] %vm4916, %v6254
      %v6259 = vld [vmem:[#allocation3] sm:$0xf]
      %v6262 = vunpack.c.l.s4 1935823168
      %v6263 = vunpack.c.0.s8 %v6262
      %v6264 = vlaneseq
      %v6265 = vshrl.u32 %v6264, 7
      %v6266 = vsub.s32 %v6263, %v6265
      %v6267 = vrot.slane %v6259, %v6266
      %v6268 = vcombine.low %v6267, %v6267
      %v6270 = vunpack.c.l.s4 1935823168
      %v6271 = vunpack.c.0.s8 %v6270
      %v6272 = vlaneseq
      %v6273 = vshrl.u32 %v6272, 7
      %v6274 = vsub.s32 %v6271, %v6273
      %v6275 = vrot.slane %v6268, %v6274
      %v6277 = vunpack.c.l.s4 1935823168
      %v6278 = vunpack.c.0.s8 %v6277
      %v6279 = vlaneseq
      %v6280 = vshrl.u32 %v6279, 7
      %v6281 = vsub.s32 %v6278, %v6280
      %v6282 = vrot.slane %v6267, %v6281
      %6283 = vrot.lane.b32.xlu0 %v6275, 16
      %v6284 = vpop.permute.xlu0 %6283
      %6285 = vrot.lane.b32.xlu0 %v6282, 16
      %v6286 = vpop.permute.xlu0 %6285
      %v6287 = vrot.slane %v6284, 4
      %v6288 = vrot.slane %v6286, 4
      %v6289 = vsel %vm4948, %v6287, %v6288
      %v6290 = vsel %vm2848, %v6284, %v6289
      %v6291 = vsel %vm2848, %v6286, %v6288
      %6294 = vst [vmem:[#allocation4 + $0x6c] sm:$0x22] %v6290
      %6295 = vst.msk [vmem:[#allocation4 + $0x74] sm:$0x2] %vm4954, %v6291
      %v6296 = vld [vmem:[#allocation3] sm:$0xf]
      %v6298 = vcombine.low %v6296, %v6296
      %v6300 = vunpack.c.l.s4 1935823168
      %v6301 = vunpack.c.0.s8 %v6300
      %v6302 = vlaneseq
      %v6303 = vshrl.u32 %v6302, 7
      %v6304 = vsub.s32 %v6301, %v6303
      %v6305 = vrot.slane %v6298, %v6304
      %v6306 = vcombine.high %v6305, %v6305
      %v6308 = vunpack.c.l.s4 1935823168
      %v6309 = vunpack.c.0.s8 %v6308
      %v6310 = vlaneseq
      %v6311 = vshrl.u32 %v6310, 7
      %v6312 = vsub.s32 %v6309, %v6311
      %v6313 = vrot.slane %v6305, %v6312
      %v6315 = vunpack.c.l.s4 1935823168
      %v6316 = vunpack.c.0.s8 %v6315
      %v6317 = vlaneseq
      %v6318 = vshrl.u32 %v6317, 7
      %v6319 = vsub.s32 %v6316, %v6318
      %v6320 = vrot.slane %v6306, %v6319
      %6321 = vrot.lane.b32.xlu0 %v6313, 15
      %v6322 = vpop.permute.xlu0 %6321
      %6323 = vrot.lane.b32.xlu0 %v6320, 15
      %v6324 = vpop.permute.xlu0 %6323
      %v6325 = vrot.slane %v6322, 4
      %v6326 = vrot.slane %v6324, 4
      %v6327 = vsel %vm4948, %v6325, %v6326
      %v6328 = vsel %vm2923, %v6322, %v6327
      %v6329 = vsel %vm2923, %v6324, %v6326
      %6332 = vst [vmem:[#allocation4 + $0x6c] sm:$0x44] %v6328
      %6333 = vst.msk [vmem:[#allocation4 + $0x74] sm:$0x4] %vm4992, %v6329
      %v6334 = vld [vmem:[#allocation3] sm:$0xf]
      %v6336 = vcombine.low %v6334, %v6334
      %v6338 = vunpack.c.l.s4 1935823168
      %v6339 = vunpack.c.0.s8 %v6338
      %v6340 = vlaneseq
      %v6341 = vshrl.u32 %v6340, 7
      %v6342 = vsub.s32 %v6339, %v6341
      %v6343 = vrot.slane %v6336, %v6342
      %v6344 = vcombine.low %v6343, %v6343
      %v6346 = vunpack.c.l.s4 1935823168
      %v6347 = vunpack.c.0.s8 %v6346
      %v6348 = vlaneseq
      %v6349 = vshrl.u32 %v6348, 7
      %v6350 = vsub.s32 %v6347, %v6349
      %v6351 = vrot.slane %v6344, %v6350
      %v6353 = vunpack.c.l.s4 1935823168
      %v6354 = vunpack.c.0.s8 %v6353
      %v6355 = vlaneseq
      %v6356 = vshrl.u32 %v6355, 7
      %v6357 = vsub.s32 %v6354, %v6356
      %v6358 = vrot.slane %v6343, %v6357
      %6359 = vrot.lane.b32.xlu0 %v6351, 14
      %v6360 = vpop.permute.xlu0 %6359
      %6361 = vrot.lane.b32.xlu0 %v6358, 14
      %v6362 = vpop.permute.xlu0 %6361
      %v6363 = vrot.slane %v6360, 4
      %v6364 = vrot.slane %v6362, 4
      %v6365 = vsel %vm4948, %v6363, %v6364
      %v6366 = vsel %vm2998, %v6360, %v6365
      %v6367 = vsel %vm2998, %v6362, %v6364
      %6370 = vst [vmem:[#allocation4 + $0x6c] sm:$0x88] %v6366
      %6371 = vst.msk [vmem:[#allocation4 + $0x74] sm:$0x8] %vm5030, %v6367
      %v6372 = vld [vmem:[#allocation3] sm:$0xf]
      %v6375 = vunpack.c.l.s4 1935823168
      %v6376 = vunpack.c.0.s8 %v6375
      %v6377 = vlaneseq
      %v6378 = vshrl.u32 %v6377, 7
      %v6379 = vsub.s32 %v6376, %v6378
      %v6380 = vrot.slane %v6372, %v6379
      %v6381 = vcombine.high %v6380, %v6380
      %v6383 = vunpack.c.l.s4 1935823168
      %v6384 = vunpack.c.0.s8 %v6383
      %v6385 = vlaneseq
      %v6386 = vshrl.u32 %v6385, 7
      %v6387 = vsub.s32 %v6384, %v6386
      %v6388 = vrot.slane %v6380, %v6387
      %v6390 = vunpack.c.l.s4 1935823168
      %v6391 = vunpack.c.0.s8 %v6390
      %v6392 = vlaneseq
      %v6393 = vshrl.u32 %v6392, 7
      %v6394 = vsub.s32 %v6391, %v6393
      %v6395 = vrot.slane %v6381, %v6394
      %6396 = vrot.lane.b32.xlu0 %v6388, 13
      %v6397 = vpop.permute.xlu0 %6396
      %6398 = vrot.lane.b32.xlu0 %v6395, 13
      %v6399 = vpop.permute.xlu0 %6398
      %v6400 = vrot.slane %v6397, 4
      %v6401 = vrot.slane %v6399, 4
      %v6402 = vsel %vm4948, %v6400, %v6401
      %v6403 = vsel %vm3073, %v6397, %v6402
      %v6404 = vsel %vm3073, %v6399, %v6401
      %6407 = vst [vmem:[#allocation4 + $0x78] sm:$0x11] %v6403
      %6408 = vst.msk [vmem:[#allocation4 + $0x80] sm:$0x1] %vm4916, %v6404
      %v6409 = vld [vmem:[#allocation3] sm:$0xf]
      %v6412 = vunpack.c.l.s4 1935823168
      %v6413 = vunpack.c.0.s8 %v6412
      %v6414 = vlaneseq
      %v6415 = vshrl.u32 %v6414, 7
      %v6416 = vsub.s32 %v6413, %v6415
      %v6417 = vrot.slane %v6409, %v6416
      %v6418 = vcombine.low %v6417, %v6417
      %v6420 = vunpack.c.l.s4 1935823168
      %v6421 = vunpack.c.0.s8 %v6420
      %v6422 = vlaneseq
      %v6423 = vshrl.u32 %v6422, 7
      %v6424 = vsub.s32 %v6421, %v6423
      %v6425 = vrot.slane %v6418, %v6424
      %v6427 = vunpack.c.l.s4 1935823168
      %v6428 = vunpack.c.0.s8 %v6427
      %v6429 = vlaneseq
      %v6430 = vshrl.u32 %v6429, 7
      %v6431 = vsub.s32 %v6428, %v6430
      %v6432 = vrot.slane %v6417, %v6431
      %6433 = vrot.lane.b32.xlu0 %v6425, 12
      %v6434 = vpop.permute.xlu0 %6433
      %6435 = vrot.lane.b32.xlu0 %v6432, 12
      %v6436 = vpop.permute.xlu0 %6435
      %v6437 = vrot.slane %v6434, 4
      %v6438 = vrot.slane %v6436, 4
      %v6439 = vsel %vm4948, %v6437, %v6438
      %v6440 = vsel %vm3148, %v6434, %v6439
      %v6441 = vsel %vm3148, %v6436, %v6438
      %6444 = vst [vmem:[#allocation4 + $0x78] sm:$0x22] %v6440
      %6445 = vst.msk [vmem:[#allocation4 + $0x80] sm:$0x2] %vm4954, %v6441
      %v6446 = vld [vmem:[#allocation3 + $0x1] sm:$0x7]
      %v6448 = vcombine.low %v6446, %v6446
      %v6450 = vunpack.c.l.s4 1935823168
      %v6451 = vunpack.c.0.s8 %v6450
      %v6452 = vlaneseq
      %v6453 = vshrl.u32 %v6452, 7
      %v6454 = vsub.s32 %v6451, %v6453
      %v6455 = vrot.slane %v6448, %v6454
      %v6456 = vcombine.high %v6455, %v6455
      %v6458 = vunpack.c.l.s4 1935823168
      %v6459 = vunpack.c.0.s8 %v6458
      %v6460 = vlaneseq
      %v6461 = vshrl.u32 %v6460, 7
      %v6462 = vsub.s32 %v6459, %v6461
      %v6463 = vrot.slane %v6455, %v6462
      %v6465 = vunpack.c.l.s4 1935823168
      %v6466 = vunpack.c.0.s8 %v6465
      %v6467 = vlaneseq
      %v6468 = vshrl.u32 %v6467, 7
      %v6469 = vsub.s32 %v6466, %v6468
      %v6470 = vrot.slane %v6456, %v6469
      %6471 = vrot.lane.b32.xlu0 %v6463, 124
      %v6472 = vpop.permute.xlu0 %6471
      %6473 = vrot.lane.b32.xlu0 %v6470, 124
      %v6474 = vpop.permute.xlu0 %6473
      %v6475 = vrot.slane %v6472, 4
      %v6476 = vrot.slane %v6474, 4
      %v6477 = vsel %vm4948, %v6475, %v6476
      %v6478 = vsel %vm483, %v6472, %v6477
      %6481 = vst [vmem:[#allocation4 + $0x78] sm:$0x44] %v6478
      %6482 = vst.msk [vmem:[#allocation4 + $0x80] sm:$0x4] %vm4992, %v6474
      %v6483 = vld [vmem:[#allocation3 + $0x1] sm:$0x7]
      %v6485 = vcombine.low %v6483, %v6483
      %v6487 = vunpack.c.l.s4 1935823168
      %v6488 = vunpack.c.0.s8 %v6487
      %v6489 = vlaneseq
      %v6490 = vshrl.u32 %v6489, 7
      %v6491 = vsub.s32 %v6488, %v6490
      %v6492 = vrot.slane %v6485, %v6491
      %v6493 = vcombine.low %v6492, %v6492
      %v6495 = vunpack.c.l.s4 1935823168
      %v6496 = vunpack.c.0.s8 %v6495
      %v6497 = vlaneseq
      %v6498 = vshrl.u32 %v6497, 7
      %v6499 = vsub.s32 %v6496, %v6498
      %v6500 = vrot.slane %v6493, %v6499
      %v6502 = vunpack.c.l.s4 1935823168
      %v6503 = vunpack.c.0.s8 %v6502
      %v6504 = vlaneseq
      %v6505 = vshrl.u32 %v6504, 7
      %v6506 = vsub.s32 %v6503, %v6505
      %v6507 = vrot.slane %v6492, %v6506
      %6508 = vrot.lane.b32.xlu0 %v6500, 123
      %v6509 = vpop.permute.xlu0 %6508
      %6510 = vrot.lane.b32.xlu0 %v6507, 123
      %v6511 = vpop.permute.xlu0 %6510
      %v6512 = vrot.slane %v6509, 4
      %v6513 = vrot.slane %v6511, 4
      %v6514 = vsel %vm4948, %v6512, %v6513
      %v6515 = vsel %vm546, %v6509, %v6514
      %6518 = vst [vmem:[#allocation4 + $0x78] sm:$0x88] %v6515
      %6519 = vst.msk [vmem:[#allocation4 + $0x80] sm:$0x8] %vm5030, %v6511
      %v6520 = vld [vmem:[#allocation3 + $0x1] sm:$0x7]
      %v6523 = vunpack.c.l.s4 1935823168
      %v6524 = vunpack.c.0.s8 %v6523
      %v6525 = vlaneseq
      %v6526 = vshrl.u32 %v6525, 7
      %v6527 = vsub.s32 %v6524, %v6526
      %v6528 = vrot.slane %v6520, %v6527
      %v6529 = vcombine.high %v6528, %v6528
      %v6531 = vunpack.c.l.s4 1935823168
      %v6532 = vunpack.c.0.s8 %v6531
      %v6533 = vlaneseq
      %v6534 = vshrl.u32 %v6533, 7
      %v6535 = vsub.s32 %v6532, %v6534
      %v6536 = vrot.slane %v6528, %v6535
      %v6538 = vunpack.c.l.s4 1935823168
      %v6539 = vunpack.c.0.s8 %v6538
      %v6540 = vlaneseq
      %v6541 = vshrl.u32 %v6540, 7
      %v6542 = vsub.s32 %v6539, %v6541
      %v6543 = vrot.slane %v6529, %v6542
      %6544 = vrot.lane.b32.xlu0 %v6536, 122
      %v6545 = vpop.permute.xlu0 %6544
      %6546 = vrot.lane.b32.xlu0 %v6543, 122
      %v6547 = vpop.permute.xlu0 %6546
      %v6548 = vrot.slane %v6545, 4
      %v6549 = vrot.slane %v6547, 4
      %v6550 = vsel %vm4948, %v6548, %v6549
      %v6551 = vsel %vm609, %v6545, %v6550
      %6554 = vst [vmem:[#allocation4 + $0x84] sm:$0x11] %v6551
      %6555 = vst.msk [vmem:[#allocation4 + $0x8c] sm:$0x1] %vm4916, %v6547
      %v6556 = vld [vmem:[#allocation3 + $0x1] sm:$0x7]
      %v6559 = vunpack.c.l.s4 1935823168
      %v6560 = vunpack.c.0.s8 %v6559
      %v6561 = vlaneseq
      %v6562 = vshrl.u32 %v6561, 7
      %v6563 = vsub.s32 %v6560, %v6562
      %v6564 = vrot.slane %v6556, %v6563
      %v6565 = vcombine.low %v6564, %v6564
      %v6567 = vunpack.c.l.s4 1935823168
      %v6568 = vunpack.c.0.s8 %v6567
      %v6569 = vlaneseq
      %v6570 = vshrl.u32 %v6569, 7
      %v6571 = vsub.s32 %v6568, %v6570
      %v6572 = vrot.slane %v6565, %v6571
      %v6574 = vunpack.c.l.s4 1935823168
      %v6575 = vunpack.c.0.s8 %v6574
      %v6576 = vlaneseq
      %v6577 = vshrl.u32 %v6576, 7
      %v6578 = vsub.s32 %v6575, %v6577
      %v6579 = vrot.slane %v6564, %v6578
      %6580 = vrot.lane.b32.xlu0 %v6572, 121
      %v6581 = vpop.permute.xlu0 %6580
      %6582 = vrot.lane.b32.xlu0 %v6579, 121
      %v6583 = vpop.permute.xlu0 %6582
      %v6584 = vrot.slane %v6581, 4
      %v6585 = vrot.slane %v6583, 4
      %v6586 = vsel %vm4948, %v6584, %v6585
      %v6587 = vsel %vm3399, %v6581, %v6586
      %6590 = vst [vmem:[#allocation4 + $0x84] sm:$0x22] %v6587
      %6591 = vst.msk [vmem:[#allocation4 + $0x8c] sm:$0x2] %vm4954, %v6583
      %v6592 = vld [vmem:[#allocation3 + $0x1] sm:$0x7]
      %v6594 = vcombine.low %v6592, %v6592
      %v6596 = vunpack.c.l.s4 1935823168
      %v6597 = vunpack.c.0.s8 %v6596
      %v6598 = vlaneseq
      %v6599 = vshrl.u32 %v6598, 7
      %v6600 = vsub.s32 %v6597, %v6599
      %v6601 = vrot.slane %v6594, %v6600
      %v6602 = vcombine.high %v6601, %v6601
      %v6604 = vunpack.c.l.s4 1935823168
      %v6605 = vunpack.c.0.s8 %v6604
      %v6606 = vlaneseq
      %v6607 = vshrl.u32 %v6606, 7
      %v6608 = vsub.s32 %v6605, %v6607
      %v6609 = vrot.slane %v6601, %v6608
      %v6611 = vunpack.c.l.s4 1935823168
      %v6612 = vunpack.c.0.s8 %v6611
      %v6613 = vlaneseq
      %v6614 = vshrl.u32 %v6613, 7
      %v6615 = vsub.s32 %v6612, %v6614
      %v6616 = vrot.slane %v6602, %v6615
      %6617 = vrot.lane.b32.xlu0 %v6609, 120
      %v6618 = vpop.permute.xlu0 %6617
      %6619 = vrot.lane.b32.xlu0 %v6616, 120
      %v6620 = vpop.permute.xlu0 %6619
      %v6621 = vrot.slane %v6618, 4
      %v6622 = vrot.slane %v6620, 4
      %v6623 = vsel %vm4948, %v6621, %v6622
      %v6624 = vsel %vm3462, %v6618, %v6623
      %6627 = vst [vmem:[#allocation4 + $0x84] sm:$0x44] %v6624
      %6628 = vst.msk [vmem:[#allocation4 + $0x8c] sm:$0x4] %vm4992, %v6620
      %v6629 = vld [vmem:[#allocation3 + $0x1] sm:$0x7]
      %v6631 = vcombine.low %v6629, %v6629
      %v6633 = vunpack.c.l.s4 1935823168
      %v6634 = vunpack.c.0.s8 %v6633
      %v6635 = vlaneseq
      %v6636 = vshrl.u32 %v6635, 7
      %v6637 = vsub.s32 %v6634, %v6636
      %v6638 = vrot.slane %v6631, %v6637
      %v6639 = vcombine.low %v6638, %v6638
      %v6641 = vunpack.c.l.s4 1935823168
      %v6642 = vunpack.c.0.s8 %v6641
      %v6643 = vlaneseq
      %v6644 = vshrl.u32 %v6643, 7
      %v6645 = vsub.s32 %v6642, %v6644
      %v6646 = vrot.slane %v6639, %v6645
      %v6648 = vunpack.c.l.s4 1935823168
      %v6649 = vunpack.c.0.s8 %v6648
      %v6650 = vlaneseq
      %v6651 = vshrl.u32 %v6650, 7
      %v6652 = vsub.s32 %v6649, %v6651
      %v6653 = vrot.slane %v6638, %v6652
      %6654 = vrot.lane.b32.xlu0 %v6646, 119
      %v6655 = vpop.permute.xlu0 %6654
      %6656 = vrot.lane.b32.xlu0 %v6653, 119
      %v6657 = vpop.permute.xlu0 %6656
      %v6658 = vrot.slane %v6655, 4
      %v6659 = vrot.slane %v6657, 4
      %v6660 = vsel %vm4948, %v6658, %v6659
      %v6661 = vsel %vm3525, %v6655, %v6660
      %6664 = vst [vmem:[#allocation4 + $0x84] sm:$0x88] %v6661
      %6665 = vst.msk [vmem:[#allocation4 + $0x8c] sm:$0x8] %vm5030, %v6657
      %v6666 = vld [vmem:[#allocation3 + $0x1] sm:$0x7]
      %v6669 = vunpack.c.l.s4 1935823168
      %v6670 = vunpack.c.0.s8 %v6669
      %v6671 = vlaneseq
      %v6672 = vshrl.u32 %v6671, 7
      %v6673 = vsub.s32 %v6670, %v6672
      %v6674 = vrot.slane %v6666, %v6673
      %v6675 = vcombine.high %v6674, %v6674
      %v6677 = vunpack.c.l.s4 1935823168
      %v6678 = vunpack.c.0.s8 %v6677
      %v6679 = vlaneseq
      %v6680 = vshrl.u32 %v6679, 7
      %v6681 = vsub.s32 %v6678, %v6680
      %v6682 = vrot.slane %v6674, %v6681
      %v6684 = vunpack.c.l.s4 1935823168
      %v6685 = vunpack.c.0.s8 %v6684
      %v6686 = vlaneseq
      %v6687 = vshrl.u32 %v6686, 7
      %v6688 = vsub.s32 %v6685, %v6687
      %v6689 = vrot.slane %v6675, %v6688
      %6690 = vrot.lane.b32.xlu0 %v6682, 118
      %v6691 = vpop.permute.xlu0 %6690
      %6692 = vrot.lane.b32.xlu0 %v6689, 118
      %v6693 = vpop.permute.xlu0 %6692
      %v6694 = vrot.slane %v6691, 4
      %v6695 = vrot.slane %v6693, 4
      %v6696 = vsel %vm4948, %v6694, %v6695
      %v6697 = vsel %vm3588, %v6691, %v6696
      %6700 = vst [vmem:[#allocation4 + $0x90] sm:$0x11] %v6697
      %6701 = vst.msk [vmem:[#allocation4 + $0x98] sm:$0x1] %vm4916, %v6693
      %v6702 = vld [vmem:[%s2] sm:$0xf]
      %v6703 = vld [vmem:[%s2 + $0x4] sm:$0xf]
      %v6704 = vld [vmem:[%s2 + $0x8] sm:$0xf]
      %v6705 = vld [vmem:[%s2 + $0xc] sm:$0xf]
      %v6706 = vld [vmem:[#allocation4] sm:$0xff]
      %v6707 = vld [vmem:[#allocation4 + $0x8] sm:$0xf]
      %v6708 = vld [vmem:[#allocation4 + $0xc] sm:$0xff]
      %v6709 = vld [vmem:[#allocation4 + $0x14] sm:$0xf]
      %v6710 = vld [vmem:[#allocation4 + $0x18] sm:$0xff]
      %v6711 = vld [vmem:[#allocation4 + $0x20] sm:$0xf]
      %v6712 = vld [vmem:[#allocation4 + $0x24] sm:$0xff]
      %v6713 = vld [vmem:[#allocation4 + $0x2c] sm:$0xf]
      %v6714 = vld [vmem:[#allocation4 + $0x30] sm:$0xff]
      %v6715 = vld [vmem:[#allocation4 + $0x38] sm:$0xf]
      %v6716 = vld [vmem:[#allocation4 + $0x3c] sm:$0xff]
      %v6717 = vld [vmem:[#allocation4 + $0x44] sm:$0xf]
      %v6718 = vld [vmem:[#allocation4 + $0x48] sm:$0xff]
      %v6719 = vld [vmem:[#allocation4 + $0x50] sm:$0xf]
      %v6720 = vld [vmem:[#allocation4 + $0x54] sm:$0xff]
      %v6721 = vld [vmem:[#allocation4 + $0x5c] sm:$0xf]
      %v6722 = vld [vmem:[#allocation4 + $0x60] sm:$0xff]
      %v6723 = vld [vmem:[#allocation4 + $0x68] sm:$0xf]
      %v6724 = vld [vmem:[#allocation4 + $0x6c] sm:$0xff]
      %v6725 = vld [vmem:[#allocation4 + $0x74] sm:$0xf]
      %v6726 = vld [vmem:[#allocation4 + $0x78] sm:$0xff]
      %v6727 = vld [vmem:[#allocation4 + $0x80] sm:$0xf]
      %v6728 = vld [vmem:[#allocation4 + $0x84] sm:$0xff]
      %v6729 = vld [vmem:[#allocation4 + $0x8c] sm:$0xf]
      %v6730 = vld [vmem:[#allocation4 + $0x90] sm:$0x11]
      %v6731 = vld [vmem:[#allocation4 + $0x98] sm:$0x1]
      %v6736 = vunpack.c.l.b16 %v6702
      %v6737 = vunpack.c.l.b16 %v6703
      %v6738 = vunpack.c.l.b16 %v6704
      %v6739 = vunpack.c.l.b16 %v6705
      %v6740 = vpack.c.b16 %v6737, %v6736
      %v6741 = vpack.c.b16 %v6739, %v6738
      %v6768 = vunpack.c.l.b16 %v6706
      %v6769 = vunpack.c.h.b16 %v6706
      %v6770 = vunpack.c.l.b16 %v6707
      %v6771 = vunpack.c.l.b16 %v6708
      %v6772 = vunpack.c.h.b16 %v6708
      %v6773 = vunpack.c.l.b16 %v6709
      %v6774 = vunpack.c.l.b16 %v6710
      %v6775 = vunpack.c.h.b16 %v6710
      %v6776 = vunpack.c.l.b16 %v6711
      %v6777 = vunpack.c.l.b16 %v6712
      %v6778 = vunpack.c.h.b16 %v6712
      %v6779 = vunpack.c.l.b16 %v6713
      %v6780 = vunpack.c.l.b16 %v6714
      %v6781 = vunpack.c.h.b16 %v6714
      %v6782 = vunpack.c.l.b16 %v6715
      %v6783 = vunpack.c.l.b16 %v6716
      %v6784 = vunpack.c.h.b16 %v6716
      %v6785 = vunpack.c.l.b16 %v6717
      %v6786 = vunpack.c.l.b16 %v6718
      %v6787 = vunpack.c.h.b16 %v6718
      %v6788 = vunpack.c.l.b16 %v6719
      %v6789 = vunpack.c.l.b16 %v6720
      %v6790 = vunpack.c.h.b16 %v6720
      %v6791 = vunpack.c.l.b16 %v6721
      %v6792 = vunpack.c.l.b16 %v6722
      %v6793 = vunpack.c.h.b16 %v6722
      %v6794 = vunpack.c.l.b16 %v6723
      %v6795 = vunpack.c.l.b16 %v6724
      %v6796 = vunpack.c.h.b16 %v6724
      %v6797 = vunpack.c.l.b16 %v6725
      %v6798 = vunpack.c.l.b16 %v6726
      %v6799 = vunpack.c.h.b16 %v6726
      %v6800 = vunpack.c.l.b16 %v6727
      %v6801 = vunpack.c.l.b16 %v6728
      %v6802 = vunpack.c.h.b16 %v6728
      %v6803 = vunpack.c.l.b16 %v6729
      %v6804 = vunpack.c.l.b16 %v6730
      %v6805 = vunpack.c.h.b16 %v6730
      %v6806 = vunpack.c.l.b16 %v6731
      %v6807 = vpack.c.b16 %v6771, %v6768
      %v6808 = vpack.c.b16 %v6772, %v6769
      %v6809 = vpack.c.b16 %v6773, %v6770
      %v6810 = vpack.c.b16 %v6777, %v6774
      %v6811 = vpack.c.b16 %v6778, %v6775
      %v6812 = vpack.c.b16 %v6779, %v6776
      %v6813 = vpack.c.b16 %v6783, %v6780
      %v6814 = vpack.c.b16 %v6784, %v6781
      %v6815 = vpack.c.b16 %v6785, %v6782
      %v6816 = vpack.c.b16 %v6789, %v6786
      %v6817 = vpack.c.b16 %v6790, %v6787
      %v6818 = vpack.c.b16 %v6791, %v6788
      %v6819 = vpack.c.b16 %v6795, %v6792
      %v6820 = vpack.c.b16 %v6796, %v6793
      %v6821 = vpack.c.b16 %v6797, %v6794
      %v6822 = vpack.c.b16 %v6801, %v6798
      %v6823 = vpack.c.b16 %v6802, %v6799
      %v6824 = vpack.c.b16 %v6803, %v6800
      %v6825 = vpack.c.b16 %v6804, %v6804
      %v6826 = vpack.c.b16 %v6805, %v6805
      %v6827 = vpack.c.b16 %v6806, %v6806
      %vm6846 = vcmask 801792
      %v6848 = vsel %vm6846, %v6740, 0
      %v6851 = vsel %vm6846, %v6741, 0
      %vm6853 = vcmask 1040384
      %v6855 = vsel %vm6853, %v6825, 0
      %v6858 = vsel %vm6853, %v6826, 0
      %v6861 = vsel %vm6853, %v6827, 0
      %6863 = vmatprep.subr.bf16.mxu0 %v6808
      %6864 = vmatpush1.bf16.msra.mxu0 %v6807
      %6865 = vmatprep.subr.bf16.mxu0 %v6811
      %6866 = vmatpush1.bf16.msra.mxu0 %v6810
      %6867 = vmatprep.subr.bf16.mxu0 %v6814
      %6868 = vmatpush1.bf16.msra.mxu0 %v6813
      %6869 = vmatprep.subr.bf16.mxu0 %v6817
      %6870 = vmatpush1.bf16.msra.mxu0 %v6816
      %6871 = vmatprep.subr.bf16.mxu0 %v6820
      %6872 = vmatpush1.bf16.msra.mxu0 %v6819
      %6873 = vmatprep.subr.bf16.mxu0 %v6823
      %6874 = vmatpush1.bf16.msra.mxu0 %v6822
      %6875 = vmatprep.subr.bf16.mxu0 %v6858
      %6876 = vmatpush1.bf16.msra.mxu0 %v6855
      %6877 = vmatprep.subr.bf16.mxu0 0
      %6878 = vmatpush1.bf16.msra.mxu0 0
      %6879 = vmatprep.subr.bf16.mxu0 0
      %6880 = vmatpush1.bf16.msra.mxu0 0
      %6881 = vmatprep.subr.bf16.mxu0 0
      %6882 = vmatpush1.bf16.msra.mxu0 0
      %6883 = vmatprep.subr.bf16.mxu0 0
      %6884 = vmatpush1.bf16.msra.mxu0 0
      %6885 = vmatprep.subr.bf16.mxu0 0
      %6886 = vmatpush1.bf16.msra.mxu0 0
      %6887 = vmatprep.subr.bf16.mxu0 0
      %6888 = vmatpush1.bf16.msra.mxu0 0
      %6889 = vmatprep.subr.bf16.mxu0 0
      %6890 = vmatpush1.bf16.msra.mxu0 0
      %6891 = vmatprep.subr.bf16.mxu0 0
      %6892 = vmatpush1.bf16.msra.mxu0 0
      %6893 = vmatprep.subr.bf16.mxu0 0
      %6894 = vmatpush1.bf16.msra.mxu0 0
      %6895 = vmatprep.mubr.bf16.mxu0 0
      %6896 = vmatmul.mubr.bf16.gmra.mrb[0].mxu0 %v6848
      %v6897 = vpop.f32.mrb[0].mxu0
      %v6898 = vadd.f32 0.0, %v6897
      %v6899 = vpop.f32.mrb[0].mxu0
      %v6900 = vadd.f32 0.0, %v6899
      %v6901 = vpop.f32.mrb[0].mxu0
      %v6902 = vadd.f32 0.0, %v6901
      %v6903 = vpop.f32.mrb[0].mxu0
      %v6904 = vadd.f32 0.0, %v6903
      %6905 = vmatprep.mubr.bf16.mxu0 0
      %6906 = vmatmul.mubr.bf16.gmra.mrb[0].mxu0 %v6851
      %v6907 = vpop.f32.mrb[0].mxu0
      %v6908 = vadd.f32 0.0, %v6907
      %v6909 = vpop.f32.mrb[0].mxu0
      %v6910 = vadd.f32 0.0, %v6909
      %v6911 = vpop.f32.mrb[0].mxu0
      %v6912 = vadd.f32 0.0, %v6911
      %v6913 = vpop.f32.mrb[0].mxu0
      %v6914 = vadd.f32 0.0, %v6913
      %6915 = vdwg.mxu0
      %6916 = vmatprep.subr.bf16.mxu0 0
      %6917 = vmatpush1.bf16.msra.mxu0 %v6809
      %6918 = vmatprep.subr.bf16.mxu0 0
      %6919 = vmatpush1.bf16.msra.mxu0 %v6812
      %6920 = vmatprep.subr.bf16.mxu0 0
      %6921 = vmatpush1.bf16.msra.mxu0 %v6815
      %6922 = vmatprep.subr.bf16.mxu0 0
      %6923 = vmatpush1.bf16.msra.mxu0 %v6818
      %6924 = vmatprep.subr.bf16.mxu0 0
      %6925 = vmatpush1.bf16.msra.mxu0 %v6821
      %6926 = vmatprep.subr.bf16.mxu0 0
      %6927 = vmatpush1.bf16.msra.mxu0 %v6824
      %6928 = vmatprep.subr.bf16.mxu0 0
      %6929 = vmatpush1.bf16.msra.mxu0 %v6861
      %6930 = vmatprep.subr.bf16.mxu0 0
      %6931 = vmatpush1.bf16.msra.mxu0 0
      %6932 = vmatprep.subr.bf16.mxu0 0
      %6933 = vmatpush1.bf16.msra.mxu0 0
      %6934 = vmatprep.subr.bf16.mxu0 0
      %6935 = vmatpush1.bf16.msra.mxu0 0
      %6936 = vmatprep.subr.bf16.mxu0 0
      %6937 = vmatpush1.bf16.msra.mxu0 0
      %6938 = vmatprep.subr.bf16.mxu0 0
      %6939 = vmatpush1.bf16.msra.mxu0 0
      %6940 = vmatprep.subr.bf16.mxu0 0
      %6941 = vmatpush1.bf16.msra.mxu0 0
      %6942 = vmatprep.subr.bf16.mxu0 0
      %6943 = vmatpush1.bf16.msra.mxu0 0
      %6944 = vmatprep.subr.bf16.mxu0 0
      %6945 = vmatpush1.bf16.msra.mxu0 0
      %6946 = vmatprep.subr.bf16.mxu0 0
      %6947 = vmatpush1.bf16.msra.mxu0 0
      %6948 = vmatprep.mubr.bf16.mxu0 0
      %6949 = vmatmul.mubr.bf16.gmra.mrb[0].mxu0 %v6848
      %v6950 = vpop.f32.mrb[0].mxu0
      %v6951 = vadd.f32 0.0, %v6950
      %v6952 = vpop.f32.mrb[0].mxu0
      %v6953 = vpop.f32.mrb[0].mxu0
      %v6954 = vadd.f32 0.0, %v6953
      %v6955 = vpop.f32.mrb[0].mxu0
      %6956 = vmatprep.mubr.bf16.mxu0 0
      %6957 = vmatmul.mubr.bf16.gmra.mrb[0].mxu0 %v6851
      %v6958 = vpop.f32.mrb[0].mxu0
      %v6959 = vadd.f32 0.0, %v6958
      %v6960 = vpop.f32.mrb[0].mxu0
      %v6961 = vpop.f32.mrb[0].mxu0
      %v6962 = vadd.f32 0.0, %v6961
      %v6963 = vpop.f32.mrb[0].mxu0
      %6964 = vdwg.mxu0
      %v6965 = vsel %vm4535, %v6898, 0.0
      %v6966 = vsel %vm4536, %v6900, 0.0
      %v6967 = vsel %vm4537, %v6951, 0.0
      %v6968 = vsel %vm4535, %v6902, 0.0
      %v6969 = vsel %vm4536, %v6904, 0.0
      %v6970 = vsel %vm4537, %v6954, 0.0
      %v6971 = vsel %vm4535, %v6908, 0.0
      %v6972 = vsel %vm4536, %v6910, 0.0
      %v6973 = vsel %vm4537, %v6959, 0.0
      %v6974 = vsel %vm4535, %v6912, 0.0
      %v6975 = vsel %vm4536, %v6914, 0.0
      %v6976 = vsel %vm4537, %v6962, 0.0
      %v6977 = vadd.f32 %v6965, %v6966
      %v6978 = vsel %vm243, %v6967, 0.0
      %v6979 = vadd.f32 %v6977, %v6978
      %6980 = vadd.xlane.f32.xlu0 %v6979
      %v6981 = vpop.xlane.xlu0 %6980
      %v6982 = vadd.f32 %v6968, %v6969
      %v6983 = vsel %vm243, %v6970, 0.0
      %v6984 = vadd.f32 %v6982, %v6983
      %6985 = vadd.xlane.f32.xlu0 %v6984
      %v6986 = vpop.xlane.xlu0 %6985
      %v6987 = vadd.f32 %v6971, %v6972
      %v6988 = vsel %vm243, %v6973, 0.0
      %v6989 = vadd.f32 %v6987, %v6988
      %6990 = vadd.xlane.f32.xlu0 %v6989
      %v6991 = vpop.xlane.xlu0 %6990
      %v6992 = vadd.f32 %v6974, %v6975
      %v6993 = vsel %vm243, %v6976, 0.0
      %v6994 = vadd.f32 %v6992, %v6993
      %6995 = vadd.xlane.f32.xlu0 %v6994
      %v6996 = vpop.xlane.xlu0 %6995
      %v6997 = vmul.f32 %v6965, %v6965
      %v6998 = vmul.f32 %v6966, %v6966
      %v6999 = vmul.f32 %v6967, %v6967
      %v7000 = vmul.f32 %v6968, %v6968
      %v7001 = vmul.f32 %v6969, %v6969
      %v7002 = vmul.f32 %v6970, %v6970
      %v7003 = vmul.f32 %v6971, %v6971
      %v7004 = vmul.f32 %v6972, %v6972
      %v7005 = vmul.f32 %v6973, %v6973
      %v7006 = vmul.f32 %v6974, %v6974
      %v7007 = vmul.f32 %v6975, %v6975
      %v7008 = vmul.f32 %v6976, %v6976
      %v7009 = vadd.f32 %v6997, %v6998
      %v7010 = vsel %vm243, %v6999, 0.0
      %v7011 = vadd.f32 %v7009, %v7010
      %7012 = vadd.xlane.f32.xlu0 %v7011
      %v7013 = vpop.xlane.xlu0 %7012
      %v7014 = vadd.f32 %v7000, %v7001
      %v7015 = vsel %vm243, %v7002, 0.0
      %v7016 = vadd.f32 %v7014, %v7015
      %7017 = vadd.xlane.f32.xlu0 %v7016
      %v7018 = vpop.xlane.xlu0 %7017
      %v7019 = vadd.f32 %v7003, %v7004
      %v7020 = vsel %vm243, %v7005, 0.0
      %v7021 = vadd.f32 %v7019, %v7020
      %7022 = vadd.xlane.f32.xlu0 %v7021
      %v7023 = vpop.xlane.xlu0 %7022
      %v7024 = vadd.f32 %v7006, %v7007
      %v7025 = vsel %vm243, %v7008, 0.0
      %v7026 = vadd.f32 %v7024, %v7025
      %7027 = vadd.xlane.f32.xlu0 %v7026
      %v7028 = vpop.xlane.xlu0 %7027
      %v7029 = vmul.f32 %v6981, 0.00390625
      %v7030 = vmul.f32 %v6986, 0.00390625
      %v7031 = vmul.f32 %v6991, 0.00390625
      %v7032 = vmul.f32 %v6996, 0.00390625
      %v7033 = vmul.f32 %v7013, 0.00390625
      %v7034 = vmul.f32 %v7018, 0.00390625
      %v7035 = vmul.f32 %v7023, 0.00390625
      %v7036 = vmul.f32 %v7028, 0.00390625
      %v7037 = vmul.f32 %v7029, %v7029
      %v7038 = vmul.f32 %v7030, %v7030
      %v7039 = vmul.f32 %v7031, %v7031
      %v7040 = vmul.f32 %v7032, %v7032
      %v7041 = vsub.f32 %v7033, %v7037
      %v7042 = vsub.f32 %v7034, %v7038
      %v7043 = vsub.f32 %v7035, %v7039
      %v7044 = vsub.f32 %v7036, %v7040
      %v7045 = vsub.f32 %v6898, %v7029
      %v7046 = vsub.f32 %v6900, %v7029
      %v7047 = vsub.f32 %v6951, %v7029
      %v7048 = vsub.f32 %v6902, %v7030
      %v7049 = vsub.f32 %v6904, %v7030
      %v7050 = vsub.f32 %v6954, %v7030
      %v7051 = vsub.f32 %v6908, %v7031
      %v7052 = vsub.f32 %v6910, %v7031
      %v7053 = vsub.f32 %v6959, %v7031
      %v7054 = vsub.f32 %v6912, %v7032
      %v7055 = vsub.f32 %v6914, %v7032
      %v7056 = vsub.f32 %v6962, %v7032
      %v7057 = vadd.f32 %v7041, 1e-05
      %v7058 = vadd.f32 %v7042, 1e-05
      %v7059 = vadd.f32 %v7043, 1e-05
      %v7060 = vadd.f32 %v7044, 1e-05
      %v7061 = vrsqrt.pop %v7057
      %v7062 = vrsqrt.pop %v7058
      %v7063 = vrsqrt.pop %v7059
      %v7064 = vrsqrt.pop %v7060
      %v7065 = vmul.f32 %v7045, %v7061
      %v7066 = vmul.f32 %v7046, %v7061
      %v7067 = vmul.f32 %v7047, %v7061
      %v7068 = vmul.f32 %v7048, %v7062
      %v7069 = vmul.f32 %v7049, %v7062
      %v7070 = vmul.f32 %v7050, %v7062
      %v7071 = vmul.f32 %v7051, %v7063
      %v7072 = vmul.f32 %v7052, %v7063
      %v7073 = vmul.f32 %v7053, %v7063
      %v7074 = vmul.f32 %v7054, %v7064
      %v7075 = vmul.f32 %v7055, %v7064
      %v7076 = vmul.f32 %v7056, %v7064
      %v7077 = vxor.u32 %v7065, 2147483648
      %v7078 = vxor.u32 %v7066, 2147483648
      %v7079 = vxor.u32 %v7067, 2147483648
      %v7080 = vxor.u32 %v7068, 2147483648
      %v7081 = vxor.u32 %v7069, 2147483648
      %v7082 = vxor.u32 %v7070, 2147483648
      %v7083 = vxor.u32 %v7071, 2147483648
      %v7084 = vxor.u32 %v7072, 2147483648
      %v7085 = vxor.u32 %v7073, 2147483648
      %v7086 = vxor.u32 %v7074, 2147483648
      %v7087 = vxor.u32 %v7075, 2147483648
      %v7088 = vxor.u32 %v7076, 2147483648
      %v7089 = vmul.f32 %v7077, 1.442695
      %v7090 = vpow.pop %v7089
      %v7091 = vmul.f32 %v7078, 1.442695
      %v7092 = vpow.pop %v7091
      %v7093 = vmul.f32 %v7079, 1.442695
      %v7094 = vpow.pop %v7093
      %v7095 = vmul.f32 %v7080, 1.442695
      %v7096 = vpow.pop %v7095
      %v7097 = vmul.f32 %v7081, 1.442695
      %v7098 = vpow.pop %v7097
      %v7099 = vmul.f32 %v7082, 1.442695
      %v7100 = vpow.pop %v7099
      %v7101 = vmul.f32 %v7083, 1.442695
      %v7102 = vpow.pop %v7101
      %v7103 = vmul.f32 %v7084, 1.442695
      %v7104 = vpow.pop %v7103
      %v7105 = vmul.f32 %v7085, 1.442695
      %v7106 = vpow.pop %v7105
      %v7107 = vmul.f32 %v7086, 1.442695
      %v7108 = vpow.pop %v7107
      %v7109 = vmul.f32 %v7087, 1.442695
      %v7110 = vpow.pop %v7109
      %v7111 = vmul.f32 %v7088, 1.442695
      %v7112 = vpow.pop %v7111
      %v7113 = vadd.f32 %v7090, 1.0
      %v7114 = vadd.f32 %v7092, 1.0
      %v7115 = vadd.f32 %v7094, 1.0
      %v7116 = vadd.f32 %v7096, 1.0
      %v7117 = vadd.f32 %v7098, 1.0
      %v7118 = vadd.f32 %v7100, 1.0
      %v7119 = vadd.f32 %v7102, 1.0
      %v7120 = vadd.f32 %v7104, 1.0
      %v7121 = vadd.f32 %v7106, 1.0
      %v7122 = vadd.f32 %v7108, 1.0
      %v7123 = vadd.f32 %v7110, 1.0
      %v7124 = vadd.f32 %v7112, 1.0
      %v7125 = vrcp.pop %v7113
      %v7126 = vmul.f32 1.0, %v7125
      %v7127 = vrcp.pop %v7114
      %v7128 = vmul.f32 1.0, %v7127
      %v7129 = vrcp.pop %v7115
      %v7130 = vmul.f32 1.0, %v7129
      %v7131 = vrcp.pop %v7116
      %v7132 = vmul.f32 1.0, %v7131
      %v7133 = vrcp.pop %v7117
      %v7134 = vmul.f32 1.0, %v7133
      %v7135 = vrcp.pop %v7118
      %v7136 = vmul.f32 1.0, %v7135
      %v7137 = vrcp.pop %v7119
      %v7138 = vmul.f32 1.0, %v7137
      %v7139 = vrcp.pop %v7120
      %v7140 = vmul.f32 1.0, %v7139
      %v7141 = vrcp.pop %v7121
      %v7142 = vmul.f32 1.0, %v7141
      %v7143 = vrcp.pop %v7122
      %v7144 = vmul.f32 1.0, %v7143
      %v7145 = vrcp.pop %v7123
      %v7146 = vmul.f32 1.0, %v7145
      %v7147 = vrcp.pop %v7124
      %v7148 = vmul.f32 1.0, %v7147
      %7149 = vst [vmem:[%s197] sm:$0xff] %v7126
      %7150 = vst [vmem:[%s197 + $0x8] sm:$0xff] %v7128
      %7151 = vst.msk [vmem:[%s197 + $0x10] sm:$0xff] %vm243, %v7130
      %7152 = vst [vmem:[%s197 + $0x18] sm:$0xff] %v7132
      %7153 = vst [vmem:[%s197 + $0x20] sm:$0xff] %v7134
      %7154 = vst.msk [vmem:[%s197 + $0x28] sm:$0xff] %vm243, %v7136
      %7155 = vst [vmem:[%s197 + $0x30] sm:$0xff] %v7138
      %7156 = vst [vmem:[%s197 + $0x38] sm:$0xff] %v7140
      %7157 = vst.msk [vmem:[%s197 + $0x40] sm:$0xff] %vm243, %v7142
      %7158 = vst [vmem:[%s197 + $0x48] sm:$0xff] %v7144
      %7159 = vst [vmem:[%s197 + $0x50] sm:$0xff] %v7146
      %7160 = vst.msk [vmem:[%s197 + $0x58] sm:$0xff] %vm243, %v7148
      %p7161 = scmp.lt.s32.totalorder %s15, 1
      %s7162 = scalar_select %p7161, %s15, 1
      %s7163 = smul.addr %s7162, 12
      %s7164 = smul.addr %s7163, 8
      %s7165 = scalar_lea.vmem %s4, %s7164
      // Predicated region
      $region37: #{gam_spatial_forward.1} parent=35 // pred_check
        %p7166 = pneg %p122
      $region38: #{gam_spatial_forward.1} parent=35 // pred_check_branch
        %7168 = sbr.rel (%p7166) target = $region40
      $region39: #{gam_spatial_forward.1} parent=35 // pred_region
        _
      $region40: #{gam_spatial_forward.1} parent=35 // pred_fallthru
        _
    $region36: #{gam_spatial_forward.1} parent=5 // pred_fallthru
      _
    %p7169 = scmp.le.s32.totalorder 2, %s10
    // Predicated region
    $region41: #{gam_spatial_forward.1} parent=5 // pred_check
      %p7170 = pneg %p7169
    $region42: #{gam_spatial_forward.1} parent=5 // pred_check_branch
      %7172 = sbr.rel (%p7170) target = $region44
    $region43: #{gam_spatial_forward.1} parent=5 // pred_region
      %s7173 = ssub.s32 %s10, 2
      // Predicated region
      $region45: #{gam_spatial_forward.1} parent=43 // pred_check
        %p7174 = pneg %p128
      $region46: #{gam_spatial_forward.1} parent=43 // pred_check_branch
        %7176 = sbr.rel (%p7174) target = $region48
      $region47: #{gam_spatial_forward.1} parent=43 // pred_region
        %p7177 = scmp.lt.s32.totalorder %s16, 1
        %s7178 = scalar_select %p7177, %s16, 1
        %s7179 = smul.addr %s7178, 12
        %s7180 = smul.addr %s7179, 8
        %s7181 = scalar_lea.vmem %s4, %s7180
      $region48: #{gam_spatial_forward.1} parent=43 // pred_fallthru
        _
    $region44: #{gam_spatial_forward.1} parent=5 // pred_fallthru
      _
  $region6: #{gam_spatial_forward.1} parent=0 // loop_footer
    %s14 = sadd.s32 1, %s10
  $region7: #{gam_spatial_forward.1} parent=0 // loop_footer_branch
    %9 = sbr.rel target = $region3
  $region8: #{gam_spatial_forward.1} parent=0 // loop_exit
    _

</llo_original>
